<compile_context>
chip_gen: v7x
topology: tpu7x:2x2x1
jax: 0.10.0
libtpu: 0.0.40
codegen_flags: <defaults>
</compile_context>

<pallas_src>
import numpy as np
import jax
import jax.numpy as jnp
from jax import lax
from jax.experimental import pallas as pl
from jax.experimental.pallas import tpu as pltpu

# ---- module geometry --------------------------------------------------------
CI1, CO1, K1 = 16, 128, 10                  # ConvTranspose2d(16, 128, 10, 1)
CI2, CO2, K2, S2, P2 = 128, 3, 4, 2, 1      # ConvTranspose2d(128, 3, 4, 2, 1)
EPS = 1e-5                                  # BatchNorm2d default eps
HW1 = K1 * K1                               # 100 spatial positions after convT1
OH = (K1 - 1) * S2 - 2 * P2 + K2            # 20
OW = OH

# ---- fused-kernel geometry (sub-pixel / 4-phase decomposition of convT2) ----
WP = 16                                     # padded width  (1 zero col left, 5 right; lane/pow2 friendly)
HP = 13                                     # padded height (1 zero row top, 2 bottom; keeps shifted slices in range)
RP = HP * WP                                # 208 flattened padded rows per sample (multiple of 8)
OUT_ROWS = K1 * WP                          # 160 phase-output rows: row = py*16 + px (px < 10 valid)
CPAD = 8                                    # output channels padded 3 -> 8 so tap columns are lane-aligned
NCOMBO = 16                                 # 4 phases x 4 taps -> 16*8 = 128 GEMM columns (full MXU width)
PHASES = ((0, 0), (0, 1), (1, 0), (1, 1))   # (ry, rx) output parity phase
TAPS = ((0, 0), (0, 1), (1, 0), (1, 1))     # (dy, dx) tap pair within a phase
KOFF = ((3, 1), (2, 0))                     # kernel tap   ky = KOFF[ry][dy]   (kx = KOFF[rx][dx])
SOFF = ((0, 1), (1, 2))                     # padded shift oy = SOFF[ry][dy]   (ox = SOFF[rx][dx])


# ------------------------- fused generator kernel ----------------------------
def _generator_kernel(x_ref, w1_ref, g_ref, b_ref, m_ref, w2_ref, o_ref):
    n = x_ref.shape[0]

    # ConvTranspose2d(16,128,10,1): 1x1 latent -> one MXU GEMM (bf16 in, f32 acc).
    # Zero weight columns realize the spatial zero-padding, so the result is
    # already the padded channels-last slab; a single retile makes it lane-dense.
    h = jnp.dot(x_ref[...], w1_ref[...], preferred_element_type=jnp.float32)  # (n, RP*128)
    h = h.reshape(n * RP, CO1)                                                # (n*RP, 128)

    # BatchNorm2d (training-mode batch stats) + ReLU.  Padded rows of h are
    # exact zeros, so plain column sums equal the sums over the N*100 valid
    # positions; the row mask is only needed for the centered variance and to
    # keep the padding at zero after the affine + ReLU.
    mask = m_ref[...]                                                         # (n*RP, 1) in {0,1}
    inv_cnt = 1.0 / (n * HW1)
    mean = jnp.sum(h, axis=0, keepdims=True) * inv_cnt                        # (1, 128)
    d = h - mean
    var = jnp.sum(d * d * mask, axis=0, keepdims=True) * inv_cnt              # (1, 128)
    scale = lax.rsqrt(var + EPS) * g_ref[...]
    shift = b_ref[...] - mean * scale
    a = (jnp.maximum(h * scale + shift, 0.0) * mask).astype(jnp.bfloat16)     # (n*RP, 128)

    # ConvTranspose2d(128,3,4,2,1) + Sigmoid via the 4-phase sub-pixel form:
    # one GEMM computes all 16 (phase, tap) channel projections (8-lane-aligned
    # column blocks), then each phase accumulates its 4 row-shifted tap slices.
    y = jnp.dot(a, w2_ref[...], preferred_element_type=jnp.float32)           # (n*RP, 128)
    y = y.reshape(n, RP, NCOMBO * CPAD)                                       # cheap leading-dim split
    for p, (ry, rx) in enumerate(PHASES):
        acc = None
        for j, (dy, dx) in enumerate(TAPS):
            t = p * 4 + j
            s = SOFF[ry][dy] * WP + SOFF[rx][dx]
            part = y[:, s:s + OUT_ROWS, t * CPAD:(t + 1) * CPAD]              # (n, 160, 8)
            acc = part if acc is None else acc + part
        # sigmoid: exp on the EUP; exact divide keeps full accuracy.
        o_ref[:, :, p * CPAD:(p + 1) * CPAD] = 1.0 / (1.0 + jnp.exp(-acc))


def _generator_call(x2d, w1pad, gamma2d, beta2d, mask, w2cat):
    n = x2d.shape[0]
    return pl.pallas_call(
        _generator_kernel,
        out_shape=jax.ShapeDtypeStruct((n, OUT_ROWS, 4 * CPAD), jnp.float32),
        grid=(1,),
        in_specs=[
            pl.BlockSpec((n, CI1), lambda i: (0, 0)),
            pl.BlockSpec((CI1, RP * CO1), lambda i: (0, 0)),
            pl.BlockSpec((1, CO1), lambda i: (0, 0)),
            pl.BlockSpec((1, CO1), lambda i: (0, 0)),
            pl.BlockSpec((n * RP, 1), lambda i: (0, 0)),
            pl.BlockSpec((CO1, NCOMBO * CPAD), lambda i: (0, 0)),
        ],
        out_specs=pl.BlockSpec((n, OUT_ROWS, 4 * CPAD), lambda i: (0, 0, 0)),
        compiler_params=pltpu.CompilerParams(
            dimension_semantics=("arbitrary",),
            internal_scratch_in_bytes=2 * 1024 * 1024,   # headroom for the retile relayout
        ),
    )(x2d, w1pad, gamma2d, beta2d, mask, w2cat)


# --------------------- parameter preparation (done once) ---------------------
def prepare_params(w1, gamma, beta, w2, batch):
    # ConvT1 weight (16,128,10,10) -> columns ordered (yp, xp, co) over the
    # zero-padded (HP, WP) frame, so the stage-1 GEMM output *is* the padded
    # channels-last slab (padding realized by zero weight columns).
    w1r = jnp.transpose(w1, (0, 2, 3, 1))                        # (16, 10, 10, 128)
    w1pad = jnp.zeros((CI1, HP, WP, CO1), jnp.float32)
    w1pad = w1pad.at[:, 1:1 + K1, 1:1 + K1, :].set(w1r)
    w1pad = w1pad.reshape(CI1, RP * CO1).astype(jnp.bfloat16)    # (16, 26624)

    # ConvT2 weight (128,3,4,4) -> 16 (phase, tap) column blocks of 8 lanes
    # (channels padded 3 -> 8 so every tap slice is lane-aligned).
    blocks = []
    for ry, rx in PHASES:
        for dy, dx in TAPS:
            ky, kx = KOFF[ry][dy], KOFF[rx][dx]
            blk = jnp.zeros((CI2, CPAD), jnp.float32)
            blk = blk.at[:, :CO2].set(w2[:, :, ky, kx])
            blocks.append(blk)
    w2cat = jnp.concatenate(blocks, axis=1).astype(jnp.bfloat16)  # (128, 128)

    # Row-validity mask of the padded slab (1 inside the 10x10 interior).
    rows = np.arange(batch * RP)
    yp = (rows % RP) // WP
    xp = rows % WP
    valid = (yp >= 1) & (yp <= K1) & (xp >= 1) & (xp <= K1)
    mask = jnp.asarray(valid.astype(np.float32).reshape(batch * RP, 1))

    return (w1pad,
            gamma.reshape(1, CO1).astype(jnp.float32),
            beta.reshape(1, CO1).astype(jnp.float32),
            mask,
            w2cat)


@jax.jit
def generator_forward(x, prepared):
    w1pad, gamma2d, beta2d, mask, w2cat = prepared
    n = x.shape[0]
    x2d = x.reshape(n, CI1).astype(jnp.bfloat16)
    slab = _generator_call(x2d, w1pad, gamma2d, beta2d, mask, w2cat)   # (n, 160, 32)
    # Unpack (py, px, ry, rx, co) -> NCHW; compiles to one tiny XLA fusion.
    z = slab.reshape(n, K1, WP, 2, 2, CPAD)[:, :, :K1, :, :, :CO2]
    return jnp.transpose(z, (0, 5, 1, 3, 2, 4)).reshape(n, CO2, OH, OW)


# ----------------------------- pure-JAX reference ----------------------------
def generator_reference(x, params):
    w1, gamma, beta, w2 = params
    w1f = jnp.transpose(jnp.flip(w1, (2, 3)), (1, 0, 2, 3))
    h = lax.conv_general_dilated(x, w1f, (1, 1), [(K1 - 1, K1 - 1)] * 2,
                                 lhs_dilation=(1, 1),
                                 dimension_numbers=('NCHW', 'OIHW', 'NCHW'))
    mean = jnp.mean(h, axis=(0, 2, 3), keepdims=True)
    var = jnp.var(h, axis=(0, 2, 3), keepdims=True)
    h = (h - mean) * lax.rsqrt(var + EPS) * gamma.reshape(1, -1, 1, 1) \
        + beta.reshape(1, -1, 1, 1)
    h = jnp.maximum(h, 0.0)
    w2f = jnp.transpose(jnp.flip(w2, (2, 3)), (1, 0, 2, 3))
    y = lax.conv_general_dilated(h, w2f, (1, 1),
                                 [(K2 - 1 - P2, K2 - 1 - P2)] * 2,
                                 lhs_dilation=(S2, S2),
                                 dimension_numbers=('NCHW', 'OIHW', 'NCHW'))
    return 1.0 / (1.0 + jnp.exp(-y))


if __name__ == "__main__":
    key = jax.random.PRNGKey(0)
    kx, k1, k2, kg, kb = jax.random.split(key, 5)
    N = 2
    x = jax.random.normal(kx, (N, CI1, 1, 1), dtype=jnp.float32)
    # Weights are consumed in bf16 by the MXU; round once so kernel and the
    # f32 reference see identical parameter values.
    w1 = (0.05 * jax.random.normal(k1, (CI1, CO1, K1, K1), jnp.float32)
          ).astype(jnp.bfloat16).astype(jnp.float32)
    w2 = (0.05 * jax.random.normal(k2, (CI2, CO2, K2, K2), jnp.float32)
          ).astype(jnp.bfloat16).astype(jnp.float32)
    gamma = 1.0 + 0.1 * jax.random.normal(kg, (CO1,), jnp.float32)
    beta = 0.1 * jax.random.normal(kb, (CO1,), jnp.float32)

    prepared = prepare_params(w1, gamma, beta, w2, N)

    y = jax.block_until_ready(generator_forward(x, prepared))
    assert y.shape == (N, CO2, OH, OW), y.shape
    y_np = np.asarray(y, np.float32)
    assert np.isfinite(y_np).all()
    y_ref = np.asarray(jax.block_until_ready(
        generator_reference(x, (w1, gamma, beta, w2))), np.float32)
    err = float(np.max(np.abs(y_np - y_ref)))
    assert err < 1e-2, err
    print("KERNEL_OK")
</pallas_src>

<mosaic_0001>
module attributes {stable_mosaic.version = 11 : i64} {
  func.func @_generator_kernel(%arg0: i32, %arg1: memref<2x16xbf16, #tpu.memory_space<vmem>>, %arg2: memref<16x26624xbf16, #tpu.memory_space<vmem>>, %arg3: memref<1x128xf32, #tpu.memory_space<vmem>>, %arg4: memref<1x128xf32, #tpu.memory_space<vmem>>, %arg5: memref<416x1xf32, #tpu.memory_space<vmem>>, %arg6: memref<128x128xbf16, #tpu.memory_space<vmem>>, %arg7: memref<2x160x32xf32, #tpu.memory_space<vmem>>) attributes {dimension_semantics = [#tpu.dimension_semantics<arbitrary>], iteration_bounds = array<i64: 1>, scalar_prefetch = 0 : i64, scratch_operands = 0 : i64, tpu.core_type = #tpu.core_type<tc>, window_params = [{pipeline_mode = #tpu.pipeline_mode<synchronous>, transform_indices = @transform_0, window_bounds = array<i64: 2, 16>}, {pipeline_mode = #tpu.pipeline_mode<synchronous>, transform_indices = @transform_1, window_bounds = array<i64: 16, 26624>}, {pipeline_mode = #tpu.pipeline_mode<synchronous>, transform_indices = @transform_2, window_bounds = array<i64: 1, 128>}, {pipeline_mode = #tpu.pipeline_mode<synchronous>, transform_indices = @transform_3, window_bounds = array<i64: 1, 128>}, {pipeline_mode = #tpu.pipeline_mode<synchronous>, transform_indices = @transform_4, window_bounds = array<i64: 416, 1>}, {pipeline_mode = #tpu.pipeline_mode<synchronous>, transform_indices = @transform_5, window_bounds = array<i64: 128, 128>}, {pipeline_mode = #tpu.pipeline_mode<synchronous>, transform_indices = @transform_6, window_bounds = array<i64: 2, 160, 32>}]} {
    %c0 = arith.constant 0 : index
    %c0_0 = arith.constant 0 : index
    %0 = vector.load %arg1[%c0, %c0_0] : memref<2x16xbf16, #tpu.memory_space<vmem>>, vector<2x16xbf16>
    %c0_1 = arith.constant 0 : index
    %c0_2 = arith.constant 0 : index
    %1 = vector.load %arg2[%c0_1, %c0_2] : memref<16x26624xbf16, #tpu.memory_space<vmem>>, vector<16x26624xbf16>
    %cst = arith.constant dense<0.000000e+00> : vector<2x26624xf32>
    %2 = tpu.matmul %0, %1, %cst {dimension_numbers = #tpu.dot_dimension_numbers<[1], [0], [0], [1], [0, 0, 1, 1], [], []>} : vector<2x16xbf16>, vector<16x26624xbf16>, vector<2x26624xf32> -> vector<2x26624xf32>
    %3 = vector.shape_cast %2 : vector<2x26624xf32> to vector<416x128xf32>
    %c0_3 = arith.constant 0 : index
    %c0_4 = arith.constant 0 : index
    %4 = vector.load %arg5[%c0_3, %c0_4] : memref<416x1xf32, #tpu.memory_space<vmem>>, vector<416x1xf32>
    %cst_5 = arith.constant dense<0.000000e+00> : vector<128xf32>
    %5 = vector.multi_reduction <add>, %3, %cst_5 [0] : vector<416x128xf32> to vector<128xf32>
    %6 = vector.shape_cast %5 : vector<128xf32> to vector<1x128xf32>
    %cst_6 = arith.constant 5.000000e-03 : f32
    %7 = vector.broadcast %cst_6 : f32 to vector<1x128xf32>
    %8 = arith.mulf %6, %7 : vector<1x128xf32>
    %9 = vector.broadcast %8 : vector<1x128xf32> to vector<416x128xf32>
    %10 = arith.subf %3, %9 : vector<416x128xf32>
    %11 = arith.mulf %10, %10 : vector<416x128xf32>
    %12 = vector.broadcast %4 : vector<416x1xf32> to vector<416x128xf32>
    %13 = arith.mulf %11, %12 : vector<416x128xf32>
    %cst_7 = arith.constant dense<0.000000e+00> : vector<128xf32>
    %14 = vector.multi_reduction <add>, %13, %cst_7 [0] : vector<416x128xf32> to vector<128xf32>
    %15 = vector.shape_cast %14 : vector<128xf32> to vector<1x128xf32>
    %cst_8 = arith.constant 5.000000e-03 : f32
    %16 = vector.broadcast %cst_8 : f32 to vector<1x128xf32>
    %17 = arith.mulf %15, %16 : vector<1x128xf32>
    %cst_9 = arith.constant 9.99999974E-6 : f32
    %18 = vector.broadcast %cst_9 : f32 to vector<1x128xf32>
    %19 = arith.addf %17, %18 : vector<1x128xf32>
    %20 = math.rsqrt %19 : vector<1x128xf32>
    %c0_10 = arith.constant 0 : index
    %c0_11 = arith.constant 0 : index
    %21 = vector.load %arg3[%c0_10, %c0_11] : memref<1x128xf32, #tpu.memory_space<vmem>>, vector<1x128xf32>
    %22 = arith.mulf %20, %21 : vector<1x128xf32>
    %c0_12 = arith.constant 0 : index
    %c0_13 = arith.constant 0 : index
    %23 = vector.load %arg4[%c0_12, %c0_13] : memref<1x128xf32, #tpu.memory_space<vmem>>, vector<1x128xf32>
    %24 = arith.mulf %8, %22 : vector<1x128xf32>
    %25 = arith.subf %23, %24 : vector<1x128xf32>
    %26 = vector.broadcast %22 : vector<1x128xf32> to vector<416x128xf32>
    %27 = arith.mulf %3, %26 : vector<416x128xf32>
    %28 = vector.broadcast %25 : vector<1x128xf32> to vector<416x128xf32>
    %29 = arith.addf %27, %28 : vector<416x128xf32>
    %cst_14 = arith.constant 0.000000e+00 : f32
    %30 = vector.broadcast %cst_14 : f32 to vector<416x128xf32>
    %31 = arith.maximumf %29, %30 : vector<416x128xf32>
    %32 = vector.broadcast %4 : vector<416x1xf32> to vector<416x128xf32>
    %33 = arith.mulf %31, %32 : vector<416x128xf32>
    %34 = arith.truncf %33 : vector<416x128xf32> to vector<416x128xbf16>
    %c0_15 = arith.constant 0 : index
    %c0_16 = arith.constant 0 : index
    %35 = vector.load %arg6[%c0_15, %c0_16] : memref<128x128xbf16, #tpu.memory_space<vmem>>, vector<128x128xbf16>
    %cst_17 = arith.constant dense<0.000000e+00> : vector<416x128xf32>
    %36 = tpu.matmul %34, %35, %cst_17 {dimension_numbers = #tpu.dot_dimension_numbers<[1], [0], [0], [1], [0, 0, 1, 1], [], []>} : vector<416x128xbf16>, vector<128x128xbf16>, vector<416x128xf32> -> vector<416x128xf32>
    %37 = vector.shape_cast %36 : vector<416x128xf32> to vector<2x208x128xf32>
    %38 = vector.extract_strided_slice %37 {offsets = [0, 0, 0], sizes = [2, 160, 8], strides = [1, 1, 1]} : vector<2x208x128xf32> to vector<2x160x8xf32>
    %39 = vector.extract_strided_slice %37 {offsets = [0, 1, 8], sizes = [2, 160, 8], strides = [1, 1, 1]} : vector<2x208x128xf32> to vector<2x160x8xf32>
    %40 = arith.addf %38, %39 : vector<2x160x8xf32>
    %41 = vector.extract_strided_slice %37 {offsets = [0, 16, 16], sizes = [2, 160, 8], strides = [1, 1, 1]} : vector<2x208x128xf32> to vector<2x160x8xf32>
    %42 = arith.addf %40, %41 : vector<2x160x8xf32>
    %43 = vector.extract_strided_slice %37 {offsets = [0, 17, 24], sizes = [2, 160, 8], strides = [1, 1, 1]} : vector<2x208x128xf32> to vector<2x160x8xf32>
    %44 = arith.addf %42, %43 : vector<2x160x8xf32>
    %cst_18 = arith.constant 0.000000e+00 : f32
    %45 = vector.broadcast %cst_18 : f32 to vector<2x160x8xf32>
    %46 = arith.subf %45, %44 : vector<2x160x8xf32>
    %47 = math.exp %46 : vector<2x160x8xf32>
    %cst_19 = arith.constant 1.000000e+00 : f32
    %48 = vector.broadcast %cst_19 : f32 to vector<2x160x8xf32>
    %49 = arith.addf %48, %47 : vector<2x160x8xf32>
    %cst_20 = arith.constant 1.000000e+00 : f32
    %50 = vector.broadcast %cst_20 : f32 to vector<2x160x8xf32>
    %51 = arith.divf %50, %49 : vector<2x160x8xf32>
    %c0_21 = arith.constant 0 : index
    %c0_22 = arith.constant 0 : index
    %c0_23 = arith.constant 0 : index
    %52 = vector.load %arg7[%c0_21, %c0_22, %c0_23] : memref<2x160x32xf32, #tpu.memory_space<vmem>>, vector<2x160x8xf32>
    tpu.vector_store %arg7[%c0_21, %c0_22, %c0_23], %51 {strides = array<i32>} : memref<2x160x32xf32, #tpu.memory_space<vmem>>, vector<2x160x8xf32>,
    %53 = vector.extract_strided_slice %37 {offsets = [0, 1, 32], sizes = [2, 160, 8], strides = [1, 1, 1]} : vector<2x208x128xf32> to vector<2x160x8xf32>
    %54 = vector.extract_strided_slice %37 {offsets = [0, 2, 40], sizes = [2, 160, 8], strides = [1, 1, 1]} : vector<2x208x128xf32> to vector<2x160x8xf32>
    %55 = arith.addf %53, %54 : vector<2x160x8xf32>
    %56 = vector.extract_strided_slice %37 {offsets = [0, 17, 48], sizes = [2, 160, 8], strides = [1, 1, 1]} : vector<2x208x128xf32> to vector<2x160x8xf32>
    %57 = arith.addf %55, %56 : vector<2x160x8xf32>
    %58 = vector.extract_strided_slice %37 {offsets = [0, 18, 56], sizes = [2, 160, 8], strides = [1, 1, 1]} : vector<2x208x128xf32> to vector<2x160x8xf32>
    %59 = arith.addf %57, %58 : vector<2x160x8xf32>
    %cst_24 = arith.constant 0.000000e+00 : f32
    %60 = vector.broadcast %cst_24 : f32 to vector<2x160x8xf32>
    %61 = arith.subf %60, %59 : vector<2x160x8xf32>
    %62 = math.exp %61 : vector<2x160x8xf32>
    %cst_25 = arith.constant 1.000000e+00 : f32
    %63 = vector.broadcast %cst_25 : f32 to vector<2x160x8xf32>
    %64 = arith.addf %63, %62 : vector<2x160x8xf32>
    %cst_26 = arith.constant 1.000000e+00 : f32
    %65 = vector.broadcast %cst_26 : f32 to vector<2x160x8xf32>
    %66 = arith.divf %65, %64 : vector<2x160x8xf32>
    %c0_27 = arith.constant 0 : index
    %c0_28 = arith.constant 0 : index
    %c8 = arith.constant 8 : index
    %67 = vector.load %arg7[%c0_27, %c0_28, %c8] : memref<2x160x32xf32, #tpu.memory_space<vmem>>, vector<2x160x8xf32>
    tpu.vector_store %arg7[%c0_27, %c0_28, %c8], %66 {strides = array<i32>} : memref<2x160x32xf32, #tpu.memory_space<vmem>>, vector<2x160x8xf32>,
    %68 = vector.extract_strided_slice %37 {offsets = [0, 16, 64], sizes = [2, 160, 8], strides = [1, 1, 1]} : vector<2x208x128xf32> to vector<2x160x8xf32>
    %69 = vector.extract_strided_slice %37 {offsets = [0, 17, 72], sizes = [2, 160, 8], strides = [1, 1, 1]} : vector<2x208x128xf32> to vector<2x160x8xf32>
    %70 = arith.addf %68, %69 : vector<2x160x8xf32>
    %71 = vector.extract_strided_slice %37 {offsets = [0, 32, 80], sizes = [2, 160, 8], strides = [1, 1, 1]} : vector<2x208x128xf32> to vector<2x160x8xf32>
    %72 = arith.addf %70, %71 : vector<2x160x8xf32>
    %73 = vector.extract_strided_slice %37 {offsets = [0, 33, 88], sizes = [2, 160, 8], strides = [1, 1, 1]} : vector<2x208x128xf32> to vector<2x160x8xf32>
    %74 = arith.addf %72, %73 : vector<2x160x8xf32>
    %cst_29 = arith.constant 0.000000e+00 : f32
    %75 = vector.broadcast %cst_29 : f32 to vector<2x160x8xf32>
    %76 = arith.subf %75, %74 : vector<2x160x8xf32>
    %77 = math.exp %76 : vector<2x160x8xf32>
    %cst_30 = arith.constant 1.000000e+00 : f32
    %78 = vector.broadcast %cst_30 : f32 to vector<2x160x8xf32>
    %79 = arith.addf %78, %77 : vector<2x160x8xf32>
    %cst_31 = arith.constant 1.000000e+00 : f32
    %80 = vector.broadcast %cst_31 : f32 to vector<2x160x8xf32>
    %81 = arith.divf %80, %79 : vector<2x160x8xf32>
    %c0_32 = arith.constant 0 : index
    %c0_33 = arith.constant 0 : index
    %c16 = arith.constant 16 : index
    %82 = vector.load %arg7[%c0_32, %c0_33, %c16] : memref<2x160x32xf32, #tpu.memory_space<vmem>>, vector<2x160x8xf32>
    tpu.vector_store %arg7[%c0_32, %c0_33, %c16], %81 {strides = array<i32>} : memref<2x160x32xf32, #tpu.memory_space<vmem>>, vector<2x160x8xf32>,
    %83 = vector.extract_strided_slice %37 {offsets = [0, 17, 96], sizes = [2, 160, 8], strides = [1, 1, 1]} : vector<2x208x128xf32> to vector<2x160x8xf32>
    %84 = vector.extract_strided_slice %37 {offsets = [0, 18, 104], sizes = [2, 160, 8], strides = [1, 1, 1]} : vector<2x208x128xf32> to vector<2x160x8xf32>
    %85 = arith.addf %83, %84 : vector<2x160x8xf32>
    %86 = vector.extract_strided_slice %37 {offsets = [0, 33, 112], sizes = [2, 160, 8], strides = [1, 1, 1]} : vector<2x208x128xf32> to vector<2x160x8xf32>
    %87 = arith.addf %85, %86 : vector<2x160x8xf32>
    %88 = vector.extract_strided_slice %37 {offsets = [0, 34, 120], sizes = [2, 160, 8], strides = [1, 1, 1]} : vector<2x208x128xf32> to vector<2x160x8xf32>
    %89 = arith.addf %87, %88 : vector<2x160x8xf32>
    %cst_34 = arith.constant 0.000000e+00 : f32
    %90 = vector.broadcast %cst_34 : f32 to vector<2x160x8xf32>
    %91 = arith.subf %90, %89 : vector<2x160x8xf32>
    %92 = math.exp %91 : vector<2x160x8xf32>
    %cst_35 = arith.constant 1.000000e+00 : f32
    %93 = vector.broadcast %cst_35 : f32 to vector<2x160x8xf32>
    %94 = arith.addf %93, %92 : vector<2x160x8xf32>
    %cst_36 = arith.constant 1.000000e+00 : f32
    %95 = vector.broadcast %cst_36 : f32 to vector<2x160x8xf32>
    %96 = arith.divf %95, %94 : vector<2x160x8xf32>
    %c0_37 = arith.constant 0 : index
    %c0_38 = arith.constant 0 : index
    %c24 = arith.constant 24 : index
    %97 = vector.load %arg7[%c0_37, %c0_38, %c24] : memref<2x160x32xf32, #tpu.memory_space<vmem>>, vector<2x160x8xf32>
    tpu.vector_store %arg7[%c0_37, %c0_38, %c24], %96 {strides = array<i32>} : memref<2x160x32xf32, #tpu.memory_space<vmem>>, vector<2x160x8xf32>,
    return
  }
  func.func @transform_0(%arg0: i32) -> (i32, i32) {
    %c0_i32 = arith.constant 0 : i32
    %c0_i32_0 = arith.constant 0 : i32
    %c0_i32_1 = arith.constant 0 : i32
    return %c0_i32, %c0_i32_0 : i32, i32
  }
  func.func @transform_1(%arg0: i32) -> (i32, i32) {
    %c0_i32 = arith.constant 0 : i32
    %c0_i32_0 = arith.constant 0 : i32
    %c0_i32_1 = arith.constant 0 : i32
    return %c0_i32, %c0_i32_0 : i32, i32
  }
  func.func @transform_2(%arg0: i32) -> (i32, i32) {
    %c0_i32 = arith.constant 0 : i32
    %c0_i32_0 = arith.constant 0 : i32
    %c0_i32_1 = arith.constant 0 : i32
    return %c0_i32, %c0_i32_0 : i32, i32
  }
  func.func @transform_3(%arg0: i32) -> (i32, i32) {
    %c0_i32 = arith.constant 0 : i32
    %c0_i32_0 = arith.constant 0 : i32
    %c0_i32_1 = arith.constant 0 : i32
    return %c0_i32, %c0_i32_0 : i32, i32
  }
  func.func @transform_4(%arg0: i32) -> (i32, i32) {
    %c0_i32 = arith.constant 0 : i32
    %c0_i32_0 = arith.constant 0 : i32
    %c0_i32_1 = arith.constant 0 : i32
    return %c0_i32, %c0_i32_0 : i32, i32
  }
  func.func @transform_5(%arg0: i32) -> (i32, i32) {
    %c0_i32 = arith.constant 0 : i32
    %c0_i32_0 = arith.constant 0 : i32
    %c0_i32_1 = arith.constant 0 : i32
    return %c0_i32, %c0_i32_0 : i32, i32
  }
  func.func @transform_6(%arg0: i32) -> (i32, i32, i32) {
    %c0_i32 = arith.constant 0 : i32
    %c0_i32_0 = arith.constant 0 : i32
    %c0_i32_1 = arith.constant 0 : i32
    %c0_i32_2 = arith.constant 0 : i32
    return %c0_i32, %c0_i32_0, %c0_i32_1 : i32, i32, i32
  }
}

</mosaic_0001>

<llo_original>
// kernel: generator_forward.1
$region0: #{generator_forward.1}
  #allocation0 [shape = 'u32[]', space=smem, size = 0x4, offset = 0x4, fixed_abs, tag = 'smem constant byte address 0x4 - core index']
  #allocation1 [shape = 'u32[4096,128]{1,0:T(1,128)}', space=vmem, size = 0x200000, scoped, tag = 'internal scratch']
  %s0 = inlined_call_operand.vmem [shape: bf16[2,16], index: 0, kind: input, shape index: {}]
  %s1 = inlined_call_operand.hbm [shape: bf16[16,26624], index: 1, kind: input, shape index: {}]
  %s2 = inlined_call_operand.vmem [shape: f32[1,128], index: 2, kind: input, shape index: {}]
  %s3 = inlined_call_operand.vmem [shape: f32[1,128], index: 3, kind: input, shape index: {}]
  %s4 = inlined_call_operand.vmem [shape: f32[416,1], index: 4, kind: input, shape index: {}]
  %s5 = inlined_call_operand.vmem [shape: bf16[128,128], index: 5, kind: input, shape index: {}]
  %s6 = inlined_call_operand.vmem [shape: f32[2,160,32], index: 6, kind: output, shape index: {}]
  %s7 = sld [smem:[#allocation0]]
  $region38: #{generator_forward.1} parent=0
    _
  %s9 = ssub.s32 1, %s7
  %s10 = scalar_select 0, %s9, %s7
  $region1: #{generator_forward.1} parent=0
    #allocation2 [shape = 'u8[851968]{0}', space=vmem, size = 0xd0000, scoped, tag = 'input window, operand 1, single buffered']
    #allocation3 [shape = 's32[1]{0}', space=sflag, size = 0x4, scoped, tag = 'scoped memory for generator_forward.1']
    %11 = vsyncpa [#allocation3], 0
    // Predicated region
    $region2: #{generator_forward.1} parent=1 // pred_check
      _
    $region3: #{generator_forward.1} parent=1 // pred_check_branch
      %13 = sbr.rel (0) target = $region5
    $region4: #{generator_forward.1} parent=1 // pred_region
      _
    $region5: #{generator_forward.1} parent=1 // pred_fallthru
      _
    // Predicated region
    $region6: #{generator_forward.1} parent=1 // pred_check
      _
    $region7: #{generator_forward.1} parent=1 // pred_check_branch
      %15 = sbr.rel (0) target = $region9
    $region8: #{generator_forward.1} parent=1 // pred_region
      %s17 = ssub.s32 26624, 26624
      %18 = vsyncadd [#allocation3], %s17
      %s19 = sshll.u32 [#allocation2], 4
      %s20 = int_to_ptr.vmem [resolvable:$true] %s19
      %25 = dma.hbm_to_vmem [thread:$0]  %s1, 26624, %s20, [#allocation3], 13312, 13312, 832
    $region9: #{generator_forward.1} parent=1 // pred_fallthru
      _
    // Predicated region
    $region10: #{generator_forward.1} parent=1 // pred_check
      _
    $region11: #{generator_forward.1} parent=1 // pred_check_branch
      %27 = sbr.rel (0) target = $region13
    $region12: #{generator_forward.1} parent=1 // pred_region
      _
    $region13: #{generator_forward.1} parent=1 // pred_fallthru
      _
    // Predicated region
    $region14: #{generator_forward.1} parent=1 // pred_check
      _
    $region15: #{generator_forward.1} parent=1 // pred_check_branch
      %29 = sbr.rel (0) target = $region17
    $region16: #{generator_forward.1} parent=1 // pred_region
      _
    $region17: #{generator_forward.1} parent=1 // pred_fallthru
      _
    // Predicated region
    $region18: #{generator_forward.1} parent=1 // pred_check
      _
    $region19: #{generator_forward.1} parent=1 // pred_check_branch
      %31 = sbr.rel (0) target = $region21
    $region20: #{generator_forward.1} parent=1 // pred_region
      _
    $region21: #{generator_forward.1} parent=1 // pred_fallthru
      _
    // Predicated region
    $region22: #{generator_forward.1} parent=1 // pred_check
      _
    $region23: #{generator_forward.1} parent=1 // pred_check_branch
      %33 = sbr.rel (0) target = $region25
    $region24: #{generator_forward.1} parent=1 // pred_region
      _
    $region25: #{generator_forward.1} parent=1 // pred_fallthru
      _
    // Predicated region
    $region26: #{generator_forward.1} parent=1 // pred_check
      _
    $region27: #{generator_forward.1} parent=1 // pred_check_branch
      %35 = sbr.rel (0) target = $region29
    $region28: #{generator_forward.1} parent=1 // pred_region
      %36 = dma.done [#allocation3], 26624
    $region29: #{generator_forward.1} parent=1 // pred_fallthru
      _
    %v38 = vld [vmem:[%s0] sm:$0x1]
    %v39 = vld [vmem:[#allocation2] sm:$0xff]
    %v40 = vld [vmem:[#allocation2 + $0x8] sm:$0xff]
    %v41 = vld [vmem:[#allocation2 + $0x10] sm:$0xff]
    %v42 = vld [vmem:[#allocation2 + $0x18] sm:$0xff]
    %v43 = vld [vmem:[#allocation2 + $0x20] sm:$0xff]
    %v44 = vld [vmem:[#allocation2 + $0x28] sm:$0xff]
    %v45 = vld [vmem:[#allocation2 + $0x30] sm:$0xff]
    %v46 = vld [vmem:[#allocation2 + $0x38] sm:$0xff]
    %v47 = vld [vmem:[#allocation2 + $0x40] sm:$0xff]
    %v48 = vld [vmem:[#allocation2 + $0x48] sm:$0xff]
    %v49 = vld [vmem:[#allocation2 + $0x50] sm:$0xff]
    %v50 = vld [vmem:[#allocation2 + $0x58] sm:$0xff]
    %v51 = vld [vmem:[#allocation2 + $0x60] sm:$0xff]
    %v52 = vld [vmem:[#allocation2 + $0x68] sm:$0xff]
    %v53 = vld [vmem:[#allocation2 + $0x70] sm:$0xff]
    %v54 = vld [vmem:[#allocation2 + $0x78] sm:$0xff]
    %v55 = vld [vmem:[#allocation2 + $0x80] sm:$0xff]
    %v56 = vld [vmem:[#allocation2 + $0x88] sm:$0xff]
    %v57 = vld [vmem:[#allocation2 + $0x90] sm:$0xff]
    %v58 = vld [vmem:[#allocation2 + $0x98] sm:$0xff]
    %v59 = vld [vmem:[#allocation2 + $0xa0] sm:$0xff]
    %v60 = vld [vmem:[#allocation2 + $0xa8] sm:$0xff]
    %v61 = vld [vmem:[#allocation2 + $0xb0] sm:$0xff]
    %v62 = vld [vmem:[#allocation2 + $0xb8] sm:$0xff]
    %v63 = vld [vmem:[#allocation2 + $0xc0] sm:$0xff]
    %v64 = vld [vmem:[#allocation2 + $0xc8] sm:$0xff]
    %v65 = vld [vmem:[#allocation2 + $0xd0] sm:$0xff]
    %v66 = vld [vmem:[#allocation2 + $0xd8] sm:$0xff]
    %v67 = vld [vmem:[#allocation2 + $0xe0] sm:$0xff]
    %v68 = vld [vmem:[#allocation2 + $0xe8] sm:$0xff]
    %v69 = vld [vmem:[#allocation2 + $0xf0] sm:$0xff]
    %v70 = vld [vmem:[#allocation2 + $0xf8] sm:$0xff]
    %v71 = vld [vmem:[#allocation2 + $0x100] sm:$0xff]
    %v72 = vld [vmem:[#allocation2 + $0x108] sm:$0xff]
    %v73 = vld [vmem:[#allocation2 + $0x110] sm:$0xff]
    %v74 = vld [vmem:[#allocation2 + $0x118] sm:$0xff]
    %v75 = vld [vmem:[#allocation2 + $0x120] sm:$0xff]
    %v76 = vld [vmem:[#allocation2 + $0x128] sm:$0xff]
    %v77 = vld [vmem:[#allocation2 + $0x130] sm:$0xff]
    %v78 = vld [vmem:[#allocation2 + $0x138] sm:$0xff]
    %v79 = vld [vmem:[#allocation2 + $0x140] sm:$0xff]
    %v80 = vld [vmem:[#allocation2 + $0x148] sm:$0xff]
    %v81 = vld [vmem:[#allocation2 + $0x150] sm:$0xff]
    %v82 = vld [vmem:[#allocation2 + $0x158] sm:$0xff]
    %v83 = vld [vmem:[#allocation2 + $0x160] sm:$0xff]
    %v84 = vld [vmem:[#allocation2 + $0x168] sm:$0xff]
    %v85 = vld [vmem:[#allocation2 + $0x170] sm:$0xff]
    %v86 = vld [vmem:[#allocation2 + $0x178] sm:$0xff]
    %v87 = vld [vmem:[#allocation2 + $0x180] sm:$0xff]
    %v88 = vld [vmem:[#allocation2 + $0x188] sm:$0xff]
    %v89 = vld [vmem:[#allocation2 + $0x190] sm:$0xff]
    %v90 = vld [vmem:[#allocation2 + $0x198] sm:$0xff]
    %v91 = vld [vmem:[#allocation2 + $0x1a0] sm:$0xff]
    %v92 = vld [vmem:[#allocation2 + $0x1a8] sm:$0xff]
    %v93 = vld [vmem:[#allocation2 + $0x1b0] sm:$0xff]
    %v94 = vld [vmem:[#allocation2 + $0x1b8] sm:$0xff]
    %v95 = vld [vmem:[#allocation2 + $0x1c0] sm:$0xff]
    %v96 = vld [vmem:[#allocation2 + $0x1c8] sm:$0xff]
    %v97 = vld [vmem:[#allocation2 + $0x1d0] sm:$0xff]
    %v98 = vld [vmem:[#allocation2 + $0x1d8] sm:$0xff]
    %v99 = vld [vmem:[#allocation2 + $0x1e0] sm:$0xff]
    %v100 = vld [vmem:[#allocation2 + $0x1e8] sm:$0xff]
    %v101 = vld [vmem:[#allocation2 + $0x1f0] sm:$0xff]
    %v102 = vld [vmem:[#allocation2 + $0x1f8] sm:$0xff]
    %v103 = vld [vmem:[#allocation2 + $0x200] sm:$0xff]
    %v104 = vld [vmem:[#allocation2 + $0x208] sm:$0xff]
    %v105 = vld [vmem:[#allocation2 + $0x210] sm:$0xff]
    %v106 = vld [vmem:[#allocation2 + $0x218] sm:$0xff]
    %v107 = vld [vmem:[#allocation2 + $0x220] sm:$0xff]
    %v108 = vld [vmem:[#allocation2 + $0x228] sm:$0xff]
    %v109 = vld [vmem:[#allocation2 + $0x230] sm:$0xff]
    %v110 = vld [vmem:[#allocation2 + $0x238] sm:$0xff]
    %v111 = vld [vmem:[#allocation2 + $0x240] sm:$0xff]
    %v112 = vld [vmem:[#allocation2 + $0x248] sm:$0xff]
    %v113 = vld [vmem:[#allocation2 + $0x250] sm:$0xff]
    %v114 = vld [vmem:[#allocation2 + $0x258] sm:$0xff]
    %v115 = vld [vmem:[#allocation2 + $0x260] sm:$0xff]
    %v116 = vld [vmem:[#allocation2 + $0x268] sm:$0xff]
    %v117 = vld [vmem:[#allocation2 + $0x270] sm:$0xff]
    %v118 = vld [vmem:[#allocation2 + $0x278] sm:$0xff]
    %v119 = vld [vmem:[#allocation2 + $0x280] sm:$0xff]
    %v120 = vld [vmem:[#allocation2 + $0x288] sm:$0xff]
    %v121 = vld [vmem:[#allocation2 + $0x290] sm:$0xff]
    %v122 = vld [vmem:[#allocation2 + $0x298] sm:$0xff]
    %v123 = vld [vmem:[#allocation2 + $0x2a0] sm:$0xff]
    %v124 = vld [vmem:[#allocation2 + $0x2a8] sm:$0xff]
    %v125 = vld [vmem:[#allocation2 + $0x2b0] sm:$0xff]
    %v126 = vld [vmem:[#allocation2 + $0x2b8] sm:$0xff]
    %v127 = vld [vmem:[#allocation2 + $0x2c0] sm:$0xff]
    %v128 = vld [vmem:[#allocation2 + $0x2c8] sm:$0xff]
    %v129 = vld [vmem:[#allocation2 + $0x2d0] sm:$0xff]
    %v130 = vld [vmem:[#allocation2 + $0x2d8] sm:$0xff]
    %v131 = vld [vmem:[#allocation2 + $0x2e0] sm:$0xff]
    %v132 = vld [vmem:[#allocation2 + $0x2e8] sm:$0xff]
    %v133 = vld [vmem:[#allocation2 + $0x2f0] sm:$0xff]
    %v134 = vld [vmem:[#allocation2 + $0x2f8] sm:$0xff]
    %v135 = vld [vmem:[#allocation2 + $0x300] sm:$0xff]
    %v136 = vld [vmem:[#allocation2 + $0x308] sm:$0xff]
    %v137 = vld [vmem:[#allocation2 + $0x310] sm:$0xff]
    %v138 = vld [vmem:[#allocation2 + $0x318] sm:$0xff]
    %v139 = vld [vmem:[#allocation2 + $0x320] sm:$0xff]
    %v140 = vld [vmem:[#allocation2 + $0x328] sm:$0xff]
    %v141 = vld [vmem:[#allocation2 + $0x330] sm:$0xff]
    %v142 = vld [vmem:[#allocation2 + $0x338] sm:$0xff]
    %v143 = vld [vmem:[#allocation2 + $0x340] sm:$0xff]
    %v144 = vld [vmem:[#allocation2 + $0x348] sm:$0xff]
    %v145 = vld [vmem:[#allocation2 + $0x350] sm:$0xff]
    %v146 = vld [vmem:[#allocation2 + $0x358] sm:$0xff]
    %v147 = vld [vmem:[#allocation2 + $0x360] sm:$0xff]
    %v148 = vld [vmem:[#allocation2 + $0x368] sm:$0xff]
    %v149 = vld [vmem:[#allocation2 + $0x370] sm:$0xff]
    %v150 = vld [vmem:[#allocation2 + $0x378] sm:$0xff]
    %v151 = vld [vmem:[#allocation2 + $0x380] sm:$0xff]
    %v152 = vld [vmem:[#allocation2 + $0x388] sm:$0xff]
    %v153 = vld [vmem:[#allocation2 + $0x390] sm:$0xff]
    %v154 = vld [vmem:[#allocation2 + $0x398] sm:$0xff]
    %v155 = vld [vmem:[#allocation2 + $0x3a0] sm:$0xff]
    %v156 = vld [vmem:[#allocation2 + $0x3a8] sm:$0xff]
    %v157 = vld [vmem:[#allocation2 + $0x3b0] sm:$0xff]
    %v158 = vld [vmem:[#allocation2 + $0x3b8] sm:$0xff]
    %v159 = vld [vmem:[#allocation2 + $0x3c0] sm:$0xff]
    %v160 = vld [vmem:[#allocation2 + $0x3c8] sm:$0xff]
    %v161 = vld [vmem:[#allocation2 + $0x3d0] sm:$0xff]
    %v162 = vld [vmem:[#allocation2 + $0x3d8] sm:$0xff]
    %v163 = vld [vmem:[#allocation2 + $0x3e0] sm:$0xff]
    %v164 = vld [vmem:[#allocation2 + $0x3e8] sm:$0xff]
    %v165 = vld [vmem:[#allocation2 + $0x3f0] sm:$0xff]
    %v166 = vld [vmem:[#allocation2 + $0x3f8] sm:$0xff]
    %v167 = vld [vmem:[#allocation2 + $0x400] sm:$0xff]
    %v168 = vld [vmem:[#allocation2 + $0x408] sm:$0xff]
    %v169 = vld [vmem:[#allocation2 + $0x410] sm:$0xff]
    %v170 = vld [vmem:[#allocation2 + $0x418] sm:$0xff]
    %v171 = vld [vmem:[#allocation2 + $0x420] sm:$0xff]
    %v172 = vld [vmem:[#allocation2 + $0x428] sm:$0xff]
    %v173 = vld [vmem:[#allocation2 + $0x430] sm:$0xff]
    %v174 = vld [vmem:[#allocation2 + $0x438] sm:$0xff]
    %v175 = vld [vmem:[#allocation2 + $0x440] sm:$0xff]
    %v176 = vld [vmem:[#allocation2 + $0x448] sm:$0xff]
    %v177 = vld [vmem:[#allocation2 + $0x450] sm:$0xff]
    %v178 = vld [vmem:[#allocation2 + $0x458] sm:$0xff]
    %v179 = vld [vmem:[#allocation2 + $0x460] sm:$0xff]
    %v180 = vld [vmem:[#allocation2 + $0x468] sm:$0xff]
    %v181 = vld [vmem:[#allocation2 + $0x470] sm:$0xff]
    %v182 = vld [vmem:[#allocation2 + $0x478] sm:$0xff]
    %v183 = vld [vmem:[#allocation2 + $0x480] sm:$0xff]
    %v184 = vld [vmem:[#allocation2 + $0x488] sm:$0xff]
    %v185 = vld [vmem:[#allocation2 + $0x490] sm:$0xff]
    %v186 = vld [vmem:[#allocation2 + $0x498] sm:$0xff]
    %v187 = vld [vmem:[#allocation2 + $0x4a0] sm:$0xff]
    %v188 = vld [vmem:[#allocation2 + $0x4a8] sm:$0xff]
    %v189 = vld [vmem:[#allocation2 + $0x4b0] sm:$0xff]
    %v190 = vld [vmem:[#allocation2 + $0x4b8] sm:$0xff]
    %v191 = vld [vmem:[#allocation2 + $0x4c0] sm:$0xff]
    %v192 = vld [vmem:[#allocation2 + $0x4c8] sm:$0xff]
    %v193 = vld [vmem:[#allocation2 + $0x4d0] sm:$0xff]
    %v194 = vld [vmem:[#allocation2 + $0x4d8] sm:$0xff]
    %v195 = vld [vmem:[#allocation2 + $0x4e0] sm:$0xff]
    %v196 = vld [vmem:[#allocation2 + $0x4e8] sm:$0xff]
    %v197 = vld [vmem:[#allocation2 + $0x4f0] sm:$0xff]
    %v198 = vld [vmem:[#allocation2 + $0x4f8] sm:$0xff]
    %v199 = vld [vmem:[#allocation2 + $0x500] sm:$0xff]
    %v200 = vld [vmem:[#allocation2 + $0x508] sm:$0xff]
    %v201 = vld [vmem:[#allocation2 + $0x510] sm:$0xff]
    %v202 = vld [vmem:[#allocation2 + $0x518] sm:$0xff]
    %v203 = vld [vmem:[#allocation2 + $0x520] sm:$0xff]
    %v204 = vld [vmem:[#allocation2 + $0x528] sm:$0xff]
    %v205 = vld [vmem:[#allocation2 + $0x530] sm:$0xff]
    %v206 = vld [vmem:[#allocation2 + $0x538] sm:$0xff]
    %v207 = vld [vmem:[#allocation2 + $0x540] sm:$0xff]
    %v208 = vld [vmem:[#allocation2 + $0x548] sm:$0xff]
    %v209 = vld [vmem:[#allocation2 + $0x550] sm:$0xff]
    %v210 = vld [vmem:[#allocation2 + $0x558] sm:$0xff]
    %v211 = vld [vmem:[#allocation2 + $0x560] sm:$0xff]
    %v212 = vld [vmem:[#allocation2 + $0x568] sm:$0xff]
    %v213 = vld [vmem:[#allocation2 + $0x570] sm:$0xff]
    %v214 = vld [vmem:[#allocation2 + $0x578] sm:$0xff]
    %v215 = vld [vmem:[#allocation2 + $0x580] sm:$0xff]
    %v216 = vld [vmem:[#allocation2 + $0x588] sm:$0xff]
    %v217 = vld [vmem:[#allocation2 + $0x590] sm:$0xff]
    %v218 = vld [vmem:[#allocation2 + $0x598] sm:$0xff]
    %v219 = vld [vmem:[#allocation2 + $0x5a0] sm:$0xff]
    %v220 = vld [vmem:[#allocation2 + $0x5a8] sm:$0xff]
    %v221 = vld [vmem:[#allocation2 + $0x5b0] sm:$0xff]
    %v222 = vld [vmem:[#allocation2 + $0x5b8] sm:$0xff]
    %v223 = vld [vmem:[#allocation2 + $0x5c0] sm:$0xff]
    %v224 = vld [vmem:[#allocation2 + $0x5c8] sm:$0xff]
    %v225 = vld [vmem:[#allocation2 + $0x5d0] sm:$0xff]
    %v226 = vld [vmem:[#allocation2 + $0x5d8] sm:$0xff]
    %v227 = vld [vmem:[#allocation2 + $0x5e0] sm:$0xff]
    %v228 = vld [vmem:[#allocation2 + $0x5e8] sm:$0xff]
    %v229 = vld [vmem:[#allocation2 + $0x5f0] sm:$0xff]
    %v230 = vld [vmem:[#allocation2 + $0x5f8] sm:$0xff]
    %v231 = vld [vmem:[#allocation2 + $0x600] sm:$0xff]
    %v232 = vld [vmem:[#allocation2 + $0x608] sm:$0xff]
    %v233 = vld [vmem:[#allocation2 + $0x610] sm:$0xff]
    %v234 = vld [vmem:[#allocation2 + $0x618] sm:$0xff]
    %v235 = vld [vmem:[#allocation2 + $0x620] sm:$0xff]
    %v236 = vld [vmem:[#allocation2 + $0x628] sm:$0xff]
    %v237 = vld [vmem:[#allocation2 + $0x630] sm:$0xff]
    %v238 = vld [vmem:[#allocation2 + $0x638] sm:$0xff]
    %v239 = vld [vmem:[#allocation2 + $0x640] sm:$0xff]
    %v240 = vld [vmem:[#allocation2 + $0x648] sm:$0xff]
    %v241 = vld [vmem:[#allocation2 + $0x650] sm:$0xff]
    %v242 = vld [vmem:[#allocation2 + $0x658] sm:$0xff]
    %v243 = vld [vmem:[#allocation2 + $0x660] sm:$0xff]
    %v244 = vld [vmem:[#allocation2 + $0x668] sm:$0xff]
    %v245 = vld [vmem:[#allocation2 + $0x670] sm:$0xff]
    %v246 = vld [vmem:[#allocation2 + $0x678] sm:$0xff]
    %v455 = vunpack.c.l.b16 %v39
    %v456 = vunpack.c.h.b16 %v39
    %v457 = vunpack.c.l.b16 %v40
    %v458 = vunpack.c.h.b16 %v40
    %v459 = vunpack.c.l.b16 %v41
    %v460 = vunpack.c.h.b16 %v41
    %v461 = vunpack.c.l.b16 %v42
    %v462 = vunpack.c.h.b16 %v42
    %v463 = vunpack.c.l.b16 %v43
    %v464 = vunpack.c.h.b16 %v43
    %v465 = vunpack.c.l.b16 %v44
    %v466 = vunpack.c.h.b16 %v44
    %v467 = vunpack.c.l.b16 %v45
    %v468 = vunpack.c.h.b16 %v45
    %v469 = vunpack.c.l.b16 %v46
    %v470 = vunpack.c.h.b16 %v46
    %v471 = vunpack.c.l.b16 %v47
    %v472 = vunpack.c.h.b16 %v47
    %v473 = vunpack.c.l.b16 %v48
    %v474 = vunpack.c.h.b16 %v48
    %v475 = vunpack.c.l.b16 %v49
    %v476 = vunpack.c.h.b16 %v49
    %v477 = vunpack.c.l.b16 %v50
    %v478 = vunpack.c.h.b16 %v50
    %v479 = vunpack.c.l.b16 %v51
    %v480 = vunpack.c.h.b16 %v51
    %v481 = vunpack.c.l.b16 %v52
    %v482 = vunpack.c.h.b16 %v52
    %v483 = vunpack.c.l.b16 %v53
    %v484 = vunpack.c.h.b16 %v53
    %v485 = vunpack.c.l.b16 %v54
    %v486 = vunpack.c.h.b16 %v54
    %v487 = vunpack.c.l.b16 %v55
    %v488 = vunpack.c.h.b16 %v55
    %v489 = vunpack.c.l.b16 %v56
    %v490 = vunpack.c.h.b16 %v56
    %v491 = vunpack.c.l.b16 %v57
    %v492 = vunpack.c.h.b16 %v57
    %v493 = vunpack.c.l.b16 %v58
    %v494 = vunpack.c.h.b16 %v58
    %v495 = vunpack.c.l.b16 %v59
    %v496 = vunpack.c.h.b16 %v59
    %v497 = vunpack.c.l.b16 %v60
    %v498 = vunpack.c.h.b16 %v60
    %v499 = vunpack.c.l.b16 %v61
    %v500 = vunpack.c.h.b16 %v61
    %v501 = vunpack.c.l.b16 %v62
    %v502 = vunpack.c.h.b16 %v62
    %v503 = vunpack.c.l.b16 %v63
    %v504 = vunpack.c.h.b16 %v63
    %v505 = vunpack.c.l.b16 %v64
    %v506 = vunpack.c.h.b16 %v64
    %v507 = vunpack.c.l.b16 %v65
    %v508 = vunpack.c.h.b16 %v65
    %v509 = vunpack.c.l.b16 %v66
    %v510 = vunpack.c.h.b16 %v66
    %v511 = vunpack.c.l.b16 %v67
    %v512 = vunpack.c.h.b16 %v67
    %v513 = vunpack.c.l.b16 %v68
    %v514 = vunpack.c.h.b16 %v68
    %v515 = vunpack.c.l.b16 %v69
    %v516 = vunpack.c.h.b16 %v69
    %v517 = vunpack.c.l.b16 %v70
    %v518 = vunpack.c.h.b16 %v70
    %v519 = vunpack.c.l.b16 %v71
    %v520 = vunpack.c.h.b16 %v71
    %v521 = vunpack.c.l.b16 %v72
    %v522 = vunpack.c.h.b16 %v72
    %v523 = vunpack.c.l.b16 %v73
    %v524 = vunpack.c.h.b16 %v73
    %v525 = vunpack.c.l.b16 %v74
    %v526 = vunpack.c.h.b16 %v74
    %v527 = vunpack.c.l.b16 %v75
    %v528 = vunpack.c.h.b16 %v75
    %v529 = vunpack.c.l.b16 %v76
    %v530 = vunpack.c.h.b16 %v76
    %v531 = vunpack.c.l.b16 %v77
    %v532 = vunpack.c.h.b16 %v77
    %v533 = vunpack.c.l.b16 %v78
    %v534 = vunpack.c.h.b16 %v78
    %v535 = vunpack.c.l.b16 %v79
    %v536 = vunpack.c.h.b16 %v79
    %v537 = vunpack.c.l.b16 %v80
    %v538 = vunpack.c.h.b16 %v80
    %v539 = vunpack.c.l.b16 %v81
    %v540 = vunpack.c.h.b16 %v81
    %v541 = vunpack.c.l.b16 %v82
    %v542 = vunpack.c.h.b16 %v82
    %v543 = vunpack.c.l.b16 %v83
    %v544 = vunpack.c.h.b16 %v83
    %v545 = vunpack.c.l.b16 %v84
    %v546 = vunpack.c.h.b16 %v84
    %v547 = vunpack.c.l.b16 %v85
    %v548 = vunpack.c.h.b16 %v85
    %v549 = vunpack.c.l.b16 %v86
    %v550 = vunpack.c.h.b16 %v86
    %v551 = vunpack.c.l.b16 %v87
    %v552 = vunpack.c.h.b16 %v87
    %v553 = vunpack.c.l.b16 %v88
    %v554 = vunpack.c.h.b16 %v88
    %v555 = vunpack.c.l.b16 %v89
    %v556 = vunpack.c.h.b16 %v89
    %v557 = vunpack.c.l.b16 %v90
    %v558 = vunpack.c.h.b16 %v90
    %v559 = vunpack.c.l.b16 %v91
    %v560 = vunpack.c.h.b16 %v91
    %v561 = vunpack.c.l.b16 %v92
    %v562 = vunpack.c.h.b16 %v92
    %v563 = vunpack.c.l.b16 %v93
    %v564 = vunpack.c.h.b16 %v93
    %v565 = vunpack.c.l.b16 %v94
    %v566 = vunpack.c.h.b16 %v94
    %v567 = vunpack.c.l.b16 %v95
    %v568 = vunpack.c.h.b16 %v95
    %v569 = vunpack.c.l.b16 %v96
    %v570 = vunpack.c.h.b16 %v96
    %v571 = vunpack.c.l.b16 %v97
    %v572 = vunpack.c.h.b16 %v97
    %v573 = vunpack.c.l.b16 %v98
    %v574 = vunpack.c.h.b16 %v98
    %v575 = vunpack.c.l.b16 %v99
    %v576 = vunpack.c.h.b16 %v99
    %v577 = vunpack.c.l.b16 %v100
    %v578 = vunpack.c.h.b16 %v100
    %v579 = vunpack.c.l.b16 %v101
    %v580 = vunpack.c.h.b16 %v101
    %v581 = vunpack.c.l.b16 %v102
    %v582 = vunpack.c.h.b16 %v102
    %v583 = vunpack.c.l.b16 %v103
    %v584 = vunpack.c.h.b16 %v103
    %v585 = vunpack.c.l.b16 %v104
    %v586 = vunpack.c.h.b16 %v104
    %v587 = vunpack.c.l.b16 %v105
    %v588 = vunpack.c.h.b16 %v105
    %v589 = vunpack.c.l.b16 %v106
    %v590 = vunpack.c.h.b16 %v106
    %v591 = vunpack.c.l.b16 %v107
    %v592 = vunpack.c.h.b16 %v107
    %v593 = vunpack.c.l.b16 %v108
    %v594 = vunpack.c.h.b16 %v108
    %v595 = vunpack.c.l.b16 %v109
    %v596 = vunpack.c.h.b16 %v109
    %v597 = vunpack.c.l.b16 %v110
    %v598 = vunpack.c.h.b16 %v110
    %v599 = vunpack.c.l.b16 %v111
    %v600 = vunpack.c.h.b16 %v111
    %v601 = vunpack.c.l.b16 %v112
    %v602 = vunpack.c.h.b16 %v112
    %v603 = vunpack.c.l.b16 %v113
    %v604 = vunpack.c.h.b16 %v113
    %v605 = vunpack.c.l.b16 %v114
    %v606 = vunpack.c.h.b16 %v114
    %v607 = vunpack.c.l.b16 %v115
    %v608 = vunpack.c.h.b16 %v115
    %v609 = vunpack.c.l.b16 %v116
    %v610 = vunpack.c.h.b16 %v116
    %v611 = vunpack.c.l.b16 %v117
    %v612 = vunpack.c.h.b16 %v117
    %v613 = vunpack.c.l.b16 %v118
    %v614 = vunpack.c.h.b16 %v118
    %v615 = vunpack.c.l.b16 %v119
    %v616 = vunpack.c.h.b16 %v119
    %v617 = vunpack.c.l.b16 %v120
    %v618 = vunpack.c.h.b16 %v120
    %v619 = vunpack.c.l.b16 %v121
    %v620 = vunpack.c.h.b16 %v121
    %v621 = vunpack.c.l.b16 %v122
    %v622 = vunpack.c.h.b16 %v122
    %v623 = vunpack.c.l.b16 %v123
    %v624 = vunpack.c.h.b16 %v123
    %v625 = vunpack.c.l.b16 %v124
    %v626 = vunpack.c.h.b16 %v124
    %v627 = vunpack.c.l.b16 %v125
    %v628 = vunpack.c.h.b16 %v125
    %v629 = vunpack.c.l.b16 %v126
    %v630 = vunpack.c.h.b16 %v126
    %v631 = vunpack.c.l.b16 %v127
    %v632 = vunpack.c.h.b16 %v127
    %v633 = vunpack.c.l.b16 %v128
    %v634 = vunpack.c.h.b16 %v128
    %v635 = vunpack.c.l.b16 %v129
    %v636 = vunpack.c.h.b16 %v129
    %v637 = vunpack.c.l.b16 %v130
    %v638 = vunpack.c.h.b16 %v130
    %v639 = vunpack.c.l.b16 %v131
    %v640 = vunpack.c.h.b16 %v131
    %v641 = vunpack.c.l.b16 %v132
    %v642 = vunpack.c.h.b16 %v132
    %v643 = vunpack.c.l.b16 %v133
    %v644 = vunpack.c.h.b16 %v133
    %v645 = vunpack.c.l.b16 %v134
    %v646 = vunpack.c.h.b16 %v134
    %v647 = vunpack.c.l.b16 %v135
    %v648 = vunpack.c.h.b16 %v135
    %v649 = vunpack.c.l.b16 %v136
    %v650 = vunpack.c.h.b16 %v136
    %v651 = vunpack.c.l.b16 %v137
    %v652 = vunpack.c.h.b16 %v137
    %v653 = vunpack.c.l.b16 %v138
    %v654 = vunpack.c.h.b16 %v138
    %v655 = vunpack.c.l.b16 %v139
    %v656 = vunpack.c.h.b16 %v139
    %v657 = vunpack.c.l.b16 %v140
    %v658 = vunpack.c.h.b16 %v140
    %v659 = vunpack.c.l.b16 %v141
    %v660 = vunpack.c.h.b16 %v141
    %v661 = vunpack.c.l.b16 %v142
    %v662 = vunpack.c.h.b16 %v142
    %v663 = vunpack.c.l.b16 %v143
    %v664 = vunpack.c.h.b16 %v143
    %v665 = vunpack.c.l.b16 %v144
    %v666 = vunpack.c.h.b16 %v144
    %v667 = vunpack.c.l.b16 %v145
    %v668 = vunpack.c.h.b16 %v145
    %v669 = vunpack.c.l.b16 %v146
    %v670 = vunpack.c.h.b16 %v146
    %v671 = vunpack.c.l.b16 %v147
    %v672 = vunpack.c.h.b16 %v147
    %v673 = vunpack.c.l.b16 %v148
    %v674 = vunpack.c.h.b16 %v148
    %v675 = vunpack.c.l.b16 %v149
    %v676 = vunpack.c.h.b16 %v149
    %v677 = vunpack.c.l.b16 %v150
    %v678 = vunpack.c.h.b16 %v150
    %v679 = vunpack.c.l.b16 %v151
    %v680 = vunpack.c.h.b16 %v151
    %v681 = vunpack.c.l.b16 %v152
    %v682 = vunpack.c.h.b16 %v152
    %v683 = vunpack.c.l.b16 %v153
    %v684 = vunpack.c.h.b16 %v153
    %v685 = vunpack.c.l.b16 %v154
    %v686 = vunpack.c.h.b16 %v154
    %v687 = vunpack.c.l.b16 %v155
    %v688 = vunpack.c.h.b16 %v155
    %v689 = vunpack.c.l.b16 %v156
    %v690 = vunpack.c.h.b16 %v156
    %v691 = vunpack.c.l.b16 %v157
    %v692 = vunpack.c.h.b16 %v157
    %v693 = vunpack.c.l.b16 %v158
    %v694 = vunpack.c.h.b16 %v158
    %v695 = vunpack.c.l.b16 %v159
    %v696 = vunpack.c.h.b16 %v159
    %v697 = vunpack.c.l.b16 %v160
    %v698 = vunpack.c.h.b16 %v160
    %v699 = vunpack.c.l.b16 %v161
    %v700 = vunpack.c.h.b16 %v161
    %v701 = vunpack.c.l.b16 %v162
    %v702 = vunpack.c.h.b16 %v162
    %v703 = vunpack.c.l.b16 %v163
    %v704 = vunpack.c.h.b16 %v163
    %v705 = vunpack.c.l.b16 %v164
    %v706 = vunpack.c.h.b16 %v164
    %v707 = vunpack.c.l.b16 %v165
    %v708 = vunpack.c.h.b16 %v165
    %v709 = vunpack.c.l.b16 %v166
    %v710 = vunpack.c.h.b16 %v166
    %v711 = vunpack.c.l.b16 %v167
    %v712 = vunpack.c.h.b16 %v167
    %v713 = vunpack.c.l.b16 %v168
    %v714 = vunpack.c.h.b16 %v168
    %v715 = vunpack.c.l.b16 %v169
    %v716 = vunpack.c.h.b16 %v169
    %v717 = vunpack.c.l.b16 %v170
    %v718 = vunpack.c.h.b16 %v170
    %v719 = vunpack.c.l.b16 %v171
    %v720 = vunpack.c.h.b16 %v171
    %v721 = vunpack.c.l.b16 %v172
    %v722 = vunpack.c.h.b16 %v172
    %v723 = vunpack.c.l.b16 %v173
    %v724 = vunpack.c.h.b16 %v173
    %v725 = vunpack.c.l.b16 %v174
    %v726 = vunpack.c.h.b16 %v174
    %v727 = vunpack.c.l.b16 %v175
    %v728 = vunpack.c.h.b16 %v175
    %v729 = vunpack.c.l.b16 %v176
    %v730 = vunpack.c.h.b16 %v176
    %v731 = vunpack.c.l.b16 %v177
    %v732 = vunpack.c.h.b16 %v177
    %v733 = vunpack.c.l.b16 %v178
    %v734 = vunpack.c.h.b16 %v178
    %v735 = vunpack.c.l.b16 %v179
    %v736 = vunpack.c.h.b16 %v179
    %v737 = vunpack.c.l.b16 %v180
    %v738 = vunpack.c.h.b16 %v180
    %v739 = vunpack.c.l.b16 %v181
    %v740 = vunpack.c.h.b16 %v181
    %v741 = vunpack.c.l.b16 %v182
    %v742 = vunpack.c.h.b16 %v182
    %v743 = vunpack.c.l.b16 %v183
    %v744 = vunpack.c.h.b16 %v183
    %v745 = vunpack.c.l.b16 %v184
    %v746 = vunpack.c.h.b16 %v184
    %v747 = vunpack.c.l.b16 %v185
    %v748 = vunpack.c.h.b16 %v185
    %v749 = vunpack.c.l.b16 %v186
    %v750 = vunpack.c.h.b16 %v186
    %v751 = vunpack.c.l.b16 %v187
    %v752 = vunpack.c.h.b16 %v187
    %v753 = vunpack.c.l.b16 %v188
    %v754 = vunpack.c.h.b16 %v188
    %v755 = vunpack.c.l.b16 %v189
    %v756 = vunpack.c.h.b16 %v189
    %v757 = vunpack.c.l.b16 %v190
    %v758 = vunpack.c.h.b16 %v190
    %v759 = vunpack.c.l.b16 %v191
    %v760 = vunpack.c.h.b16 %v191
    %v761 = vunpack.c.l.b16 %v192
    %v762 = vunpack.c.h.b16 %v192
    %v763 = vunpack.c.l.b16 %v193
    %v764 = vunpack.c.h.b16 %v193
    %v765 = vunpack.c.l.b16 %v194
    %v766 = vunpack.c.h.b16 %v194
    %v767 = vunpack.c.l.b16 %v195
    %v768 = vunpack.c.h.b16 %v195
    %v769 = vunpack.c.l.b16 %v196
    %v770 = vunpack.c.h.b16 %v196
    %v771 = vunpack.c.l.b16 %v197
    %v772 = vunpack.c.h.b16 %v197
    %v773 = vunpack.c.l.b16 %v198
    %v774 = vunpack.c.h.b16 %v198
    %v775 = vunpack.c.l.b16 %v199
    %v776 = vunpack.c.h.b16 %v199
    %v777 = vunpack.c.l.b16 %v200
    %v778 = vunpack.c.h.b16 %v200
    %v779 = vunpack.c.l.b16 %v201
    %v780 = vunpack.c.h.b16 %v201
    %v781 = vunpack.c.l.b16 %v202
    %v782 = vunpack.c.h.b16 %v202
    %v783 = vunpack.c.l.b16 %v203
    %v784 = vunpack.c.h.b16 %v203
    %v785 = vunpack.c.l.b16 %v204
    %v786 = vunpack.c.h.b16 %v204
    %v787 = vunpack.c.l.b16 %v205
    %v788 = vunpack.c.h.b16 %v205
    %v789 = vunpack.c.l.b16 %v206
    %v790 = vunpack.c.h.b16 %v206
    %v791 = vunpack.c.l.b16 %v207
    %v792 = vunpack.c.h.b16 %v207
    %v793 = vunpack.c.l.b16 %v208
    %v794 = vunpack.c.h.b16 %v208
    %v795 = vunpack.c.l.b16 %v209
    %v796 = vunpack.c.h.b16 %v209
    %v797 = vunpack.c.l.b16 %v210
    %v798 = vunpack.c.h.b16 %v210
    %v799 = vunpack.c.l.b16 %v211
    %v800 = vunpack.c.h.b16 %v211
    %v801 = vunpack.c.l.b16 %v212
    %v802 = vunpack.c.h.b16 %v212
    %v803 = vunpack.c.l.b16 %v213
    %v804 = vunpack.c.h.b16 %v213
    %v805 = vunpack.c.l.b16 %v214
    %v806 = vunpack.c.h.b16 %v214
    %v807 = vunpack.c.l.b16 %v215
    %v808 = vunpack.c.h.b16 %v215
    %v809 = vunpack.c.l.b16 %v216
    %v810 = vunpack.c.h.b16 %v216
    %v811 = vunpack.c.l.b16 %v217
    %v812 = vunpack.c.h.b16 %v217
    %v813 = vunpack.c.l.b16 %v218
    %v814 = vunpack.c.h.b16 %v218
    %v815 = vunpack.c.l.b16 %v219
    %v816 = vunpack.c.h.b16 %v219
    %v817 = vunpack.c.l.b16 %v220
    %v818 = vunpack.c.h.b16 %v220
    %v819 = vunpack.c.l.b16 %v221
    %v820 = vunpack.c.h.b16 %v221
    %v821 = vunpack.c.l.b16 %v222
    %v822 = vunpack.c.h.b16 %v222
    %v823 = vunpack.c.l.b16 %v223
    %v824 = vunpack.c.h.b16 %v223
    %v825 = vunpack.c.l.b16 %v224
    %v826 = vunpack.c.h.b16 %v224
    %v827 = vunpack.c.l.b16 %v225
    %v828 = vunpack.c.h.b16 %v225
    %v829 = vunpack.c.l.b16 %v226
    %v830 = vunpack.c.h.b16 %v226
    %v831 = vunpack.c.l.b16 %v227
    %v832 = vunpack.c.h.b16 %v227
    %v833 = vunpack.c.l.b16 %v228
    %v834 = vunpack.c.h.b16 %v228
    %v835 = vunpack.c.l.b16 %v229
    %v836 = vunpack.c.h.b16 %v229
    %v837 = vunpack.c.l.b16 %v230
    %v838 = vunpack.c.h.b16 %v230
    %v839 = vunpack.c.l.b16 %v231
    %v840 = vunpack.c.h.b16 %v231
    %v841 = vunpack.c.l.b16 %v232
    %v842 = vunpack.c.h.b16 %v232
    %v843 = vunpack.c.l.b16 %v233
    %v844 = vunpack.c.h.b16 %v233
    %v845 = vunpack.c.l.b16 %v234
    %v846 = vunpack.c.h.b16 %v234
    %v847 = vunpack.c.l.b16 %v235
    %v848 = vunpack.c.h.b16 %v235
    %v849 = vunpack.c.l.b16 %v236
    %v850 = vunpack.c.h.b16 %v236
    %v851 = vunpack.c.l.b16 %v237
    %v852 = vunpack.c.h.b16 %v237
    %v853 = vunpack.c.l.b16 %v238
    %v854 = vunpack.c.h.b16 %v238
    %v855 = vunpack.c.l.b16 %v239
    %v856 = vunpack.c.h.b16 %v239
    %v857 = vunpack.c.l.b16 %v240
    %v858 = vunpack.c.h.b16 %v240
    %v859 = vunpack.c.l.b16 %v241
    %v860 = vunpack.c.h.b16 %v241
    %v861 = vunpack.c.l.b16 %v242
    %v862 = vunpack.c.h.b16 %v242
    %v863 = vunpack.c.l.b16 %v243
    %v864 = vunpack.c.h.b16 %v243
    %v865 = vunpack.c.l.b16 %v244
    %v866 = vunpack.c.h.b16 %v244
    %v867 = vunpack.c.l.b16 %v245
    %v868 = vunpack.c.h.b16 %v245
    %v869 = vunpack.c.l.b16 %v246
    %v870 = vunpack.c.h.b16 %v246
    %v871 = vpack.c.b16 %v663, %v455
    %v872 = vpack.c.b16 %v664, %v456
    %v873 = vpack.c.b16 %v665, %v457
    %v874 = vpack.c.b16 %v666, %v458
    %v875 = vpack.c.b16 %v667, %v459
    %v876 = vpack.c.b16 %v668, %v460
    %v877 = vpack.c.b16 %v669, %v461
    %v878 = vpack.c.b16 %v670, %v462
    %v879 = vpack.c.b16 %v671, %v463
    %v880 = vpack.c.b16 %v672, %v464
    %v881 = vpack.c.b16 %v673, %v465
    %v882 = vpack.c.b16 %v674, %v466
    %v883 = vpack.c.b16 %v675, %v467
    %v884 = vpack.c.b16 %v676, %v468
    %v885 = vpack.c.b16 %v677, %v469
    %v886 = vpack.c.b16 %v678, %v470
    %v887 = vpack.c.b16 %v679, %v471
    %v888 = vpack.c.b16 %v680, %v472
    %v889 = vpack.c.b16 %v681, %v473
    %v890 = vpack.c.b16 %v682, %v474
    %v891 = vpack.c.b16 %v683, %v475
    %v892 = vpack.c.b16 %v684, %v476
    %v893 = vpack.c.b16 %v685, %v477
    %v894 = vpack.c.b16 %v686, %v478
    %v895 = vpack.c.b16 %v687, %v479
    %v896 = vpack.c.b16 %v688, %v480
    %v897 = vpack.c.b16 %v689, %v481
    %v898 = vpack.c.b16 %v690, %v482
    %v899 = vpack.c.b16 %v691, %v483
    %v900 = vpack.c.b16 %v692, %v484
    %v901 = vpack.c.b16 %v693, %v485
    %v902 = vpack.c.b16 %v694, %v486
    %v903 = vpack.c.b16 %v695, %v487
    %v904 = vpack.c.b16 %v696, %v488
    %v905 = vpack.c.b16 %v697, %v489
    %v906 = vpack.c.b16 %v698, %v490
    %v907 = vpack.c.b16 %v699, %v491
    %v908 = vpack.c.b16 %v700, %v492
    %v909 = vpack.c.b16 %v701, %v493
    %v910 = vpack.c.b16 %v702, %v494
    %v911 = vpack.c.b16 %v703, %v495
    %v912 = vpack.c.b16 %v704, %v496
    %v913 = vpack.c.b16 %v705, %v497
    %v914 = vpack.c.b16 %v706, %v498
    %v915 = vpack.c.b16 %v707, %v499
    %v916 = vpack.c.b16 %v708, %v500
    %v917 = vpack.c.b16 %v709, %v501
    %v918 = vpack.c.b16 %v710, %v502
    %v919 = vpack.c.b16 %v711, %v503
    %v920 = vpack.c.b16 %v712, %v504
    %v921 = vpack.c.b16 %v713, %v505
    %v922 = vpack.c.b16 %v714, %v506
    %v923 = vpack.c.b16 %v715, %v507
    %v924 = vpack.c.b16 %v716, %v508
    %v925 = vpack.c.b16 %v717, %v509
    %v926 = vpack.c.b16 %v718, %v510
    %v927 = vpack.c.b16 %v719, %v511
    %v928 = vpack.c.b16 %v720, %v512
    %v929 = vpack.c.b16 %v721, %v513
    %v930 = vpack.c.b16 %v722, %v514
    %v931 = vpack.c.b16 %v723, %v515
    %v932 = vpack.c.b16 %v724, %v516
    %v933 = vpack.c.b16 %v725, %v517
    %v934 = vpack.c.b16 %v726, %v518
    %v935 = vpack.c.b16 %v727, %v519
    %v936 = vpack.c.b16 %v728, %v520
    %v937 = vpack.c.b16 %v729, %v521
    %v938 = vpack.c.b16 %v730, %v522
    %v939 = vpack.c.b16 %v731, %v523
    %v940 = vpack.c.b16 %v732, %v524
    %v941 = vpack.c.b16 %v733, %v525
    %v942 = vpack.c.b16 %v734, %v526
    %v943 = vpack.c.b16 %v735, %v527
    %v944 = vpack.c.b16 %v736, %v528
    %v945 = vpack.c.b16 %v737, %v529
    %v946 = vpack.c.b16 %v738, %v530
    %v947 = vpack.c.b16 %v739, %v531
    %v948 = vpack.c.b16 %v740, %v532
    %v949 = vpack.c.b16 %v741, %v533
    %v950 = vpack.c.b16 %v742, %v534
    %v951 = vpack.c.b16 %v743, %v535
    %v952 = vpack.c.b16 %v744, %v536
    %v953 = vpack.c.b16 %v745, %v537
    %v954 = vpack.c.b16 %v746, %v538
    %v955 = vpack.c.b16 %v747, %v539
    %v956 = vpack.c.b16 %v748, %v540
    %v957 = vpack.c.b16 %v749, %v541
    %v958 = vpack.c.b16 %v750, %v542
    %v959 = vpack.c.b16 %v751, %v543
    %v960 = vpack.c.b16 %v752, %v544
    %v961 = vpack.c.b16 %v753, %v545
    %v962 = vpack.c.b16 %v754, %v546
    %v963 = vpack.c.b16 %v755, %v547
    %v964 = vpack.c.b16 %v756, %v548
    %v965 = vpack.c.b16 %v757, %v549
    %v966 = vpack.c.b16 %v758, %v550
    %v967 = vpack.c.b16 %v759, %v551
    %v968 = vpack.c.b16 %v760, %v552
    %v969 = vpack.c.b16 %v761, %v553
    %v970 = vpack.c.b16 %v762, %v554
    %v971 = vpack.c.b16 %v763, %v555
    %v972 = vpack.c.b16 %v764, %v556
    %v973 = vpack.c.b16 %v765, %v557
    %v974 = vpack.c.b16 %v766, %v558
    %v975 = vpack.c.b16 %v767, %v559
    %v976 = vpack.c.b16 %v768, %v560
    %v977 = vpack.c.b16 %v769, %v561
    %v978 = vpack.c.b16 %v770, %v562
    %v979 = vpack.c.b16 %v771, %v563
    %v980 = vpack.c.b16 %v772, %v564
    %v981 = vpack.c.b16 %v773, %v565
    %v982 = vpack.c.b16 %v774, %v566
    %v983 = vpack.c.b16 %v775, %v567
    %v984 = vpack.c.b16 %v776, %v568
    %v985 = vpack.c.b16 %v777, %v569
    %v986 = vpack.c.b16 %v778, %v570
    %v987 = vpack.c.b16 %v779, %v571
    %v988 = vpack.c.b16 %v780, %v572
    %v989 = vpack.c.b16 %v781, %v573
    %v990 = vpack.c.b16 %v782, %v574
    %v991 = vpack.c.b16 %v783, %v575
    %v992 = vpack.c.b16 %v784, %v576
    %v993 = vpack.c.b16 %v785, %v577
    %v994 = vpack.c.b16 %v786, %v578
    %v995 = vpack.c.b16 %v787, %v579
    %v996 = vpack.c.b16 %v788, %v580
    %v997 = vpack.c.b16 %v789, %v581
    %v998 = vpack.c.b16 %v790, %v582
    %v999 = vpack.c.b16 %v791, %v583
    %v1000 = vpack.c.b16 %v792, %v584
    %v1001 = vpack.c.b16 %v793, %v585
    %v1002 = vpack.c.b16 %v794, %v586
    %v1003 = vpack.c.b16 %v795, %v587
    %v1004 = vpack.c.b16 %v796, %v588
    %v1005 = vpack.c.b16 %v797, %v589
    %v1006 = vpack.c.b16 %v798, %v590
    %v1007 = vpack.c.b16 %v799, %v591
    %v1008 = vpack.c.b16 %v800, %v592
    %v1009 = vpack.c.b16 %v801, %v593
    %v1010 = vpack.c.b16 %v802, %v594
    %v1011 = vpack.c.b16 %v803, %v595
    %v1012 = vpack.c.b16 %v804, %v596
    %v1013 = vpack.c.b16 %v805, %v597
    %v1014 = vpack.c.b16 %v806, %v598
    %v1015 = vpack.c.b16 %v807, %v599
    %v1016 = vpack.c.b16 %v808, %v600
    %v1017 = vpack.c.b16 %v809, %v601
    %v1018 = vpack.c.b16 %v810, %v602
    %v1019 = vpack.c.b16 %v811, %v603
    %v1020 = vpack.c.b16 %v812, %v604
    %v1021 = vpack.c.b16 %v813, %v605
    %v1022 = vpack.c.b16 %v814, %v606
    %v1023 = vpack.c.b16 %v815, %v607
    %v1024 = vpack.c.b16 %v816, %v608
    %v1025 = vpack.c.b16 %v817, %v609
    %v1026 = vpack.c.b16 %v818, %v610
    %v1027 = vpack.c.b16 %v819, %v611
    %v1028 = vpack.c.b16 %v820, %v612
    %v1029 = vpack.c.b16 %v821, %v613
    %v1030 = vpack.c.b16 %v822, %v614
    %v1031 = vpack.c.b16 %v823, %v615
    %v1032 = vpack.c.b16 %v824, %v616
    %v1033 = vpack.c.b16 %v825, %v617
    %v1034 = vpack.c.b16 %v826, %v618
    %v1035 = vpack.c.b16 %v827, %v619
    %v1036 = vpack.c.b16 %v828, %v620
    %v1037 = vpack.c.b16 %v829, %v621
    %v1038 = vpack.c.b16 %v830, %v622
    %v1039 = vpack.c.b16 %v831, %v623
    %v1040 = vpack.c.b16 %v832, %v624
    %v1041 = vpack.c.b16 %v833, %v625
    %v1042 = vpack.c.b16 %v834, %v626
    %v1043 = vpack.c.b16 %v835, %v627
    %v1044 = vpack.c.b16 %v836, %v628
    %v1045 = vpack.c.b16 %v837, %v629
    %v1046 = vpack.c.b16 %v838, %v630
    %v1047 = vpack.c.b16 %v839, %v631
    %v1048 = vpack.c.b16 %v840, %v632
    %v1049 = vpack.c.b16 %v841, %v633
    %v1050 = vpack.c.b16 %v842, %v634
    %v1051 = vpack.c.b16 %v843, %v635
    %v1052 = vpack.c.b16 %v844, %v636
    %v1053 = vpack.c.b16 %v845, %v637
    %v1054 = vpack.c.b16 %v846, %v638
    %v1055 = vpack.c.b16 %v847, %v639
    %v1056 = vpack.c.b16 %v848, %v640
    %v1057 = vpack.c.b16 %v849, %v641
    %v1058 = vpack.c.b16 %v850, %v642
    %v1059 = vpack.c.b16 %v851, %v643
    %v1060 = vpack.c.b16 %v852, %v644
    %v1061 = vpack.c.b16 %v853, %v645
    %v1062 = vpack.c.b16 %v854, %v646
    %v1063 = vpack.c.b16 %v855, %v647
    %v1064 = vpack.c.b16 %v856, %v648
    %v1065 = vpack.c.b16 %v857, %v649
    %v1066 = vpack.c.b16 %v858, %v650
    %v1067 = vpack.c.b16 %v859, %v651
    %v1068 = vpack.c.b16 %v860, %v652
    %v1069 = vpack.c.b16 %v861, %v653
    %v1070 = vpack.c.b16 %v862, %v654
    %v1071 = vpack.c.b16 %v863, %v655
    %v1072 = vpack.c.b16 %v864, %v656
    %v1073 = vpack.c.b16 %v865, %v657
    %v1074 = vpack.c.b16 %v866, %v658
    %v1075 = vpack.c.b16 %v867, %v659
    %v1076 = vpack.c.b16 %v868, %v660
    %v1077 = vpack.c.b16 %v869, %v661
    %v1078 = vpack.c.b16 %v870, %v662
    %vm1287 = vcmask 130048
    %v1289 = vsel %vm1287, %v38, 0
    %1291 = vmatprep.subr.bf16.mxu0 %v872
    %1292 = vmatpush1.bf16.msra.mxu0 %v871
    %1293 = vmatprep.subr.bf16.mxu0 0
    %1294 = vmatpush1.bf16.msra.mxu0 0
    %1295 = vmatprep.subr.bf16.mxu0 0
    %1296 = vmatpush1.bf16.msra.mxu0 0
    %1297 = vmatprep.subr.bf16.mxu0 0
    %1298 = vmatpush1.bf16.msra.mxu0 0
    %1299 = vmatprep.subr.bf16.mxu0 0
    %1300 = vmatpush1.bf16.msra.mxu0 0
    %1301 = vmatprep.subr.bf16.mxu0 0
    %1302 = vmatpush1.bf16.msra.mxu0 0
    %1303 = vmatprep.subr.bf16.mxu0 0
    %1304 = vmatpush1.bf16.msra.mxu0 0
    %1305 = vmatprep.subr.bf16.mxu0 0
    %1306 = vmatpush1.bf16.msra.mxu0 0
    %1307 = vmatprep.subr.bf16.mxu0 0
    %1308 = vmatpush1.bf16.msra.mxu0 0
    %1309 = vmatprep.subr.bf16.mxu0 0
    %1310 = vmatpush1.bf16.msra.mxu0 0
    %1311 = vmatprep.subr.bf16.mxu0 0
    %1312 = vmatpush1.bf16.msra.mxu0 0
    %1313 = vmatprep.subr.bf16.mxu0 0
    %1314 = vmatpush1.bf16.msra.mxu0 0
    %1315 = vmatprep.subr.bf16.mxu0 0
    %1316 = vmatpush1.bf16.msra.mxu0 0
    %1317 = vmatprep.subr.bf16.mxu0 0
    %1318 = vmatpush1.bf16.msra.mxu0 0
    %1319 = vmatprep.subr.bf16.mxu0 0
    %1320 = vmatpush1.bf16.msra.mxu0 0
    %1321 = vmatprep.subr.bf16.mxu0 0
    %1322 = vmatpush1.bf16.msra.mxu0 0
    %1323 = vmatprep.mubr.bf16.mxu0 0
    %1324 = vmatmul.mubr.bf16.gmra.mrb[0].mxu0 %v1289
    %v1325 = vpop.f32.mrb[0].mxu0
    %v1326 = vadd.f32 0.0, %v1325
    %v1327 = vpop.f32.mrb[0].mxu0
    %v1328 = vadd.f32 0.0, %v1327
    %v1329 = vpop.f32.mrb[0].mxu0
    %v1330 = vpop.f32.mrb[0].mxu0
    %1331 = vdwg.mxu0
    %1332 = vmatprep.subr.bf16.mxu0 %v874
    %1333 = vmatpush1.bf16.msra.mxu0 %v873
    %1334 = vmatprep.subr.bf16.mxu0 0
    %1335 = vmatpush1.bf16.msra.mxu0 0
    %1336 = vmatprep.subr.bf16.mxu0 0
    %1337 = vmatpush1.bf16.msra.mxu0 0
    %1338 = vmatprep.subr.bf16.mxu0 0
    %1339 = vmatpush1.bf16.msra.mxu0 0
    %1340 = vmatprep.subr.bf16.mxu0 0
    %1341 = vmatpush1.bf16.msra.mxu0 0
    %1342 = vmatprep.subr.bf16.mxu0 0
    %1343 = vmatpush1.bf16.msra.mxu0 0
    %1344 = vmatprep.subr.bf16.mxu0 0
    %1345 = vmatpush1.bf16.msra.mxu0 0
    %1346 = vmatprep.subr.bf16.mxu0 0
    %1347 = vmatpush1.bf16.msra.mxu0 0
    %1348 = vmatprep.subr.bf16.mxu0 0
    %1349 = vmatpush1.bf16.msra.mxu0 0
    %1350 = vmatprep.subr.bf16.mxu0 0
    %1351 = vmatpush1.bf16.msra.mxu0 0
    %1352 = vmatprep.subr.bf16.mxu0 0
    %1353 = vmatpush1.bf16.msra.mxu0 0
    %1354 = vmatprep.subr.bf16.mxu0 0
    %1355 = vmatpush1.bf16.msra.mxu0 0
    %1356 = vmatprep.subr.bf16.mxu0 0
    %1357 = vmatpush1.bf16.msra.mxu0 0
    %1358 = vmatprep.subr.bf16.mxu0 0
    %1359 = vmatpush1.bf16.msra.mxu0 0
    %1360 = vmatprep.subr.bf16.mxu0 0
    %1361 = vmatpush1.bf16.msra.mxu0 0
    %1362 = vmatprep.subr.bf16.mxu0 0
    %1363 = vmatpush1.bf16.msra.mxu0 0
    %1364 = vmatprep.mubr.bf16.mxu0 0
    %1365 = vmatmul.mubr.bf16.gmra.mrb[0].mxu0 %v1289
    %v1366 = vpop.f32.mrb[0].mxu0
    %v1367 = vadd.f32 0.0, %v1366
    %v1368 = vpop.f32.mrb[0].mxu0
    %v1369 = vadd.f32 0.0, %v1368
    %v1370 = vpop.f32.mrb[0].mxu0
    %v1371 = vpop.f32.mrb[0].mxu0
    %1372 = vdwg.mxu0
    %1373 = vmatprep.subr.bf16.mxu0 %v876
    %1374 = vmatpush1.bf16.msra.mxu0 %v875
    %1375 = vmatprep.subr.bf16.mxu0 0
    %1376 = vmatpush1.bf16.msra.mxu0 0
    %1377 = vmatprep.subr.bf16.mxu0 0
    %1378 = vmatpush1.bf16.msra.mxu0 0
    %1379 = vmatprep.subr.bf16.mxu0 0
    %1380 = vmatpush1.bf16.msra.mxu0 0
    %1381 = vmatprep.subr.bf16.mxu0 0
    %1382 = vmatpush1.bf16.msra.mxu0 0
    %1383 = vmatprep.subr.bf16.mxu0 0
    %1384 = vmatpush1.bf16.msra.mxu0 0
    %1385 = vmatprep.subr.bf16.mxu0 0
    %1386 = vmatpush1.bf16.msra.mxu0 0
    %1387 = vmatprep.subr.bf16.mxu0 0
    %1388 = vmatpush1.bf16.msra.mxu0 0
    %1389 = vmatprep.subr.bf16.mxu0 0
    %1390 = vmatpush1.bf16.msra.mxu0 0
    %1391 = vmatprep.subr.bf16.mxu0 0
    %1392 = vmatpush1.bf16.msra.mxu0 0
    %1393 = vmatprep.subr.bf16.mxu0 0
    %1394 = vmatpush1.bf16.msra.mxu0 0
    %1395 = vmatprep.subr.bf16.mxu0 0
    %1396 = vmatpush1.bf16.msra.mxu0 0
    %1397 = vmatprep.subr.bf16.mxu0 0
    %1398 = vmatpush1.bf16.msra.mxu0 0
    %1399 = vmatprep.subr.bf16.mxu0 0
    %1400 = vmatpush1.bf16.msra.mxu0 0
    %1401 = vmatprep.subr.bf16.mxu0 0
    %1402 = vmatpush1.bf16.msra.mxu0 0
    %1403 = vmatprep.subr.bf16.mxu0 0
    %1404 = vmatpush1.bf16.msra.mxu0 0
    %1405 = vmatprep.mubr.bf16.mxu0 0
    %1406 = vmatmul.mubr.bf16.gmra.mrb[0].mxu0 %v1289
    %v1407 = vpop.f32.mrb[0].mxu0
    %v1408 = vadd.f32 0.0, %v1407
    %v1409 = vpop.f32.mrb[0].mxu0
    %v1410 = vadd.f32 0.0, %v1409
    %v1411 = vpop.f32.mrb[0].mxu0
    %v1412 = vpop.f32.mrb[0].mxu0
    %1413 = vdwg.mxu0
    %1414 = vmatprep.subr.bf16.mxu0 %v878
    %1415 = vmatpush1.bf16.msra.mxu0 %v877
    %1416 = vmatprep.subr.bf16.mxu0 0
    %1417 = vmatpush1.bf16.msra.mxu0 0
    %1418 = vmatprep.subr.bf16.mxu0 0
    %1419 = vmatpush1.bf16.msra.mxu0 0
    %1420 = vmatprep.subr.bf16.mxu0 0
    %1421 = vmatpush1.bf16.msra.mxu0 0
    %1422 = vmatprep.subr.bf16.mxu0 0
    %1423 = vmatpush1.bf16.msra.mxu0 0
    %1424 = vmatprep.subr.bf16.mxu0 0
    %1425 = vmatpush1.bf16.msra.mxu0 0
    %1426 = vmatprep.subr.bf16.mxu0 0
    %1427 = vmatpush1.bf16.msra.mxu0 0
    %1428 = vmatprep.subr.bf16.mxu0 0
    %1429 = vmatpush1.bf16.msra.mxu0 0
    %1430 = vmatprep.subr.bf16.mxu0 0
    %1431 = vmatpush1.bf16.msra.mxu0 0
    %1432 = vmatprep.subr.bf16.mxu0 0
    %1433 = vmatpush1.bf16.msra.mxu0 0
    %1434 = vmatprep.subr.bf16.mxu0 0
    %1435 = vmatpush1.bf16.msra.mxu0 0
    %1436 = vmatprep.subr.bf16.mxu0 0
    %1437 = vmatpush1.bf16.msra.mxu0 0
    %1438 = vmatprep.subr.bf16.mxu0 0
    %1439 = vmatpush1.bf16.msra.mxu0 0
    %1440 = vmatprep.subr.bf16.mxu0 0
    %1441 = vmatpush1.bf16.msra.mxu0 0
    %1442 = vmatprep.subr.bf16.mxu0 0
    %1443 = vmatpush1.bf16.msra.mxu0 0
    %1444 = vmatprep.subr.bf16.mxu0 0
    %1445 = vmatpush1.bf16.msra.mxu0 0
    %1446 = vmatprep.mubr.bf16.mxu0 0
    %1447 = vmatmul.mubr.bf16.gmra.mrb[0].mxu0 %v1289
    %v1448 = vpop.f32.mrb[0].mxu0
    %v1449 = vadd.f32 0.0, %v1448
    %v1450 = vpop.f32.mrb[0].mxu0
    %v1451 = vadd.f32 0.0, %v1450
    %v1452 = vpop.f32.mrb[0].mxu0
    %v1453 = vpop.f32.mrb[0].mxu0
    %1454 = vdwg.mxu0
    %1455 = vmatprep.subr.bf16.mxu0 %v880
    %1456 = vmatpush1.bf16.msra.mxu0 %v879
    %1457 = vmatprep.subr.bf16.mxu0 0
    %1458 = vmatpush1.bf16.msra.mxu0 0
    %1459 = vmatprep.subr.bf16.mxu0 0
    %1460 = vmatpush1.bf16.msra.mxu0 0
    %1461 = vmatprep.subr.bf16.mxu0 0
    %1462 = vmatpush1.bf16.msra.mxu0 0
    %1463 = vmatprep.subr.bf16.mxu0 0
    %1464 = vmatpush1.bf16.msra.mxu0 0
    %1465 = vmatprep.subr.bf16.mxu0 0
    %1466 = vmatpush1.bf16.msra.mxu0 0
    %1467 = vmatprep.subr.bf16.mxu0 0
    %1468 = vmatpush1.bf16.msra.mxu0 0
    %1469 = vmatprep.subr.bf16.mxu0 0
    %1470 = vmatpush1.bf16.msra.mxu0 0
    %1471 = vmatprep.subr.bf16.mxu0 0
    %1472 = vmatpush1.bf16.msra.mxu0 0
    %1473 = vmatprep.subr.bf16.mxu0 0
    %1474 = vmatpush1.bf16.msra.mxu0 0
    %1475 = vmatprep.subr.bf16.mxu0 0
    %1476 = vmatpush1.bf16.msra.mxu0 0
    %1477 = vmatprep.subr.bf16.mxu0 0
    %1478 = vmatpush1.bf16.msra.mxu0 0
    %1479 = vmatprep.subr.bf16.mxu0 0
    %1480 = vmatpush1.bf16.msra.mxu0 0
    %1481 = vmatprep.subr.bf16.mxu0 0
    %1482 = vmatpush1.bf16.msra.mxu0 0
    %1483 = vmatprep.subr.bf16.mxu0 0
    %1484 = vmatpush1.bf16.msra.mxu0 0
    %1485 = vmatprep.subr.bf16.mxu0 0
    %1486 = vmatpush1.bf16.msra.mxu0 0
    %1487 = vmatprep.mubr.bf16.mxu0 0
    %1488 = vmatmul.mubr.bf16.gmra.mrb[0].mxu0 %v1289
    %v1489 = vpop.f32.mrb[0].mxu0
    %v1490 = vadd.f32 0.0, %v1489
    %v1491 = vpop.f32.mrb[0].mxu0
    %v1492 = vadd.f32 0.0, %v1491
    %v1493 = vpop.f32.mrb[0].mxu0
    %v1494 = vpop.f32.mrb[0].mxu0
    %1495 = vdwg.mxu0
    %1496 = vmatprep.subr.bf16.mxu0 %v882
    %1497 = vmatpush1.bf16.msra.mxu0 %v881
    %1498 = vmatprep.subr.bf16.mxu0 0
    %1499 = vmatpush1.bf16.msra.mxu0 0
    %1500 = vmatprep.subr.bf16.mxu0 0
    %1501 = vmatpush1.bf16.msra.mxu0 0
    %1502 = vmatprep.subr.bf16.mxu0 0
    %1503 = vmatpush1.bf16.msra.mxu0 0
    %1504 = vmatprep.subr.bf16.mxu0 0
    %1505 = vmatpush1.bf16.msra.mxu0 0
    %1506 = vmatprep.subr.bf16.mxu0 0
    %1507 = vmatpush1.bf16.msra.mxu0 0
    %1508 = vmatprep.subr.bf16.mxu0 0
    %1509 = vmatpush1.bf16.msra.mxu0 0
    %1510 = vmatprep.subr.bf16.mxu0 0
    %1511 = vmatpush1.bf16.msra.mxu0 0
    %1512 = vmatprep.subr.bf16.mxu0 0
    %1513 = vmatpush1.bf16.msra.mxu0 0
    %1514 = vmatprep.subr.bf16.mxu0 0
    %1515 = vmatpush1.bf16.msra.mxu0 0
    %1516 = vmatprep.subr.bf16.mxu0 0
    %1517 = vmatpush1.bf16.msra.mxu0 0
    %1518 = vmatprep.subr.bf16.mxu0 0
    %1519 = vmatpush1.bf16.msra.mxu0 0
    %1520 = vmatprep.subr.bf16.mxu0 0
    %1521 = vmatpush1.bf16.msra.mxu0 0
    %1522 = vmatprep.subr.bf16.mxu0 0
    %1523 = vmatpush1.bf16.msra.mxu0 0
    %1524 = vmatprep.subr.bf16.mxu0 0
    %1525 = vmatpush1.bf16.msra.mxu0 0
    %1526 = vmatprep.subr.bf16.mxu0 0
    %1527 = vmatpush1.bf16.msra.mxu0 0
    %1528 = vmatprep.mubr.bf16.mxu0 0
    %1529 = vmatmul.mubr.bf16.gmra.mrb[0].mxu0 %v1289
    %v1530 = vpop.f32.mrb[0].mxu0
    %v1531 = vadd.f32 0.0, %v1530
    %v1532 = vpop.f32.mrb[0].mxu0
    %v1533 = vadd.f32 0.0, %v1532
    %v1534 = vpop.f32.mrb[0].mxu0
    %v1535 = vpop.f32.mrb[0].mxu0
    %1536 = vdwg.mxu0
    %1537 = vmatprep.subr.bf16.mxu0 %v884
    %1538 = vmatpush1.bf16.msra.mxu0 %v883
    %1539 = vmatprep.subr.bf16.mxu0 0
    %1540 = vmatpush1.bf16.msra.mxu0 0
    %1541 = vmatprep.subr.bf16.mxu0 0
    %1542 = vmatpush1.bf16.msra.mxu0 0
    %1543 = vmatprep.subr.bf16.mxu0 0
    %1544 = vmatpush1.bf16.msra.mxu0 0
    %1545 = vmatprep.subr.bf16.mxu0 0
    %1546 = vmatpush1.bf16.msra.mxu0 0
    %1547 = vmatprep.subr.bf16.mxu0 0
    %1548 = vmatpush1.bf16.msra.mxu0 0
    %1549 = vmatprep.subr.bf16.mxu0 0
    %1550 = vmatpush1.bf16.msra.mxu0 0
    %1551 = vmatprep.subr.bf16.mxu0 0
    %1552 = vmatpush1.bf16.msra.mxu0 0
    %1553 = vmatprep.subr.bf16.mxu0 0
    %1554 = vmatpush1.bf16.msra.mxu0 0
    %1555 = vmatprep.subr.bf16.mxu0 0
    %1556 = vmatpush1.bf16.msra.mxu0 0
    %1557 = vmatprep.subr.bf16.mxu0 0
    %1558 = vmatpush1.bf16.msra.mxu0 0
    %1559 = vmatprep.subr.bf16.mxu0 0
    %1560 = vmatpush1.bf16.msra.mxu0 0
    %1561 = vmatprep.subr.bf16.mxu0 0
    %1562 = vmatpush1.bf16.msra.mxu0 0
    %1563 = vmatprep.subr.bf16.mxu0 0
    %1564 = vmatpush1.bf16.msra.mxu0 0
    %1565 = vmatprep.subr.bf16.mxu0 0
    %1566 = vmatpush1.bf16.msra.mxu0 0
    %1567 = vmatprep.subr.bf16.mxu0 0
    %1568 = vmatpush1.bf16.msra.mxu0 0
    %1569 = vmatprep.mubr.bf16.mxu0 0
    %1570 = vmatmul.mubr.bf16.gmra.mrb[0].mxu0 %v1289
    %v1571 = vpop.f32.mrb[0].mxu0
    %v1572 = vadd.f32 0.0, %v1571
    %v1573 = vpop.f32.mrb[0].mxu0
    %v1574 = vadd.f32 0.0, %v1573
    %v1575 = vpop.f32.mrb[0].mxu0
    %v1576 = vpop.f32.mrb[0].mxu0
    %1577 = vdwg.mxu0
    %1578 = vmatprep.subr.bf16.mxu0 %v886
    %1579 = vmatpush1.bf16.msra.mxu0 %v885
    %1580 = vmatprep.subr.bf16.mxu0 0
    %1581 = vmatpush1.bf16.msra.mxu0 0
    %1582 = vmatprep.subr.bf16.mxu0 0
    %1583 = vmatpush1.bf16.msra.mxu0 0
    %1584 = vmatprep.subr.bf16.mxu0 0
    %1585 = vmatpush1.bf16.msra.mxu0 0
    %1586 = vmatprep.subr.bf16.mxu0 0
    %1587 = vmatpush1.bf16.msra.mxu0 0
    %1588 = vmatprep.subr.bf16.mxu0 0
    %1589 = vmatpush1.bf16.msra.mxu0 0
    %1590 = vmatprep.subr.bf16.mxu0 0
    %1591 = vmatpush1.bf16.msra.mxu0 0
    %1592 = vmatprep.subr.bf16.mxu0 0
    %1593 = vmatpush1.bf16.msra.mxu0 0
    %1594 = vmatprep.subr.bf16.mxu0 0
    %1595 = vmatpush1.bf16.msra.mxu0 0
    %1596 = vmatprep.subr.bf16.mxu0 0
    %1597 = vmatpush1.bf16.msra.mxu0 0
    %1598 = vmatprep.subr.bf16.mxu0 0
    %1599 = vmatpush1.bf16.msra.mxu0 0
    %1600 = vmatprep.subr.bf16.mxu0 0
    %1601 = vmatpush1.bf16.msra.mxu0 0
    %1602 = vmatprep.subr.bf16.mxu0 0
    %1603 = vmatpush1.bf16.msra.mxu0 0
    %1604 = vmatprep.subr.bf16.mxu0 0
    %1605 = vmatpush1.bf16.msra.mxu0 0
    %1606 = vmatprep.subr.bf16.mxu0 0
    %1607 = vmatpush1.bf16.msra.mxu0 0
    %1608 = vmatprep.subr.bf16.mxu0 0
    %1609 = vmatpush1.bf16.msra.mxu0 0
    %1610 = vmatprep.mubr.bf16.mxu0 0
    %1611 = vmatmul.mubr.bf16.gmra.mrb[0].mxu0 %v1289
    %v1612 = vpop.f32.mrb[0].mxu0
    %v1613 = vadd.f32 0.0, %v1612
    %v1614 = vpop.f32.mrb[0].mxu0
    %v1615 = vadd.f32 0.0, %v1614
    %v1616 = vpop.f32.mrb[0].mxu0
    %v1617 = vpop.f32.mrb[0].mxu0
    %1618 = vdwg.mxu0
    %1619 = vmatprep.subr.bf16.mxu0 %v888
    %1620 = vmatpush1.bf16.msra.mxu0 %v887
    %1621 = vmatprep.subr.bf16.mxu0 0
    %1622 = vmatpush1.bf16.msra.mxu0 0
    %1623 = vmatprep.subr.bf16.mxu0 0
    %1624 = vmatpush1.bf16.msra.mxu0 0
    %1625 = vmatprep.subr.bf16.mxu0 0
    %1626 = vmatpush1.bf16.msra.mxu0 0
    %1627 = vmatprep.subr.bf16.mxu0 0
    %1628 = vmatpush1.bf16.msra.mxu0 0
    %1629 = vmatprep.subr.bf16.mxu0 0
    %1630 = vmatpush1.bf16.msra.mxu0 0
    %1631 = vmatprep.subr.bf16.mxu0 0
    %1632 = vmatpush1.bf16.msra.mxu0 0
    %1633 = vmatprep.subr.bf16.mxu0 0
    %1634 = vmatpush1.bf16.msra.mxu0 0
    %1635 = vmatprep.subr.bf16.mxu0 0
    %1636 = vmatpush1.bf16.msra.mxu0 0
    %1637 = vmatprep.subr.bf16.mxu0 0
    %1638 = vmatpush1.bf16.msra.mxu0 0
    %1639 = vmatprep.subr.bf16.mxu0 0
    %1640 = vmatpush1.bf16.msra.mxu0 0
    %1641 = vmatprep.subr.bf16.mxu0 0
    %1642 = vmatpush1.bf16.msra.mxu0 0
    %1643 = vmatprep.subr.bf16.mxu0 0
    %1644 = vmatpush1.bf16.msra.mxu0 0
    %1645 = vmatprep.subr.bf16.mxu0 0
    %1646 = vmatpush1.bf16.msra.mxu0 0
    %1647 = vmatprep.subr.bf16.mxu0 0
    %1648 = vmatpush1.bf16.msra.mxu0 0
    %1649 = vmatprep.subr.bf16.mxu0 0
    %1650 = vmatpush1.bf16.msra.mxu0 0
    %1651 = vmatprep.mubr.bf16.mxu0 0
    %1652 = vmatmul.mubr.bf16.gmra.mrb[0].mxu0 %v1289
    %v1653 = vpop.f32.mrb[0].mxu0
    %v1654 = vadd.f32 0.0, %v1653
    %v1655 = vpop.f32.mrb[0].mxu0
    %v1656 = vadd.f32 0.0, %v1655
    %v1657 = vpop.f32.mrb[0].mxu0
    %v1658 = vpop.f32.mrb[0].mxu0
    %1659 = vdwg.mxu0
    %1660 = vmatprep.subr.bf16.mxu0 %v890
    %1661 = vmatpush1.bf16.msra.mxu0 %v889
    %1662 = vmatprep.subr.bf16.mxu0 0
    %1663 = vmatpush1.bf16.msra.mxu0 0
    %1664 = vmatprep.subr.bf16.mxu0 0
    %1665 = vmatpush1.bf16.msra.mxu0 0
    %1666 = vmatprep.subr.bf16.mxu0 0
    %1667 = vmatpush1.bf16.msra.mxu0 0
    %1668 = vmatprep.subr.bf16.mxu0 0
    %1669 = vmatpush1.bf16.msra.mxu0 0
    %1670 = vmatprep.subr.bf16.mxu0 0
    %1671 = vmatpush1.bf16.msra.mxu0 0
    %1672 = vmatprep.subr.bf16.mxu0 0
    %1673 = vmatpush1.bf16.msra.mxu0 0
    %1674 = vmatprep.subr.bf16.mxu0 0
    %1675 = vmatpush1.bf16.msra.mxu0 0
    %1676 = vmatprep.subr.bf16.mxu0 0
    %1677 = vmatpush1.bf16.msra.mxu0 0
    %1678 = vmatprep.subr.bf16.mxu0 0
    %1679 = vmatpush1.bf16.msra.mxu0 0
    %1680 = vmatprep.subr.bf16.mxu0 0
    %1681 = vmatpush1.bf16.msra.mxu0 0
    %1682 = vmatprep.subr.bf16.mxu0 0
    %1683 = vmatpush1.bf16.msra.mxu0 0
    %1684 = vmatprep.subr.bf16.mxu0 0
    %1685 = vmatpush1.bf16.msra.mxu0 0
    %1686 = vmatprep.subr.bf16.mxu0 0
    %1687 = vmatpush1.bf16.msra.mxu0 0
    %1688 = vmatprep.subr.bf16.mxu0 0
    %1689 = vmatpush1.bf16.msra.mxu0 0
    %1690 = vmatprep.subr.bf16.mxu0 0
    %1691 = vmatpush1.bf16.msra.mxu0 0
    %1692 = vmatprep.mubr.bf16.mxu0 0
    %1693 = vmatmul.mubr.bf16.gmra.mrb[0].mxu0 %v1289
    %v1694 = vpop.f32.mrb[0].mxu0
    %v1695 = vadd.f32 0.0, %v1694
    %v1696 = vpop.f32.mrb[0].mxu0
    %v1697 = vadd.f32 0.0, %v1696
    %v1698 = vpop.f32.mrb[0].mxu0
    %v1699 = vpop.f32.mrb[0].mxu0
    %1700 = vdwg.mxu0
    %1701 = vmatprep.subr.bf16.mxu0 %v892
    %1702 = vmatpush1.bf16.msra.mxu0 %v891
    %1703 = vmatprep.subr.bf16.mxu0 0
    %1704 = vmatpush1.bf16.msra.mxu0 0
    %1705 = vmatprep.subr.bf16.mxu0 0
    %1706 = vmatpush1.bf16.msra.mxu0 0
    %1707 = vmatprep.subr.bf16.mxu0 0
    %1708 = vmatpush1.bf16.msra.mxu0 0
    %1709 = vmatprep.subr.bf16.mxu0 0
    %1710 = vmatpush1.bf16.msra.mxu0 0
    %1711 = vmatprep.subr.bf16.mxu0 0
    %1712 = vmatpush1.bf16.msra.mxu0 0
    %1713 = vmatprep.subr.bf16.mxu0 0
    %1714 = vmatpush1.bf16.msra.mxu0 0
    %1715 = vmatprep.subr.bf16.mxu0 0
    %1716 = vmatpush1.bf16.msra.mxu0 0
    %1717 = vmatprep.subr.bf16.mxu0 0
    %1718 = vmatpush1.bf16.msra.mxu0 0
    %1719 = vmatprep.subr.bf16.mxu0 0
    %1720 = vmatpush1.bf16.msra.mxu0 0
    %1721 = vmatprep.subr.bf16.mxu0 0
    %1722 = vmatpush1.bf16.msra.mxu0 0
    %1723 = vmatprep.subr.bf16.mxu0 0
    %1724 = vmatpush1.bf16.msra.mxu0 0
    %1725 = vmatprep.subr.bf16.mxu0 0
    %1726 = vmatpush1.bf16.msra.mxu0 0
    %1727 = vmatprep.subr.bf16.mxu0 0
    %1728 = vmatpush1.bf16.msra.mxu0 0
    %1729 = vmatprep.subr.bf16.mxu0 0
    %1730 = vmatpush1.bf16.msra.mxu0 0
    %1731 = vmatprep.subr.bf16.mxu0 0
    %1732 = vmatpush1.bf16.msra.mxu0 0
    %1733 = vmatprep.mubr.bf16.mxu0 0
    %1734 = vmatmul.mubr.bf16.gmra.mrb[0].mxu0 %v1289
    %v1735 = vpop.f32.mrb[0].mxu0
    %v1736 = vadd.f32 0.0, %v1735
    %v1737 = vpop.f32.mrb[0].mxu0
    %v1738 = vadd.f32 0.0, %v1737
    %v1739 = vpop.f32.mrb[0].mxu0
    %v1740 = vpop.f32.mrb[0].mxu0
    %1741 = vdwg.mxu0
    %1742 = vmatprep.subr.bf16.mxu0 %v894
    %1743 = vmatpush1.bf16.msra.mxu0 %v893
    %1744 = vmatprep.subr.bf16.mxu0 0
    %1745 = vmatpush1.bf16.msra.mxu0 0
    %1746 = vmatprep.subr.bf16.mxu0 0
    %1747 = vmatpush1.bf16.msra.mxu0 0
    %1748 = vmatprep.subr.bf16.mxu0 0
    %1749 = vmatpush1.bf16.msra.mxu0 0
    %1750 = vmatprep.subr.bf16.mxu0 0
    %1751 = vmatpush1.bf16.msra.mxu0 0
    %1752 = vmatprep.subr.bf16.mxu0 0
    %1753 = vmatpush1.bf16.msra.mxu0 0
    %1754 = vmatprep.subr.bf16.mxu0 0
    %1755 = vmatpush1.bf16.msra.mxu0 0
    %1756 = vmatprep.subr.bf16.mxu0 0
    %1757 = vmatpush1.bf16.msra.mxu0 0
    %1758 = vmatprep.subr.bf16.mxu0 0
    %1759 = vmatpush1.bf16.msra.mxu0 0
    %1760 = vmatprep.subr.bf16.mxu0 0
    %1761 = vmatpush1.bf16.msra.mxu0 0
    %1762 = vmatprep.subr.bf16.mxu0 0
    %1763 = vmatpush1.bf16.msra.mxu0 0
    %1764 = vmatprep.subr.bf16.mxu0 0
    %1765 = vmatpush1.bf16.msra.mxu0 0
    %1766 = vmatprep.subr.bf16.mxu0 0
    %1767 = vmatpush1.bf16.msra.mxu0 0
    %1768 = vmatprep.subr.bf16.mxu0 0
    %1769 = vmatpush1.bf16.msra.mxu0 0
    %1770 = vmatprep.subr.bf16.mxu0 0
    %1771 = vmatpush1.bf16.msra.mxu0 0
    %1772 = vmatprep.subr.bf16.mxu0 0
    %1773 = vmatpush1.bf16.msra.mxu0 0
    %1774 = vmatprep.mubr.bf16.mxu0 0
    %1775 = vmatmul.mubr.bf16.gmra.mrb[0].mxu0 %v1289
    %v1776 = vpop.f32.mrb[0].mxu0
    %v1777 = vadd.f32 0.0, %v1776
    %v1778 = vpop.f32.mrb[0].mxu0
    %v1779 = vadd.f32 0.0, %v1778
    %v1780 = vpop.f32.mrb[0].mxu0
    %v1781 = vpop.f32.mrb[0].mxu0
    %1782 = vdwg.mxu0
    %1783 = vmatprep.subr.bf16.mxu0 %v896
    %1784 = vmatpush1.bf16.msra.mxu0 %v895
    %1785 = vmatprep.subr.bf16.mxu0 0
    %1786 = vmatpush1.bf16.msra.mxu0 0
    %1787 = vmatprep.subr.bf16.mxu0 0
    %1788 = vmatpush1.bf16.msra.mxu0 0
    %1789 = vmatprep.subr.bf16.mxu0 0
    %1790 = vmatpush1.bf16.msra.mxu0 0
    %1791 = vmatprep.subr.bf16.mxu0 0
    %1792 = vmatpush1.bf16.msra.mxu0 0
    %1793 = vmatprep.subr.bf16.mxu0 0
    %1794 = vmatpush1.bf16.msra.mxu0 0
    %1795 = vmatprep.subr.bf16.mxu0 0
    %1796 = vmatpush1.bf16.msra.mxu0 0
    %1797 = vmatprep.subr.bf16.mxu0 0
    %1798 = vmatpush1.bf16.msra.mxu0 0
    %1799 = vmatprep.subr.bf16.mxu0 0
    %1800 = vmatpush1.bf16.msra.mxu0 0
    %1801 = vmatprep.subr.bf16.mxu0 0
    %1802 = vmatpush1.bf16.msra.mxu0 0
    %1803 = vmatprep.subr.bf16.mxu0 0
    %1804 = vmatpush1.bf16.msra.mxu0 0
    %1805 = vmatprep.subr.bf16.mxu0 0
    %1806 = vmatpush1.bf16.msra.mxu0 0
    %1807 = vmatprep.subr.bf16.mxu0 0
    %1808 = vmatpush1.bf16.msra.mxu0 0
    %1809 = vmatprep.subr.bf16.mxu0 0
    %1810 = vmatpush1.bf16.msra.mxu0 0
    %1811 = vmatprep.subr.bf16.mxu0 0
    %1812 = vmatpush1.bf16.msra.mxu0 0
    %1813 = vmatprep.subr.bf16.mxu0 0
    %1814 = vmatpush1.bf16.msra.mxu0 0
    %1815 = vmatprep.mubr.bf16.mxu0 0
    %1816 = vmatmul.mubr.bf16.gmra.mrb[0].mxu0 %v1289
    %v1817 = vpop.f32.mrb[0].mxu0
    %v1818 = vadd.f32 0.0, %v1817
    %v1819 = vpop.f32.mrb[0].mxu0
    %v1820 = vadd.f32 0.0, %v1819
    %v1821 = vpop.f32.mrb[0].mxu0
    %v1822 = vpop.f32.mrb[0].mxu0
    %1823 = vdwg.mxu0
    %1824 = vmatprep.subr.bf16.mxu0 %v898
    %1825 = vmatpush1.bf16.msra.mxu0 %v897
    %1826 = vmatprep.subr.bf16.mxu0 0
    %1827 = vmatpush1.bf16.msra.mxu0 0
    %1828 = vmatprep.subr.bf16.mxu0 0
    %1829 = vmatpush1.bf16.msra.mxu0 0
    %1830 = vmatprep.subr.bf16.mxu0 0
    %1831 = vmatpush1.bf16.msra.mxu0 0
    %1832 = vmatprep.subr.bf16.mxu0 0
    %1833 = vmatpush1.bf16.msra.mxu0 0
    %1834 = vmatprep.subr.bf16.mxu0 0
    %1835 = vmatpush1.bf16.msra.mxu0 0
    %1836 = vmatprep.subr.bf16.mxu0 0
    %1837 = vmatpush1.bf16.msra.mxu0 0
    %1838 = vmatprep.subr.bf16.mxu0 0
    %1839 = vmatpush1.bf16.msra.mxu0 0
    %1840 = vmatprep.subr.bf16.mxu0 0
    %1841 = vmatpush1.bf16.msra.mxu0 0
    %1842 = vmatprep.subr.bf16.mxu0 0
    %1843 = vmatpush1.bf16.msra.mxu0 0
    %1844 = vmatprep.subr.bf16.mxu0 0
    %1845 = vmatpush1.bf16.msra.mxu0 0
    %1846 = vmatprep.subr.bf16.mxu0 0
    %1847 = vmatpush1.bf16.msra.mxu0 0
    %1848 = vmatprep.subr.bf16.mxu0 0
    %1849 = vmatpush1.bf16.msra.mxu0 0
    %1850 = vmatprep.subr.bf16.mxu0 0
    %1851 = vmatpush1.bf16.msra.mxu0 0
    %1852 = vmatprep.subr.bf16.mxu0 0
    %1853 = vmatpush1.bf16.msra.mxu0 0
    %1854 = vmatprep.subr.bf16.mxu0 0
    %1855 = vmatpush1.bf16.msra.mxu0 0
    %1856 = vmatprep.mubr.bf16.mxu0 0
    %1857 = vmatmul.mubr.bf16.gmra.mrb[0].mxu0 %v1289
    %v1858 = vpop.f32.mrb[0].mxu0
    %v1859 = vadd.f32 0.0, %v1858
    %v1860 = vpop.f32.mrb[0].mxu0
    %v1861 = vadd.f32 0.0, %v1860
    %v1862 = vpop.f32.mrb[0].mxu0
    %v1863 = vpop.f32.mrb[0].mxu0
    %1864 = vdwg.mxu0
    %1865 = vmatprep.subr.bf16.mxu0 %v900
    %1866 = vmatpush1.bf16.msra.mxu0 %v899
    %1867 = vmatprep.subr.bf16.mxu0 0
    %1868 = vmatpush1.bf16.msra.mxu0 0
    %1869 = vmatprep.subr.bf16.mxu0 0
    %1870 = vmatpush1.bf16.msra.mxu0 0
    %1871 = vmatprep.subr.bf16.mxu0 0
    %1872 = vmatpush1.bf16.msra.mxu0 0
    %1873 = vmatprep.subr.bf16.mxu0 0
    %1874 = vmatpush1.bf16.msra.mxu0 0
    %1875 = vmatprep.subr.bf16.mxu0 0
    %1876 = vmatpush1.bf16.msra.mxu0 0
    %1877 = vmatprep.subr.bf16.mxu0 0
    %1878 = vmatpush1.bf16.msra.mxu0 0
    %1879 = vmatprep.subr.bf16.mxu0 0
    %1880 = vmatpush1.bf16.msra.mxu0 0
    %1881 = vmatprep.subr.bf16.mxu0 0
    %1882 = vmatpush1.bf16.msra.mxu0 0
    %1883 = vmatprep.subr.bf16.mxu0 0
    %1884 = vmatpush1.bf16.msra.mxu0 0
    %1885 = vmatprep.subr.bf16.mxu0 0
    %1886 = vmatpush1.bf16.msra.mxu0 0
    %1887 = vmatprep.subr.bf16.mxu0 0
    %1888 = vmatpush1.bf16.msra.mxu0 0
    %1889 = vmatprep.subr.bf16.mxu0 0
    %1890 = vmatpush1.bf16.msra.mxu0 0
    %1891 = vmatprep.subr.bf16.mxu0 0
    %1892 = vmatpush1.bf16.msra.mxu0 0
    %1893 = vmatprep.subr.bf16.mxu0 0
    %1894 = vmatpush1.bf16.msra.mxu0 0
    %1895 = vmatprep.subr.bf16.mxu0 0
    %1896 = vmatpush1.bf16.msra.mxu0 0
    %1897 = vmatprep.mubr.bf16.mxu0 0
    %1898 = vmatmul.mubr.bf16.gmra.mrb[0].mxu0 %v1289
    %v1899 = vpop.f32.mrb[0].mxu0
    %v1900 = vadd.f32 0.0, %v1899
    %v1901 = vpop.f32.mrb[0].mxu0
    %v1902 = vadd.f32 0.0, %v1901
    %v1903 = vpop.f32.mrb[0].mxu0
    %v1904 = vpop.f32.mrb[0].mxu0
    %1905 = vdwg.mxu0
    %1906 = vmatprep.subr.bf16.mxu0 %v902
    %1907 = vmatpush1.bf16.msra.mxu0 %v901
    %1908 = vmatprep.subr.bf16.mxu0 0
    %1909 = vmatpush1.bf16.msra.mxu0 0
    %1910 = vmatprep.subr.bf16.mxu0 0
    %1911 = vmatpush1.bf16.msra.mxu0 0
    %1912 = vmatprep.subr.bf16.mxu0 0
    %1913 = vmatpush1.bf16.msra.mxu0 0
    %1914 = vmatprep.subr.bf16.mxu0 0
    %1915 = vmatpush1.bf16.msra.mxu0 0
    %1916 = vmatprep.subr.bf16.mxu0 0
    %1917 = vmatpush1.bf16.msra.mxu0 0
    %1918 = vmatprep.subr.bf16.mxu0 0
    %1919 = vmatpush1.bf16.msra.mxu0 0
    %1920 = vmatprep.subr.bf16.mxu0 0
    %1921 = vmatpush1.bf16.msra.mxu0 0
    %1922 = vmatprep.subr.bf16.mxu0 0
    %1923 = vmatpush1.bf16.msra.mxu0 0
    %1924 = vmatprep.subr.bf16.mxu0 0
    %1925 = vmatpush1.bf16.msra.mxu0 0
    %1926 = vmatprep.subr.bf16.mxu0 0
    %1927 = vmatpush1.bf16.msra.mxu0 0
    %1928 = vmatprep.subr.bf16.mxu0 0
    %1929 = vmatpush1.bf16.msra.mxu0 0
    %1930 = vmatprep.subr.bf16.mxu0 0
    %1931 = vmatpush1.bf16.msra.mxu0 0
    %1932 = vmatprep.subr.bf16.mxu0 0
    %1933 = vmatpush1.bf16.msra.mxu0 0
    %1934 = vmatprep.subr.bf16.mxu0 0
    %1935 = vmatpush1.bf16.msra.mxu0 0
    %1936 = vmatprep.subr.bf16.mxu0 0
    %1937 = vmatpush1.bf16.msra.mxu0 0
    %1938 = vmatprep.mubr.bf16.mxu0 0
    %1939 = vmatmul.mubr.bf16.gmra.mrb[0].mxu0 %v1289
    %v1940 = vpop.f32.mrb[0].mxu0
    %v1941 = vadd.f32 0.0, %v1940
    %v1942 = vpop.f32.mrb[0].mxu0
    %v1943 = vadd.f32 0.0, %v1942
    %v1944 = vpop.f32.mrb[0].mxu0
    %v1945 = vpop.f32.mrb[0].mxu0
    %1946 = vdwg.mxu0
    %1947 = vmatprep.subr.bf16.mxu0 %v904
    %1948 = vmatpush1.bf16.msra.mxu0 %v903
    %1949 = vmatprep.subr.bf16.mxu0 0
    %1950 = vmatpush1.bf16.msra.mxu0 0
    %1951 = vmatprep.subr.bf16.mxu0 0
    %1952 = vmatpush1.bf16.msra.mxu0 0
    %1953 = vmatprep.subr.bf16.mxu0 0
    %1954 = vmatpush1.bf16.msra.mxu0 0
    %1955 = vmatprep.subr.bf16.mxu0 0
    %1956 = vmatpush1.bf16.msra.mxu0 0
    %1957 = vmatprep.subr.bf16.mxu0 0
    %1958 = vmatpush1.bf16.msra.mxu0 0
    %1959 = vmatprep.subr.bf16.mxu0 0
    %1960 = vmatpush1.bf16.msra.mxu0 0
    %1961 = vmatprep.subr.bf16.mxu0 0
    %1962 = vmatpush1.bf16.msra.mxu0 0
    %1963 = vmatprep.subr.bf16.mxu0 0
    %1964 = vmatpush1.bf16.msra.mxu0 0
    %1965 = vmatprep.subr.bf16.mxu0 0
    %1966 = vmatpush1.bf16.msra.mxu0 0
    %1967 = vmatprep.subr.bf16.mxu0 0
    %1968 = vmatpush1.bf16.msra.mxu0 0
    %1969 = vmatprep.subr.bf16.mxu0 0
    %1970 = vmatpush1.bf16.msra.mxu0 0
    %1971 = vmatprep.subr.bf16.mxu0 0
    %1972 = vmatpush1.bf16.msra.mxu0 0
    %1973 = vmatprep.subr.bf16.mxu0 0
    %1974 = vmatpush1.bf16.msra.mxu0 0
    %1975 = vmatprep.subr.bf16.mxu0 0
    %1976 = vmatpush1.bf16.msra.mxu0 0
    %1977 = vmatprep.subr.bf16.mxu0 0
    %1978 = vmatpush1.bf16.msra.mxu0 0
    %1979 = vmatprep.mubr.bf16.mxu0 0
    %1980 = vmatmul.mubr.bf16.gmra.mrb[0].mxu0 %v1289
    %v1981 = vpop.f32.mrb[0].mxu0
    %v1982 = vadd.f32 0.0, %v1981
    %v1983 = vpop.f32.mrb[0].mxu0
    %v1984 = vadd.f32 0.0, %v1983
    %v1985 = vpop.f32.mrb[0].mxu0
    %v1986 = vpop.f32.mrb[0].mxu0
    %1987 = vdwg.mxu0
    %1988 = vmatprep.subr.bf16.mxu0 %v906
    %1989 = vmatpush1.bf16.msra.mxu0 %v905
    %1990 = vmatprep.subr.bf16.mxu0 0
    %1991 = vmatpush1.bf16.msra.mxu0 0
    %1992 = vmatprep.subr.bf16.mxu0 0
    %1993 = vmatpush1.bf16.msra.mxu0 0
    %1994 = vmatprep.subr.bf16.mxu0 0
    %1995 = vmatpush1.bf16.msra.mxu0 0
    %1996 = vmatprep.subr.bf16.mxu0 0
    %1997 = vmatpush1.bf16.msra.mxu0 0
    %1998 = vmatprep.subr.bf16.mxu0 0
    %1999 = vmatpush1.bf16.msra.mxu0 0
    %2000 = vmatprep.subr.bf16.mxu0 0
    %2001 = vmatpush1.bf16.msra.mxu0 0
    %2002 = vmatprep.subr.bf16.mxu0 0
    %2003 = vmatpush1.bf16.msra.mxu0 0
    %2004 = vmatprep.subr.bf16.mxu0 0
    %2005 = vmatpush1.bf16.msra.mxu0 0
    %2006 = vmatprep.subr.bf16.mxu0 0
    %2007 = vmatpush1.bf16.msra.mxu0 0
    %2008 = vmatprep.subr.bf16.mxu0 0
    %2009 = vmatpush1.bf16.msra.mxu0 0
    %2010 = vmatprep.subr.bf16.mxu0 0
    %2011 = vmatpush1.bf16.msra.mxu0 0
    %2012 = vmatprep.subr.bf16.mxu0 0
    %2013 = vmatpush1.bf16.msra.mxu0 0
    %2014 = vmatprep.subr.bf16.mxu0 0
    %2015 = vmatpush1.bf16.msra.mxu0 0
    %2016 = vmatprep.subr.bf16.mxu0 0
    %2017 = vmatpush1.bf16.msra.mxu0 0
    %2018 = vmatprep.subr.bf16.mxu0 0
    %2019 = vmatpush1.bf16.msra.mxu0 0
    %2020 = vmatprep.mubr.bf16.mxu0 0
    %2021 = vmatmul.mubr.bf16.gmra.mrb[0].mxu0 %v1289
    %v2022 = vpop.f32.mrb[0].mxu0
    %v2023 = vadd.f32 0.0, %v2022
    %v2024 = vpop.f32.mrb[0].mxu0
    %v2025 = vadd.f32 0.0, %v2024
    %v2026 = vpop.f32.mrb[0].mxu0
    %v2027 = vpop.f32.mrb[0].mxu0
    %2028 = vdwg.mxu0
    %2029 = vmatprep.subr.bf16.mxu0 %v908
    %2030 = vmatpush1.bf16.msra.mxu0 %v907
    %2031 = vmatprep.subr.bf16.mxu0 0
    %2032 = vmatpush1.bf16.msra.mxu0 0
    %2033 = vmatprep.subr.bf16.mxu0 0
    %2034 = vmatpush1.bf16.msra.mxu0 0
    %2035 = vmatprep.subr.bf16.mxu0 0
    %2036 = vmatpush1.bf16.msra.mxu0 0
    %2037 = vmatprep.subr.bf16.mxu0 0
    %2038 = vmatpush1.bf16.msra.mxu0 0
    %2039 = vmatprep.subr.bf16.mxu0 0
    %2040 = vmatpush1.bf16.msra.mxu0 0
    %2041 = vmatprep.subr.bf16.mxu0 0
    %2042 = vmatpush1.bf16.msra.mxu0 0
    %2043 = vmatprep.subr.bf16.mxu0 0
    %2044 = vmatpush1.bf16.msra.mxu0 0
    %2045 = vmatprep.subr.bf16.mxu0 0
    %2046 = vmatpush1.bf16.msra.mxu0 0
    %2047 = vmatprep.subr.bf16.mxu0 0
    %2048 = vmatpush1.bf16.msra.mxu0 0
    %2049 = vmatprep.subr.bf16.mxu0 0
    %2050 = vmatpush1.bf16.msra.mxu0 0
    %2051 = vmatprep.subr.bf16.mxu0 0
    %2052 = vmatpush1.bf16.msra.mxu0 0
    %2053 = vmatprep.subr.bf16.mxu0 0
    %2054 = vmatpush1.bf16.msra.mxu0 0
    %2055 = vmatprep.subr.bf16.mxu0 0
    %2056 = vmatpush1.bf16.msra.mxu0 0
    %2057 = vmatprep.subr.bf16.mxu0 0
    %2058 = vmatpush1.bf16.msra.mxu0 0
    %2059 = vmatprep.subr.bf16.mxu0 0
    %2060 = vmatpush1.bf16.msra.mxu0 0
    %2061 = vmatprep.mubr.bf16.mxu0 0
    %2062 = vmatmul.mubr.bf16.gmra.mrb[0].mxu0 %v1289
    %v2063 = vpop.f32.mrb[0].mxu0
    %v2064 = vadd.f32 0.0, %v2063
    %v2065 = vpop.f32.mrb[0].mxu0
    %v2066 = vadd.f32 0.0, %v2065
    %v2067 = vpop.f32.mrb[0].mxu0
    %v2068 = vpop.f32.mrb[0].mxu0
    %2069 = vdwg.mxu0
    %2070 = vmatprep.subr.bf16.mxu0 %v910
    %2071 = vmatpush1.bf16.msra.mxu0 %v909
    %2072 = vmatprep.subr.bf16.mxu0 0
    %2073 = vmatpush1.bf16.msra.mxu0 0
    %2074 = vmatprep.subr.bf16.mxu0 0
    %2075 = vmatpush1.bf16.msra.mxu0 0
    %2076 = vmatprep.subr.bf16.mxu0 0
    %2077 = vmatpush1.bf16.msra.mxu0 0
    %2078 = vmatprep.subr.bf16.mxu0 0
    %2079 = vmatpush1.bf16.msra.mxu0 0
    %2080 = vmatprep.subr.bf16.mxu0 0
    %2081 = vmatpush1.bf16.msra.mxu0 0
    %2082 = vmatprep.subr.bf16.mxu0 0
    %2083 = vmatpush1.bf16.msra.mxu0 0
    %2084 = vmatprep.subr.bf16.mxu0 0
    %2085 = vmatpush1.bf16.msra.mxu0 0
    %2086 = vmatprep.subr.bf16.mxu0 0
    %2087 = vmatpush1.bf16.msra.mxu0 0
    %2088 = vmatprep.subr.bf16.mxu0 0
    %2089 = vmatpush1.bf16.msra.mxu0 0
    %2090 = vmatprep.subr.bf16.mxu0 0
    %2091 = vmatpush1.bf16.msra.mxu0 0
    %2092 = vmatprep.subr.bf16.mxu0 0
    %2093 = vmatpush1.bf16.msra.mxu0 0
    %2094 = vmatprep.subr.bf16.mxu0 0
    %2095 = vmatpush1.bf16.msra.mxu0 0
    %2096 = vmatprep.subr.bf16.mxu0 0
    %2097 = vmatpush1.bf16.msra.mxu0 0
    %2098 = vmatprep.subr.bf16.mxu0 0
    %2099 = vmatpush1.bf16.msra.mxu0 0
    %2100 = vmatprep.subr.bf16.mxu0 0
    %2101 = vmatpush1.bf16.msra.mxu0 0
    %2102 = vmatprep.mubr.bf16.mxu0 0
    %2103 = vmatmul.mubr.bf16.gmra.mrb[0].mxu0 %v1289
    %v2104 = vpop.f32.mrb[0].mxu0
    %v2105 = vadd.f32 0.0, %v2104
    %v2106 = vpop.f32.mrb[0].mxu0
    %v2107 = vadd.f32 0.0, %v2106
    %v2108 = vpop.f32.mrb[0].mxu0
    %v2109 = vpop.f32.mrb[0].mxu0
    %2110 = vdwg.mxu0
    %2111 = vmatprep.subr.bf16.mxu0 %v912
    %2112 = vmatpush1.bf16.msra.mxu0 %v911
    %2113 = vmatprep.subr.bf16.mxu0 0
    %2114 = vmatpush1.bf16.msra.mxu0 0
    %2115 = vmatprep.subr.bf16.mxu0 0
    %2116 = vmatpush1.bf16.msra.mxu0 0
    %2117 = vmatprep.subr.bf16.mxu0 0
    %2118 = vmatpush1.bf16.msra.mxu0 0
    %2119 = vmatprep.subr.bf16.mxu0 0
    %2120 = vmatpush1.bf16.msra.mxu0 0
    %2121 = vmatprep.subr.bf16.mxu0 0
    %2122 = vmatpush1.bf16.msra.mxu0 0
    %2123 = vmatprep.subr.bf16.mxu0 0
    %2124 = vmatpush1.bf16.msra.mxu0 0
    %2125 = vmatprep.subr.bf16.mxu0 0
    %2126 = vmatpush1.bf16.msra.mxu0 0
    %2127 = vmatprep.subr.bf16.mxu0 0
    %2128 = vmatpush1.bf16.msra.mxu0 0
    %2129 = vmatprep.subr.bf16.mxu0 0
    %2130 = vmatpush1.bf16.msra.mxu0 0
    %2131 = vmatprep.subr.bf16.mxu0 0
    %2132 = vmatpush1.bf16.msra.mxu0 0
    %2133 = vmatprep.subr.bf16.mxu0 0
    %2134 = vmatpush1.bf16.msra.mxu0 0
    %2135 = vmatprep.subr.bf16.mxu0 0
    %2136 = vmatpush1.bf16.msra.mxu0 0
    %2137 = vmatprep.subr.bf16.mxu0 0
    %2138 = vmatpush1.bf16.msra.mxu0 0
    %2139 = vmatprep.subr.bf16.mxu0 0
    %2140 = vmatpush1.bf16.msra.mxu0 0
    %2141 = vmatprep.subr.bf16.mxu0 0
    %2142 = vmatpush1.bf16.msra.mxu0 0
    %2143 = vmatprep.mubr.bf16.mxu0 0
    %2144 = vmatmul.mubr.bf16.gmra.mrb[0].mxu0 %v1289
    %v2145 = vpop.f32.mrb[0].mxu0
    %v2146 = vadd.f32 0.0, %v2145
    %v2147 = vpop.f32.mrb[0].mxu0
    %v2148 = vadd.f32 0.0, %v2147
    %v2149 = vpop.f32.mrb[0].mxu0
    %v2150 = vpop.f32.mrb[0].mxu0
    %2151 = vdwg.mxu0
    %2152 = vmatprep.subr.bf16.mxu0 %v914
    %2153 = vmatpush1.bf16.msra.mxu0 %v913
    %2154 = vmatprep.subr.bf16.mxu0 0
    %2155 = vmatpush1.bf16.msra.mxu0 0
    %2156 = vmatprep.subr.bf16.mxu0 0
    %2157 = vmatpush1.bf16.msra.mxu0 0
    %2158 = vmatprep.subr.bf16.mxu0 0
    %2159 = vmatpush1.bf16.msra.mxu0 0
    %2160 = vmatprep.subr.bf16.mxu0 0
    %2161 = vmatpush1.bf16.msra.mxu0 0
    %2162 = vmatprep.subr.bf16.mxu0 0
    %2163 = vmatpush1.bf16.msra.mxu0 0
    %2164 = vmatprep.subr.bf16.mxu0 0
    %2165 = vmatpush1.bf16.msra.mxu0 0
    %2166 = vmatprep.subr.bf16.mxu0 0
    %2167 = vmatpush1.bf16.msra.mxu0 0
    %2168 = vmatprep.subr.bf16.mxu0 0
    %2169 = vmatpush1.bf16.msra.mxu0 0
    %2170 = vmatprep.subr.bf16.mxu0 0
    %2171 = vmatpush1.bf16.msra.mxu0 0
    %2172 = vmatprep.subr.bf16.mxu0 0
    %2173 = vmatpush1.bf16.msra.mxu0 0
    %2174 = vmatprep.subr.bf16.mxu0 0
    %2175 = vmatpush1.bf16.msra.mxu0 0
    %2176 = vmatprep.subr.bf16.mxu0 0
    %2177 = vmatpush1.bf16.msra.mxu0 0
    %2178 = vmatprep.subr.bf16.mxu0 0
    %2179 = vmatpush1.bf16.msra.mxu0 0
    %2180 = vmatprep.subr.bf16.mxu0 0
    %2181 = vmatpush1.bf16.msra.mxu0 0
    %2182 = vmatprep.subr.bf16.mxu0 0
    %2183 = vmatpush1.bf16.msra.mxu0 0
    %2184 = vmatprep.mubr.bf16.mxu0 0
    %2185 = vmatmul.mubr.bf16.gmra.mrb[0].mxu0 %v1289
    %v2186 = vpop.f32.mrb[0].mxu0
    %v2187 = vadd.f32 0.0, %v2186
    %v2188 = vpop.f32.mrb[0].mxu0
    %v2189 = vadd.f32 0.0, %v2188
    %v2190 = vpop.f32.mrb[0].mxu0
    %v2191 = vpop.f32.mrb[0].mxu0
    %2192 = vdwg.mxu0
    %2193 = vmatprep.subr.bf16.mxu0 %v916
    %2194 = vmatpush1.bf16.msra.mxu0 %v915
    %2195 = vmatprep.subr.bf16.mxu0 0
    %2196 = vmatpush1.bf16.msra.mxu0 0
    %2197 = vmatprep.subr.bf16.mxu0 0
    %2198 = vmatpush1.bf16.msra.mxu0 0
    %2199 = vmatprep.subr.bf16.mxu0 0
    %2200 = vmatpush1.bf16.msra.mxu0 0
    %2201 = vmatprep.subr.bf16.mxu0 0
    %2202 = vmatpush1.bf16.msra.mxu0 0
    %2203 = vmatprep.subr.bf16.mxu0 0
    %2204 = vmatpush1.bf16.msra.mxu0 0
    %2205 = vmatprep.subr.bf16.mxu0 0
    %2206 = vmatpush1.bf16.msra.mxu0 0
    %2207 = vmatprep.subr.bf16.mxu0 0
    %2208 = vmatpush1.bf16.msra.mxu0 0
    %2209 = vmatprep.subr.bf16.mxu0 0
    %2210 = vmatpush1.bf16.msra.mxu0 0
    %2211 = vmatprep.subr.bf16.mxu0 0
    %2212 = vmatpush1.bf16.msra.mxu0 0
    %2213 = vmatprep.subr.bf16.mxu0 0
    %2214 = vmatpush1.bf16.msra.mxu0 0
    %2215 = vmatprep.subr.bf16.mxu0 0
    %2216 = vmatpush1.bf16.msra.mxu0 0
    %2217 = vmatprep.subr.bf16.mxu0 0
    %2218 = vmatpush1.bf16.msra.mxu0 0
    %2219 = vmatprep.subr.bf16.mxu0 0
    %2220 = vmatpush1.bf16.msra.mxu0 0
    %2221 = vmatprep.subr.bf16.mxu0 0
    %2222 = vmatpush1.bf16.msra.mxu0 0
    %2223 = vmatprep.subr.bf16.mxu0 0
    %2224 = vmatpush1.bf16.msra.mxu0 0
    %2225 = vmatprep.mubr.bf16.mxu0 0
    %2226 = vmatmul.mubr.bf16.gmra.mrb[0].mxu0 %v1289
    %v2227 = vpop.f32.mrb[0].mxu0
    %v2228 = vadd.f32 0.0, %v2227
    %v2229 = vpop.f32.mrb[0].mxu0
    %v2230 = vadd.f32 0.0, %v2229
    %v2231 = vpop.f32.mrb[0].mxu0
    %v2232 = vpop.f32.mrb[0].mxu0
    %2233 = vdwg.mxu0
    %2234 = vmatprep.subr.bf16.mxu0 %v918
    %2235 = vmatpush1.bf16.msra.mxu0 %v917
    %2236 = vmatprep.subr.bf16.mxu0 0
    %2237 = vmatpush1.bf16.msra.mxu0 0
    %2238 = vmatprep.subr.bf16.mxu0 0
    %2239 = vmatpush1.bf16.msra.mxu0 0
    %2240 = vmatprep.subr.bf16.mxu0 0
    %2241 = vmatpush1.bf16.msra.mxu0 0
    %2242 = vmatprep.subr.bf16.mxu0 0
    %2243 = vmatpush1.bf16.msra.mxu0 0
    %2244 = vmatprep.subr.bf16.mxu0 0
    %2245 = vmatpush1.bf16.msra.mxu0 0
    %2246 = vmatprep.subr.bf16.mxu0 0
    %2247 = vmatpush1.bf16.msra.mxu0 0
    %2248 = vmatprep.subr.bf16.mxu0 0
    %2249 = vmatpush1.bf16.msra.mxu0 0
    %2250 = vmatprep.subr.bf16.mxu0 0
    %2251 = vmatpush1.bf16.msra.mxu0 0
    %2252 = vmatprep.subr.bf16.mxu0 0
    %2253 = vmatpush1.bf16.msra.mxu0 0
    %2254 = vmatprep.subr.bf16.mxu0 0
    %2255 = vmatpush1.bf16.msra.mxu0 0
    %2256 = vmatprep.subr.bf16.mxu0 0
    %2257 = vmatpush1.bf16.msra.mxu0 0
    %2258 = vmatprep.subr.bf16.mxu0 0
    %2259 = vmatpush1.bf16.msra.mxu0 0
    %2260 = vmatprep.subr.bf16.mxu0 0
    %2261 = vmatpush1.bf16.msra.mxu0 0
    %2262 = vmatprep.subr.bf16.mxu0 0
    %2263 = vmatpush1.bf16.msra.mxu0 0
    %2264 = vmatprep.subr.bf16.mxu0 0
    %2265 = vmatpush1.bf16.msra.mxu0 0
    %2266 = vmatprep.mubr.bf16.mxu0 0
    %2267 = vmatmul.mubr.bf16.gmra.mrb[0].mxu0 %v1289
    %v2268 = vpop.f32.mrb[0].mxu0
    %v2269 = vadd.f32 0.0, %v2268
    %v2270 = vpop.f32.mrb[0].mxu0
    %v2271 = vadd.f32 0.0, %v2270
    %v2272 = vpop.f32.mrb[0].mxu0
    %v2273 = vpop.f32.mrb[0].mxu0
    %2274 = vdwg.mxu0
    %2275 = vmatprep.subr.bf16.mxu0 %v920
    %2276 = vmatpush1.bf16.msra.mxu0 %v919
    %2277 = vmatprep.subr.bf16.mxu0 0
    %2278 = vmatpush1.bf16.msra.mxu0 0
    %2279 = vmatprep.subr.bf16.mxu0 0
    %2280 = vmatpush1.bf16.msra.mxu0 0
    %2281 = vmatprep.subr.bf16.mxu0 0
    %2282 = vmatpush1.bf16.msra.mxu0 0
    %2283 = vmatprep.subr.bf16.mxu0 0
    %2284 = vmatpush1.bf16.msra.mxu0 0
    %2285 = vmatprep.subr.bf16.mxu0 0
    %2286 = vmatpush1.bf16.msra.mxu0 0
    %2287 = vmatprep.subr.bf16.mxu0 0
    %2288 = vmatpush1.bf16.msra.mxu0 0
    %2289 = vmatprep.subr.bf16.mxu0 0
    %2290 = vmatpush1.bf16.msra.mxu0 0
    %2291 = vmatprep.subr.bf16.mxu0 0
    %2292 = vmatpush1.bf16.msra.mxu0 0
    %2293 = vmatprep.subr.bf16.mxu0 0
    %2294 = vmatpush1.bf16.msra.mxu0 0
    %2295 = vmatprep.subr.bf16.mxu0 0
    %2296 = vmatpush1.bf16.msra.mxu0 0
    %2297 = vmatprep.subr.bf16.mxu0 0
    %2298 = vmatpush1.bf16.msra.mxu0 0
    %2299 = vmatprep.subr.bf16.mxu0 0
    %2300 = vmatpush1.bf16.msra.mxu0 0
    %2301 = vmatprep.subr.bf16.mxu0 0
    %2302 = vmatpush1.bf16.msra.mxu0 0
    %2303 = vmatprep.subr.bf16.mxu0 0
    %2304 = vmatpush1.bf16.msra.mxu0 0
    %2305 = vmatprep.subr.bf16.mxu0 0
    %2306 = vmatpush1.bf16.msra.mxu0 0
    %2307 = vmatprep.mubr.bf16.mxu0 0
    %2308 = vmatmul.mubr.bf16.gmra.mrb[0].mxu0 %v1289
    %v2309 = vpop.f32.mrb[0].mxu0
    %v2310 = vadd.f32 0.0, %v2309
    %v2311 = vpop.f32.mrb[0].mxu0
    %v2312 = vadd.f32 0.0, %v2311
    %v2313 = vpop.f32.mrb[0].mxu0
    %v2314 = vpop.f32.mrb[0].mxu0
    %2315 = vdwg.mxu0
    %2316 = vmatprep.subr.bf16.mxu0 %v922
    %2317 = vmatpush1.bf16.msra.mxu0 %v921
    %2318 = vmatprep.subr.bf16.mxu0 0
    %2319 = vmatpush1.bf16.msra.mxu0 0
    %2320 = vmatprep.subr.bf16.mxu0 0
    %2321 = vmatpush1.bf16.msra.mxu0 0
    %2322 = vmatprep.subr.bf16.mxu0 0
    %2323 = vmatpush1.bf16.msra.mxu0 0
    %2324 = vmatprep.subr.bf16.mxu0 0
    %2325 = vmatpush1.bf16.msra.mxu0 0
    %2326 = vmatprep.subr.bf16.mxu0 0
    %2327 = vmatpush1.bf16.msra.mxu0 0
    %2328 = vmatprep.subr.bf16.mxu0 0
    %2329 = vmatpush1.bf16.msra.mxu0 0
    %2330 = vmatprep.subr.bf16.mxu0 0
    %2331 = vmatpush1.bf16.msra.mxu0 0
    %2332 = vmatprep.subr.bf16.mxu0 0
    %2333 = vmatpush1.bf16.msra.mxu0 0
    %2334 = vmatprep.subr.bf16.mxu0 0
    %2335 = vmatpush1.bf16.msra.mxu0 0
    %2336 = vmatprep.subr.bf16.mxu0 0
    %2337 = vmatpush1.bf16.msra.mxu0 0
    %2338 = vmatprep.subr.bf16.mxu0 0
    %2339 = vmatpush1.bf16.msra.mxu0 0
    %2340 = vmatprep.subr.bf16.mxu0 0
    %2341 = vmatpush1.bf16.msra.mxu0 0
    %2342 = vmatprep.subr.bf16.mxu0 0
    %2343 = vmatpush1.bf16.msra.mxu0 0
    %2344 = vmatprep.subr.bf16.mxu0 0
    %2345 = vmatpush1.bf16.msra.mxu0 0
    %2346 = vmatprep.subr.bf16.mxu0 0
    %2347 = vmatpush1.bf16.msra.mxu0 0
    %2348 = vmatprep.mubr.bf16.mxu0 0
    %2349 = vmatmul.mubr.bf16.gmra.mrb[0].mxu0 %v1289
    %v2350 = vpop.f32.mrb[0].mxu0
    %v2351 = vadd.f32 0.0, %v2350
    %v2352 = vpop.f32.mrb[0].mxu0
    %v2353 = vadd.f32 0.0, %v2352
    %v2354 = vpop.f32.mrb[0].mxu0
    %v2355 = vpop.f32.mrb[0].mxu0
    %2356 = vdwg.mxu0
    %2357 = vmatprep.subr.bf16.mxu0 %v924
    %2358 = vmatpush1.bf16.msra.mxu0 %v923
    %2359 = vmatprep.subr.bf16.mxu0 0
    %2360 = vmatpush1.bf16.msra.mxu0 0
    %2361 = vmatprep.subr.bf16.mxu0 0
    %2362 = vmatpush1.bf16.msra.mxu0 0
    %2363 = vmatprep.subr.bf16.mxu0 0
    %2364 = vmatpush1.bf16.msra.mxu0 0
    %2365 = vmatprep.subr.bf16.mxu0 0
    %2366 = vmatpush1.bf16.msra.mxu0 0
    %2367 = vmatprep.subr.bf16.mxu0 0
    %2368 = vmatpush1.bf16.msra.mxu0 0
    %2369 = vmatprep.subr.bf16.mxu0 0
    %2370 = vmatpush1.bf16.msra.mxu0 0
    %2371 = vmatprep.subr.bf16.mxu0 0
    %2372 = vmatpush1.bf16.msra.mxu0 0
    %2373 = vmatprep.subr.bf16.mxu0 0
    %2374 = vmatpush1.bf16.msra.mxu0 0
    %2375 = vmatprep.subr.bf16.mxu0 0
    %2376 = vmatpush1.bf16.msra.mxu0 0
    %2377 = vmatprep.subr.bf16.mxu0 0
    %2378 = vmatpush1.bf16.msra.mxu0 0
    %2379 = vmatprep.subr.bf16.mxu0 0
    %2380 = vmatpush1.bf16.msra.mxu0 0
    %2381 = vmatprep.subr.bf16.mxu0 0
    %2382 = vmatpush1.bf16.msra.mxu0 0
    %2383 = vmatprep.subr.bf16.mxu0 0
    %2384 = vmatpush1.bf16.msra.mxu0 0
    %2385 = vmatprep.subr.bf16.mxu0 0
    %2386 = vmatpush1.bf16.msra.mxu0 0
    %2387 = vmatprep.subr.bf16.mxu0 0
    %2388 = vmatpush1.bf16.msra.mxu0 0
    %2389 = vmatprep.mubr.bf16.mxu0 0
    %2390 = vmatmul.mubr.bf16.gmra.mrb[0].mxu0 %v1289
    %v2391 = vpop.f32.mrb[0].mxu0
    %v2392 = vadd.f32 0.0, %v2391
    %v2393 = vpop.f32.mrb[0].mxu0
    %v2394 = vadd.f32 0.0, %v2393
    %v2395 = vpop.f32.mrb[0].mxu0
    %v2396 = vpop.f32.mrb[0].mxu0
    %2397 = vdwg.mxu0
    %2398 = vmatprep.subr.bf16.mxu0 %v926
    %2399 = vmatpush1.bf16.msra.mxu0 %v925
    %2400 = vmatprep.subr.bf16.mxu0 0
    %2401 = vmatpush1.bf16.msra.mxu0 0
    %2402 = vmatprep.subr.bf16.mxu0 0
    %2403 = vmatpush1.bf16.msra.mxu0 0
    %2404 = vmatprep.subr.bf16.mxu0 0
    %2405 = vmatpush1.bf16.msra.mxu0 0
    %2406 = vmatprep.subr.bf16.mxu0 0
    %2407 = vmatpush1.bf16.msra.mxu0 0
    %2408 = vmatprep.subr.bf16.mxu0 0
    %2409 = vmatpush1.bf16.msra.mxu0 0
    %2410 = vmatprep.subr.bf16.mxu0 0
    %2411 = vmatpush1.bf16.msra.mxu0 0
    %2412 = vmatprep.subr.bf16.mxu0 0
    %2413 = vmatpush1.bf16.msra.mxu0 0
    %2414 = vmatprep.subr.bf16.mxu0 0
    %2415 = vmatpush1.bf16.msra.mxu0 0
    %2416 = vmatprep.subr.bf16.mxu0 0
    %2417 = vmatpush1.bf16.msra.mxu0 0
    %2418 = vmatprep.subr.bf16.mxu0 0
    %2419 = vmatpush1.bf16.msra.mxu0 0
    %2420 = vmatprep.subr.bf16.mxu0 0
    %2421 = vmatpush1.bf16.msra.mxu0 0
    %2422 = vmatprep.subr.bf16.mxu0 0
    %2423 = vmatpush1.bf16.msra.mxu0 0
    %2424 = vmatprep.subr.bf16.mxu0 0
    %2425 = vmatpush1.bf16.msra.mxu0 0
    %2426 = vmatprep.subr.bf16.mxu0 0
    %2427 = vmatpush1.bf16.msra.mxu0 0
    %2428 = vmatprep.subr.bf16.mxu0 0
    %2429 = vmatpush1.bf16.msra.mxu0 0
    %2430 = vmatprep.mubr.bf16.mxu0 0
    %2431 = vmatmul.mubr.bf16.gmra.mrb[0].mxu0 %v1289
    %v2432 = vpop.f32.mrb[0].mxu0
    %v2433 = vadd.f32 0.0, %v2432
    %v2434 = vpop.f32.mrb[0].mxu0
    %v2435 = vadd.f32 0.0, %v2434
    %v2436 = vpop.f32.mrb[0].mxu0
    %v2437 = vpop.f32.mrb[0].mxu0
    %2438 = vdwg.mxu0
    %2439 = vmatprep.subr.bf16.mxu0 %v928
    %2440 = vmatpush1.bf16.msra.mxu0 %v927
    %2441 = vmatprep.subr.bf16.mxu0 0
    %2442 = vmatpush1.bf16.msra.mxu0 0
    %2443 = vmatprep.subr.bf16.mxu0 0
    %2444 = vmatpush1.bf16.msra.mxu0 0
    %2445 = vmatprep.subr.bf16.mxu0 0
    %2446 = vmatpush1.bf16.msra.mxu0 0
    %2447 = vmatprep.subr.bf16.mxu0 0
    %2448 = vmatpush1.bf16.msra.mxu0 0
    %2449 = vmatprep.subr.bf16.mxu0 0
    %2450 = vmatpush1.bf16.msra.mxu0 0
    %2451 = vmatprep.subr.bf16.mxu0 0
    %2452 = vmatpush1.bf16.msra.mxu0 0
    %2453 = vmatprep.subr.bf16.mxu0 0
    %2454 = vmatpush1.bf16.msra.mxu0 0
    %2455 = vmatprep.subr.bf16.mxu0 0
    %2456 = vmatpush1.bf16.msra.mxu0 0
    %2457 = vmatprep.subr.bf16.mxu0 0
    %2458 = vmatpush1.bf16.msra.mxu0 0
    %2459 = vmatprep.subr.bf16.mxu0 0
    %2460 = vmatpush1.bf16.msra.mxu0 0
    %2461 = vmatprep.subr.bf16.mxu0 0
    %2462 = vmatpush1.bf16.msra.mxu0 0
    %2463 = vmatprep.subr.bf16.mxu0 0
    %2464 = vmatpush1.bf16.msra.mxu0 0
    %2465 = vmatprep.subr.bf16.mxu0 0
    %2466 = vmatpush1.bf16.msra.mxu0 0
    %2467 = vmatprep.subr.bf16.mxu0 0
    %2468 = vmatpush1.bf16.msra.mxu0 0
    %2469 = vmatprep.subr.bf16.mxu0 0
    %2470 = vmatpush1.bf16.msra.mxu0 0
    %2471 = vmatprep.mubr.bf16.mxu0 0
    %2472 = vmatmul.mubr.bf16.gmra.mrb[0].mxu0 %v1289
    %v2473 = vpop.f32.mrb[0].mxu0
    %v2474 = vadd.f32 0.0, %v2473
    %v2475 = vpop.f32.mrb[0].mxu0
    %v2476 = vadd.f32 0.0, %v2475
    %v2477 = vpop.f32.mrb[0].mxu0
    %v2478 = vpop.f32.mrb[0].mxu0
    %2479 = vdwg.mxu0
    %2480 = vmatprep.subr.bf16.mxu0 %v930
    %2481 = vmatpush1.bf16.msra.mxu0 %v929
    %2482 = vmatprep.subr.bf16.mxu0 0
    %2483 = vmatpush1.bf16.msra.mxu0 0
    %2484 = vmatprep.subr.bf16.mxu0 0
    %2485 = vmatpush1.bf16.msra.mxu0 0
    %2486 = vmatprep.subr.bf16.mxu0 0
    %2487 = vmatpush1.bf16.msra.mxu0 0
    %2488 = vmatprep.subr.bf16.mxu0 0
    %2489 = vmatpush1.bf16.msra.mxu0 0
    %2490 = vmatprep.subr.bf16.mxu0 0
    %2491 = vmatpush1.bf16.msra.mxu0 0
    %2492 = vmatprep.subr.bf16.mxu0 0
    %2493 = vmatpush1.bf16.msra.mxu0 0
    %2494 = vmatprep.subr.bf16.mxu0 0
    %2495 = vmatpush1.bf16.msra.mxu0 0
    %2496 = vmatprep.subr.bf16.mxu0 0
    %2497 = vmatpush1.bf16.msra.mxu0 0
    %2498 = vmatprep.subr.bf16.mxu0 0
    %2499 = vmatpush1.bf16.msra.mxu0 0
    %2500 = vmatprep.subr.bf16.mxu0 0
    %2501 = vmatpush1.bf16.msra.mxu0 0
    %2502 = vmatprep.subr.bf16.mxu0 0
    %2503 = vmatpush1.bf16.msra.mxu0 0
    %2504 = vmatprep.subr.bf16.mxu0 0
    %2505 = vmatpush1.bf16.msra.mxu0 0
    %2506 = vmatprep.subr.bf16.mxu0 0
    %2507 = vmatpush1.bf16.msra.mxu0 0
    %2508 = vmatprep.subr.bf16.mxu0 0
    %2509 = vmatpush1.bf16.msra.mxu0 0
    %2510 = vmatprep.subr.bf16.mxu0 0
    %2511 = vmatpush1.bf16.msra.mxu0 0
    %2512 = vmatprep.mubr.bf16.mxu0 0
    %2513 = vmatmul.mubr.bf16.gmra.mrb[0].mxu0 %v1289
    %v2514 = vpop.f32.mrb[0].mxu0
    %v2515 = vadd.f32 0.0, %v2514
    %v2516 = vpop.f32.mrb[0].mxu0
    %v2517 = vadd.f32 0.0, %v2516
    %v2518 = vpop.f32.mrb[0].mxu0
    %v2519 = vpop.f32.mrb[0].mxu0
    %2520 = vdwg.mxu0
    %2521 = vmatprep.subr.bf16.mxu0 %v932
    %2522 = vmatpush1.bf16.msra.mxu0 %v931
    %2523 = vmatprep.subr.bf16.mxu0 0
    %2524 = vmatpush1.bf16.msra.mxu0 0
    %2525 = vmatprep.subr.bf16.mxu0 0
    %2526 = vmatpush1.bf16.msra.mxu0 0
    %2527 = vmatprep.subr.bf16.mxu0 0
    %2528 = vmatpush1.bf16.msra.mxu0 0
    %2529 = vmatprep.subr.bf16.mxu0 0
    %2530 = vmatpush1.bf16.msra.mxu0 0
    %2531 = vmatprep.subr.bf16.mxu0 0
    %2532 = vmatpush1.bf16.msra.mxu0 0
    %2533 = vmatprep.subr.bf16.mxu0 0
    %2534 = vmatpush1.bf16.msra.mxu0 0
    %2535 = vmatprep.subr.bf16.mxu0 0
    %2536 = vmatpush1.bf16.msra.mxu0 0
    %2537 = vmatprep.subr.bf16.mxu0 0
    %2538 = vmatpush1.bf16.msra.mxu0 0
    %2539 = vmatprep.subr.bf16.mxu0 0
    %2540 = vmatpush1.bf16.msra.mxu0 0
    %2541 = vmatprep.subr.bf16.mxu0 0
    %2542 = vmatpush1.bf16.msra.mxu0 0
    %2543 = vmatprep.subr.bf16.mxu0 0
    %2544 = vmatpush1.bf16.msra.mxu0 0
    %2545 = vmatprep.subr.bf16.mxu0 0
    %2546 = vmatpush1.bf16.msra.mxu0 0
    %2547 = vmatprep.subr.bf16.mxu0 0
    %2548 = vmatpush1.bf16.msra.mxu0 0
    %2549 = vmatprep.subr.bf16.mxu0 0
    %2550 = vmatpush1.bf16.msra.mxu0 0
    %2551 = vmatprep.subr.bf16.mxu0 0
    %2552 = vmatpush1.bf16.msra.mxu0 0
    %2553 = vmatprep.mubr.bf16.mxu0 0
    %2554 = vmatmul.mubr.bf16.gmra.mrb[0].mxu0 %v1289
    %v2555 = vpop.f32.mrb[0].mxu0
    %v2556 = vadd.f32 0.0, %v2555
    %v2557 = vpop.f32.mrb[0].mxu0
    %v2558 = vadd.f32 0.0, %v2557
    %v2559 = vpop.f32.mrb[0].mxu0
    %v2560 = vpop.f32.mrb[0].mxu0
    %2561 = vdwg.mxu0
    %2562 = vmatprep.subr.bf16.mxu0 %v934
    %2563 = vmatpush1.bf16.msra.mxu0 %v933
    %2564 = vmatprep.subr.bf16.mxu0 0
    %2565 = vmatpush1.bf16.msra.mxu0 0
    %2566 = vmatprep.subr.bf16.mxu0 0
    %2567 = vmatpush1.bf16.msra.mxu0 0
    %2568 = vmatprep.subr.bf16.mxu0 0
    %2569 = vmatpush1.bf16.msra.mxu0 0
    %2570 = vmatprep.subr.bf16.mxu0 0
    %2571 = vmatpush1.bf16.msra.mxu0 0
    %2572 = vmatprep.subr.bf16.mxu0 0
    %2573 = vmatpush1.bf16.msra.mxu0 0
    %2574 = vmatprep.subr.bf16.mxu0 0
    %2575 = vmatpush1.bf16.msra.mxu0 0
    %2576 = vmatprep.subr.bf16.mxu0 0
    %2577 = vmatpush1.bf16.msra.mxu0 0
    %2578 = vmatprep.subr.bf16.mxu0 0
    %2579 = vmatpush1.bf16.msra.mxu0 0
    %2580 = vmatprep.subr.bf16.mxu0 0
    %2581 = vmatpush1.bf16.msra.mxu0 0
    %2582 = vmatprep.subr.bf16.mxu0 0
    %2583 = vmatpush1.bf16.msra.mxu0 0
    %2584 = vmatprep.subr.bf16.mxu0 0
    %2585 = vmatpush1.bf16.msra.mxu0 0
    %2586 = vmatprep.subr.bf16.mxu0 0
    %2587 = vmatpush1.bf16.msra.mxu0 0
    %2588 = vmatprep.subr.bf16.mxu0 0
    %2589 = vmatpush1.bf16.msra.mxu0 0
    %2590 = vmatprep.subr.bf16.mxu0 0
    %2591 = vmatpush1.bf16.msra.mxu0 0
    %2592 = vmatprep.subr.bf16.mxu0 0
    %2593 = vmatpush1.bf16.msra.mxu0 0
    %2594 = vmatprep.mubr.bf16.mxu0 0
    %2595 = vmatmul.mubr.bf16.gmra.mrb[0].mxu0 %v1289
    %v2596 = vpop.f32.mrb[0].mxu0
    %v2597 = vadd.f32 0.0, %v2596
    %v2598 = vpop.f32.mrb[0].mxu0
    %v2599 = vadd.f32 0.0, %v2598
    %v2600 = vpop.f32.mrb[0].mxu0
    %v2601 = vpop.f32.mrb[0].mxu0
    %2602 = vdwg.mxu0
    %2603 = vmatprep.subr.bf16.mxu0 %v936
    %2604 = vmatpush1.bf16.msra.mxu0 %v935
    %2605 = vmatprep.subr.bf16.mxu0 0
    %2606 = vmatpush1.bf16.msra.mxu0 0
    %2607 = vmatprep.subr.bf16.mxu0 0
    %2608 = vmatpush1.bf16.msra.mxu0 0
    %2609 = vmatprep.subr.bf16.mxu0 0
    %2610 = vmatpush1.bf16.msra.mxu0 0
    %2611 = vmatprep.subr.bf16.mxu0 0
    %2612 = vmatpush1.bf16.msra.mxu0 0
    %2613 = vmatprep.subr.bf16.mxu0 0
    %2614 = vmatpush1.bf16.msra.mxu0 0
    %2615 = vmatprep.subr.bf16.mxu0 0
    %2616 = vmatpush1.bf16.msra.mxu0 0
    %2617 = vmatprep.subr.bf16.mxu0 0
    %2618 = vmatpush1.bf16.msra.mxu0 0
    %2619 = vmatprep.subr.bf16.mxu0 0
    %2620 = vmatpush1.bf16.msra.mxu0 0
    %2621 = vmatprep.subr.bf16.mxu0 0
    %2622 = vmatpush1.bf16.msra.mxu0 0
    %2623 = vmatprep.subr.bf16.mxu0 0
    %2624 = vmatpush1.bf16.msra.mxu0 0
    %2625 = vmatprep.subr.bf16.mxu0 0
    %2626 = vmatpush1.bf16.msra.mxu0 0
    %2627 = vmatprep.subr.bf16.mxu0 0
    %2628 = vmatpush1.bf16.msra.mxu0 0
    %2629 = vmatprep.subr.bf16.mxu0 0
    %2630 = vmatpush1.bf16.msra.mxu0 0
    %2631 = vmatprep.subr.bf16.mxu0 0
    %2632 = vmatpush1.bf16.msra.mxu0 0
    %2633 = vmatprep.subr.bf16.mxu0 0
    %2634 = vmatpush1.bf16.msra.mxu0 0
    %2635 = vmatprep.mubr.bf16.mxu0 0
    %2636 = vmatmul.mubr.bf16.gmra.mrb[0].mxu0 %v1289
    %v2637 = vpop.f32.mrb[0].mxu0
    %v2638 = vadd.f32 0.0, %v2637
    %v2639 = vpop.f32.mrb[0].mxu0
    %v2640 = vadd.f32 0.0, %v2639
    %v2641 = vpop.f32.mrb[0].mxu0
    %v2642 = vpop.f32.mrb[0].mxu0
    %2643 = vdwg.mxu0
    %2644 = vmatprep.subr.bf16.mxu0 %v938
    %2645 = vmatpush1.bf16.msra.mxu0 %v937
    %2646 = vmatprep.subr.bf16.mxu0 0
    %2647 = vmatpush1.bf16.msra.mxu0 0
    %2648 = vmatprep.subr.bf16.mxu0 0
    %2649 = vmatpush1.bf16.msra.mxu0 0
    %2650 = vmatprep.subr.bf16.mxu0 0
    %2651 = vmatpush1.bf16.msra.mxu0 0
    %2652 = vmatprep.subr.bf16.mxu0 0
    %2653 = vmatpush1.bf16.msra.mxu0 0
    %2654 = vmatprep.subr.bf16.mxu0 0
    %2655 = vmatpush1.bf16.msra.mxu0 0
    %2656 = vmatprep.subr.bf16.mxu0 0
    %2657 = vmatpush1.bf16.msra.mxu0 0
    %2658 = vmatprep.subr.bf16.mxu0 0
    %2659 = vmatpush1.bf16.msra.mxu0 0
    %2660 = vmatprep.subr.bf16.mxu0 0
    %2661 = vmatpush1.bf16.msra.mxu0 0
    %2662 = vmatprep.subr.bf16.mxu0 0
    %2663 = vmatpush1.bf16.msra.mxu0 0
    %2664 = vmatprep.subr.bf16.mxu0 0
    %2665 = vmatpush1.bf16.msra.mxu0 0
    %2666 = vmatprep.subr.bf16.mxu0 0
    %2667 = vmatpush1.bf16.msra.mxu0 0
    %2668 = vmatprep.subr.bf16.mxu0 0
    %2669 = vmatpush1.bf16.msra.mxu0 0
    %2670 = vmatprep.subr.bf16.mxu0 0
    %2671 = vmatpush1.bf16.msra.mxu0 0
    %2672 = vmatprep.subr.bf16.mxu0 0
    %2673 = vmatpush1.bf16.msra.mxu0 0
    %2674 = vmatprep.subr.bf16.mxu0 0
    %2675 = vmatpush1.bf16.msra.mxu0 0
    %2676 = vmatprep.mubr.bf16.mxu0 0
    %2677 = vmatmul.mubr.bf16.gmra.mrb[0].mxu0 %v1289
    %v2678 = vpop.f32.mrb[0].mxu0
    %v2679 = vadd.f32 0.0, %v2678
    %v2680 = vpop.f32.mrb[0].mxu0
    %v2681 = vadd.f32 0.0, %v2680
    %v2682 = vpop.f32.mrb[0].mxu0
    %v2683 = vpop.f32.mrb[0].mxu0
    %2684 = vdwg.mxu0
    %2685 = vmatprep.subr.bf16.mxu0 %v940
    %2686 = vmatpush1.bf16.msra.mxu0 %v939
    %2687 = vmatprep.subr.bf16.mxu0 0
    %2688 = vmatpush1.bf16.msra.mxu0 0
    %2689 = vmatprep.subr.bf16.mxu0 0
    %2690 = vmatpush1.bf16.msra.mxu0 0
    %2691 = vmatprep.subr.bf16.mxu0 0
    %2692 = vmatpush1.bf16.msra.mxu0 0
    %2693 = vmatprep.subr.bf16.mxu0 0
    %2694 = vmatpush1.bf16.msra.mxu0 0
    %2695 = vmatprep.subr.bf16.mxu0 0
    %2696 = vmatpush1.bf16.msra.mxu0 0
    %2697 = vmatprep.subr.bf16.mxu0 0
    %2698 = vmatpush1.bf16.msra.mxu0 0
    %2699 = vmatprep.subr.bf16.mxu0 0
    %2700 = vmatpush1.bf16.msra.mxu0 0
    %2701 = vmatprep.subr.bf16.mxu0 0
    %2702 = vmatpush1.bf16.msra.mxu0 0
    %2703 = vmatprep.subr.bf16.mxu0 0
    %2704 = vmatpush1.bf16.msra.mxu0 0
    %2705 = vmatprep.subr.bf16.mxu0 0
    %2706 = vmatpush1.bf16.msra.mxu0 0
    %2707 = vmatprep.subr.bf16.mxu0 0
    %2708 = vmatpush1.bf16.msra.mxu0 0
    %2709 = vmatprep.subr.bf16.mxu0 0
    %2710 = vmatpush1.bf16.msra.mxu0 0
    %2711 = vmatprep.subr.bf16.mxu0 0
    %2712 = vmatpush1.bf16.msra.mxu0 0
    %2713 = vmatprep.subr.bf16.mxu0 0
    %2714 = vmatpush1.bf16.msra.mxu0 0
    %2715 = vmatprep.subr.bf16.mxu0 0
    %2716 = vmatpush1.bf16.msra.mxu0 0
    %2717 = vmatprep.mubr.bf16.mxu0 0
    %2718 = vmatmul.mubr.bf16.gmra.mrb[0].mxu0 %v1289
    %v2719 = vpop.f32.mrb[0].mxu0
    %v2720 = vadd.f32 0.0, %v2719
    %v2721 = vpop.f32.mrb[0].mxu0
    %v2722 = vadd.f32 0.0, %v2721
    %v2723 = vpop.f32.mrb[0].mxu0
    %v2724 = vpop.f32.mrb[0].mxu0
    %2725 = vdwg.mxu0
    %2726 = vmatprep.subr.bf16.mxu0 %v942
    %2727 = vmatpush1.bf16.msra.mxu0 %v941
    %2728 = vmatprep.subr.bf16.mxu0 0
    %2729 = vmatpush1.bf16.msra.mxu0 0
    %2730 = vmatprep.subr.bf16.mxu0 0
    %2731 = vmatpush1.bf16.msra.mxu0 0
    %2732 = vmatprep.subr.bf16.mxu0 0
    %2733 = vmatpush1.bf16.msra.mxu0 0
    %2734 = vmatprep.subr.bf16.mxu0 0
    %2735 = vmatpush1.bf16.msra.mxu0 0
    %2736 = vmatprep.subr.bf16.mxu0 0
    %2737 = vmatpush1.bf16.msra.mxu0 0
    %2738 = vmatprep.subr.bf16.mxu0 0
    %2739 = vmatpush1.bf16.msra.mxu0 0
    %2740 = vmatprep.subr.bf16.mxu0 0
    %2741 = vmatpush1.bf16.msra.mxu0 0
    %2742 = vmatprep.subr.bf16.mxu0 0
    %2743 = vmatpush1.bf16.msra.mxu0 0
    %2744 = vmatprep.subr.bf16.mxu0 0
    %2745 = vmatpush1.bf16.msra.mxu0 0
    %2746 = vmatprep.subr.bf16.mxu0 0
    %2747 = vmatpush1.bf16.msra.mxu0 0
    %2748 = vmatprep.subr.bf16.mxu0 0
    %2749 = vmatpush1.bf16.msra.mxu0 0
    %2750 = vmatprep.subr.bf16.mxu0 0
    %2751 = vmatpush1.bf16.msra.mxu0 0
    %2752 = vmatprep.subr.bf16.mxu0 0
    %2753 = vmatpush1.bf16.msra.mxu0 0
    %2754 = vmatprep.subr.bf16.mxu0 0
    %2755 = vmatpush1.bf16.msra.mxu0 0
    %2756 = vmatprep.subr.bf16.mxu0 0
    %2757 = vmatpush1.bf16.msra.mxu0 0
    %2758 = vmatprep.mubr.bf16.mxu0 0
    %2759 = vmatmul.mubr.bf16.gmra.mrb[0].mxu0 %v1289
    %v2760 = vpop.f32.mrb[0].mxu0
    %v2761 = vadd.f32 0.0, %v2760
    %v2762 = vpop.f32.mrb[0].mxu0
    %v2763 = vadd.f32 0.0, %v2762
    %v2764 = vpop.f32.mrb[0].mxu0
    %v2765 = vpop.f32.mrb[0].mxu0
    %2766 = vdwg.mxu0
    %2767 = vmatprep.subr.bf16.mxu0 %v944
    %2768 = vmatpush1.bf16.msra.mxu0 %v943
    %2769 = vmatprep.subr.bf16.mxu0 0
    %2770 = vmatpush1.bf16.msra.mxu0 0
    %2771 = vmatprep.subr.bf16.mxu0 0
    %2772 = vmatpush1.bf16.msra.mxu0 0
    %2773 = vmatprep.subr.bf16.mxu0 0
    %2774 = vmatpush1.bf16.msra.mxu0 0
    %2775 = vmatprep.subr.bf16.mxu0 0
    %2776 = vmatpush1.bf16.msra.mxu0 0
    %2777 = vmatprep.subr.bf16.mxu0 0
    %2778 = vmatpush1.bf16.msra.mxu0 0
    %2779 = vmatprep.subr.bf16.mxu0 0
    %2780 = vmatpush1.bf16.msra.mxu0 0
    %2781 = vmatprep.subr.bf16.mxu0 0
    %2782 = vmatpush1.bf16.msra.mxu0 0
    %2783 = vmatprep.subr.bf16.mxu0 0
    %2784 = vmatpush1.bf16.msra.mxu0 0
    %2785 = vmatprep.subr.bf16.mxu0 0
    %2786 = vmatpush1.bf16.msra.mxu0 0
    %2787 = vmatprep.subr.bf16.mxu0 0
    %2788 = vmatpush1.bf16.msra.mxu0 0
    %2789 = vmatprep.subr.bf16.mxu0 0
    %2790 = vmatpush1.bf16.msra.mxu0 0
    %2791 = vmatprep.subr.bf16.mxu0 0
    %2792 = vmatpush1.bf16.msra.mxu0 0
    %2793 = vmatprep.subr.bf16.mxu0 0
    %2794 = vmatpush1.bf16.msra.mxu0 0
    %2795 = vmatprep.subr.bf16.mxu0 0
    %2796 = vmatpush1.bf16.msra.mxu0 0
    %2797 = vmatprep.subr.bf16.mxu0 0
    %2798 = vmatpush1.bf16.msra.mxu0 0
    %2799 = vmatprep.mubr.bf16.mxu0 0
    %2800 = vmatmul.mubr.bf16.gmra.mrb[0].mxu0 %v1289
    %v2801 = vpop.f32.mrb[0].mxu0
    %v2802 = vadd.f32 0.0, %v2801
    %v2803 = vpop.f32.mrb[0].mxu0
    %v2804 = vadd.f32 0.0, %v2803
    %v2805 = vpop.f32.mrb[0].mxu0
    %v2806 = vpop.f32.mrb[0].mxu0
    %2807 = vdwg.mxu0
    %2808 = vmatprep.subr.bf16.mxu0 %v946
    %2809 = vmatpush1.bf16.msra.mxu0 %v945
    %2810 = vmatprep.subr.bf16.mxu0 0
    %2811 = vmatpush1.bf16.msra.mxu0 0
    %2812 = vmatprep.subr.bf16.mxu0 0
    %2813 = vmatpush1.bf16.msra.mxu0 0
    %2814 = vmatprep.subr.bf16.mxu0 0
    %2815 = vmatpush1.bf16.msra.mxu0 0
    %2816 = vmatprep.subr.bf16.mxu0 0
    %2817 = vmatpush1.bf16.msra.mxu0 0
    %2818 = vmatprep.subr.bf16.mxu0 0
    %2819 = vmatpush1.bf16.msra.mxu0 0
    %2820 = vmatprep.subr.bf16.mxu0 0
    %2821 = vmatpush1.bf16.msra.mxu0 0
    %2822 = vmatprep.subr.bf16.mxu0 0
    %2823 = vmatpush1.bf16.msra.mxu0 0
    %2824 = vmatprep.subr.bf16.mxu0 0
    %2825 = vmatpush1.bf16.msra.mxu0 0
    %2826 = vmatprep.subr.bf16.mxu0 0
    %2827 = vmatpush1.bf16.msra.mxu0 0
    %2828 = vmatprep.subr.bf16.mxu0 0
    %2829 = vmatpush1.bf16.msra.mxu0 0
    %2830 = vmatprep.subr.bf16.mxu0 0
    %2831 = vmatpush1.bf16.msra.mxu0 0
    %2832 = vmatprep.subr.bf16.mxu0 0
    %2833 = vmatpush1.bf16.msra.mxu0 0
    %2834 = vmatprep.subr.bf16.mxu0 0
    %2835 = vmatpush1.bf16.msra.mxu0 0
    %2836 = vmatprep.subr.bf16.mxu0 0
    %2837 = vmatpush1.bf16.msra.mxu0 0
    %2838 = vmatprep.subr.bf16.mxu0 0
    %2839 = vmatpush1.bf16.msra.mxu0 0
    %2840 = vmatprep.mubr.bf16.mxu0 0
    %2841 = vmatmul.mubr.bf16.gmra.mrb[0].mxu0 %v1289
    %v2842 = vpop.f32.mrb[0].mxu0
    %v2843 = vadd.f32 0.0, %v2842
    %v2844 = vpop.f32.mrb[0].mxu0
    %v2845 = vadd.f32 0.0, %v2844
    %v2846 = vpop.f32.mrb[0].mxu0
    %v2847 = vpop.f32.mrb[0].mxu0
    %2848 = vdwg.mxu0
    %2849 = vmatprep.subr.bf16.mxu0 %v948
    %2850 = vmatpush1.bf16.msra.mxu0 %v947
    %2851 = vmatprep.subr.bf16.mxu0 0
    %2852 = vmatpush1.bf16.msra.mxu0 0
    %2853 = vmatprep.subr.bf16.mxu0 0
    %2854 = vmatpush1.bf16.msra.mxu0 0
    %2855 = vmatprep.subr.bf16.mxu0 0
    %2856 = vmatpush1.bf16.msra.mxu0 0
    %2857 = vmatprep.subr.bf16.mxu0 0
    %2858 = vmatpush1.bf16.msra.mxu0 0
    %2859 = vmatprep.subr.bf16.mxu0 0
    %2860 = vmatpush1.bf16.msra.mxu0 0
    %2861 = vmatprep.subr.bf16.mxu0 0
    %2862 = vmatpush1.bf16.msra.mxu0 0
    %2863 = vmatprep.subr.bf16.mxu0 0
    %2864 = vmatpush1.bf16.msra.mxu0 0
    %2865 = vmatprep.subr.bf16.mxu0 0
    %2866 = vmatpush1.bf16.msra.mxu0 0
    %2867 = vmatprep.subr.bf16.mxu0 0
    %2868 = vmatpush1.bf16.msra.mxu0 0
    %2869 = vmatprep.subr.bf16.mxu0 0
    %2870 = vmatpush1.bf16.msra.mxu0 0
    %2871 = vmatprep.subr.bf16.mxu0 0
    %2872 = vmatpush1.bf16.msra.mxu0 0
    %2873 = vmatprep.subr.bf16.mxu0 0
    %2874 = vmatpush1.bf16.msra.mxu0 0
    %2875 = vmatprep.subr.bf16.mxu0 0
    %2876 = vmatpush1.bf16.msra.mxu0 0
    %2877 = vmatprep.subr.bf16.mxu0 0
    %2878 = vmatpush1.bf16.msra.mxu0 0
    %2879 = vmatprep.subr.bf16.mxu0 0
    %2880 = vmatpush1.bf16.msra.mxu0 0
    %2881 = vmatprep.mubr.bf16.mxu0 0
    %2882 = vmatmul.mubr.bf16.gmra.mrb[0].mxu0 %v1289
    %v2883 = vpop.f32.mrb[0].mxu0
    %v2884 = vadd.f32 0.0, %v2883
    %v2885 = vpop.f32.mrb[0].mxu0
    %v2886 = vadd.f32 0.0, %v2885
    %v2887 = vpop.f32.mrb[0].mxu0
    %v2888 = vpop.f32.mrb[0].mxu0
    %2889 = vdwg.mxu0
    %2890 = vmatprep.subr.bf16.mxu0 %v950
    %2891 = vmatpush1.bf16.msra.mxu0 %v949
    %2892 = vmatprep.subr.bf16.mxu0 0
    %2893 = vmatpush1.bf16.msra.mxu0 0
    %2894 = vmatprep.subr.bf16.mxu0 0
    %2895 = vmatpush1.bf16.msra.mxu0 0
    %2896 = vmatprep.subr.bf16.mxu0 0
    %2897 = vmatpush1.bf16.msra.mxu0 0
    %2898 = vmatprep.subr.bf16.mxu0 0
    %2899 = vmatpush1.bf16.msra.mxu0 0
    %2900 = vmatprep.subr.bf16.mxu0 0
    %2901 = vmatpush1.bf16.msra.mxu0 0
    %2902 = vmatprep.subr.bf16.mxu0 0
    %2903 = vmatpush1.bf16.msra.mxu0 0
    %2904 = vmatprep.subr.bf16.mxu0 0
    %2905 = vmatpush1.bf16.msra.mxu0 0
    %2906 = vmatprep.subr.bf16.mxu0 0
    %2907 = vmatpush1.bf16.msra.mxu0 0
    %2908 = vmatprep.subr.bf16.mxu0 0
    %2909 = vmatpush1.bf16.msra.mxu0 0
    %2910 = vmatprep.subr.bf16.mxu0 0
    %2911 = vmatpush1.bf16.msra.mxu0 0
    %2912 = vmatprep.subr.bf16.mxu0 0
    %2913 = vmatpush1.bf16.msra.mxu0 0
    %2914 = vmatprep.subr.bf16.mxu0 0
    %2915 = vmatpush1.bf16.msra.mxu0 0
    %2916 = vmatprep.subr.bf16.mxu0 0
    %2917 = vmatpush1.bf16.msra.mxu0 0
    %2918 = vmatprep.subr.bf16.mxu0 0
    %2919 = vmatpush1.bf16.msra.mxu0 0
    %2920 = vmatprep.subr.bf16.mxu0 0
    %2921 = vmatpush1.bf16.msra.mxu0 0
    %2922 = vmatprep.mubr.bf16.mxu0 0
    %2923 = vmatmul.mubr.bf16.gmra.mrb[0].mxu0 %v1289
    %v2924 = vpop.f32.mrb[0].mxu0
    %v2925 = vadd.f32 0.0, %v2924
    %v2926 = vpop.f32.mrb[0].mxu0
    %v2927 = vadd.f32 0.0, %v2926
    %v2928 = vpop.f32.mrb[0].mxu0
    %v2929 = vpop.f32.mrb[0].mxu0
    %2930 = vdwg.mxu0
    %2931 = vmatprep.subr.bf16.mxu0 %v952
    %2932 = vmatpush1.bf16.msra.mxu0 %v951
    %2933 = vmatprep.subr.bf16.mxu0 0
    %2934 = vmatpush1.bf16.msra.mxu0 0
    %2935 = vmatprep.subr.bf16.mxu0 0
    %2936 = vmatpush1.bf16.msra.mxu0 0
    %2937 = vmatprep.subr.bf16.mxu0 0
    %2938 = vmatpush1.bf16.msra.mxu0 0
    %2939 = vmatprep.subr.bf16.mxu0 0
    %2940 = vmatpush1.bf16.msra.mxu0 0
    %2941 = vmatprep.subr.bf16.mxu0 0
    %2942 = vmatpush1.bf16.msra.mxu0 0
    %2943 = vmatprep.subr.bf16.mxu0 0
    %2944 = vmatpush1.bf16.msra.mxu0 0
    %2945 = vmatprep.subr.bf16.mxu0 0
    %2946 = vmatpush1.bf16.msra.mxu0 0
    %2947 = vmatprep.subr.bf16.mxu0 0
    %2948 = vmatpush1.bf16.msra.mxu0 0
    %2949 = vmatprep.subr.bf16.mxu0 0
    %2950 = vmatpush1.bf16.msra.mxu0 0
    %2951 = vmatprep.subr.bf16.mxu0 0
    %2952 = vmatpush1.bf16.msra.mxu0 0
    %2953 = vmatprep.subr.bf16.mxu0 0
    %2954 = vmatpush1.bf16.msra.mxu0 0
    %2955 = vmatprep.subr.bf16.mxu0 0
    %2956 = vmatpush1.bf16.msra.mxu0 0
    %2957 = vmatprep.subr.bf16.mxu0 0
    %2958 = vmatpush1.bf16.msra.mxu0 0
    %2959 = vmatprep.subr.bf16.mxu0 0
    %2960 = vmatpush1.bf16.msra.mxu0 0
    %2961 = vmatprep.subr.bf16.mxu0 0
    %2962 = vmatpush1.bf16.msra.mxu0 0
    %2963 = vmatprep.mubr.bf16.mxu0 0
    %2964 = vmatmul.mubr.bf16.gmra.mrb[0].mxu0 %v1289
    %v2965 = vpop.f32.mrb[0].mxu0
    %v2966 = vadd.f32 0.0, %v2965
    %v2967 = vpop.f32.mrb[0].mxu0
    %v2968 = vadd.f32 0.0, %v2967
    %v2969 = vpop.f32.mrb[0].mxu0
    %v2970 = vpop.f32.mrb[0].mxu0
    %2971 = vdwg.mxu0
    %2972 = vmatprep.subr.bf16.mxu0 %v954
    %2973 = vmatpush1.bf16.msra.mxu0 %v953
    %2974 = vmatprep.subr.bf16.mxu0 0
    %2975 = vmatpush1.bf16.msra.mxu0 0
    %2976 = vmatprep.subr.bf16.mxu0 0
    %2977 = vmatpush1.bf16.msra.mxu0 0
    %2978 = vmatprep.subr.bf16.mxu0 0
    %2979 = vmatpush1.bf16.msra.mxu0 0
    %2980 = vmatprep.subr.bf16.mxu0 0
    %2981 = vmatpush1.bf16.msra.mxu0 0
    %2982 = vmatprep.subr.bf16.mxu0 0
    %2983 = vmatpush1.bf16.msra.mxu0 0
    %2984 = vmatprep.subr.bf16.mxu0 0
    %2985 = vmatpush1.bf16.msra.mxu0 0
    %2986 = vmatprep.subr.bf16.mxu0 0
    %2987 = vmatpush1.bf16.msra.mxu0 0
    %2988 = vmatprep.subr.bf16.mxu0 0
    %2989 = vmatpush1.bf16.msra.mxu0 0
    %2990 = vmatprep.subr.bf16.mxu0 0
    %2991 = vmatpush1.bf16.msra.mxu0 0
    %2992 = vmatprep.subr.bf16.mxu0 0
    %2993 = vmatpush1.bf16.msra.mxu0 0
    %2994 = vmatprep.subr.bf16.mxu0 0
    %2995 = vmatpush1.bf16.msra.mxu0 0
    %2996 = vmatprep.subr.bf16.mxu0 0
    %2997 = vmatpush1.bf16.msra.mxu0 0
    %2998 = vmatprep.subr.bf16.mxu0 0
    %2999 = vmatpush1.bf16.msra.mxu0 0
    %3000 = vmatprep.subr.bf16.mxu0 0
    %3001 = vmatpush1.bf16.msra.mxu0 0
    %3002 = vmatprep.subr.bf16.mxu0 0
    %3003 = vmatpush1.bf16.msra.mxu0 0
    %3004 = vmatprep.mubr.bf16.mxu0 0
    %3005 = vmatmul.mubr.bf16.gmra.mrb[0].mxu0 %v1289
    %v3006 = vpop.f32.mrb[0].mxu0
    %v3007 = vadd.f32 0.0, %v3006
    %v3008 = vpop.f32.mrb[0].mxu0
    %v3009 = vadd.f32 0.0, %v3008
    %v3010 = vpop.f32.mrb[0].mxu0
    %v3011 = vpop.f32.mrb[0].mxu0
    %3012 = vdwg.mxu0
    %3013 = vmatprep.subr.bf16.mxu0 %v956
    %3014 = vmatpush1.bf16.msra.mxu0 %v955
    %3015 = vmatprep.subr.bf16.mxu0 0
    %3016 = vmatpush1.bf16.msra.mxu0 0
    %3017 = vmatprep.subr.bf16.mxu0 0
    %3018 = vmatpush1.bf16.msra.mxu0 0
    %3019 = vmatprep.subr.bf16.mxu0 0
    %3020 = vmatpush1.bf16.msra.mxu0 0
    %3021 = vmatprep.subr.bf16.mxu0 0
    %3022 = vmatpush1.bf16.msra.mxu0 0
    %3023 = vmatprep.subr.bf16.mxu0 0
    %3024 = vmatpush1.bf16.msra.mxu0 0
    %3025 = vmatprep.subr.bf16.mxu0 0
    %3026 = vmatpush1.bf16.msra.mxu0 0
    %3027 = vmatprep.subr.bf16.mxu0 0
    %3028 = vmatpush1.bf16.msra.mxu0 0
    %3029 = vmatprep.subr.bf16.mxu0 0
    %3030 = vmatpush1.bf16.msra.mxu0 0
    %3031 = vmatprep.subr.bf16.mxu0 0
    %3032 = vmatpush1.bf16.msra.mxu0 0
    %3033 = vmatprep.subr.bf16.mxu0 0
    %3034 = vmatpush1.bf16.msra.mxu0 0
    %3035 = vmatprep.subr.bf16.mxu0 0
    %3036 = vmatpush1.bf16.msra.mxu0 0
    %3037 = vmatprep.subr.bf16.mxu0 0
    %3038 = vmatpush1.bf16.msra.mxu0 0
    %3039 = vmatprep.subr.bf16.mxu0 0
    %3040 = vmatpush1.bf16.msra.mxu0 0
    %3041 = vmatprep.subr.bf16.mxu0 0
    %3042 = vmatpush1.bf16.msra.mxu0 0
    %3043 = vmatprep.subr.bf16.mxu0 0
    %3044 = vmatpush1.bf16.msra.mxu0 0
    %3045 = vmatprep.mubr.bf16.mxu0 0
    %3046 = vmatmul.mubr.bf16.gmra.mrb[0].mxu0 %v1289
    %v3047 = vpop.f32.mrb[0].mxu0
    %v3048 = vadd.f32 0.0, %v3047
    %v3049 = vpop.f32.mrb[0].mxu0
    %v3050 = vadd.f32 0.0, %v3049
    %v3051 = vpop.f32.mrb[0].mxu0
    %v3052 = vpop.f32.mrb[0].mxu0
    %3053 = vdwg.mxu0
    %3054 = vmatprep.subr.bf16.mxu0 %v958
    %3055 = vmatpush1.bf16.msra.mxu0 %v957
    %3056 = vmatprep.subr.bf16.mxu0 0
    %3057 = vmatpush1.bf16.msra.mxu0 0
    %3058 = vmatprep.subr.bf16.mxu0 0
    %3059 = vmatpush1.bf16.msra.mxu0 0
    %3060 = vmatprep.subr.bf16.mxu0 0
    %3061 = vmatpush1.bf16.msra.mxu0 0
    %3062 = vmatprep.subr.bf16.mxu0 0
    %3063 = vmatpush1.bf16.msra.mxu0 0
    %3064 = vmatprep.subr.bf16.mxu0 0
    %3065 = vmatpush1.bf16.msra.mxu0 0
    %3066 = vmatprep.subr.bf16.mxu0 0
    %3067 = vmatpush1.bf16.msra.mxu0 0
    %3068 = vmatprep.subr.bf16.mxu0 0
    %3069 = vmatpush1.bf16.msra.mxu0 0
    %3070 = vmatprep.subr.bf16.mxu0 0
    %3071 = vmatpush1.bf16.msra.mxu0 0
    %3072 = vmatprep.subr.bf16.mxu0 0
    %3073 = vmatpush1.bf16.msra.mxu0 0
    %3074 = vmatprep.subr.bf16.mxu0 0
    %3075 = vmatpush1.bf16.msra.mxu0 0
    %3076 = vmatprep.subr.bf16.mxu0 0
    %3077 = vmatpush1.bf16.msra.mxu0 0
    %3078 = vmatprep.subr.bf16.mxu0 0
    %3079 = vmatpush1.bf16.msra.mxu0 0
    %3080 = vmatprep.subr.bf16.mxu0 0
    %3081 = vmatpush1.bf16.msra.mxu0 0
    %3082 = vmatprep.subr.bf16.mxu0 0
    %3083 = vmatpush1.bf16.msra.mxu0 0
    %3084 = vmatprep.subr.bf16.mxu0 0
    %3085 = vmatpush1.bf16.msra.mxu0 0
    %3086 = vmatprep.mubr.bf16.mxu0 0
    %3087 = vmatmul.mubr.bf16.gmra.mrb[0].mxu0 %v1289
    %v3088 = vpop.f32.mrb[0].mxu0
    %v3089 = vadd.f32 0.0, %v3088
    %v3090 = vpop.f32.mrb[0].mxu0
    %v3091 = vadd.f32 0.0, %v3090
    %v3092 = vpop.f32.mrb[0].mxu0
    %v3093 = vpop.f32.mrb[0].mxu0
    %3094 = vdwg.mxu0
    %3095 = vmatprep.subr.bf16.mxu0 %v960
    %3096 = vmatpush1.bf16.msra.mxu0 %v959
    %3097 = vmatprep.subr.bf16.mxu0 0
    %3098 = vmatpush1.bf16.msra.mxu0 0
    %3099 = vmatprep.subr.bf16.mxu0 0
    %3100 = vmatpush1.bf16.msra.mxu0 0
    %3101 = vmatprep.subr.bf16.mxu0 0
    %3102 = vmatpush1.bf16.msra.mxu0 0
    %3103 = vmatprep.subr.bf16.mxu0 0
    %3104 = vmatpush1.bf16.msra.mxu0 0
    %3105 = vmatprep.subr.bf16.mxu0 0
    %3106 = vmatpush1.bf16.msra.mxu0 0
    %3107 = vmatprep.subr.bf16.mxu0 0
    %3108 = vmatpush1.bf16.msra.mxu0 0
    %3109 = vmatprep.subr.bf16.mxu0 0
    %3110 = vmatpush1.bf16.msra.mxu0 0
    %3111 = vmatprep.subr.bf16.mxu0 0
    %3112 = vmatpush1.bf16.msra.mxu0 0
    %3113 = vmatprep.subr.bf16.mxu0 0
    %3114 = vmatpush1.bf16.msra.mxu0 0
    %3115 = vmatprep.subr.bf16.mxu0 0
    %3116 = vmatpush1.bf16.msra.mxu0 0
    %3117 = vmatprep.subr.bf16.mxu0 0
    %3118 = vmatpush1.bf16.msra.mxu0 0
    %3119 = vmatprep.subr.bf16.mxu0 0
    %3120 = vmatpush1.bf16.msra.mxu0 0
    %3121 = vmatprep.subr.bf16.mxu0 0
    %3122 = vmatpush1.bf16.msra.mxu0 0
    %3123 = vmatprep.subr.bf16.mxu0 0
    %3124 = vmatpush1.bf16.msra.mxu0 0
    %3125 = vmatprep.subr.bf16.mxu0 0
    %3126 = vmatpush1.bf16.msra.mxu0 0
    %3127 = vmatprep.mubr.bf16.mxu0 0
    %3128 = vmatmul.mubr.bf16.gmra.mrb[0].mxu0 %v1289
    %v3129 = vpop.f32.mrb[0].mxu0
    %v3130 = vadd.f32 0.0, %v3129
    %v3131 = vpop.f32.mrb[0].mxu0
    %v3132 = vadd.f32 0.0, %v3131
    %v3133 = vpop.f32.mrb[0].mxu0
    %v3134 = vpop.f32.mrb[0].mxu0
    %3135 = vdwg.mxu0
    %3136 = vmatprep.subr.bf16.mxu0 %v962
    %3137 = vmatpush1.bf16.msra.mxu0 %v961
    %3138 = vmatprep.subr.bf16.mxu0 0
    %3139 = vmatpush1.bf16.msra.mxu0 0
    %3140 = vmatprep.subr.bf16.mxu0 0
    %3141 = vmatpush1.bf16.msra.mxu0 0
    %3142 = vmatprep.subr.bf16.mxu0 0
    %3143 = vmatpush1.bf16.msra.mxu0 0
    %3144 = vmatprep.subr.bf16.mxu0 0
    %3145 = vmatpush1.bf16.msra.mxu0 0
    %3146 = vmatprep.subr.bf16.mxu0 0
    %3147 = vmatpush1.bf16.msra.mxu0 0
    %3148 = vmatprep.subr.bf16.mxu0 0
    %3149 = vmatpush1.bf16.msra.mxu0 0
    %3150 = vmatprep.subr.bf16.mxu0 0
    %3151 = vmatpush1.bf16.msra.mxu0 0
    %3152 = vmatprep.subr.bf16.mxu0 0
    %3153 = vmatpush1.bf16.msra.mxu0 0
    %3154 = vmatprep.subr.bf16.mxu0 0
    %3155 = vmatpush1.bf16.msra.mxu0 0
    %3156 = vmatprep.subr.bf16.mxu0 0
    %3157 = vmatpush1.bf16.msra.mxu0 0
    %3158 = vmatprep.subr.bf16.mxu0 0
    %3159 = vmatpush1.bf16.msra.mxu0 0
    %3160 = vmatprep.subr.bf16.mxu0 0
    %3161 = vmatpush1.bf16.msra.mxu0 0
    %3162 = vmatprep.subr.bf16.mxu0 0
    %3163 = vmatpush1.bf16.msra.mxu0 0
    %3164 = vmatprep.subr.bf16.mxu0 0
    %3165 = vmatpush1.bf16.msra.mxu0 0
    %3166 = vmatprep.subr.bf16.mxu0 0
    %3167 = vmatpush1.bf16.msra.mxu0 0
    %3168 = vmatprep.mubr.bf16.mxu0 0
    %3169 = vmatmul.mubr.bf16.gmra.mrb[0].mxu0 %v1289
    %v3170 = vpop.f32.mrb[0].mxu0
    %v3171 = vadd.f32 0.0, %v3170
    %v3172 = vpop.f32.mrb[0].mxu0
    %v3173 = vadd.f32 0.0, %v3172
    %v3174 = vpop.f32.mrb[0].mxu0
    %v3175 = vpop.f32.mrb[0].mxu0
    %3176 = vdwg.mxu0
    %3177 = vmatprep.subr.bf16.mxu0 %v964
    %3178 = vmatpush1.bf16.msra.mxu0 %v963
    %3179 = vmatprep.subr.bf16.mxu0 0
    %3180 = vmatpush1.bf16.msra.mxu0 0
    %3181 = vmatprep.subr.bf16.mxu0 0
    %3182 = vmatpush1.bf16.msra.mxu0 0
    %3183 = vmatprep.subr.bf16.mxu0 0
    %3184 = vmatpush1.bf16.msra.mxu0 0
    %3185 = vmatprep.subr.bf16.mxu0 0
    %3186 = vmatpush1.bf16.msra.mxu0 0
    %3187 = vmatprep.subr.bf16.mxu0 0
    %3188 = vmatpush1.bf16.msra.mxu0 0
    %3189 = vmatprep.subr.bf16.mxu0 0
    %3190 = vmatpush1.bf16.msra.mxu0 0
    %3191 = vmatprep.subr.bf16.mxu0 0
    %3192 = vmatpush1.bf16.msra.mxu0 0
    %3193 = vmatprep.subr.bf16.mxu0 0
    %3194 = vmatpush1.bf16.msra.mxu0 0
    %3195 = vmatprep.subr.bf16.mxu0 0
    %3196 = vmatpush1.bf16.msra.mxu0 0
    %3197 = vmatprep.subr.bf16.mxu0 0
    %3198 = vmatpush1.bf16.msra.mxu0 0
    %3199 = vmatprep.subr.bf16.mxu0 0
    %3200 = vmatpush1.bf16.msra.mxu0 0
    %3201 = vmatprep.subr.bf16.mxu0 0
    %3202 = vmatpush1.bf16.msra.mxu0 0
    %3203 = vmatprep.subr.bf16.mxu0 0
    %3204 = vmatpush1.bf16.msra.mxu0 0
    %3205 = vmatprep.subr.bf16.mxu0 0
    %3206 = vmatpush1.bf16.msra.mxu0 0
    %3207 = vmatprep.subr.bf16.mxu0 0
    %3208 = vmatpush1.bf16.msra.mxu0 0
    %3209 = vmatprep.mubr.bf16.mxu0 0
    %3210 = vmatmul.mubr.bf16.gmra.mrb[0].mxu0 %v1289
    %v3211 = vpop.f32.mrb[0].mxu0
    %v3212 = vadd.f32 0.0, %v3211
    %v3213 = vpop.f32.mrb[0].mxu0
    %v3214 = vadd.f32 0.0, %v3213
    %v3215 = vpop.f32.mrb[0].mxu0
    %v3216 = vpop.f32.mrb[0].mxu0
    %3217 = vdwg.mxu0
    %3218 = vmatprep.subr.bf16.mxu0 %v966
    %3219 = vmatpush1.bf16.msra.mxu0 %v965
    %3220 = vmatprep.subr.bf16.mxu0 0
    %3221 = vmatpush1.bf16.msra.mxu0 0
    %3222 = vmatprep.subr.bf16.mxu0 0
    %3223 = vmatpush1.bf16.msra.mxu0 0
    %3224 = vmatprep.subr.bf16.mxu0 0
    %3225 = vmatpush1.bf16.msra.mxu0 0
    %3226 = vmatprep.subr.bf16.mxu0 0
    %3227 = vmatpush1.bf16.msra.mxu0 0
    %3228 = vmatprep.subr.bf16.mxu0 0
    %3229 = vmatpush1.bf16.msra.mxu0 0
    %3230 = vmatprep.subr.bf16.mxu0 0
    %3231 = vmatpush1.bf16.msra.mxu0 0
    %3232 = vmatprep.subr.bf16.mxu0 0
    %3233 = vmatpush1.bf16.msra.mxu0 0
    %3234 = vmatprep.subr.bf16.mxu0 0
    %3235 = vmatpush1.bf16.msra.mxu0 0
    %3236 = vmatprep.subr.bf16.mxu0 0
    %3237 = vmatpush1.bf16.msra.mxu0 0
    %3238 = vmatprep.subr.bf16.mxu0 0
    %3239 = vmatpush1.bf16.msra.mxu0 0
    %3240 = vmatprep.subr.bf16.mxu0 0
    %3241 = vmatpush1.bf16.msra.mxu0 0
    %3242 = vmatprep.subr.bf16.mxu0 0
    %3243 = vmatpush1.bf16.msra.mxu0 0
    %3244 = vmatprep.subr.bf16.mxu0 0
    %3245 = vmatpush1.bf16.msra.mxu0 0
    %3246 = vmatprep.subr.bf16.mxu0 0
    %3247 = vmatpush1.bf16.msra.mxu0 0
    %3248 = vmatprep.subr.bf16.mxu0 0
    %3249 = vmatpush1.bf16.msra.mxu0 0
    %3250 = vmatprep.mubr.bf16.mxu0 0
    %3251 = vmatmul.mubr.bf16.gmra.mrb[0].mxu0 %v1289
    %v3252 = vpop.f32.mrb[0].mxu0
    %v3253 = vadd.f32 0.0, %v3252
    %v3254 = vpop.f32.mrb[0].mxu0
    %v3255 = vadd.f32 0.0, %v3254
    %v3256 = vpop.f32.mrb[0].mxu0
    %v3257 = vpop.f32.mrb[0].mxu0
    %3258 = vdwg.mxu0
    %3259 = vmatprep.subr.bf16.mxu0 %v968
    %3260 = vmatpush1.bf16.msra.mxu0 %v967
    %3261 = vmatprep.subr.bf16.mxu0 0
    %3262 = vmatpush1.bf16.msra.mxu0 0
    %3263 = vmatprep.subr.bf16.mxu0 0
    %3264 = vmatpush1.bf16.msra.mxu0 0
    %3265 = vmatprep.subr.bf16.mxu0 0
    %3266 = vmatpush1.bf16.msra.mxu0 0
    %3267 = vmatprep.subr.bf16.mxu0 0
    %3268 = vmatpush1.bf16.msra.mxu0 0
    %3269 = vmatprep.subr.bf16.mxu0 0
    %3270 = vmatpush1.bf16.msra.mxu0 0
    %3271 = vmatprep.subr.bf16.mxu0 0
    %3272 = vmatpush1.bf16.msra.mxu0 0
    %3273 = vmatprep.subr.bf16.mxu0 0
    %3274 = vmatpush1.bf16.msra.mxu0 0
    %3275 = vmatprep.subr.bf16.mxu0 0
    %3276 = vmatpush1.bf16.msra.mxu0 0
    %3277 = vmatprep.subr.bf16.mxu0 0
    %3278 = vmatpush1.bf16.msra.mxu0 0
    %3279 = vmatprep.subr.bf16.mxu0 0
    %3280 = vmatpush1.bf16.msra.mxu0 0
    %3281 = vmatprep.subr.bf16.mxu0 0
    %3282 = vmatpush1.bf16.msra.mxu0 0
    %3283 = vmatprep.subr.bf16.mxu0 0
    %3284 = vmatpush1.bf16.msra.mxu0 0
    %3285 = vmatprep.subr.bf16.mxu0 0
    %3286 = vmatpush1.bf16.msra.mxu0 0
    %3287 = vmatprep.subr.bf16.mxu0 0
    %3288 = vmatpush1.bf16.msra.mxu0 0
    %3289 = vmatprep.subr.bf16.mxu0 0
    %3290 = vmatpush1.bf16.msra.mxu0 0
    %3291 = vmatprep.mubr.bf16.mxu0 0
    %3292 = vmatmul.mubr.bf16.gmra.mrb[0].mxu0 %v1289
    %v3293 = vpop.f32.mrb[0].mxu0
    %v3294 = vadd.f32 0.0, %v3293
    %v3295 = vpop.f32.mrb[0].mxu0
    %v3296 = vadd.f32 0.0, %v3295
    %v3297 = vpop.f32.mrb[0].mxu0
    %v3298 = vpop.f32.mrb[0].mxu0
    %3299 = vdwg.mxu0
    %3300 = vmatprep.subr.bf16.mxu0 %v970
    %3301 = vmatpush1.bf16.msra.mxu0 %v969
    %3302 = vmatprep.subr.bf16.mxu0 0
    %3303 = vmatpush1.bf16.msra.mxu0 0
    %3304 = vmatprep.subr.bf16.mxu0 0
    %3305 = vmatpush1.bf16.msra.mxu0 0
    %3306 = vmatprep.subr.bf16.mxu0 0
    %3307 = vmatpush1.bf16.msra.mxu0 0
    %3308 = vmatprep.subr.bf16.mxu0 0
    %3309 = vmatpush1.bf16.msra.mxu0 0
    %3310 = vmatprep.subr.bf16.mxu0 0
    %3311 = vmatpush1.bf16.msra.mxu0 0
    %3312 = vmatprep.subr.bf16.mxu0 0
    %3313 = vmatpush1.bf16.msra.mxu0 0
    %3314 = vmatprep.subr.bf16.mxu0 0
    %3315 = vmatpush1.bf16.msra.mxu0 0
    %3316 = vmatprep.subr.bf16.mxu0 0
    %3317 = vmatpush1.bf16.msra.mxu0 0
    %3318 = vmatprep.subr.bf16.mxu0 0
    %3319 = vmatpush1.bf16.msra.mxu0 0
    %3320 = vmatprep.subr.bf16.mxu0 0
    %3321 = vmatpush1.bf16.msra.mxu0 0
    %3322 = vmatprep.subr.bf16.mxu0 0
    %3323 = vmatpush1.bf16.msra.mxu0 0
    %3324 = vmatprep.subr.bf16.mxu0 0
    %3325 = vmatpush1.bf16.msra.mxu0 0
    %3326 = vmatprep.subr.bf16.mxu0 0
    %3327 = vmatpush1.bf16.msra.mxu0 0
    %3328 = vmatprep.subr.bf16.mxu0 0
    %3329 = vmatpush1.bf16.msra.mxu0 0
    %3330 = vmatprep.subr.bf16.mxu0 0
    %3331 = vmatpush1.bf16.msra.mxu0 0
    %3332 = vmatprep.mubr.bf16.mxu0 0
    %3333 = vmatmul.mubr.bf16.gmra.mrb[0].mxu0 %v1289
    %v3334 = vpop.f32.mrb[0].mxu0
    %v3335 = vadd.f32 0.0, %v3334
    %v3336 = vpop.f32.mrb[0].mxu0
    %v3337 = vadd.f32 0.0, %v3336
    %v3338 = vpop.f32.mrb[0].mxu0
    %v3339 = vpop.f32.mrb[0].mxu0
    %3340 = vdwg.mxu0
    %3341 = vmatprep.subr.bf16.mxu0 %v972
    %3342 = vmatpush1.bf16.msra.mxu0 %v971
    %3343 = vmatprep.subr.bf16.mxu0 0
    %3344 = vmatpush1.bf16.msra.mxu0 0
    %3345 = vmatprep.subr.bf16.mxu0 0
    %3346 = vmatpush1.bf16.msra.mxu0 0
    %3347 = vmatprep.subr.bf16.mxu0 0
    %3348 = vmatpush1.bf16.msra.mxu0 0
    %3349 = vmatprep.subr.bf16.mxu0 0
    %3350 = vmatpush1.bf16.msra.mxu0 0
    %3351 = vmatprep.subr.bf16.mxu0 0
    %3352 = vmatpush1.bf16.msra.mxu0 0
    %3353 = vmatprep.subr.bf16.mxu0 0
    %3354 = vmatpush1.bf16.msra.mxu0 0
    %3355 = vmatprep.subr.bf16.mxu0 0
    %3356 = vmatpush1.bf16.msra.mxu0 0
    %3357 = vmatprep.subr.bf16.mxu0 0
    %3358 = vmatpush1.bf16.msra.mxu0 0
    %3359 = vmatprep.subr.bf16.mxu0 0
    %3360 = vmatpush1.bf16.msra.mxu0 0
    %3361 = vmatprep.subr.bf16.mxu0 0
    %3362 = vmatpush1.bf16.msra.mxu0 0
    %3363 = vmatprep.subr.bf16.mxu0 0
    %3364 = vmatpush1.bf16.msra.mxu0 0
    %3365 = vmatprep.subr.bf16.mxu0 0
    %3366 = vmatpush1.bf16.msra.mxu0 0
    %3367 = vmatprep.subr.bf16.mxu0 0
    %3368 = vmatpush1.bf16.msra.mxu0 0
    %3369 = vmatprep.subr.bf16.mxu0 0
    %3370 = vmatpush1.bf16.msra.mxu0 0
    %3371 = vmatprep.subr.bf16.mxu0 0
    %3372 = vmatpush1.bf16.msra.mxu0 0
    %3373 = vmatprep.mubr.bf16.mxu0 0
    %3374 = vmatmul.mubr.bf16.gmra.mrb[0].mxu0 %v1289
    %v3375 = vpop.f32.mrb[0].mxu0
    %v3376 = vadd.f32 0.0, %v3375
    %v3377 = vpop.f32.mrb[0].mxu0
    %v3378 = vadd.f32 0.0, %v3377
    %v3379 = vpop.f32.mrb[0].mxu0
    %v3380 = vpop.f32.mrb[0].mxu0
    %3381 = vdwg.mxu0
    %3382 = vmatprep.subr.bf16.mxu0 %v974
    %3383 = vmatpush1.bf16.msra.mxu0 %v973
    %3384 = vmatprep.subr.bf16.mxu0 0
    %3385 = vmatpush1.bf16.msra.mxu0 0
    %3386 = vmatprep.subr.bf16.mxu0 0
    %3387 = vmatpush1.bf16.msra.mxu0 0
    %3388 = vmatprep.subr.bf16.mxu0 0
    %3389 = vmatpush1.bf16.msra.mxu0 0
    %3390 = vmatprep.subr.bf16.mxu0 0
    %3391 = vmatpush1.bf16.msra.mxu0 0
    %3392 = vmatprep.subr.bf16.mxu0 0
    %3393 = vmatpush1.bf16.msra.mxu0 0
    %3394 = vmatprep.subr.bf16.mxu0 0
    %3395 = vmatpush1.bf16.msra.mxu0 0
    %3396 = vmatprep.subr.bf16.mxu0 0
    %3397 = vmatpush1.bf16.msra.mxu0 0
    %3398 = vmatprep.subr.bf16.mxu0 0
    %3399 = vmatpush1.bf16.msra.mxu0 0
    %3400 = vmatprep.subr.bf16.mxu0 0
    %3401 = vmatpush1.bf16.msra.mxu0 0
    %3402 = vmatprep.subr.bf16.mxu0 0
    %3403 = vmatpush1.bf16.msra.mxu0 0
    %3404 = vmatprep.subr.bf16.mxu0 0
    %3405 = vmatpush1.bf16.msra.mxu0 0
    %3406 = vmatprep.subr.bf16.mxu0 0
    %3407 = vmatpush1.bf16.msra.mxu0 0
    %3408 = vmatprep.subr.bf16.mxu0 0
    %3409 = vmatpush1.bf16.msra.mxu0 0
    %3410 = vmatprep.subr.bf16.mxu0 0
    %3411 = vmatpush1.bf16.msra.mxu0 0
    %3412 = vmatprep.subr.bf16.mxu0 0
    %3413 = vmatpush1.bf16.msra.mxu0 0
    %3414 = vmatprep.mubr.bf16.mxu0 0
    %3415 = vmatmul.mubr.bf16.gmra.mrb[0].mxu0 %v1289
    %v3416 = vpop.f32.mrb[0].mxu0
    %v3417 = vadd.f32 0.0, %v3416
    %v3418 = vpop.f32.mrb[0].mxu0
    %v3419 = vadd.f32 0.0, %v3418
    %v3420 = vpop.f32.mrb[0].mxu0
    %v3421 = vpop.f32.mrb[0].mxu0
    %3422 = vdwg.mxu0
    %3423 = vmatprep.subr.bf16.mxu0 %v976
    %3424 = vmatpush1.bf16.msra.mxu0 %v975
    %3425 = vmatprep.subr.bf16.mxu0 0
    %3426 = vmatpush1.bf16.msra.mxu0 0
    %3427 = vmatprep.subr.bf16.mxu0 0
    %3428 = vmatpush1.bf16.msra.mxu0 0
    %3429 = vmatprep.subr.bf16.mxu0 0
    %3430 = vmatpush1.bf16.msra.mxu0 0
    %3431 = vmatprep.subr.bf16.mxu0 0
    %3432 = vmatpush1.bf16.msra.mxu0 0
    %3433 = vmatprep.subr.bf16.mxu0 0
    %3434 = vmatpush1.bf16.msra.mxu0 0
    %3435 = vmatprep.subr.bf16.mxu0 0
    %3436 = vmatpush1.bf16.msra.mxu0 0
    %3437 = vmatprep.subr.bf16.mxu0 0
    %3438 = vmatpush1.bf16.msra.mxu0 0
    %3439 = vmatprep.subr.bf16.mxu0 0
    %3440 = vmatpush1.bf16.msra.mxu0 0
    %3441 = vmatprep.subr.bf16.mxu0 0
    %3442 = vmatpush1.bf16.msra.mxu0 0
    %3443 = vmatprep.subr.bf16.mxu0 0
    %3444 = vmatpush1.bf16.msra.mxu0 0
    %3445 = vmatprep.subr.bf16.mxu0 0
    %3446 = vmatpush1.bf16.msra.mxu0 0
    %3447 = vmatprep.subr.bf16.mxu0 0
    %3448 = vmatpush1.bf16.msra.mxu0 0
    %3449 = vmatprep.subr.bf16.mxu0 0
    %3450 = vmatpush1.bf16.msra.mxu0 0
    %3451 = vmatprep.subr.bf16.mxu0 0
    %3452 = vmatpush1.bf16.msra.mxu0 0
    %3453 = vmatprep.subr.bf16.mxu0 0
    %3454 = vmatpush1.bf16.msra.mxu0 0
    %3455 = vmatprep.mubr.bf16.mxu0 0
    %3456 = vmatmul.mubr.bf16.gmra.mrb[0].mxu0 %v1289
    %v3457 = vpop.f32.mrb[0].mxu0
    %v3458 = vadd.f32 0.0, %v3457
    %v3459 = vpop.f32.mrb[0].mxu0
    %v3460 = vadd.f32 0.0, %v3459
    %v3461 = vpop.f32.mrb[0].mxu0
    %v3462 = vpop.f32.mrb[0].mxu0
    %3463 = vdwg.mxu0
    %3464 = vmatprep.subr.bf16.mxu0 %v978
    %3465 = vmatpush1.bf16.msra.mxu0 %v977
    %3466 = vmatprep.subr.bf16.mxu0 0
    %3467 = vmatpush1.bf16.msra.mxu0 0
    %3468 = vmatprep.subr.bf16.mxu0 0
    %3469 = vmatpush1.bf16.msra.mxu0 0
    %3470 = vmatprep.subr.bf16.mxu0 0
    %3471 = vmatpush1.bf16.msra.mxu0 0
    %3472 = vmatprep.subr.bf16.mxu0 0
    %3473 = vmatpush1.bf16.msra.mxu0 0
    %3474 = vmatprep.subr.bf16.mxu0 0
    %3475 = vmatpush1.bf16.msra.mxu0 0
    %3476 = vmatprep.subr.bf16.mxu0 0
    %3477 = vmatpush1.bf16.msra.mxu0 0
    %3478 = vmatprep.subr.bf16.mxu0 0
    %3479 = vmatpush1.bf16.msra.mxu0 0
    %3480 = vmatprep.subr.bf16.mxu0 0
    %3481 = vmatpush1.bf16.msra.mxu0 0
    %3482 = vmatprep.subr.bf16.mxu0 0
    %3483 = vmatpush1.bf16.msra.mxu0 0
    %3484 = vmatprep.subr.bf16.mxu0 0
    %3485 = vmatpush1.bf16.msra.mxu0 0
    %3486 = vmatprep.subr.bf16.mxu0 0
    %3487 = vmatpush1.bf16.msra.mxu0 0
    %3488 = vmatprep.subr.bf16.mxu0 0
    %3489 = vmatpush1.bf16.msra.mxu0 0
    %3490 = vmatprep.subr.bf16.mxu0 0
    %3491 = vmatpush1.bf16.msra.mxu0 0
    %3492 = vmatprep.subr.bf16.mxu0 0
    %3493 = vmatpush1.bf16.msra.mxu0 0
    %3494 = vmatprep.subr.bf16.mxu0 0
    %3495 = vmatpush1.bf16.msra.mxu0 0
    %3496 = vmatprep.mubr.bf16.mxu0 0
    %3497 = vmatmul.mubr.bf16.gmra.mrb[0].mxu0 %v1289
    %v3498 = vpop.f32.mrb[0].mxu0
    %v3499 = vadd.f32 0.0, %v3498
    %v3500 = vpop.f32.mrb[0].mxu0
    %v3501 = vadd.f32 0.0, %v3500
    %v3502 = vpop.f32.mrb[0].mxu0
    %v3503 = vpop.f32.mrb[0].mxu0
    %3504 = vdwg.mxu0
    %3505 = vmatprep.subr.bf16.mxu0 %v980
    %3506 = vmatpush1.bf16.msra.mxu0 %v979
    %3507 = vmatprep.subr.bf16.mxu0 0
    %3508 = vmatpush1.bf16.msra.mxu0 0
    %3509 = vmatprep.subr.bf16.mxu0 0
    %3510 = vmatpush1.bf16.msra.mxu0 0
    %3511 = vmatprep.subr.bf16.mxu0 0
    %3512 = vmatpush1.bf16.msra.mxu0 0
    %3513 = vmatprep.subr.bf16.mxu0 0
    %3514 = vmatpush1.bf16.msra.mxu0 0
    %3515 = vmatprep.subr.bf16.mxu0 0
    %3516 = vmatpush1.bf16.msra.mxu0 0
    %3517 = vmatprep.subr.bf16.mxu0 0
    %3518 = vmatpush1.bf16.msra.mxu0 0
    %3519 = vmatprep.subr.bf16.mxu0 0
    %3520 = vmatpush1.bf16.msra.mxu0 0
    %3521 = vmatprep.subr.bf16.mxu0 0
    %3522 = vmatpush1.bf16.msra.mxu0 0
    %3523 = vmatprep.subr.bf16.mxu0 0
    %3524 = vmatpush1.bf16.msra.mxu0 0
    %3525 = vmatprep.subr.bf16.mxu0 0
    %3526 = vmatpush1.bf16.msra.mxu0 0
    %3527 = vmatprep.subr.bf16.mxu0 0
    %3528 = vmatpush1.bf16.msra.mxu0 0
    %3529 = vmatprep.subr.bf16.mxu0 0
    %3530 = vmatpush1.bf16.msra.mxu0 0
    %3531 = vmatprep.subr.bf16.mxu0 0
    %3532 = vmatpush1.bf16.msra.mxu0 0
    %3533 = vmatprep.subr.bf16.mxu0 0
    %3534 = vmatpush1.bf16.msra.mxu0 0
    %3535 = vmatprep.subr.bf16.mxu0 0
    %3536 = vmatpush1.bf16.msra.mxu0 0
    %3537 = vmatprep.mubr.bf16.mxu0 0
    %3538 = vmatmul.mubr.bf16.gmra.mrb[0].mxu0 %v1289
    %v3539 = vpop.f32.mrb[0].mxu0
    %v3540 = vadd.f32 0.0, %v3539
    %v3541 = vpop.f32.mrb[0].mxu0
    %v3542 = vadd.f32 0.0, %v3541
    %v3543 = vpop.f32.mrb[0].mxu0
    %v3544 = vpop.f32.mrb[0].mxu0
    %3545 = vdwg.mxu0
    %3546 = vmatprep.subr.bf16.mxu0 %v982
    %3547 = vmatpush1.bf16.msra.mxu0 %v981
    %3548 = vmatprep.subr.bf16.mxu0 0
    %3549 = vmatpush1.bf16.msra.mxu0 0
    %3550 = vmatprep.subr.bf16.mxu0 0
    %3551 = vmatpush1.bf16.msra.mxu0 0
    %3552 = vmatprep.subr.bf16.mxu0 0
    %3553 = vmatpush1.bf16.msra.mxu0 0
    %3554 = vmatprep.subr.bf16.mxu0 0
    %3555 = vmatpush1.bf16.msra.mxu0 0
    %3556 = vmatprep.subr.bf16.mxu0 0
    %3557 = vmatpush1.bf16.msra.mxu0 0
    %3558 = vmatprep.subr.bf16.mxu0 0
    %3559 = vmatpush1.bf16.msra.mxu0 0
    %3560 = vmatprep.subr.bf16.mxu0 0
    %3561 = vmatpush1.bf16.msra.mxu0 0
    %3562 = vmatprep.subr.bf16.mxu0 0
    %3563 = vmatpush1.bf16.msra.mxu0 0
    %3564 = vmatprep.subr.bf16.mxu0 0
    %3565 = vmatpush1.bf16.msra.mxu0 0
    %3566 = vmatprep.subr.bf16.mxu0 0
    %3567 = vmatpush1.bf16.msra.mxu0 0
    %3568 = vmatprep.subr.bf16.mxu0 0
    %3569 = vmatpush1.bf16.msra.mxu0 0
    %3570 = vmatprep.subr.bf16.mxu0 0
    %3571 = vmatpush1.bf16.msra.mxu0 0
    %3572 = vmatprep.subr.bf16.mxu0 0
    %3573 = vmatpush1.bf16.msra.mxu0 0
    %3574 = vmatprep.subr.bf16.mxu0 0
    %3575 = vmatpush1.bf16.msra.mxu0 0
    %3576 = vmatprep.subr.bf16.mxu0 0
    %3577 = vmatpush1.bf16.msra.mxu0 0
    %3578 = vmatprep.mubr.bf16.mxu0 0
    %3579 = vmatmul.mubr.bf16.gmra.mrb[0].mxu0 %v1289
    %v3580 = vpop.f32.mrb[0].mxu0
    %v3581 = vadd.f32 0.0, %v3580
    %v3582 = vpop.f32.mrb[0].mxu0
    %v3583 = vadd.f32 0.0, %v3582
    %v3584 = vpop.f32.mrb[0].mxu0
    %v3585 = vpop.f32.mrb[0].mxu0
    %3586 = vdwg.mxu0
    %3587 = vmatprep.subr.bf16.mxu0 %v984
    %3588 = vmatpush1.bf16.msra.mxu0 %v983
    %3589 = vmatprep.subr.bf16.mxu0 0
    %3590 = vmatpush1.bf16.msra.mxu0 0
    %3591 = vmatprep.subr.bf16.mxu0 0
    %3592 = vmatpush1.bf16.msra.mxu0 0
    %3593 = vmatprep.subr.bf16.mxu0 0
    %3594 = vmatpush1.bf16.msra.mxu0 0
    %3595 = vmatprep.subr.bf16.mxu0 0
    %3596 = vmatpush1.bf16.msra.mxu0 0
    %3597 = vmatprep.subr.bf16.mxu0 0
    %3598 = vmatpush1.bf16.msra.mxu0 0
    %3599 = vmatprep.subr.bf16.mxu0 0
    %3600 = vmatpush1.bf16.msra.mxu0 0
    %3601 = vmatprep.subr.bf16.mxu0 0
    %3602 = vmatpush1.bf16.msra.mxu0 0
    %3603 = vmatprep.subr.bf16.mxu0 0
    %3604 = vmatpush1.bf16.msra.mxu0 0
    %3605 = vmatprep.subr.bf16.mxu0 0
    %3606 = vmatpush1.bf16.msra.mxu0 0
    %3607 = vmatprep.subr.bf16.mxu0 0
    %3608 = vmatpush1.bf16.msra.mxu0 0
    %3609 = vmatprep.subr.bf16.mxu0 0
    %3610 = vmatpush1.bf16.msra.mxu0 0
    %3611 = vmatprep.subr.bf16.mxu0 0
    %3612 = vmatpush1.bf16.msra.mxu0 0
    %3613 = vmatprep.subr.bf16.mxu0 0
    %3614 = vmatpush1.bf16.msra.mxu0 0
    %3615 = vmatprep.subr.bf16.mxu0 0
    %3616 = vmatpush1.bf16.msra.mxu0 0
    %3617 = vmatprep.subr.bf16.mxu0 0
    %3618 = vmatpush1.bf16.msra.mxu0 0
    %3619 = vmatprep.mubr.bf16.mxu0 0
    %3620 = vmatmul.mubr.bf16.gmra.mrb[0].mxu0 %v1289
    %v3621 = vpop.f32.mrb[0].mxu0
    %v3622 = vadd.f32 0.0, %v3621
    %v3623 = vpop.f32.mrb[0].mxu0
    %v3624 = vadd.f32 0.0, %v3623
    %v3625 = vpop.f32.mrb[0].mxu0
    %v3626 = vpop.f32.mrb[0].mxu0
    %3627 = vdwg.mxu0
    %3628 = vmatprep.subr.bf16.mxu0 %v986
    %3629 = vmatpush1.bf16.msra.mxu0 %v985
    %3630 = vmatprep.subr.bf16.mxu0 0
    %3631 = vmatpush1.bf16.msra.mxu0 0
    %3632 = vmatprep.subr.bf16.mxu0 0
    %3633 = vmatpush1.bf16.msra.mxu0 0
    %3634 = vmatprep.subr.bf16.mxu0 0
    %3635 = vmatpush1.bf16.msra.mxu0 0
    %3636 = vmatprep.subr.bf16.mxu0 0
    %3637 = vmatpush1.bf16.msra.mxu0 0
    %3638 = vmatprep.subr.bf16.mxu0 0
    %3639 = vmatpush1.bf16.msra.mxu0 0
    %3640 = vmatprep.subr.bf16.mxu0 0
    %3641 = vmatpush1.bf16.msra.mxu0 0
    %3642 = vmatprep.subr.bf16.mxu0 0
    %3643 = vmatpush1.bf16.msra.mxu0 0
    %3644 = vmatprep.subr.bf16.mxu0 0
    %3645 = vmatpush1.bf16.msra.mxu0 0
    %3646 = vmatprep.subr.bf16.mxu0 0
    %3647 = vmatpush1.bf16.msra.mxu0 0
    %3648 = vmatprep.subr.bf16.mxu0 0
    %3649 = vmatpush1.bf16.msra.mxu0 0
    %3650 = vmatprep.subr.bf16.mxu0 0
    %3651 = vmatpush1.bf16.msra.mxu0 0
    %3652 = vmatprep.subr.bf16.mxu0 0
    %3653 = vmatpush1.bf16.msra.mxu0 0
    %3654 = vmatprep.subr.bf16.mxu0 0
    %3655 = vmatpush1.bf16.msra.mxu0 0
    %3656 = vmatprep.subr.bf16.mxu0 0
    %3657 = vmatpush1.bf16.msra.mxu0 0
    %3658 = vmatprep.subr.bf16.mxu0 0
    %3659 = vmatpush1.bf16.msra.mxu0 0
    %3660 = vmatprep.mubr.bf16.mxu0 0
    %3661 = vmatmul.mubr.bf16.gmra.mrb[0].mxu0 %v1289
    %v3662 = vpop.f32.mrb[0].mxu0
    %v3663 = vadd.f32 0.0, %v3662
    %v3664 = vpop.f32.mrb[0].mxu0
    %v3665 = vadd.f32 0.0, %v3664
    %v3666 = vpop.f32.mrb[0].mxu0
    %v3667 = vpop.f32.mrb[0].mxu0
    %3668 = vdwg.mxu0
    %3669 = vmatprep.subr.bf16.mxu0 %v988
    %3670 = vmatpush1.bf16.msra.mxu0 %v987
    %3671 = vmatprep.subr.bf16.mxu0 0
    %3672 = vmatpush1.bf16.msra.mxu0 0
    %3673 = vmatprep.subr.bf16.mxu0 0
    %3674 = vmatpush1.bf16.msra.mxu0 0
    %3675 = vmatprep.subr.bf16.mxu0 0
    %3676 = vmatpush1.bf16.msra.mxu0 0
    %3677 = vmatprep.subr.bf16.mxu0 0
    %3678 = vmatpush1.bf16.msra.mxu0 0
    %3679 = vmatprep.subr.bf16.mxu0 0
    %3680 = vmatpush1.bf16.msra.mxu0 0
    %3681 = vmatprep.subr.bf16.mxu0 0
    %3682 = vmatpush1.bf16.msra.mxu0 0
    %3683 = vmatprep.subr.bf16.mxu0 0
    %3684 = vmatpush1.bf16.msra.mxu0 0
    %3685 = vmatprep.subr.bf16.mxu0 0
    %3686 = vmatpush1.bf16.msra.mxu0 0
    %3687 = vmatprep.subr.bf16.mxu0 0
    %3688 = vmatpush1.bf16.msra.mxu0 0
    %3689 = vmatprep.subr.bf16.mxu0 0
    %3690 = vmatpush1.bf16.msra.mxu0 0
    %3691 = vmatprep.subr.bf16.mxu0 0
    %3692 = vmatpush1.bf16.msra.mxu0 0
    %3693 = vmatprep.subr.bf16.mxu0 0
    %3694 = vmatpush1.bf16.msra.mxu0 0
    %3695 = vmatprep.subr.bf16.mxu0 0
    %3696 = vmatpush1.bf16.msra.mxu0 0
    %3697 = vmatprep.subr.bf16.mxu0 0
    %3698 = vmatpush1.bf16.msra.mxu0 0
    %3699 = vmatprep.subr.bf16.mxu0 0
    %3700 = vmatpush1.bf16.msra.mxu0 0
    %3701 = vmatprep.mubr.bf16.mxu0 0
    %3702 = vmatmul.mubr.bf16.gmra.mrb[0].mxu0 %v1289
    %v3703 = vpop.f32.mrb[0].mxu0
    %v3704 = vadd.f32 0.0, %v3703
    %v3705 = vpop.f32.mrb[0].mxu0
    %v3706 = vadd.f32 0.0, %v3705
    %v3707 = vpop.f32.mrb[0].mxu0
    %v3708 = vpop.f32.mrb[0].mxu0
    %3709 = vdwg.mxu0
    %3710 = vmatprep.subr.bf16.mxu0 %v990
    %3711 = vmatpush1.bf16.msra.mxu0 %v989
    %3712 = vmatprep.subr.bf16.mxu0 0
    %3713 = vmatpush1.bf16.msra.mxu0 0
    %3714 = vmatprep.subr.bf16.mxu0 0
    %3715 = vmatpush1.bf16.msra.mxu0 0
    %3716 = vmatprep.subr.bf16.mxu0 0
    %3717 = vmatpush1.bf16.msra.mxu0 0
    %3718 = vmatprep.subr.bf16.mxu0 0
    %3719 = vmatpush1.bf16.msra.mxu0 0
    %3720 = vmatprep.subr.bf16.mxu0 0
    %3721 = vmatpush1.bf16.msra.mxu0 0
    %3722 = vmatprep.subr.bf16.mxu0 0
    %3723 = vmatpush1.bf16.msra.mxu0 0
    %3724 = vmatprep.subr.bf16.mxu0 0
    %3725 = vmatpush1.bf16.msra.mxu0 0
    %3726 = vmatprep.subr.bf16.mxu0 0
    %3727 = vmatpush1.bf16.msra.mxu0 0
    %3728 = vmatprep.subr.bf16.mxu0 0
    %3729 = vmatpush1.bf16.msra.mxu0 0
    %3730 = vmatprep.subr.bf16.mxu0 0
    %3731 = vmatpush1.bf16.msra.mxu0 0
    %3732 = vmatprep.subr.bf16.mxu0 0
    %3733 = vmatpush1.bf16.msra.mxu0 0
    %3734 = vmatprep.subr.bf16.mxu0 0
    %3735 = vmatpush1.bf16.msra.mxu0 0
    %3736 = vmatprep.subr.bf16.mxu0 0
    %3737 = vmatpush1.bf16.msra.mxu0 0
    %3738 = vmatprep.subr.bf16.mxu0 0
    %3739 = vmatpush1.bf16.msra.mxu0 0
    %3740 = vmatprep.subr.bf16.mxu0 0
    %3741 = vmatpush1.bf16.msra.mxu0 0
    %3742 = vmatprep.mubr.bf16.mxu0 0
    %3743 = vmatmul.mubr.bf16.gmra.mrb[0].mxu0 %v1289
    %v3744 = vpop.f32.mrb[0].mxu0
    %v3745 = vadd.f32 0.0, %v3744
    %v3746 = vpop.f32.mrb[0].mxu0
    %v3747 = vadd.f32 0.0, %v3746
    %v3748 = vpop.f32.mrb[0].mxu0
    %v3749 = vpop.f32.mrb[0].mxu0
    %3750 = vdwg.mxu0
    %3751 = vmatprep.subr.bf16.mxu0 %v992
    %3752 = vmatpush1.bf16.msra.mxu0 %v991
    %3753 = vmatprep.subr.bf16.mxu0 0
    %3754 = vmatpush1.bf16.msra.mxu0 0
    %3755 = vmatprep.subr.bf16.mxu0 0
    %3756 = vmatpush1.bf16.msra.mxu0 0
    %3757 = vmatprep.subr.bf16.mxu0 0
    %3758 = vmatpush1.bf16.msra.mxu0 0
    %3759 = vmatprep.subr.bf16.mxu0 0
    %3760 = vmatpush1.bf16.msra.mxu0 0
    %3761 = vmatprep.subr.bf16.mxu0 0
    %3762 = vmatpush1.bf16.msra.mxu0 0
    %3763 = vmatprep.subr.bf16.mxu0 0
    %3764 = vmatpush1.bf16.msra.mxu0 0
    %3765 = vmatprep.subr.bf16.mxu0 0
    %3766 = vmatpush1.bf16.msra.mxu0 0
    %3767 = vmatprep.subr.bf16.mxu0 0
    %3768 = vmatpush1.bf16.msra.mxu0 0
    %3769 = vmatprep.subr.bf16.mxu0 0
    %3770 = vmatpush1.bf16.msra.mxu0 0
    %3771 = vmatprep.subr.bf16.mxu0 0
    %3772 = vmatpush1.bf16.msra.mxu0 0
    %3773 = vmatprep.subr.bf16.mxu0 0
    %3774 = vmatpush1.bf16.msra.mxu0 0
    %3775 = vmatprep.subr.bf16.mxu0 0
    %3776 = vmatpush1.bf16.msra.mxu0 0
    %3777 = vmatprep.subr.bf16.mxu0 0
    %3778 = vmatpush1.bf16.msra.mxu0 0
    %3779 = vmatprep.subr.bf16.mxu0 0
    %3780 = vmatpush1.bf16.msra.mxu0 0
    %3781 = vmatprep.subr.bf16.mxu0 0
    %3782 = vmatpush1.bf16.msra.mxu0 0
    %3783 = vmatprep.mubr.bf16.mxu0 0
    %3784 = vmatmul.mubr.bf16.gmra.mrb[0].mxu0 %v1289
    %v3785 = vpop.f32.mrb[0].mxu0
    %v3786 = vadd.f32 0.0, %v3785
    %v3787 = vpop.f32.mrb[0].mxu0
    %v3788 = vadd.f32 0.0, %v3787
    %v3789 = vpop.f32.mrb[0].mxu0
    %v3790 = vpop.f32.mrb[0].mxu0
    %3791 = vdwg.mxu0
    %3792 = vmatprep.subr.bf16.mxu0 %v994
    %3793 = vmatpush1.bf16.msra.mxu0 %v993
    %3794 = vmatprep.subr.bf16.mxu0 0
    %3795 = vmatpush1.bf16.msra.mxu0 0
    %3796 = vmatprep.subr.bf16.mxu0 0
    %3797 = vmatpush1.bf16.msra.mxu0 0
    %3798 = vmatprep.subr.bf16.mxu0 0
    %3799 = vmatpush1.bf16.msra.mxu0 0
    %3800 = vmatprep.subr.bf16.mxu0 0
    %3801 = vmatpush1.bf16.msra.mxu0 0
    %3802 = vmatprep.subr.bf16.mxu0 0
    %3803 = vmatpush1.bf16.msra.mxu0 0
    %3804 = vmatprep.subr.bf16.mxu0 0
    %3805 = vmatpush1.bf16.msra.mxu0 0
    %3806 = vmatprep.subr.bf16.mxu0 0
    %3807 = vmatpush1.bf16.msra.mxu0 0
    %3808 = vmatprep.subr.bf16.mxu0 0
    %3809 = vmatpush1.bf16.msra.mxu0 0
    %3810 = vmatprep.subr.bf16.mxu0 0
    %3811 = vmatpush1.bf16.msra.mxu0 0
    %3812 = vmatprep.subr.bf16.mxu0 0
    %3813 = vmatpush1.bf16.msra.mxu0 0
    %3814 = vmatprep.subr.bf16.mxu0 0
    %3815 = vmatpush1.bf16.msra.mxu0 0
    %3816 = vmatprep.subr.bf16.mxu0 0
    %3817 = vmatpush1.bf16.msra.mxu0 0
    %3818 = vmatprep.subr.bf16.mxu0 0
    %3819 = vmatpush1.bf16.msra.mxu0 0
    %3820 = vmatprep.subr.bf16.mxu0 0
    %3821 = vmatpush1.bf16.msra.mxu0 0
    %3822 = vmatprep.subr.bf16.mxu0 0
    %3823 = vmatpush1.bf16.msra.mxu0 0
    %3824 = vmatprep.mubr.bf16.mxu0 0
    %3825 = vmatmul.mubr.bf16.gmra.mrb[0].mxu0 %v1289
    %v3826 = vpop.f32.mrb[0].mxu0
    %v3827 = vadd.f32 0.0, %v3826
    %v3828 = vpop.f32.mrb[0].mxu0
    %v3829 = vadd.f32 0.0, %v3828
    %v3830 = vpop.f32.mrb[0].mxu0
    %v3831 = vpop.f32.mrb[0].mxu0
    %3832 = vdwg.mxu0
    %3833 = vmatprep.subr.bf16.mxu0 %v996
    %3834 = vmatpush1.bf16.msra.mxu0 %v995
    %3835 = vmatprep.subr.bf16.mxu0 0
    %3836 = vmatpush1.bf16.msra.mxu0 0
    %3837 = vmatprep.subr.bf16.mxu0 0
    %3838 = vmatpush1.bf16.msra.mxu0 0
    %3839 = vmatprep.subr.bf16.mxu0 0
    %3840 = vmatpush1.bf16.msra.mxu0 0
    %3841 = vmatprep.subr.bf16.mxu0 0
    %3842 = vmatpush1.bf16.msra.mxu0 0
    %3843 = vmatprep.subr.bf16.mxu0 0
    %3844 = vmatpush1.bf16.msra.mxu0 0
    %3845 = vmatprep.subr.bf16.mxu0 0
    %3846 = vmatpush1.bf16.msra.mxu0 0
    %3847 = vmatprep.subr.bf16.mxu0 0
    %3848 = vmatpush1.bf16.msra.mxu0 0
    %3849 = vmatprep.subr.bf16.mxu0 0
    %3850 = vmatpush1.bf16.msra.mxu0 0
    %3851 = vmatprep.subr.bf16.mxu0 0
    %3852 = vmatpush1.bf16.msra.mxu0 0
    %3853 = vmatprep.subr.bf16.mxu0 0
    %3854 = vmatpush1.bf16.msra.mxu0 0
    %3855 = vmatprep.subr.bf16.mxu0 0
    %3856 = vmatpush1.bf16.msra.mxu0 0
    %3857 = vmatprep.subr.bf16.mxu0 0
    %3858 = vmatpush1.bf16.msra.mxu0 0
    %3859 = vmatprep.subr.bf16.mxu0 0
    %3860 = vmatpush1.bf16.msra.mxu0 0
    %3861 = vmatprep.subr.bf16.mxu0 0
    %3862 = vmatpush1.bf16.msra.mxu0 0
    %3863 = vmatprep.subr.bf16.mxu0 0
    %3864 = vmatpush1.bf16.msra.mxu0 0
    %3865 = vmatprep.mubr.bf16.mxu0 0
    %3866 = vmatmul.mubr.bf16.gmra.mrb[0].mxu0 %v1289
    %v3867 = vpop.f32.mrb[0].mxu0
    %v3868 = vadd.f32 0.0, %v3867
    %v3869 = vpop.f32.mrb[0].mxu0
    %v3870 = vadd.f32 0.0, %v3869
    %v3871 = vpop.f32.mrb[0].mxu0
    %v3872 = vpop.f32.mrb[0].mxu0
    %3873 = vdwg.mxu0
    %3874 = vmatprep.subr.bf16.mxu0 %v998
    %3875 = vmatpush1.bf16.msra.mxu0 %v997
    %3876 = vmatprep.subr.bf16.mxu0 0
    %3877 = vmatpush1.bf16.msra.mxu0 0
    %3878 = vmatprep.subr.bf16.mxu0 0
    %3879 = vmatpush1.bf16.msra.mxu0 0
    %3880 = vmatprep.subr.bf16.mxu0 0
    %3881 = vmatpush1.bf16.msra.mxu0 0
    %3882 = vmatprep.subr.bf16.mxu0 0
    %3883 = vmatpush1.bf16.msra.mxu0 0
    %3884 = vmatprep.subr.bf16.mxu0 0
    %3885 = vmatpush1.bf16.msra.mxu0 0
    %3886 = vmatprep.subr.bf16.mxu0 0
    %3887 = vmatpush1.bf16.msra.mxu0 0
    %3888 = vmatprep.subr.bf16.mxu0 0
    %3889 = vmatpush1.bf16.msra.mxu0 0
    %3890 = vmatprep.subr.bf16.mxu0 0
    %3891 = vmatpush1.bf16.msra.mxu0 0
    %3892 = vmatprep.subr.bf16.mxu0 0
    %3893 = vmatpush1.bf16.msra.mxu0 0
    %3894 = vmatprep.subr.bf16.mxu0 0
    %3895 = vmatpush1.bf16.msra.mxu0 0
    %3896 = vmatprep.subr.bf16.mxu0 0
    %3897 = vmatpush1.bf16.msra.mxu0 0
    %3898 = vmatprep.subr.bf16.mxu0 0
    %3899 = vmatpush1.bf16.msra.mxu0 0
    %3900 = vmatprep.subr.bf16.mxu0 0
    %3901 = vmatpush1.bf16.msra.mxu0 0
    %3902 = vmatprep.subr.bf16.mxu0 0
    %3903 = vmatpush1.bf16.msra.mxu0 0
    %3904 = vmatprep.subr.bf16.mxu0 0
    %3905 = vmatpush1.bf16.msra.mxu0 0
    %3906 = vmatprep.mubr.bf16.mxu0 0
    %3907 = vmatmul.mubr.bf16.gmra.mrb[0].mxu0 %v1289
    %v3908 = vpop.f32.mrb[0].mxu0
    %v3909 = vadd.f32 0.0, %v3908
    %v3910 = vpop.f32.mrb[0].mxu0
    %v3911 = vadd.f32 0.0, %v3910
    %v3912 = vpop.f32.mrb[0].mxu0
    %v3913 = vpop.f32.mrb[0].mxu0
    %3914 = vdwg.mxu0
    %3915 = vmatprep.subr.bf16.mxu0 %v1000
    %3916 = vmatpush1.bf16.msra.mxu0 %v999
    %3917 = vmatprep.subr.bf16.mxu0 0
    %3918 = vmatpush1.bf16.msra.mxu0 0
    %3919 = vmatprep.subr.bf16.mxu0 0
    %3920 = vmatpush1.bf16.msra.mxu0 0
    %3921 = vmatprep.subr.bf16.mxu0 0
    %3922 = vmatpush1.bf16.msra.mxu0 0
    %3923 = vmatprep.subr.bf16.mxu0 0
    %3924 = vmatpush1.bf16.msra.mxu0 0
    %3925 = vmatprep.subr.bf16.mxu0 0
    %3926 = vmatpush1.bf16.msra.mxu0 0
    %3927 = vmatprep.subr.bf16.mxu0 0
    %3928 = vmatpush1.bf16.msra.mxu0 0
    %3929 = vmatprep.subr.bf16.mxu0 0
    %3930 = vmatpush1.bf16.msra.mxu0 0
    %3931 = vmatprep.subr.bf16.mxu0 0
    %3932 = vmatpush1.bf16.msra.mxu0 0
    %3933 = vmatprep.subr.bf16.mxu0 0
    %3934 = vmatpush1.bf16.msra.mxu0 0
    %3935 = vmatprep.subr.bf16.mxu0 0
    %3936 = vmatpush1.bf16.msra.mxu0 0
    %3937 = vmatprep.subr.bf16.mxu0 0
    %3938 = vmatpush1.bf16.msra.mxu0 0
    %3939 = vmatprep.subr.bf16.mxu0 0
    %3940 = vmatpush1.bf16.msra.mxu0 0
    %3941 = vmatprep.subr.bf16.mxu0 0
    %3942 = vmatpush1.bf16.msra.mxu0 0
    %3943 = vmatprep.subr.bf16.mxu0 0
    %3944 = vmatpush1.bf16.msra.mxu0 0
    %3945 = vmatprep.subr.bf16.mxu0 0
    %3946 = vmatpush1.bf16.msra.mxu0 0
    %3947 = vmatprep.mubr.bf16.mxu0 0
    %3948 = vmatmul.mubr.bf16.gmra.mrb[0].mxu0 %v1289
    %v3949 = vpop.f32.mrb[0].mxu0
    %v3950 = vadd.f32 0.0, %v3949
    %v3951 = vpop.f32.mrb[0].mxu0
    %v3952 = vadd.f32 0.0, %v3951
    %v3953 = vpop.f32.mrb[0].mxu0
    %v3954 = vpop.f32.mrb[0].mxu0
    %3955 = vdwg.mxu0
    %3956 = vmatprep.subr.bf16.mxu0 %v1002
    %3957 = vmatpush1.bf16.msra.mxu0 %v1001
    %3958 = vmatprep.subr.bf16.mxu0 0
    %3959 = vmatpush1.bf16.msra.mxu0 0
    %3960 = vmatprep.subr.bf16.mxu0 0
    %3961 = vmatpush1.bf16.msra.mxu0 0
    %3962 = vmatprep.subr.bf16.mxu0 0
    %3963 = vmatpush1.bf16.msra.mxu0 0
    %3964 = vmatprep.subr.bf16.mxu0 0
    %3965 = vmatpush1.bf16.msra.mxu0 0
    %3966 = vmatprep.subr.bf16.mxu0 0
    %3967 = vmatpush1.bf16.msra.mxu0 0
    %3968 = vmatprep.subr.bf16.mxu0 0
    %3969 = vmatpush1.bf16.msra.mxu0 0
    %3970 = vmatprep.subr.bf16.mxu0 0
    %3971 = vmatpush1.bf16.msra.mxu0 0
    %3972 = vmatprep.subr.bf16.mxu0 0
    %3973 = vmatpush1.bf16.msra.mxu0 0
    %3974 = vmatprep.subr.bf16.mxu0 0
    %3975 = vmatpush1.bf16.msra.mxu0 0
    %3976 = vmatprep.subr.bf16.mxu0 0
    %3977 = vmatpush1.bf16.msra.mxu0 0
    %3978 = vmatprep.subr.bf16.mxu0 0
    %3979 = vmatpush1.bf16.msra.mxu0 0
    %3980 = vmatprep.subr.bf16.mxu0 0
    %3981 = vmatpush1.bf16.msra.mxu0 0
    %3982 = vmatprep.subr.bf16.mxu0 0
    %3983 = vmatpush1.bf16.msra.mxu0 0
    %3984 = vmatprep.subr.bf16.mxu0 0
    %3985 = vmatpush1.bf16.msra.mxu0 0
    %3986 = vmatprep.subr.bf16.mxu0 0
    %3987 = vmatpush1.bf16.msra.mxu0 0
    %3988 = vmatprep.mubr.bf16.mxu0 0
    %3989 = vmatmul.mubr.bf16.gmra.mrb[0].mxu0 %v1289
    %v3990 = vpop.f32.mrb[0].mxu0
    %v3991 = vadd.f32 0.0, %v3990
    %v3992 = vpop.f32.mrb[0].mxu0
    %v3993 = vadd.f32 0.0, %v3992
    %v3994 = vpop.f32.mrb[0].mxu0
    %v3995 = vpop.f32.mrb[0].mxu0
    %3996 = vdwg.mxu0
    %3997 = vmatprep.subr.bf16.mxu0 %v1004
    %3998 = vmatpush1.bf16.msra.mxu0 %v1003
    %3999 = vmatprep.subr.bf16.mxu0 0
    %4000 = vmatpush1.bf16.msra.mxu0 0
    %4001 = vmatprep.subr.bf16.mxu0 0
    %4002 = vmatpush1.bf16.msra.mxu0 0
    %4003 = vmatprep.subr.bf16.mxu0 0
    %4004 = vmatpush1.bf16.msra.mxu0 0
    %4005 = vmatprep.subr.bf16.mxu0 0
    %4006 = vmatpush1.bf16.msra.mxu0 0
    %4007 = vmatprep.subr.bf16.mxu0 0
    %4008 = vmatpush1.bf16.msra.mxu0 0
    %4009 = vmatprep.subr.bf16.mxu0 0
    %4010 = vmatpush1.bf16.msra.mxu0 0
    %4011 = vmatprep.subr.bf16.mxu0 0
    %4012 = vmatpush1.bf16.msra.mxu0 0
    %4013 = vmatprep.subr.bf16.mxu0 0
    %4014 = vmatpush1.bf16.msra.mxu0 0
    %4015 = vmatprep.subr.bf16.mxu0 0
    %4016 = vmatpush1.bf16.msra.mxu0 0
    %4017 = vmatprep.subr.bf16.mxu0 0
    %4018 = vmatpush1.bf16.msra.mxu0 0
    %4019 = vmatprep.subr.bf16.mxu0 0
    %4020 = vmatpush1.bf16.msra.mxu0 0
    %4021 = vmatprep.subr.bf16.mxu0 0
    %4022 = vmatpush1.bf16.msra.mxu0 0
    %4023 = vmatprep.subr.bf16.mxu0 0
    %4024 = vmatpush1.bf16.msra.mxu0 0
    %4025 = vmatprep.subr.bf16.mxu0 0
    %4026 = vmatpush1.bf16.msra.mxu0 0
    %4027 = vmatprep.subr.bf16.mxu0 0
    %4028 = vmatpush1.bf16.msra.mxu0 0
    %4029 = vmatprep.mubr.bf16.mxu0 0
    %4030 = vmatmul.mubr.bf16.gmra.mrb[0].mxu0 %v1289
    %v4031 = vpop.f32.mrb[0].mxu0
    %v4032 = vadd.f32 0.0, %v4031
    %v4033 = vpop.f32.mrb[0].mxu0
    %v4034 = vadd.f32 0.0, %v4033
    %v4035 = vpop.f32.mrb[0].mxu0
    %v4036 = vpop.f32.mrb[0].mxu0
    %4037 = vdwg.mxu0
    %4038 = vmatprep.subr.bf16.mxu0 %v1006
    %4039 = vmatpush1.bf16.msra.mxu0 %v1005
    %4040 = vmatprep.subr.bf16.mxu0 0
    %4041 = vmatpush1.bf16.msra.mxu0 0
    %4042 = vmatprep.subr.bf16.mxu0 0
    %4043 = vmatpush1.bf16.msra.mxu0 0
    %4044 = vmatprep.subr.bf16.mxu0 0
    %4045 = vmatpush1.bf16.msra.mxu0 0
    %4046 = vmatprep.subr.bf16.mxu0 0
    %4047 = vmatpush1.bf16.msra.mxu0 0
    %4048 = vmatprep.subr.bf16.mxu0 0
    %4049 = vmatpush1.bf16.msra.mxu0 0
    %4050 = vmatprep.subr.bf16.mxu0 0
    %4051 = vmatpush1.bf16.msra.mxu0 0
    %4052 = vmatprep.subr.bf16.mxu0 0
    %4053 = vmatpush1.bf16.msra.mxu0 0
    %4054 = vmatprep.subr.bf16.mxu0 0
    %4055 = vmatpush1.bf16.msra.mxu0 0
    %4056 = vmatprep.subr.bf16.mxu0 0
    %4057 = vmatpush1.bf16.msra.mxu0 0
    %4058 = vmatprep.subr.bf16.mxu0 0
    %4059 = vmatpush1.bf16.msra.mxu0 0
    %4060 = vmatprep.subr.bf16.mxu0 0
    %4061 = vmatpush1.bf16.msra.mxu0 0
    %4062 = vmatprep.subr.bf16.mxu0 0
    %4063 = vmatpush1.bf16.msra.mxu0 0
    %4064 = vmatprep.subr.bf16.mxu0 0
    %4065 = vmatpush1.bf16.msra.mxu0 0
    %4066 = vmatprep.subr.bf16.mxu0 0
    %4067 = vmatpush1.bf16.msra.mxu0 0
    %4068 = vmatprep.subr.bf16.mxu0 0
    %4069 = vmatpush1.bf16.msra.mxu0 0
    %4070 = vmatprep.mubr.bf16.mxu0 0
    %4071 = vmatmul.mubr.bf16.gmra.mrb[0].mxu0 %v1289
    %v4072 = vpop.f32.mrb[0].mxu0
    %v4073 = vadd.f32 0.0, %v4072
    %v4074 = vpop.f32.mrb[0].mxu0
    %v4075 = vadd.f32 0.0, %v4074
    %v4076 = vpop.f32.mrb[0].mxu0
    %v4077 = vpop.f32.mrb[0].mxu0
    %4078 = vdwg.mxu0
    %4079 = vmatprep.subr.bf16.mxu0 %v1008
    %4080 = vmatpush1.bf16.msra.mxu0 %v1007
    %4081 = vmatprep.subr.bf16.mxu0 0
    %4082 = vmatpush1.bf16.msra.mxu0 0
    %4083 = vmatprep.subr.bf16.mxu0 0
    %4084 = vmatpush1.bf16.msra.mxu0 0
    %4085 = vmatprep.subr.bf16.mxu0 0
    %4086 = vmatpush1.bf16.msra.mxu0 0
    %4087 = vmatprep.subr.bf16.mxu0 0
    %4088 = vmatpush1.bf16.msra.mxu0 0
    %4089 = vmatprep.subr.bf16.mxu0 0
    %4090 = vmatpush1.bf16.msra.mxu0 0
    %4091 = vmatprep.subr.bf16.mxu0 0
    %4092 = vmatpush1.bf16.msra.mxu0 0
    %4093 = vmatprep.subr.bf16.mxu0 0
    %4094 = vmatpush1.bf16.msra.mxu0 0
    %4095 = vmatprep.subr.bf16.mxu0 0
    %4096 = vmatpush1.bf16.msra.mxu0 0
    %4097 = vmatprep.subr.bf16.mxu0 0
    %4098 = vmatpush1.bf16.msra.mxu0 0
    %4099 = vmatprep.subr.bf16.mxu0 0
    %4100 = vmatpush1.bf16.msra.mxu0 0
    %4101 = vmatprep.subr.bf16.mxu0 0
    %4102 = vmatpush1.bf16.msra.mxu0 0
    %4103 = vmatprep.subr.bf16.mxu0 0
    %4104 = vmatpush1.bf16.msra.mxu0 0
    %4105 = vmatprep.subr.bf16.mxu0 0
    %4106 = vmatpush1.bf16.msra.mxu0 0
    %4107 = vmatprep.subr.bf16.mxu0 0
    %4108 = vmatpush1.bf16.msra.mxu0 0
    %4109 = vmatprep.subr.bf16.mxu0 0
    %4110 = vmatpush1.bf16.msra.mxu0 0
    %4111 = vmatprep.mubr.bf16.mxu0 0
    %4112 = vmatmul.mubr.bf16.gmra.mrb[0].mxu0 %v1289
    %v4113 = vpop.f32.mrb[0].mxu0
    %v4114 = vadd.f32 0.0, %v4113
    %v4115 = vpop.f32.mrb[0].mxu0
    %v4116 = vadd.f32 0.0, %v4115
    %v4117 = vpop.f32.mrb[0].mxu0
    %v4118 = vpop.f32.mrb[0].mxu0
    %4119 = vdwg.mxu0
    %4120 = vmatprep.subr.bf16.mxu0 %v1010
    %4121 = vmatpush1.bf16.msra.mxu0 %v1009
    %4122 = vmatprep.subr.bf16.mxu0 0
    %4123 = vmatpush1.bf16.msra.mxu0 0
    %4124 = vmatprep.subr.bf16.mxu0 0
    %4125 = vmatpush1.bf16.msra.mxu0 0
    %4126 = vmatprep.subr.bf16.mxu0 0
    %4127 = vmatpush1.bf16.msra.mxu0 0
    %4128 = vmatprep.subr.bf16.mxu0 0
    %4129 = vmatpush1.bf16.msra.mxu0 0
    %4130 = vmatprep.subr.bf16.mxu0 0
    %4131 = vmatpush1.bf16.msra.mxu0 0
    %4132 = vmatprep.subr.bf16.mxu0 0
    %4133 = vmatpush1.bf16.msra.mxu0 0
    %4134 = vmatprep.subr.bf16.mxu0 0
    %4135 = vmatpush1.bf16.msra.mxu0 0
    %4136 = vmatprep.subr.bf16.mxu0 0
    %4137 = vmatpush1.bf16.msra.mxu0 0
    %4138 = vmatprep.subr.bf16.mxu0 0
    %4139 = vmatpush1.bf16.msra.mxu0 0
    %4140 = vmatprep.subr.bf16.mxu0 0
    %4141 = vmatpush1.bf16.msra.mxu0 0
    %4142 = vmatprep.subr.bf16.mxu0 0
    %4143 = vmatpush1.bf16.msra.mxu0 0
    %4144 = vmatprep.subr.bf16.mxu0 0
    %4145 = vmatpush1.bf16.msra.mxu0 0
    %4146 = vmatprep.subr.bf16.mxu0 0
    %4147 = vmatpush1.bf16.msra.mxu0 0
    %4148 = vmatprep.subr.bf16.mxu0 0
    %4149 = vmatpush1.bf16.msra.mxu0 0
    %4150 = vmatprep.subr.bf16.mxu0 0
    %4151 = vmatpush1.bf16.msra.mxu0 0
    %4152 = vmatprep.mubr.bf16.mxu0 0
    %4153 = vmatmul.mubr.bf16.gmra.mrb[0].mxu0 %v1289
    %v4154 = vpop.f32.mrb[0].mxu0
    %v4155 = vadd.f32 0.0, %v4154
    %v4156 = vpop.f32.mrb[0].mxu0
    %v4157 = vadd.f32 0.0, %v4156
    %v4158 = vpop.f32.mrb[0].mxu0
    %v4159 = vpop.f32.mrb[0].mxu0
    %4160 = vdwg.mxu0
    %4161 = vmatprep.subr.bf16.mxu0 %v1012
    %4162 = vmatpush1.bf16.msra.mxu0 %v1011
    %4163 = vmatprep.subr.bf16.mxu0 0
    %4164 = vmatpush1.bf16.msra.mxu0 0
    %4165 = vmatprep.subr.bf16.mxu0 0
    %4166 = vmatpush1.bf16.msra.mxu0 0
    %4167 = vmatprep.subr.bf16.mxu0 0
    %4168 = vmatpush1.bf16.msra.mxu0 0
    %4169 = vmatprep.subr.bf16.mxu0 0
    %4170 = vmatpush1.bf16.msra.mxu0 0
    %4171 = vmatprep.subr.bf16.mxu0 0
    %4172 = vmatpush1.bf16.msra.mxu0 0
    %4173 = vmatprep.subr.bf16.mxu0 0
    %4174 = vmatpush1.bf16.msra.mxu0 0
    %4175 = vmatprep.subr.bf16.mxu0 0
    %4176 = vmatpush1.bf16.msra.mxu0 0
    %4177 = vmatprep.subr.bf16.mxu0 0
    %4178 = vmatpush1.bf16.msra.mxu0 0
    %4179 = vmatprep.subr.bf16.mxu0 0
    %4180 = vmatpush1.bf16.msra.mxu0 0
    %4181 = vmatprep.subr.bf16.mxu0 0
    %4182 = vmatpush1.bf16.msra.mxu0 0
    %4183 = vmatprep.subr.bf16.mxu0 0
    %4184 = vmatpush1.bf16.msra.mxu0 0
    %4185 = vmatprep.subr.bf16.mxu0 0
    %4186 = vmatpush1.bf16.msra.mxu0 0
    %4187 = vmatprep.subr.bf16.mxu0 0
    %4188 = vmatpush1.bf16.msra.mxu0 0
    %4189 = vmatprep.subr.bf16.mxu0 0
    %4190 = vmatpush1.bf16.msra.mxu0 0
    %4191 = vmatprep.subr.bf16.mxu0 0
    %4192 = vmatpush1.bf16.msra.mxu0 0
    %4193 = vmatprep.mubr.bf16.mxu0 0
    %4194 = vmatmul.mubr.bf16.gmra.mrb[0].mxu0 %v1289
    %v4195 = vpop.f32.mrb[0].mxu0
    %v4196 = vadd.f32 0.0, %v4195
    %v4197 = vpop.f32.mrb[0].mxu0
    %v4198 = vadd.f32 0.0, %v4197
    %v4199 = vpop.f32.mrb[0].mxu0
    %v4200 = vpop.f32.mrb[0].mxu0
    %4201 = vdwg.mxu0
    %4202 = vmatprep.subr.bf16.mxu0 %v1014
    %4203 = vmatpush1.bf16.msra.mxu0 %v1013
    %4204 = vmatprep.subr.bf16.mxu0 0
    %4205 = vmatpush1.bf16.msra.mxu0 0
    %4206 = vmatprep.subr.bf16.mxu0 0
    %4207 = vmatpush1.bf16.msra.mxu0 0
    %4208 = vmatprep.subr.bf16.mxu0 0
    %4209 = vmatpush1.bf16.msra.mxu0 0
    %4210 = vmatprep.subr.bf16.mxu0 0
    %4211 = vmatpush1.bf16.msra.mxu0 0
    %4212 = vmatprep.subr.bf16.mxu0 0
    %4213 = vmatpush1.bf16.msra.mxu0 0
    %4214 = vmatprep.subr.bf16.mxu0 0
    %4215 = vmatpush1.bf16.msra.mxu0 0
    %4216 = vmatprep.subr.bf16.mxu0 0
    %4217 = vmatpush1.bf16.msra.mxu0 0
    %4218 = vmatprep.subr.bf16.mxu0 0
    %4219 = vmatpush1.bf16.msra.mxu0 0
    %4220 = vmatprep.subr.bf16.mxu0 0
    %4221 = vmatpush1.bf16.msra.mxu0 0
    %4222 = vmatprep.subr.bf16.mxu0 0
    %4223 = vmatpush1.bf16.msra.mxu0 0
    %4224 = vmatprep.subr.bf16.mxu0 0
    %4225 = vmatpush1.bf16.msra.mxu0 0
    %4226 = vmatprep.subr.bf16.mxu0 0
    %4227 = vmatpush1.bf16.msra.mxu0 0
    %4228 = vmatprep.subr.bf16.mxu0 0
    %4229 = vmatpush1.bf16.msra.mxu0 0
    %4230 = vmatprep.subr.bf16.mxu0 0
    %4231 = vmatpush1.bf16.msra.mxu0 0
    %4232 = vmatprep.subr.bf16.mxu0 0
    %4233 = vmatpush1.bf16.msra.mxu0 0
    %4234 = vmatprep.mubr.bf16.mxu0 0
    %4235 = vmatmul.mubr.bf16.gmra.mrb[0].mxu0 %v1289
    %v4236 = vpop.f32.mrb[0].mxu0
    %v4237 = vadd.f32 0.0, %v4236
    %v4238 = vpop.f32.mrb[0].mxu0
    %v4239 = vadd.f32 0.0, %v4238
    %v4240 = vpop.f32.mrb[0].mxu0
    %v4241 = vpop.f32.mrb[0].mxu0
    %4242 = vdwg.mxu0
    %4243 = vmatprep.subr.bf16.mxu0 %v1016
    %4244 = vmatpush1.bf16.msra.mxu0 %v1015
    %4245 = vmatprep.subr.bf16.mxu0 0
    %4246 = vmatpush1.bf16.msra.mxu0 0
    %4247 = vmatprep.subr.bf16.mxu0 0
    %4248 = vmatpush1.bf16.msra.mxu0 0
    %4249 = vmatprep.subr.bf16.mxu0 0
    %4250 = vmatpush1.bf16.msra.mxu0 0
    %4251 = vmatprep.subr.bf16.mxu0 0
    %4252 = vmatpush1.bf16.msra.mxu0 0
    %4253 = vmatprep.subr.bf16.mxu0 0
    %4254 = vmatpush1.bf16.msra.mxu0 0
    %4255 = vmatprep.subr.bf16.mxu0 0
    %4256 = vmatpush1.bf16.msra.mxu0 0
    %4257 = vmatprep.subr.bf16.mxu0 0
    %4258 = vmatpush1.bf16.msra.mxu0 0
    %4259 = vmatprep.subr.bf16.mxu0 0
    %4260 = vmatpush1.bf16.msra.mxu0 0
    %4261 = vmatprep.subr.bf16.mxu0 0
    %4262 = vmatpush1.bf16.msra.mxu0 0
    %4263 = vmatprep.subr.bf16.mxu0 0
    %4264 = vmatpush1.bf16.msra.mxu0 0
    %4265 = vmatprep.subr.bf16.mxu0 0
    %4266 = vmatpush1.bf16.msra.mxu0 0
    %4267 = vmatprep.subr.bf16.mxu0 0
    %4268 = vmatpush1.bf16.msra.mxu0 0
    %4269 = vmatprep.subr.bf16.mxu0 0
    %4270 = vmatpush1.bf16.msra.mxu0 0
    %4271 = vmatprep.subr.bf16.mxu0 0
    %4272 = vmatpush1.bf16.msra.mxu0 0
    %4273 = vmatprep.subr.bf16.mxu0 0
    %4274 = vmatpush1.bf16.msra.mxu0 0
    %4275 = vmatprep.mubr.bf16.mxu0 0
    %4276 = vmatmul.mubr.bf16.gmra.mrb[0].mxu0 %v1289
    %v4277 = vpop.f32.mrb[0].mxu0
    %v4278 = vadd.f32 0.0, %v4277
    %v4279 = vpop.f32.mrb[0].mxu0
    %v4280 = vadd.f32 0.0, %v4279
    %v4281 = vpop.f32.mrb[0].mxu0
    %v4282 = vpop.f32.mrb[0].mxu0
    %4283 = vdwg.mxu0
    %4284 = vmatprep.subr.bf16.mxu0 %v1018
    %4285 = vmatpush1.bf16.msra.mxu0 %v1017
    %4286 = vmatprep.subr.bf16.mxu0 0
    %4287 = vmatpush1.bf16.msra.mxu0 0
    %4288 = vmatprep.subr.bf16.mxu0 0
    %4289 = vmatpush1.bf16.msra.mxu0 0
    %4290 = vmatprep.subr.bf16.mxu0 0
    %4291 = vmatpush1.bf16.msra.mxu0 0
    %4292 = vmatprep.subr.bf16.mxu0 0
    %4293 = vmatpush1.bf16.msra.mxu0 0
    %4294 = vmatprep.subr.bf16.mxu0 0
    %4295 = vmatpush1.bf16.msra.mxu0 0
    %4296 = vmatprep.subr.bf16.mxu0 0
    %4297 = vmatpush1.bf16.msra.mxu0 0
    %4298 = vmatprep.subr.bf16.mxu0 0
    %4299 = vmatpush1.bf16.msra.mxu0 0
    %4300 = vmatprep.subr.bf16.mxu0 0
    %4301 = vmatpush1.bf16.msra.mxu0 0
    %4302 = vmatprep.subr.bf16.mxu0 0
    %4303 = vmatpush1.bf16.msra.mxu0 0
    %4304 = vmatprep.subr.bf16.mxu0 0
    %4305 = vmatpush1.bf16.msra.mxu0 0
    %4306 = vmatprep.subr.bf16.mxu0 0
    %4307 = vmatpush1.bf16.msra.mxu0 0
    %4308 = vmatprep.subr.bf16.mxu0 0
    %4309 = vmatpush1.bf16.msra.mxu0 0
    %4310 = vmatprep.subr.bf16.mxu0 0
    %4311 = vmatpush1.bf16.msra.mxu0 0
    %4312 = vmatprep.subr.bf16.mxu0 0
    %4313 = vmatpush1.bf16.msra.mxu0 0
    %4314 = vmatprep.subr.bf16.mxu0 0
    %4315 = vmatpush1.bf16.msra.mxu0 0
    %4316 = vmatprep.mubr.bf16.mxu0 0
    %4317 = vmatmul.mubr.bf16.gmra.mrb[0].mxu0 %v1289
    %v4318 = vpop.f32.mrb[0].mxu0
    %v4319 = vadd.f32 0.0, %v4318
    %v4320 = vpop.f32.mrb[0].mxu0
    %v4321 = vadd.f32 0.0, %v4320
    %v4322 = vpop.f32.mrb[0].mxu0
    %v4323 = vpop.f32.mrb[0].mxu0
    %4324 = vdwg.mxu0
    %4325 = vmatprep.subr.bf16.mxu0 %v1020
    %4326 = vmatpush1.bf16.msra.mxu0 %v1019
    %4327 = vmatprep.subr.bf16.mxu0 0
    %4328 = vmatpush1.bf16.msra.mxu0 0
    %4329 = vmatprep.subr.bf16.mxu0 0
    %4330 = vmatpush1.bf16.msra.mxu0 0
    %4331 = vmatprep.subr.bf16.mxu0 0
    %4332 = vmatpush1.bf16.msra.mxu0 0
    %4333 = vmatprep.subr.bf16.mxu0 0
    %4334 = vmatpush1.bf16.msra.mxu0 0
    %4335 = vmatprep.subr.bf16.mxu0 0
    %4336 = vmatpush1.bf16.msra.mxu0 0
    %4337 = vmatprep.subr.bf16.mxu0 0
    %4338 = vmatpush1.bf16.msra.mxu0 0
    %4339 = vmatprep.subr.bf16.mxu0 0
    %4340 = vmatpush1.bf16.msra.mxu0 0
    %4341 = vmatprep.subr.bf16.mxu0 0
    %4342 = vmatpush1.bf16.msra.mxu0 0
    %4343 = vmatprep.subr.bf16.mxu0 0
    %4344 = vmatpush1.bf16.msra.mxu0 0
    %4345 = vmatprep.subr.bf16.mxu0 0
    %4346 = vmatpush1.bf16.msra.mxu0 0
    %4347 = vmatprep.subr.bf16.mxu0 0
    %4348 = vmatpush1.bf16.msra.mxu0 0
    %4349 = vmatprep.subr.bf16.mxu0 0
    %4350 = vmatpush1.bf16.msra.mxu0 0
    %4351 = vmatprep.subr.bf16.mxu0 0
    %4352 = vmatpush1.bf16.msra.mxu0 0
    %4353 = vmatprep.subr.bf16.mxu0 0
    %4354 = vmatpush1.bf16.msra.mxu0 0
    %4355 = vmatprep.subr.bf16.mxu0 0
    %4356 = vmatpush1.bf16.msra.mxu0 0
    %4357 = vmatprep.mubr.bf16.mxu0 0
    %4358 = vmatmul.mubr.bf16.gmra.mrb[0].mxu0 %v1289
    %v4359 = vpop.f32.mrb[0].mxu0
    %v4360 = vadd.f32 0.0, %v4359
    %v4361 = vpop.f32.mrb[0].mxu0
    %v4362 = vadd.f32 0.0, %v4361
    %v4363 = vpop.f32.mrb[0].mxu0
    %v4364 = vpop.f32.mrb[0].mxu0
    %4365 = vdwg.mxu0
    %4366 = vmatprep.subr.bf16.mxu0 %v1022
    %4367 = vmatpush1.bf16.msra.mxu0 %v1021
    %4368 = vmatprep.subr.bf16.mxu0 0
    %4369 = vmatpush1.bf16.msra.mxu0 0
    %4370 = vmatprep.subr.bf16.mxu0 0
    %4371 = vmatpush1.bf16.msra.mxu0 0
    %4372 = vmatprep.subr.bf16.mxu0 0
    %4373 = vmatpush1.bf16.msra.mxu0 0
    %4374 = vmatprep.subr.bf16.mxu0 0
    %4375 = vmatpush1.bf16.msra.mxu0 0
    %4376 = vmatprep.subr.bf16.mxu0 0
    %4377 = vmatpush1.bf16.msra.mxu0 0
    %4378 = vmatprep.subr.bf16.mxu0 0
    %4379 = vmatpush1.bf16.msra.mxu0 0
    %4380 = vmatprep.subr.bf16.mxu0 0
    %4381 = vmatpush1.bf16.msra.mxu0 0
    %4382 = vmatprep.subr.bf16.mxu0 0
    %4383 = vmatpush1.bf16.msra.mxu0 0
    %4384 = vmatprep.subr.bf16.mxu0 0
    %4385 = vmatpush1.bf16.msra.mxu0 0
    %4386 = vmatprep.subr.bf16.mxu0 0
    %4387 = vmatpush1.bf16.msra.mxu0 0
    %4388 = vmatprep.subr.bf16.mxu0 0
    %4389 = vmatpush1.bf16.msra.mxu0 0
    %4390 = vmatprep.subr.bf16.mxu0 0
    %4391 = vmatpush1.bf16.msra.mxu0 0
    %4392 = vmatprep.subr.bf16.mxu0 0
    %4393 = vmatpush1.bf16.msra.mxu0 0
    %4394 = vmatprep.subr.bf16.mxu0 0
    %4395 = vmatpush1.bf16.msra.mxu0 0
    %4396 = vmatprep.subr.bf16.mxu0 0
    %4397 = vmatpush1.bf16.msra.mxu0 0
    %4398 = vmatprep.mubr.bf16.mxu0 0
    %4399 = vmatmul.mubr.bf16.gmra.mrb[0].mxu0 %v1289
    %v4400 = vpop.f32.mrb[0].mxu0
    %v4401 = vadd.f32 0.0, %v4400
    %v4402 = vpop.f32.mrb[0].mxu0
    %v4403 = vadd.f32 0.0, %v4402
    %v4404 = vpop.f32.mrb[0].mxu0
    %v4405 = vpop.f32.mrb[0].mxu0
    %4406 = vdwg.mxu0
    %4407 = vmatprep.subr.bf16.mxu0 %v1024
    %4408 = vmatpush1.bf16.msra.mxu0 %v1023
    %4409 = vmatprep.subr.bf16.mxu0 0
    %4410 = vmatpush1.bf16.msra.mxu0 0
    %4411 = vmatprep.subr.bf16.mxu0 0
    %4412 = vmatpush1.bf16.msra.mxu0 0
    %4413 = vmatprep.subr.bf16.mxu0 0
    %4414 = vmatpush1.bf16.msra.mxu0 0
    %4415 = vmatprep.subr.bf16.mxu0 0
    %4416 = vmatpush1.bf16.msra.mxu0 0
    %4417 = vmatprep.subr.bf16.mxu0 0
    %4418 = vmatpush1.bf16.msra.mxu0 0
    %4419 = vmatprep.subr.bf16.mxu0 0
    %4420 = vmatpush1.bf16.msra.mxu0 0
    %4421 = vmatprep.subr.bf16.mxu0 0
    %4422 = vmatpush1.bf16.msra.mxu0 0
    %4423 = vmatprep.subr.bf16.mxu0 0
    %4424 = vmatpush1.bf16.msra.mxu0 0
    %4425 = vmatprep.subr.bf16.mxu0 0
    %4426 = vmatpush1.bf16.msra.mxu0 0
    %4427 = vmatprep.subr.bf16.mxu0 0
    %4428 = vmatpush1.bf16.msra.mxu0 0
    %4429 = vmatprep.subr.bf16.mxu0 0
    %4430 = vmatpush1.bf16.msra.mxu0 0
    %4431 = vmatprep.subr.bf16.mxu0 0
    %4432 = vmatpush1.bf16.msra.mxu0 0
    %4433 = vmatprep.subr.bf16.mxu0 0
    %4434 = vmatpush1.bf16.msra.mxu0 0
    %4435 = vmatprep.subr.bf16.mxu0 0
    %4436 = vmatpush1.bf16.msra.mxu0 0
    %4437 = vmatprep.subr.bf16.mxu0 0
    %4438 = vmatpush1.bf16.msra.mxu0 0
    %4439 = vmatprep.mubr.bf16.mxu0 0
    %4440 = vmatmul.mubr.bf16.gmra.mrb[0].mxu0 %v1289
    %v4441 = vpop.f32.mrb[0].mxu0
    %v4442 = vadd.f32 0.0, %v4441
    %v4443 = vpop.f32.mrb[0].mxu0
    %v4444 = vadd.f32 0.0, %v4443
    %v4445 = vpop.f32.mrb[0].mxu0
    %v4446 = vpop.f32.mrb[0].mxu0
    %4447 = vdwg.mxu0
    %4448 = vmatprep.subr.bf16.mxu0 %v1026
    %4449 = vmatpush1.bf16.msra.mxu0 %v1025
    %4450 = vmatprep.subr.bf16.mxu0 0
    %4451 = vmatpush1.bf16.msra.mxu0 0
    %4452 = vmatprep.subr.bf16.mxu0 0
    %4453 = vmatpush1.bf16.msra.mxu0 0
    %4454 = vmatprep.subr.bf16.mxu0 0
    %4455 = vmatpush1.bf16.msra.mxu0 0
    %4456 = vmatprep.subr.bf16.mxu0 0
    %4457 = vmatpush1.bf16.msra.mxu0 0
    %4458 = vmatprep.subr.bf16.mxu0 0
    %4459 = vmatpush1.bf16.msra.mxu0 0
    %4460 = vmatprep.subr.bf16.mxu0 0
    %4461 = vmatpush1.bf16.msra.mxu0 0
    %4462 = vmatprep.subr.bf16.mxu0 0
    %4463 = vmatpush1.bf16.msra.mxu0 0
    %4464 = vmatprep.subr.bf16.mxu0 0
    %4465 = vmatpush1.bf16.msra.mxu0 0
    %4466 = vmatprep.subr.bf16.mxu0 0
    %4467 = vmatpush1.bf16.msra.mxu0 0
    %4468 = vmatprep.subr.bf16.mxu0 0
    %4469 = vmatpush1.bf16.msra.mxu0 0
    %4470 = vmatprep.subr.bf16.mxu0 0
    %4471 = vmatpush1.bf16.msra.mxu0 0
    %4472 = vmatprep.subr.bf16.mxu0 0
    %4473 = vmatpush1.bf16.msra.mxu0 0
    %4474 = vmatprep.subr.bf16.mxu0 0
    %4475 = vmatpush1.bf16.msra.mxu0 0
    %4476 = vmatprep.subr.bf16.mxu0 0
    %4477 = vmatpush1.bf16.msra.mxu0 0
    %4478 = vmatprep.subr.bf16.mxu0 0
    %4479 = vmatpush1.bf16.msra.mxu0 0
    %4480 = vmatprep.mubr.bf16.mxu0 0
    %4481 = vmatmul.mubr.bf16.gmra.mrb[0].mxu0 %v1289
    %v4482 = vpop.f32.mrb[0].mxu0
    %v4483 = vadd.f32 0.0, %v4482
    %v4484 = vpop.f32.mrb[0].mxu0
    %v4485 = vadd.f32 0.0, %v4484
    %v4486 = vpop.f32.mrb[0].mxu0
    %v4487 = vpop.f32.mrb[0].mxu0
    %4488 = vdwg.mxu0
    %4489 = vmatprep.subr.bf16.mxu0 %v1028
    %4490 = vmatpush1.bf16.msra.mxu0 %v1027
    %4491 = vmatprep.subr.bf16.mxu0 0
    %4492 = vmatpush1.bf16.msra.mxu0 0
    %4493 = vmatprep.subr.bf16.mxu0 0
    %4494 = vmatpush1.bf16.msra.mxu0 0
    %4495 = vmatprep.subr.bf16.mxu0 0
    %4496 = vmatpush1.bf16.msra.mxu0 0
    %4497 = vmatprep.subr.bf16.mxu0 0
    %4498 = vmatpush1.bf16.msra.mxu0 0
    %4499 = vmatprep.subr.bf16.mxu0 0
    %4500 = vmatpush1.bf16.msra.mxu0 0
    %4501 = vmatprep.subr.bf16.mxu0 0
    %4502 = vmatpush1.bf16.msra.mxu0 0
    %4503 = vmatprep.subr.bf16.mxu0 0
    %4504 = vmatpush1.bf16.msra.mxu0 0
    %4505 = vmatprep.subr.bf16.mxu0 0
    %4506 = vmatpush1.bf16.msra.mxu0 0
    %4507 = vmatprep.subr.bf16.mxu0 0
    %4508 = vmatpush1.bf16.msra.mxu0 0
    %4509 = vmatprep.subr.bf16.mxu0 0
    %4510 = vmatpush1.bf16.msra.mxu0 0
    %4511 = vmatprep.subr.bf16.mxu0 0
    %4512 = vmatpush1.bf16.msra.mxu0 0
    %4513 = vmatprep.subr.bf16.mxu0 0
    %4514 = vmatpush1.bf16.msra.mxu0 0
    %4515 = vmatprep.subr.bf16.mxu0 0
    %4516 = vmatpush1.bf16.msra.mxu0 0
    %4517 = vmatprep.subr.bf16.mxu0 0
    %4518 = vmatpush1.bf16.msra.mxu0 0
    %4519 = vmatprep.subr.bf16.mxu0 0
    %4520 = vmatpush1.bf16.msra.mxu0 0
    %4521 = vmatprep.mubr.bf16.mxu0 0
    %4522 = vmatmul.mubr.bf16.gmra.mrb[0].mxu0 %v1289
    %v4523 = vpop.f32.mrb[0].mxu0
    %v4524 = vadd.f32 0.0, %v4523
    %v4525 = vpop.f32.mrb[0].mxu0
    %v4526 = vadd.f32 0.0, %v4525
    %v4527 = vpop.f32.mrb[0].mxu0
    %v4528 = vpop.f32.mrb[0].mxu0
    %4529 = vdwg.mxu0
    %4530 = vmatprep.subr.bf16.mxu0 %v1030
    %4531 = vmatpush1.bf16.msra.mxu0 %v1029
    %4532 = vmatprep.subr.bf16.mxu0 0
    %4533 = vmatpush1.bf16.msra.mxu0 0
    %4534 = vmatprep.subr.bf16.mxu0 0
    %4535 = vmatpush1.bf16.msra.mxu0 0
    %4536 = vmatprep.subr.bf16.mxu0 0
    %4537 = vmatpush1.bf16.msra.mxu0 0
    %4538 = vmatprep.subr.bf16.mxu0 0
    %4539 = vmatpush1.bf16.msra.mxu0 0
    %4540 = vmatprep.subr.bf16.mxu0 0
    %4541 = vmatpush1.bf16.msra.mxu0 0
    %4542 = vmatprep.subr.bf16.mxu0 0
    %4543 = vmatpush1.bf16.msra.mxu0 0
    %4544 = vmatprep.subr.bf16.mxu0 0
    %4545 = vmatpush1.bf16.msra.mxu0 0
    %4546 = vmatprep.subr.bf16.mxu0 0
    %4547 = vmatpush1.bf16.msra.mxu0 0
    %4548 = vmatprep.subr.bf16.mxu0 0
    %4549 = vmatpush1.bf16.msra.mxu0 0
    %4550 = vmatprep.subr.bf16.mxu0 0
    %4551 = vmatpush1.bf16.msra.mxu0 0
    %4552 = vmatprep.subr.bf16.mxu0 0
    %4553 = vmatpush1.bf16.msra.mxu0 0
    %4554 = vmatprep.subr.bf16.mxu0 0
    %4555 = vmatpush1.bf16.msra.mxu0 0
    %4556 = vmatprep.subr.bf16.mxu0 0
    %4557 = vmatpush1.bf16.msra.mxu0 0
    %4558 = vmatprep.subr.bf16.mxu0 0
    %4559 = vmatpush1.bf16.msra.mxu0 0
    %4560 = vmatprep.subr.bf16.mxu0 0
    %4561 = vmatpush1.bf16.msra.mxu0 0
    %4562 = vmatprep.mubr.bf16.mxu0 0
    %4563 = vmatmul.mubr.bf16.gmra.mrb[0].mxu0 %v1289
    %v4564 = vpop.f32.mrb[0].mxu0
    %v4565 = vadd.f32 0.0, %v4564
    %v4566 = vpop.f32.mrb[0].mxu0
    %v4567 = vadd.f32 0.0, %v4566
    %v4568 = vpop.f32.mrb[0].mxu0
    %v4569 = vpop.f32.mrb[0].mxu0
    %4570 = vdwg.mxu0
    %4571 = vmatprep.subr.bf16.mxu0 %v1032
    %4572 = vmatpush1.bf16.msra.mxu0 %v1031
    %4573 = vmatprep.subr.bf16.mxu0 0
    %4574 = vmatpush1.bf16.msra.mxu0 0
    %4575 = vmatprep.subr.bf16.mxu0 0
    %4576 = vmatpush1.bf16.msra.mxu0 0
    %4577 = vmatprep.subr.bf16.mxu0 0
    %4578 = vmatpush1.bf16.msra.mxu0 0
    %4579 = vmatprep.subr.bf16.mxu0 0
    %4580 = vmatpush1.bf16.msra.mxu0 0
    %4581 = vmatprep.subr.bf16.mxu0 0
    %4582 = vmatpush1.bf16.msra.mxu0 0
    %4583 = vmatprep.subr.bf16.mxu0 0
    %4584 = vmatpush1.bf16.msra.mxu0 0
    %4585 = vmatprep.subr.bf16.mxu0 0
    %4586 = vmatpush1.bf16.msra.mxu0 0
    %4587 = vmatprep.subr.bf16.mxu0 0
    %4588 = vmatpush1.bf16.msra.mxu0 0
    %4589 = vmatprep.subr.bf16.mxu0 0
    %4590 = vmatpush1.bf16.msra.mxu0 0
    %4591 = vmatprep.subr.bf16.mxu0 0
    %4592 = vmatpush1.bf16.msra.mxu0 0
    %4593 = vmatprep.subr.bf16.mxu0 0
    %4594 = vmatpush1.bf16.msra.mxu0 0
    %4595 = vmatprep.subr.bf16.mxu0 0
    %4596 = vmatpush1.bf16.msra.mxu0 0
    %4597 = vmatprep.subr.bf16.mxu0 0
    %4598 = vmatpush1.bf16.msra.mxu0 0
    %4599 = vmatprep.subr.bf16.mxu0 0
    %4600 = vmatpush1.bf16.msra.mxu0 0
    %4601 = vmatprep.subr.bf16.mxu0 0
    %4602 = vmatpush1.bf16.msra.mxu0 0
    %4603 = vmatprep.mubr.bf16.mxu0 0
    %4604 = vmatmul.mubr.bf16.gmra.mrb[0].mxu0 %v1289
    %v4605 = vpop.f32.mrb[0].mxu0
    %v4606 = vadd.f32 0.0, %v4605
    %v4607 = vpop.f32.mrb[0].mxu0
    %v4608 = vadd.f32 0.0, %v4607
    %v4609 = vpop.f32.mrb[0].mxu0
    %v4610 = vpop.f32.mrb[0].mxu0
    %4611 = vdwg.mxu0
    %4612 = vmatprep.subr.bf16.mxu0 %v1034
    %4613 = vmatpush1.bf16.msra.mxu0 %v1033
    %4614 = vmatprep.subr.bf16.mxu0 0
    %4615 = vmatpush1.bf16.msra.mxu0 0
    %4616 = vmatprep.subr.bf16.mxu0 0
    %4617 = vmatpush1.bf16.msra.mxu0 0
    %4618 = vmatprep.subr.bf16.mxu0 0
    %4619 = vmatpush1.bf16.msra.mxu0 0
    %4620 = vmatprep.subr.bf16.mxu0 0
    %4621 = vmatpush1.bf16.msra.mxu0 0
    %4622 = vmatprep.subr.bf16.mxu0 0
    %4623 = vmatpush1.bf16.msra.mxu0 0
    %4624 = vmatprep.subr.bf16.mxu0 0
    %4625 = vmatpush1.bf16.msra.mxu0 0
    %4626 = vmatprep.subr.bf16.mxu0 0
    %4627 = vmatpush1.bf16.msra.mxu0 0
    %4628 = vmatprep.subr.bf16.mxu0 0
    %4629 = vmatpush1.bf16.msra.mxu0 0
    %4630 = vmatprep.subr.bf16.mxu0 0
    %4631 = vmatpush1.bf16.msra.mxu0 0
    %4632 = vmatprep.subr.bf16.mxu0 0
    %4633 = vmatpush1.bf16.msra.mxu0 0
    %4634 = vmatprep.subr.bf16.mxu0 0
    %4635 = vmatpush1.bf16.msra.mxu0 0
    %4636 = vmatprep.subr.bf16.mxu0 0
    %4637 = vmatpush1.bf16.msra.mxu0 0
    %4638 = vmatprep.subr.bf16.mxu0 0
    %4639 = vmatpush1.bf16.msra.mxu0 0
    %4640 = vmatprep.subr.bf16.mxu0 0
    %4641 = vmatpush1.bf16.msra.mxu0 0
    %4642 = vmatprep.subr.bf16.mxu0 0
    %4643 = vmatpush1.bf16.msra.mxu0 0
    %4644 = vmatprep.mubr.bf16.mxu0 0
    %4645 = vmatmul.mubr.bf16.gmra.mrb[0].mxu0 %v1289
    %v4646 = vpop.f32.mrb[0].mxu0
    %v4647 = vadd.f32 0.0, %v4646
    %v4648 = vpop.f32.mrb[0].mxu0
    %v4649 = vadd.f32 0.0, %v4648
    %v4650 = vpop.f32.mrb[0].mxu0
    %v4651 = vpop.f32.mrb[0].mxu0
    %4652 = vdwg.mxu0
    %4653 = vmatprep.subr.bf16.mxu0 %v1036
    %4654 = vmatpush1.bf16.msra.mxu0 %v1035
    %4655 = vmatprep.subr.bf16.mxu0 0
    %4656 = vmatpush1.bf16.msra.mxu0 0
    %4657 = vmatprep.subr.bf16.mxu0 0
    %4658 = vmatpush1.bf16.msra.mxu0 0
    %4659 = vmatprep.subr.bf16.mxu0 0
    %4660 = vmatpush1.bf16.msra.mxu0 0
    %4661 = vmatprep.subr.bf16.mxu0 0
    %4662 = vmatpush1.bf16.msra.mxu0 0
    %4663 = vmatprep.subr.bf16.mxu0 0
    %4664 = vmatpush1.bf16.msra.mxu0 0
    %4665 = vmatprep.subr.bf16.mxu0 0
    %4666 = vmatpush1.bf16.msra.mxu0 0
    %4667 = vmatprep.subr.bf16.mxu0 0
    %4668 = vmatpush1.bf16.msra.mxu0 0
    %4669 = vmatprep.subr.bf16.mxu0 0
    %4670 = vmatpush1.bf16.msra.mxu0 0
    %4671 = vmatprep.subr.bf16.mxu0 0
    %4672 = vmatpush1.bf16.msra.mxu0 0
    %4673 = vmatprep.subr.bf16.mxu0 0
    %4674 = vmatpush1.bf16.msra.mxu0 0
    %4675 = vmatprep.subr.bf16.mxu0 0
    %4676 = vmatpush1.bf16.msra.mxu0 0
    %4677 = vmatprep.subr.bf16.mxu0 0
    %4678 = vmatpush1.bf16.msra.mxu0 0
    %4679 = vmatprep.subr.bf16.mxu0 0
    %4680 = vmatpush1.bf16.msra.mxu0 0
    %4681 = vmatprep.subr.bf16.mxu0 0
    %4682 = vmatpush1.bf16.msra.mxu0 0
    %4683 = vmatprep.subr.bf16.mxu0 0
    %4684 = vmatpush1.bf16.msra.mxu0 0
    %4685 = vmatprep.mubr.bf16.mxu0 0
    %4686 = vmatmul.mubr.bf16.gmra.mrb[0].mxu0 %v1289
    %v4687 = vpop.f32.mrb[0].mxu0
    %v4688 = vadd.f32 0.0, %v4687
    %v4689 = vpop.f32.mrb[0].mxu0
    %v4690 = vadd.f32 0.0, %v4689
    %v4691 = vpop.f32.mrb[0].mxu0
    %v4692 = vpop.f32.mrb[0].mxu0
    %4693 = vdwg.mxu0
    %4694 = vmatprep.subr.bf16.mxu0 %v1038
    %4695 = vmatpush1.bf16.msra.mxu0 %v1037
    %4696 = vmatprep.subr.bf16.mxu0 0
    %4697 = vmatpush1.bf16.msra.mxu0 0
    %4698 = vmatprep.subr.bf16.mxu0 0
    %4699 = vmatpush1.bf16.msra.mxu0 0
    %4700 = vmatprep.subr.bf16.mxu0 0
    %4701 = vmatpush1.bf16.msra.mxu0 0
    %4702 = vmatprep.subr.bf16.mxu0 0
    %4703 = vmatpush1.bf16.msra.mxu0 0
    %4704 = vmatprep.subr.bf16.mxu0 0
    %4705 = vmatpush1.bf16.msra.mxu0 0
    %4706 = vmatprep.subr.bf16.mxu0 0
    %4707 = vmatpush1.bf16.msra.mxu0 0
    %4708 = vmatprep.subr.bf16.mxu0 0
    %4709 = vmatpush1.bf16.msra.mxu0 0
    %4710 = vmatprep.subr.bf16.mxu0 0
    %4711 = vmatpush1.bf16.msra.mxu0 0
    %4712 = vmatprep.subr.bf16.mxu0 0
    %4713 = vmatpush1.bf16.msra.mxu0 0
    %4714 = vmatprep.subr.bf16.mxu0 0
    %4715 = vmatpush1.bf16.msra.mxu0 0
    %4716 = vmatprep.subr.bf16.mxu0 0
    %4717 = vmatpush1.bf16.msra.mxu0 0
    %4718 = vmatprep.subr.bf16.mxu0 0
    %4719 = vmatpush1.bf16.msra.mxu0 0
    %4720 = vmatprep.subr.bf16.mxu0 0
    %4721 = vmatpush1.bf16.msra.mxu0 0
    %4722 = vmatprep.subr.bf16.mxu0 0
    %4723 = vmatpush1.bf16.msra.mxu0 0
    %4724 = vmatprep.subr.bf16.mxu0 0
    %4725 = vmatpush1.bf16.msra.mxu0 0
    %4726 = vmatprep.mubr.bf16.mxu0 0
    %4727 = vmatmul.mubr.bf16.gmra.mrb[0].mxu0 %v1289
    %v4728 = vpop.f32.mrb[0].mxu0
    %v4729 = vadd.f32 0.0, %v4728
    %v4730 = vpop.f32.mrb[0].mxu0
    %v4731 = vadd.f32 0.0, %v4730
    %v4732 = vpop.f32.mrb[0].mxu0
    %v4733 = vpop.f32.mrb[0].mxu0
    %4734 = vdwg.mxu0
    %4735 = vmatprep.subr.bf16.mxu0 %v1040
    %4736 = vmatpush1.bf16.msra.mxu0 %v1039
    %4737 = vmatprep.subr.bf16.mxu0 0
    %4738 = vmatpush1.bf16.msra.mxu0 0
    %4739 = vmatprep.subr.bf16.mxu0 0
    %4740 = vmatpush1.bf16.msra.mxu0 0
    %4741 = vmatprep.subr.bf16.mxu0 0
    %4742 = vmatpush1.bf16.msra.mxu0 0
    %4743 = vmatprep.subr.bf16.mxu0 0
    %4744 = vmatpush1.bf16.msra.mxu0 0
    %4745 = vmatprep.subr.bf16.mxu0 0
    %4746 = vmatpush1.bf16.msra.mxu0 0
    %4747 = vmatprep.subr.bf16.mxu0 0
    %4748 = vmatpush1.bf16.msra.mxu0 0
    %4749 = vmatprep.subr.bf16.mxu0 0
    %4750 = vmatpush1.bf16.msra.mxu0 0
    %4751 = vmatprep.subr.bf16.mxu0 0
    %4752 = vmatpush1.bf16.msra.mxu0 0
    %4753 = vmatprep.subr.bf16.mxu0 0
    %4754 = vmatpush1.bf16.msra.mxu0 0
    %4755 = vmatprep.subr.bf16.mxu0 0
    %4756 = vmatpush1.bf16.msra.mxu0 0
    %4757 = vmatprep.subr.bf16.mxu0 0
    %4758 = vmatpush1.bf16.msra.mxu0 0
    %4759 = vmatprep.subr.bf16.mxu0 0
    %4760 = vmatpush1.bf16.msra.mxu0 0
    %4761 = vmatprep.subr.bf16.mxu0 0
    %4762 = vmatpush1.bf16.msra.mxu0 0
    %4763 = vmatprep.subr.bf16.mxu0 0
    %4764 = vmatpush1.bf16.msra.mxu0 0
    %4765 = vmatprep.subr.bf16.mxu0 0
    %4766 = vmatpush1.bf16.msra.mxu0 0
    %4767 = vmatprep.mubr.bf16.mxu0 0
    %4768 = vmatmul.mubr.bf16.gmra.mrb[0].mxu0 %v1289
    %v4769 = vpop.f32.mrb[0].mxu0
    %v4770 = vadd.f32 0.0, %v4769
    %v4771 = vpop.f32.mrb[0].mxu0
    %v4772 = vadd.f32 0.0, %v4771
    %v4773 = vpop.f32.mrb[0].mxu0
    %v4774 = vpop.f32.mrb[0].mxu0
    %4775 = vdwg.mxu0
    %4776 = vmatprep.subr.bf16.mxu0 %v1042
    %4777 = vmatpush1.bf16.msra.mxu0 %v1041
    %4778 = vmatprep.subr.bf16.mxu0 0
    %4779 = vmatpush1.bf16.msra.mxu0 0
    %4780 = vmatprep.subr.bf16.mxu0 0
    %4781 = vmatpush1.bf16.msra.mxu0 0
    %4782 = vmatprep.subr.bf16.mxu0 0
    %4783 = vmatpush1.bf16.msra.mxu0 0
    %4784 = vmatprep.subr.bf16.mxu0 0
    %4785 = vmatpush1.bf16.msra.mxu0 0
    %4786 = vmatprep.subr.bf16.mxu0 0
    %4787 = vmatpush1.bf16.msra.mxu0 0
    %4788 = vmatprep.subr.bf16.mxu0 0
    %4789 = vmatpush1.bf16.msra.mxu0 0
    %4790 = vmatprep.subr.bf16.mxu0 0
    %4791 = vmatpush1.bf16.msra.mxu0 0
    %4792 = vmatprep.subr.bf16.mxu0 0
    %4793 = vmatpush1.bf16.msra.mxu0 0
    %4794 = vmatprep.subr.bf16.mxu0 0
    %4795 = vmatpush1.bf16.msra.mxu0 0
    %4796 = vmatprep.subr.bf16.mxu0 0
    %4797 = vmatpush1.bf16.msra.mxu0 0
    %4798 = vmatprep.subr.bf16.mxu0 0
    %4799 = vmatpush1.bf16.msra.mxu0 0
    %4800 = vmatprep.subr.bf16.mxu0 0
    %4801 = vmatpush1.bf16.msra.mxu0 0
    %4802 = vmatprep.subr.bf16.mxu0 0
    %4803 = vmatpush1.bf16.msra.mxu0 0
    %4804 = vmatprep.subr.bf16.mxu0 0
    %4805 = vmatpush1.bf16.msra.mxu0 0
    %4806 = vmatprep.subr.bf16.mxu0 0
    %4807 = vmatpush1.bf16.msra.mxu0 0
    %4808 = vmatprep.mubr.bf16.mxu0 0
    %4809 = vmatmul.mubr.bf16.gmra.mrb[0].mxu0 %v1289
    %v4810 = vpop.f32.mrb[0].mxu0
    %v4811 = vadd.f32 0.0, %v4810
    %v4812 = vpop.f32.mrb[0].mxu0
    %v4813 = vadd.f32 0.0, %v4812
    %v4814 = vpop.f32.mrb[0].mxu0
    %v4815 = vpop.f32.mrb[0].mxu0
    %4816 = vdwg.mxu0
    %4817 = vmatprep.subr.bf16.mxu0 %v1044
    %4818 = vmatpush1.bf16.msra.mxu0 %v1043
    %4819 = vmatprep.subr.bf16.mxu0 0
    %4820 = vmatpush1.bf16.msra.mxu0 0
    %4821 = vmatprep.subr.bf16.mxu0 0
    %4822 = vmatpush1.bf16.msra.mxu0 0
    %4823 = vmatprep.subr.bf16.mxu0 0
    %4824 = vmatpush1.bf16.msra.mxu0 0
    %4825 = vmatprep.subr.bf16.mxu0 0
    %4826 = vmatpush1.bf16.msra.mxu0 0
    %4827 = vmatprep.subr.bf16.mxu0 0
    %4828 = vmatpush1.bf16.msra.mxu0 0
    %4829 = vmatprep.subr.bf16.mxu0 0
    %4830 = vmatpush1.bf16.msra.mxu0 0
    %4831 = vmatprep.subr.bf16.mxu0 0
    %4832 = vmatpush1.bf16.msra.mxu0 0
    %4833 = vmatprep.subr.bf16.mxu0 0
    %4834 = vmatpush1.bf16.msra.mxu0 0
    %4835 = vmatprep.subr.bf16.mxu0 0
    %4836 = vmatpush1.bf16.msra.mxu0 0
    %4837 = vmatprep.subr.bf16.mxu0 0
    %4838 = vmatpush1.bf16.msra.mxu0 0
    %4839 = vmatprep.subr.bf16.mxu0 0
    %4840 = vmatpush1.bf16.msra.mxu0 0
    %4841 = vmatprep.subr.bf16.mxu0 0
    %4842 = vmatpush1.bf16.msra.mxu0 0
    %4843 = vmatprep.subr.bf16.mxu0 0
    %4844 = vmatpush1.bf16.msra.mxu0 0
    %4845 = vmatprep.subr.bf16.mxu0 0
    %4846 = vmatpush1.bf16.msra.mxu0 0
    %4847 = vmatprep.subr.bf16.mxu0 0
    %4848 = vmatpush1.bf16.msra.mxu0 0
    %4849 = vmatprep.mubr.bf16.mxu0 0
    %4850 = vmatmul.mubr.bf16.gmra.mrb[0].mxu0 %v1289
    %v4851 = vpop.f32.mrb[0].mxu0
    %v4852 = vadd.f32 0.0, %v4851
    %v4853 = vpop.f32.mrb[0].mxu0
    %v4854 = vadd.f32 0.0, %v4853
    %v4855 = vpop.f32.mrb[0].mxu0
    %v4856 = vpop.f32.mrb[0].mxu0
    %4857 = vdwg.mxu0
    %4858 = vmatprep.subr.bf16.mxu0 %v1046
    %4859 = vmatpush1.bf16.msra.mxu0 %v1045
    %4860 = vmatprep.subr.bf16.mxu0 0
    %4861 = vmatpush1.bf16.msra.mxu0 0
    %4862 = vmatprep.subr.bf16.mxu0 0
    %4863 = vmatpush1.bf16.msra.mxu0 0
    %4864 = vmatprep.subr.bf16.mxu0 0
    %4865 = vmatpush1.bf16.msra.mxu0 0
    %4866 = vmatprep.subr.bf16.mxu0 0
    %4867 = vmatpush1.bf16.msra.mxu0 0
    %4868 = vmatprep.subr.bf16.mxu0 0
    %4869 = vmatpush1.bf16.msra.mxu0 0
    %4870 = vmatprep.subr.bf16.mxu0 0
    %4871 = vmatpush1.bf16.msra.mxu0 0
    %4872 = vmatprep.subr.bf16.mxu0 0
    %4873 = vmatpush1.bf16.msra.mxu0 0
    %4874 = vmatprep.subr.bf16.mxu0 0
    %4875 = vmatpush1.bf16.msra.mxu0 0
    %4876 = vmatprep.subr.bf16.mxu0 0
    %4877 = vmatpush1.bf16.msra.mxu0 0
    %4878 = vmatprep.subr.bf16.mxu0 0
    %4879 = vmatpush1.bf16.msra.mxu0 0
    %4880 = vmatprep.subr.bf16.mxu0 0
    %4881 = vmatpush1.bf16.msra.mxu0 0
    %4882 = vmatprep.subr.bf16.mxu0 0
    %4883 = vmatpush1.bf16.msra.mxu0 0
    %4884 = vmatprep.subr.bf16.mxu0 0
    %4885 = vmatpush1.bf16.msra.mxu0 0
    %4886 = vmatprep.subr.bf16.mxu0 0
    %4887 = vmatpush1.bf16.msra.mxu0 0
    %4888 = vmatprep.subr.bf16.mxu0 0
    %4889 = vmatpush1.bf16.msra.mxu0 0
    %4890 = vmatprep.mubr.bf16.mxu0 0
    %4891 = vmatmul.mubr.bf16.gmra.mrb[0].mxu0 %v1289
    %v4892 = vpop.f32.mrb[0].mxu0
    %v4893 = vadd.f32 0.0, %v4892
    %v4894 = vpop.f32.mrb[0].mxu0
    %v4895 = vadd.f32 0.0, %v4894
    %v4896 = vpop.f32.mrb[0].mxu0
    %v4897 = vpop.f32.mrb[0].mxu0
    %4898 = vdwg.mxu0
    %4899 = vmatprep.subr.bf16.mxu0 %v1048
    %4900 = vmatpush1.bf16.msra.mxu0 %v1047
    %4901 = vmatprep.subr.bf16.mxu0 0
    %4902 = vmatpush1.bf16.msra.mxu0 0
    %4903 = vmatprep.subr.bf16.mxu0 0
    %4904 = vmatpush1.bf16.msra.mxu0 0
    %4905 = vmatprep.subr.bf16.mxu0 0
    %4906 = vmatpush1.bf16.msra.mxu0 0
    %4907 = vmatprep.subr.bf16.mxu0 0
    %4908 = vmatpush1.bf16.msra.mxu0 0
    %4909 = vmatprep.subr.bf16.mxu0 0
    %4910 = vmatpush1.bf16.msra.mxu0 0
    %4911 = vmatprep.subr.bf16.mxu0 0
    %4912 = vmatpush1.bf16.msra.mxu0 0
    %4913 = vmatprep.subr.bf16.mxu0 0
    %4914 = vmatpush1.bf16.msra.mxu0 0
    %4915 = vmatprep.subr.bf16.mxu0 0
    %4916 = vmatpush1.bf16.msra.mxu0 0
    %4917 = vmatprep.subr.bf16.mxu0 0
    %4918 = vmatpush1.bf16.msra.mxu0 0
    %4919 = vmatprep.subr.bf16.mxu0 0
    %4920 = vmatpush1.bf16.msra.mxu0 0
    %4921 = vmatprep.subr.bf16.mxu0 0
    %4922 = vmatpush1.bf16.msra.mxu0 0
    %4923 = vmatprep.subr.bf16.mxu0 0
    %4924 = vmatpush1.bf16.msra.mxu0 0
    %4925 = vmatprep.subr.bf16.mxu0 0
    %4926 = vmatpush1.bf16.msra.mxu0 0
    %4927 = vmatprep.subr.bf16.mxu0 0
    %4928 = vmatpush1.bf16.msra.mxu0 0
    %4929 = vmatprep.subr.bf16.mxu0 0
    %4930 = vmatpush1.bf16.msra.mxu0 0
    %4931 = vmatprep.mubr.bf16.mxu0 0
    %4932 = vmatmul.mubr.bf16.gmra.mrb[0].mxu0 %v1289
    %v4933 = vpop.f32.mrb[0].mxu0
    %v4934 = vadd.f32 0.0, %v4933
    %v4935 = vpop.f32.mrb[0].mxu0
    %v4936 = vadd.f32 0.0, %v4935
    %v4937 = vpop.f32.mrb[0].mxu0
    %v4938 = vpop.f32.mrb[0].mxu0
    %4939 = vdwg.mxu0
    %4940 = vmatprep.subr.bf16.mxu0 %v1050
    %4941 = vmatpush1.bf16.msra.mxu0 %v1049
    %4942 = vmatprep.subr.bf16.mxu0 0
    %4943 = vmatpush1.bf16.msra.mxu0 0
    %4944 = vmatprep.subr.bf16.mxu0 0
    %4945 = vmatpush1.bf16.msra.mxu0 0
    %4946 = vmatprep.subr.bf16.mxu0 0
    %4947 = vmatpush1.bf16.msra.mxu0 0
    %4948 = vmatprep.subr.bf16.mxu0 0
    %4949 = vmatpush1.bf16.msra.mxu0 0
    %4950 = vmatprep.subr.bf16.mxu0 0
    %4951 = vmatpush1.bf16.msra.mxu0 0
    %4952 = vmatprep.subr.bf16.mxu0 0
    %4953 = vmatpush1.bf16.msra.mxu0 0
    %4954 = vmatprep.subr.bf16.mxu0 0
    %4955 = vmatpush1.bf16.msra.mxu0 0
    %4956 = vmatprep.subr.bf16.mxu0 0
    %4957 = vmatpush1.bf16.msra.mxu0 0
    %4958 = vmatprep.subr.bf16.mxu0 0
    %4959 = vmatpush1.bf16.msra.mxu0 0
    %4960 = vmatprep.subr.bf16.mxu0 0
    %4961 = vmatpush1.bf16.msra.mxu0 0
    %4962 = vmatprep.subr.bf16.mxu0 0
    %4963 = vmatpush1.bf16.msra.mxu0 0
    %4964 = vmatprep.subr.bf16.mxu0 0
    %4965 = vmatpush1.bf16.msra.mxu0 0
    %4966 = vmatprep.subr.bf16.mxu0 0
    %4967 = vmatpush1.bf16.msra.mxu0 0
    %4968 = vmatprep.subr.bf16.mxu0 0
    %4969 = vmatpush1.bf16.msra.mxu0 0
    %4970 = vmatprep.subr.bf16.mxu0 0
    %4971 = vmatpush1.bf16.msra.mxu0 0
    %4972 = vmatprep.mubr.bf16.mxu0 0
    %4973 = vmatmul.mubr.bf16.gmra.mrb[0].mxu0 %v1289
    %v4974 = vpop.f32.mrb[0].mxu0
    %v4975 = vadd.f32 0.0, %v4974
    %v4976 = vpop.f32.mrb[0].mxu0
    %v4977 = vadd.f32 0.0, %v4976
    %v4978 = vpop.f32.mrb[0].mxu0
    %v4979 = vpop.f32.mrb[0].mxu0
    %4980 = vdwg.mxu0
    %4981 = vmatprep.subr.bf16.mxu0 %v1052
    %4982 = vmatpush1.bf16.msra.mxu0 %v1051
    %4983 = vmatprep.subr.bf16.mxu0 0
    %4984 = vmatpush1.bf16.msra.mxu0 0
    %4985 = vmatprep.subr.bf16.mxu0 0
    %4986 = vmatpush1.bf16.msra.mxu0 0
    %4987 = vmatprep.subr.bf16.mxu0 0
    %4988 = vmatpush1.bf16.msra.mxu0 0
    %4989 = vmatprep.subr.bf16.mxu0 0
    %4990 = vmatpush1.bf16.msra.mxu0 0
    %4991 = vmatprep.subr.bf16.mxu0 0
    %4992 = vmatpush1.bf16.msra.mxu0 0
    %4993 = vmatprep.subr.bf16.mxu0 0
    %4994 = vmatpush1.bf16.msra.mxu0 0
    %4995 = vmatprep.subr.bf16.mxu0 0
    %4996 = vmatpush1.bf16.msra.mxu0 0
    %4997 = vmatprep.subr.bf16.mxu0 0
    %4998 = vmatpush1.bf16.msra.mxu0 0
    %4999 = vmatprep.subr.bf16.mxu0 0
    %5000 = vmatpush1.bf16.msra.mxu0 0
    %5001 = vmatprep.subr.bf16.mxu0 0
    %5002 = vmatpush1.bf16.msra.mxu0 0
    %5003 = vmatprep.subr.bf16.mxu0 0
    %5004 = vmatpush1.bf16.msra.mxu0 0
    %5005 = vmatprep.subr.bf16.mxu0 0
    %5006 = vmatpush1.bf16.msra.mxu0 0
    %5007 = vmatprep.subr.bf16.mxu0 0
    %5008 = vmatpush1.bf16.msra.mxu0 0
    %5009 = vmatprep.subr.bf16.mxu0 0
    %5010 = vmatpush1.bf16.msra.mxu0 0
    %5011 = vmatprep.subr.bf16.mxu0 0
    %5012 = vmatpush1.bf16.msra.mxu0 0
    %5013 = vmatprep.mubr.bf16.mxu0 0
    %5014 = vmatmul.mubr.bf16.gmra.mrb[0].mxu0 %v1289
    %v5015 = vpop.f32.mrb[0].mxu0
    %v5016 = vadd.f32 0.0, %v5015
    %v5017 = vpop.f32.mrb[0].mxu0
    %v5018 = vadd.f32 0.0, %v5017
    %v5019 = vpop.f32.mrb[0].mxu0
    %v5020 = vpop.f32.mrb[0].mxu0
    %5021 = vdwg.mxu0
    %5022 = vmatprep.subr.bf16.mxu0 %v1054
    %5023 = vmatpush1.bf16.msra.mxu0 %v1053
    %5024 = vmatprep.subr.bf16.mxu0 0
    %5025 = vmatpush1.bf16.msra.mxu0 0
    %5026 = vmatprep.subr.bf16.mxu0 0
    %5027 = vmatpush1.bf16.msra.mxu0 0
    %5028 = vmatprep.subr.bf16.mxu0 0
    %5029 = vmatpush1.bf16.msra.mxu0 0
    %5030 = vmatprep.subr.bf16.mxu0 0
    %5031 = vmatpush1.bf16.msra.mxu0 0
    %5032 = vmatprep.subr.bf16.mxu0 0
    %5033 = vmatpush1.bf16.msra.mxu0 0
    %5034 = vmatprep.subr.bf16.mxu0 0
    %5035 = vmatpush1.bf16.msra.mxu0 0
    %5036 = vmatprep.subr.bf16.mxu0 0
    %5037 = vmatpush1.bf16.msra.mxu0 0
    %5038 = vmatprep.subr.bf16.mxu0 0
    %5039 = vmatpush1.bf16.msra.mxu0 0
    %5040 = vmatprep.subr.bf16.mxu0 0
    %5041 = vmatpush1.bf16.msra.mxu0 0
    %5042 = vmatprep.subr.bf16.mxu0 0
    %5043 = vmatpush1.bf16.msra.mxu0 0
    %5044 = vmatprep.subr.bf16.mxu0 0
    %5045 = vmatpush1.bf16.msra.mxu0 0
    %5046 = vmatprep.subr.bf16.mxu0 0
    %5047 = vmatpush1.bf16.msra.mxu0 0
    %5048 = vmatprep.subr.bf16.mxu0 0
    %5049 = vmatpush1.bf16.msra.mxu0 0
    %5050 = vmatprep.subr.bf16.mxu0 0
    %5051 = vmatpush1.bf16.msra.mxu0 0
    %5052 = vmatprep.subr.bf16.mxu0 0
    %5053 = vmatpush1.bf16.msra.mxu0 0
    %5054 = vmatprep.mubr.bf16.mxu0 0
    %5055 = vmatmul.mubr.bf16.gmra.mrb[0].mxu0 %v1289
    %v5056 = vpop.f32.mrb[0].mxu0
    %v5057 = vadd.f32 0.0, %v5056
    %v5058 = vpop.f32.mrb[0].mxu0
    %v5059 = vadd.f32 0.0, %v5058
    %v5060 = vpop.f32.mrb[0].mxu0
    %v5061 = vpop.f32.mrb[0].mxu0
    %5062 = vdwg.mxu0
    %5063 = vmatprep.subr.bf16.mxu0 %v1056
    %5064 = vmatpush1.bf16.msra.mxu0 %v1055
    %5065 = vmatprep.subr.bf16.mxu0 0
    %5066 = vmatpush1.bf16.msra.mxu0 0
    %5067 = vmatprep.subr.bf16.mxu0 0
    %5068 = vmatpush1.bf16.msra.mxu0 0
    %5069 = vmatprep.subr.bf16.mxu0 0
    %5070 = vmatpush1.bf16.msra.mxu0 0
    %5071 = vmatprep.subr.bf16.mxu0 0
    %5072 = vmatpush1.bf16.msra.mxu0 0
    %5073 = vmatprep.subr.bf16.mxu0 0
    %5074 = vmatpush1.bf16.msra.mxu0 0
    %5075 = vmatprep.subr.bf16.mxu0 0
    %5076 = vmatpush1.bf16.msra.mxu0 0
    %5077 = vmatprep.subr.bf16.mxu0 0
    %5078 = vmatpush1.bf16.msra.mxu0 0
    %5079 = vmatprep.subr.bf16.mxu0 0
    %5080 = vmatpush1.bf16.msra.mxu0 0
    %5081 = vmatprep.subr.bf16.mxu0 0
    %5082 = vmatpush1.bf16.msra.mxu0 0
    %5083 = vmatprep.subr.bf16.mxu0 0
    %5084 = vmatpush1.bf16.msra.mxu0 0
    %5085 = vmatprep.subr.bf16.mxu0 0
    %5086 = vmatpush1.bf16.msra.mxu0 0
    %5087 = vmatprep.subr.bf16.mxu0 0
    %5088 = vmatpush1.bf16.msra.mxu0 0
    %5089 = vmatprep.subr.bf16.mxu0 0
    %5090 = vmatpush1.bf16.msra.mxu0 0
    %5091 = vmatprep.subr.bf16.mxu0 0
    %5092 = vmatpush1.bf16.msra.mxu0 0
    %5093 = vmatprep.subr.bf16.mxu0 0
    %5094 = vmatpush1.bf16.msra.mxu0 0
    %5095 = vmatprep.mubr.bf16.mxu0 0
    %5096 = vmatmul.mubr.bf16.gmra.mrb[0].mxu0 %v1289
    %v5097 = vpop.f32.mrb[0].mxu0
    %v5098 = vadd.f32 0.0, %v5097
    %v5099 = vpop.f32.mrb[0].mxu0
    %v5100 = vadd.f32 0.0, %v5099
    %v5101 = vpop.f32.mrb[0].mxu0
    %v5102 = vpop.f32.mrb[0].mxu0
    %5103 = vdwg.mxu0
    %5104 = vmatprep.subr.bf16.mxu0 %v1058
    %5105 = vmatpush1.bf16.msra.mxu0 %v1057
    %5106 = vmatprep.subr.bf16.mxu0 0
    %5107 = vmatpush1.bf16.msra.mxu0 0
    %5108 = vmatprep.subr.bf16.mxu0 0
    %5109 = vmatpush1.bf16.msra.mxu0 0
    %5110 = vmatprep.subr.bf16.mxu0 0
    %5111 = vmatpush1.bf16.msra.mxu0 0
    %5112 = vmatprep.subr.bf16.mxu0 0
    %5113 = vmatpush1.bf16.msra.mxu0 0
    %5114 = vmatprep.subr.bf16.mxu0 0
    %5115 = vmatpush1.bf16.msra.mxu0 0
    %5116 = vmatprep.subr.bf16.mxu0 0
    %5117 = vmatpush1.bf16.msra.mxu0 0
    %5118 = vmatprep.subr.bf16.mxu0 0
    %5119 = vmatpush1.bf16.msra.mxu0 0
    %5120 = vmatprep.subr.bf16.mxu0 0
    %5121 = vmatpush1.bf16.msra.mxu0 0
    %5122 = vmatprep.subr.bf16.mxu0 0
    %5123 = vmatpush1.bf16.msra.mxu0 0
    %5124 = vmatprep.subr.bf16.mxu0 0
    %5125 = vmatpush1.bf16.msra.mxu0 0
    %5126 = vmatprep.subr.bf16.mxu0 0
    %5127 = vmatpush1.bf16.msra.mxu0 0
    %5128 = vmatprep.subr.bf16.mxu0 0
    %5129 = vmatpush1.bf16.msra.mxu0 0
    %5130 = vmatprep.subr.bf16.mxu0 0
    %5131 = vmatpush1.bf16.msra.mxu0 0
    %5132 = vmatprep.subr.bf16.mxu0 0
    %5133 = vmatpush1.bf16.msra.mxu0 0
    %5134 = vmatprep.subr.bf16.mxu0 0
    %5135 = vmatpush1.bf16.msra.mxu0 0
    %5136 = vmatprep.mubr.bf16.mxu0 0
    %5137 = vmatmul.mubr.bf16.gmra.mrb[0].mxu0 %v1289
    %v5138 = vpop.f32.mrb[0].mxu0
    %v5139 = vadd.f32 0.0, %v5138
    %v5140 = vpop.f32.mrb[0].mxu0
    %v5141 = vadd.f32 0.0, %v5140
    %v5142 = vpop.f32.mrb[0].mxu0
    %v5143 = vpop.f32.mrb[0].mxu0
    %5144 = vdwg.mxu0
    %5145 = vmatprep.subr.bf16.mxu0 %v1060
    %5146 = vmatpush1.bf16.msra.mxu0 %v1059
    %5147 = vmatprep.subr.bf16.mxu0 0
    %5148 = vmatpush1.bf16.msra.mxu0 0
    %5149 = vmatprep.subr.bf16.mxu0 0
    %5150 = vmatpush1.bf16.msra.mxu0 0
    %5151 = vmatprep.subr.bf16.mxu0 0
    %5152 = vmatpush1.bf16.msra.mxu0 0
    %5153 = vmatprep.subr.bf16.mxu0 0
    %5154 = vmatpush1.bf16.msra.mxu0 0
    %5155 = vmatprep.subr.bf16.mxu0 0
    %5156 = vmatpush1.bf16.msra.mxu0 0
    %5157 = vmatprep.subr.bf16.mxu0 0
    %5158 = vmatpush1.bf16.msra.mxu0 0
    %5159 = vmatprep.subr.bf16.mxu0 0
    %5160 = vmatpush1.bf16.msra.mxu0 0
    %5161 = vmatprep.subr.bf16.mxu0 0
    %5162 = vmatpush1.bf16.msra.mxu0 0
    %5163 = vmatprep.subr.bf16.mxu0 0
    %5164 = vmatpush1.bf16.msra.mxu0 0
    %5165 = vmatprep.subr.bf16.mxu0 0
    %5166 = vmatpush1.bf16.msra.mxu0 0
    %5167 = vmatprep.subr.bf16.mxu0 0
    %5168 = vmatpush1.bf16.msra.mxu0 0
    %5169 = vmatprep.subr.bf16.mxu0 0
    %5170 = vmatpush1.bf16.msra.mxu0 0
    %5171 = vmatprep.subr.bf16.mxu0 0
    %5172 = vmatpush1.bf16.msra.mxu0 0
    %5173 = vmatprep.subr.bf16.mxu0 0
    %5174 = vmatpush1.bf16.msra.mxu0 0
    %5175 = vmatprep.subr.bf16.mxu0 0
    %5176 = vmatpush1.bf16.msra.mxu0 0
    %5177 = vmatprep.mubr.bf16.mxu0 0
    %5178 = vmatmul.mubr.bf16.gmra.mrb[0].mxu0 %v1289
    %v5179 = vpop.f32.mrb[0].mxu0
    %v5180 = vadd.f32 0.0, %v5179
    %v5181 = vpop.f32.mrb[0].mxu0
    %v5182 = vadd.f32 0.0, %v5181
    %v5183 = vpop.f32.mrb[0].mxu0
    %v5184 = vpop.f32.mrb[0].mxu0
    %5185 = vdwg.mxu0
    %5186 = vmatprep.subr.bf16.mxu0 %v1062
    %5187 = vmatpush1.bf16.msra.mxu0 %v1061
    %5188 = vmatprep.subr.bf16.mxu0 0
    %5189 = vmatpush1.bf16.msra.mxu0 0
    %5190 = vmatprep.subr.bf16.mxu0 0
    %5191 = vmatpush1.bf16.msra.mxu0 0
    %5192 = vmatprep.subr.bf16.mxu0 0
    %5193 = vmatpush1.bf16.msra.mxu0 0
    %5194 = vmatprep.subr.bf16.mxu0 0
    %5195 = vmatpush1.bf16.msra.mxu0 0
    %5196 = vmatprep.subr.bf16.mxu0 0
    %5197 = vmatpush1.bf16.msra.mxu0 0
    %5198 = vmatprep.subr.bf16.mxu0 0
    %5199 = vmatpush1.bf16.msra.mxu0 0
    %5200 = vmatprep.subr.bf16.mxu0 0
    %5201 = vmatpush1.bf16.msra.mxu0 0
    %5202 = vmatprep.subr.bf16.mxu0 0
    %5203 = vmatpush1.bf16.msra.mxu0 0
    %5204 = vmatprep.subr.bf16.mxu0 0
    %5205 = vmatpush1.bf16.msra.mxu0 0
    %5206 = vmatprep.subr.bf16.mxu0 0
    %5207 = vmatpush1.bf16.msra.mxu0 0
    %5208 = vmatprep.subr.bf16.mxu0 0
    %5209 = vmatpush1.bf16.msra.mxu0 0
    %5210 = vmatprep.subr.bf16.mxu0 0
    %5211 = vmatpush1.bf16.msra.mxu0 0
    %5212 = vmatprep.subr.bf16.mxu0 0
    %5213 = vmatpush1.bf16.msra.mxu0 0
    %5214 = vmatprep.subr.bf16.mxu0 0
    %5215 = vmatpush1.bf16.msra.mxu0 0
    %5216 = vmatprep.subr.bf16.mxu0 0
    %5217 = vmatpush1.bf16.msra.mxu0 0
    %5218 = vmatprep.mubr.bf16.mxu0 0
    %5219 = vmatmul.mubr.bf16.gmra.mrb[0].mxu0 %v1289
    %v5220 = vpop.f32.mrb[0].mxu0
    %v5221 = vadd.f32 0.0, %v5220
    %v5222 = vpop.f32.mrb[0].mxu0
    %v5223 = vadd.f32 0.0, %v5222
    %v5224 = vpop.f32.mrb[0].mxu0
    %v5225 = vpop.f32.mrb[0].mxu0
    %5226 = vdwg.mxu0
    %5227 = vmatprep.subr.bf16.mxu0 %v1064
    %5228 = vmatpush1.bf16.msra.mxu0 %v1063
    %5229 = vmatprep.subr.bf16.mxu0 0
    %5230 = vmatpush1.bf16.msra.mxu0 0
    %5231 = vmatprep.subr.bf16.mxu0 0
    %5232 = vmatpush1.bf16.msra.mxu0 0
    %5233 = vmatprep.subr.bf16.mxu0 0
    %5234 = vmatpush1.bf16.msra.mxu0 0
    %5235 = vmatprep.subr.bf16.mxu0 0
    %5236 = vmatpush1.bf16.msra.mxu0 0
    %5237 = vmatprep.subr.bf16.mxu0 0
    %5238 = vmatpush1.bf16.msra.mxu0 0
    %5239 = vmatprep.subr.bf16.mxu0 0
    %5240 = vmatpush1.bf16.msra.mxu0 0
    %5241 = vmatprep.subr.bf16.mxu0 0
    %5242 = vmatpush1.bf16.msra.mxu0 0
    %5243 = vmatprep.subr.bf16.mxu0 0
    %5244 = vmatpush1.bf16.msra.mxu0 0
    %5245 = vmatprep.subr.bf16.mxu0 0
    %5246 = vmatpush1.bf16.msra.mxu0 0
    %5247 = vmatprep.subr.bf16.mxu0 0
    %5248 = vmatpush1.bf16.msra.mxu0 0
    %5249 = vmatprep.subr.bf16.mxu0 0
    %5250 = vmatpush1.bf16.msra.mxu0 0
    %5251 = vmatprep.subr.bf16.mxu0 0
    %5252 = vmatpush1.bf16.msra.mxu0 0
    %5253 = vmatprep.subr.bf16.mxu0 0
    %5254 = vmatpush1.bf16.msra.mxu0 0
    %5255 = vmatprep.subr.bf16.mxu0 0
    %5256 = vmatpush1.bf16.msra.mxu0 0
    %5257 = vmatprep.subr.bf16.mxu0 0
    %5258 = vmatpush1.bf16.msra.mxu0 0
    %5259 = vmatprep.mubr.bf16.mxu0 0
    %5260 = vmatmul.mubr.bf16.gmra.mrb[0].mxu0 %v1289
    %v5261 = vpop.f32.mrb[0].mxu0
    %v5262 = vadd.f32 0.0, %v5261
    %v5263 = vpop.f32.mrb[0].mxu0
    %v5264 = vadd.f32 0.0, %v5263
    %v5265 = vpop.f32.mrb[0].mxu0
    %v5266 = vpop.f32.mrb[0].mxu0
    %5267 = vdwg.mxu0
    %5268 = vmatprep.subr.bf16.mxu0 %v1066
    %5269 = vmatpush1.bf16.msra.mxu0 %v1065
    %5270 = vmatprep.subr.bf16.mxu0 0
    %5271 = vmatpush1.bf16.msra.mxu0 0
    %5272 = vmatprep.subr.bf16.mxu0 0
    %5273 = vmatpush1.bf16.msra.mxu0 0
    %5274 = vmatprep.subr.bf16.mxu0 0
    %5275 = vmatpush1.bf16.msra.mxu0 0
    %5276 = vmatprep.subr.bf16.mxu0 0
    %5277 = vmatpush1.bf16.msra.mxu0 0
    %5278 = vmatprep.subr.bf16.mxu0 0
    %5279 = vmatpush1.bf16.msra.mxu0 0
    %5280 = vmatprep.subr.bf16.mxu0 0
    %5281 = vmatpush1.bf16.msra.mxu0 0
    %5282 = vmatprep.subr.bf16.mxu0 0
    %5283 = vmatpush1.bf16.msra.mxu0 0
    %5284 = vmatprep.subr.bf16.mxu0 0
    %5285 = vmatpush1.bf16.msra.mxu0 0
    %5286 = vmatprep.subr.bf16.mxu0 0
    %5287 = vmatpush1.bf16.msra.mxu0 0
    %5288 = vmatprep.subr.bf16.mxu0 0
    %5289 = vmatpush1.bf16.msra.mxu0 0
    %5290 = vmatprep.subr.bf16.mxu0 0
    %5291 = vmatpush1.bf16.msra.mxu0 0
    %5292 = vmatprep.subr.bf16.mxu0 0
    %5293 = vmatpush1.bf16.msra.mxu0 0
    %5294 = vmatprep.subr.bf16.mxu0 0
    %5295 = vmatpush1.bf16.msra.mxu0 0
    %5296 = vmatprep.subr.bf16.mxu0 0
    %5297 = vmatpush1.bf16.msra.mxu0 0
    %5298 = vmatprep.subr.bf16.mxu0 0
    %5299 = vmatpush1.bf16.msra.mxu0 0
    %5300 = vmatprep.mubr.bf16.mxu0 0
    %5301 = vmatmul.mubr.bf16.gmra.mrb[0].mxu0 %v1289
    %v5302 = vpop.f32.mrb[0].mxu0
    %v5303 = vadd.f32 0.0, %v5302
    %v5304 = vpop.f32.mrb[0].mxu0
    %v5305 = vadd.f32 0.0, %v5304
    %v5306 = vpop.f32.mrb[0].mxu0
    %v5307 = vpop.f32.mrb[0].mxu0
    %5308 = vdwg.mxu0
    %5309 = vmatprep.subr.bf16.mxu0 %v1068
    %5310 = vmatpush1.bf16.msra.mxu0 %v1067
    %5311 = vmatprep.subr.bf16.mxu0 0
    %5312 = vmatpush1.bf16.msra.mxu0 0
    %5313 = vmatprep.subr.bf16.mxu0 0
    %5314 = vmatpush1.bf16.msra.mxu0 0
    %5315 = vmatprep.subr.bf16.mxu0 0
    %5316 = vmatpush1.bf16.msra.mxu0 0
    %5317 = vmatprep.subr.bf16.mxu0 0
    %5318 = vmatpush1.bf16.msra.mxu0 0
    %5319 = vmatprep.subr.bf16.mxu0 0
    %5320 = vmatpush1.bf16.msra.mxu0 0
    %5321 = vmatprep.subr.bf16.mxu0 0
    %5322 = vmatpush1.bf16.msra.mxu0 0
    %5323 = vmatprep.subr.bf16.mxu0 0
    %5324 = vmatpush1.bf16.msra.mxu0 0
    %5325 = vmatprep.subr.bf16.mxu0 0
    %5326 = vmatpush1.bf16.msra.mxu0 0
    %5327 = vmatprep.subr.bf16.mxu0 0
    %5328 = vmatpush1.bf16.msra.mxu0 0
    %5329 = vmatprep.subr.bf16.mxu0 0
    %5330 = vmatpush1.bf16.msra.mxu0 0
    %5331 = vmatprep.subr.bf16.mxu0 0
    %5332 = vmatpush1.bf16.msra.mxu0 0
    %5333 = vmatprep.subr.bf16.mxu0 0
    %5334 = vmatpush1.bf16.msra.mxu0 0
    %5335 = vmatprep.subr.bf16.mxu0 0
    %5336 = vmatpush1.bf16.msra.mxu0 0
    %5337 = vmatprep.subr.bf16.mxu0 0
    %5338 = vmatpush1.bf16.msra.mxu0 0
    %5339 = vmatprep.subr.bf16.mxu0 0
    %5340 = vmatpush1.bf16.msra.mxu0 0
    %5341 = vmatprep.mubr.bf16.mxu0 0
    %5342 = vmatmul.mubr.bf16.gmra.mrb[0].mxu0 %v1289
    %v5343 = vpop.f32.mrb[0].mxu0
    %v5344 = vadd.f32 0.0, %v5343
    %v5345 = vpop.f32.mrb[0].mxu0
    %v5346 = vadd.f32 0.0, %v5345
    %v5347 = vpop.f32.mrb[0].mxu0
    %v5348 = vpop.f32.mrb[0].mxu0
    %5349 = vdwg.mxu0
    %5350 = vmatprep.subr.bf16.mxu0 %v1070
    %5351 = vmatpush1.bf16.msra.mxu0 %v1069
    %5352 = vmatprep.subr.bf16.mxu0 0
    %5353 = vmatpush1.bf16.msra.mxu0 0
    %5354 = vmatprep.subr.bf16.mxu0 0
    %5355 = vmatpush1.bf16.msra.mxu0 0
    %5356 = vmatprep.subr.bf16.mxu0 0
    %5357 = vmatpush1.bf16.msra.mxu0 0
    %5358 = vmatprep.subr.bf16.mxu0 0
    %5359 = vmatpush1.bf16.msra.mxu0 0
    %5360 = vmatprep.subr.bf16.mxu0 0
    %5361 = vmatpush1.bf16.msra.mxu0 0
    %5362 = vmatprep.subr.bf16.mxu0 0
    %5363 = vmatpush1.bf16.msra.mxu0 0
    %5364 = vmatprep.subr.bf16.mxu0 0
    %5365 = vmatpush1.bf16.msra.mxu0 0
    %5366 = vmatprep.subr.bf16.mxu0 0
    %5367 = vmatpush1.bf16.msra.mxu0 0
    %5368 = vmatprep.subr.bf16.mxu0 0
    %5369 = vmatpush1.bf16.msra.mxu0 0
    %5370 = vmatprep.subr.bf16.mxu0 0
    %5371 = vmatpush1.bf16.msra.mxu0 0
    %5372 = vmatprep.subr.bf16.mxu0 0
    %5373 = vmatpush1.bf16.msra.mxu0 0
    %5374 = vmatprep.subr.bf16.mxu0 0
    %5375 = vmatpush1.bf16.msra.mxu0 0
    %5376 = vmatprep.subr.bf16.mxu0 0
    %5377 = vmatpush1.bf16.msra.mxu0 0
    %5378 = vmatprep.subr.bf16.mxu0 0
    %5379 = vmatpush1.bf16.msra.mxu0 0
    %5380 = vmatprep.subr.bf16.mxu0 0
    %5381 = vmatpush1.bf16.msra.mxu0 0
    %5382 = vmatprep.mubr.bf16.mxu0 0
    %5383 = vmatmul.mubr.bf16.gmra.mrb[0].mxu0 %v1289
    %v5384 = vpop.f32.mrb[0].mxu0
    %v5385 = vadd.f32 0.0, %v5384
    %v5386 = vpop.f32.mrb[0].mxu0
    %v5387 = vadd.f32 0.0, %v5386
    %v5388 = vpop.f32.mrb[0].mxu0
    %v5389 = vpop.f32.mrb[0].mxu0
    %5390 = vdwg.mxu0
    %5391 = vmatprep.subr.bf16.mxu0 %v1072
    %5392 = vmatpush1.bf16.msra.mxu0 %v1071
    %5393 = vmatprep.subr.bf16.mxu0 0
    %5394 = vmatpush1.bf16.msra.mxu0 0
    %5395 = vmatprep.subr.bf16.mxu0 0
    %5396 = vmatpush1.bf16.msra.mxu0 0
    %5397 = vmatprep.subr.bf16.mxu0 0
    %5398 = vmatpush1.bf16.msra.mxu0 0
    %5399 = vmatprep.subr.bf16.mxu0 0
    %5400 = vmatpush1.bf16.msra.mxu0 0
    %5401 = vmatprep.subr.bf16.mxu0 0
    %5402 = vmatpush1.bf16.msra.mxu0 0
    %5403 = vmatprep.subr.bf16.mxu0 0
    %5404 = vmatpush1.bf16.msra.mxu0 0
    %5405 = vmatprep.subr.bf16.mxu0 0
    %5406 = vmatpush1.bf16.msra.mxu0 0
    %5407 = vmatprep.subr.bf16.mxu0 0
    %5408 = vmatpush1.bf16.msra.mxu0 0
    %5409 = vmatprep.subr.bf16.mxu0 0
    %5410 = vmatpush1.bf16.msra.mxu0 0
    %5411 = vmatprep.subr.bf16.mxu0 0
    %5412 = vmatpush1.bf16.msra.mxu0 0
    %5413 = vmatprep.subr.bf16.mxu0 0
    %5414 = vmatpush1.bf16.msra.mxu0 0
    %5415 = vmatprep.subr.bf16.mxu0 0
    %5416 = vmatpush1.bf16.msra.mxu0 0
    %5417 = vmatprep.subr.bf16.mxu0 0
    %5418 = vmatpush1.bf16.msra.mxu0 0
    %5419 = vmatprep.subr.bf16.mxu0 0
    %5420 = vmatpush1.bf16.msra.mxu0 0
    %5421 = vmatprep.subr.bf16.mxu0 0
    %5422 = vmatpush1.bf16.msra.mxu0 0
    %5423 = vmatprep.mubr.bf16.mxu0 0
    %5424 = vmatmul.mubr.bf16.gmra.mrb[0].mxu0 %v1289
    %v5425 = vpop.f32.mrb[0].mxu0
    %v5426 = vadd.f32 0.0, %v5425
    %v5427 = vpop.f32.mrb[0].mxu0
    %v5428 = vadd.f32 0.0, %v5427
    %v5429 = vpop.f32.mrb[0].mxu0
    %v5430 = vpop.f32.mrb[0].mxu0
    %5431 = vdwg.mxu0
    %5432 = vmatprep.subr.bf16.mxu0 %v1074
    %5433 = vmatpush1.bf16.msra.mxu0 %v1073
    %5434 = vmatprep.subr.bf16.mxu0 0
    %5435 = vmatpush1.bf16.msra.mxu0 0
    %5436 = vmatprep.subr.bf16.mxu0 0
    %5437 = vmatpush1.bf16.msra.mxu0 0
    %5438 = vmatprep.subr.bf16.mxu0 0
    %5439 = vmatpush1.bf16.msra.mxu0 0
    %5440 = vmatprep.subr.bf16.mxu0 0
    %5441 = vmatpush1.bf16.msra.mxu0 0
    %5442 = vmatprep.subr.bf16.mxu0 0
    %5443 = vmatpush1.bf16.msra.mxu0 0
    %5444 = vmatprep.subr.bf16.mxu0 0
    %5445 = vmatpush1.bf16.msra.mxu0 0
    %5446 = vmatprep.subr.bf16.mxu0 0
    %5447 = vmatpush1.bf16.msra.mxu0 0
    %5448 = vmatprep.subr.bf16.mxu0 0
    %5449 = vmatpush1.bf16.msra.mxu0 0
    %5450 = vmatprep.subr.bf16.mxu0 0
    %5451 = vmatpush1.bf16.msra.mxu0 0
    %5452 = vmatprep.subr.bf16.mxu0 0
    %5453 = vmatpush1.bf16.msra.mxu0 0
    %5454 = vmatprep.subr.bf16.mxu0 0
    %5455 = vmatpush1.bf16.msra.mxu0 0
    %5456 = vmatprep.subr.bf16.mxu0 0
    %5457 = vmatpush1.bf16.msra.mxu0 0
    %5458 = vmatprep.subr.bf16.mxu0 0
    %5459 = vmatpush1.bf16.msra.mxu0 0
    %5460 = vmatprep.subr.bf16.mxu0 0
    %5461 = vmatpush1.bf16.msra.mxu0 0
    %5462 = vmatprep.subr.bf16.mxu0 0
    %5463 = vmatpush1.bf16.msra.mxu0 0
    %5464 = vmatprep.mubr.bf16.mxu0 0
    %5465 = vmatmul.mubr.bf16.gmra.mrb[0].mxu0 %v1289
    %v5466 = vpop.f32.mrb[0].mxu0
    %v5467 = vadd.f32 0.0, %v5466
    %v5468 = vpop.f32.mrb[0].mxu0
    %v5469 = vadd.f32 0.0, %v5468
    %v5470 = vpop.f32.mrb[0].mxu0
    %v5471 = vpop.f32.mrb[0].mxu0
    %5472 = vdwg.mxu0
    %5473 = vmatprep.subr.bf16.mxu0 %v1076
    %5474 = vmatpush1.bf16.msra.mxu0 %v1075
    %5475 = vmatprep.subr.bf16.mxu0 0
    %5476 = vmatpush1.bf16.msra.mxu0 0
    %5477 = vmatprep.subr.bf16.mxu0 0
    %5478 = vmatpush1.bf16.msra.mxu0 0
    %5479 = vmatprep.subr.bf16.mxu0 0
    %5480 = vmatpush1.bf16.msra.mxu0 0
    %5481 = vmatprep.subr.bf16.mxu0 0
    %5482 = vmatpush1.bf16.msra.mxu0 0
    %5483 = vmatprep.subr.bf16.mxu0 0
    %5484 = vmatpush1.bf16.msra.mxu0 0
    %5485 = vmatprep.subr.bf16.mxu0 0
    %5486 = vmatpush1.bf16.msra.mxu0 0
    %5487 = vmatprep.subr.bf16.mxu0 0
    %5488 = vmatpush1.bf16.msra.mxu0 0
    %5489 = vmatprep.subr.bf16.mxu0 0
    %5490 = vmatpush1.bf16.msra.mxu0 0
    %5491 = vmatprep.subr.bf16.mxu0 0
    %5492 = vmatpush1.bf16.msra.mxu0 0
    %5493 = vmatprep.subr.bf16.mxu0 0
    %5494 = vmatpush1.bf16.msra.mxu0 0
    %5495 = vmatprep.subr.bf16.mxu0 0
    %5496 = vmatpush1.bf16.msra.mxu0 0
    %5497 = vmatprep.subr.bf16.mxu0 0
    %5498 = vmatpush1.bf16.msra.mxu0 0
    %5499 = vmatprep.subr.bf16.mxu0 0
    %5500 = vmatpush1.bf16.msra.mxu0 0
    %5501 = vmatprep.subr.bf16.mxu0 0
    %5502 = vmatpush1.bf16.msra.mxu0 0
    %5503 = vmatprep.subr.bf16.mxu0 0
    %5504 = vmatpush1.bf16.msra.mxu0 0
    %5505 = vmatprep.mubr.bf16.mxu0 0
    %5506 = vmatmul.mubr.bf16.gmra.mrb[0].mxu0 %v1289
    %v5507 = vpop.f32.mrb[0].mxu0
    %v5508 = vadd.f32 0.0, %v5507
    %v5509 = vpop.f32.mrb[0].mxu0
    %v5510 = vadd.f32 0.0, %v5509
    %v5511 = vpop.f32.mrb[0].mxu0
    %v5512 = vpop.f32.mrb[0].mxu0
    %5513 = vdwg.mxu0
    %5514 = vmatprep.subr.bf16.mxu0 %v1078
    %5515 = vmatpush1.bf16.msra.mxu0 %v1077
    %5516 = vmatprep.subr.bf16.mxu0 0
    %5517 = vmatpush1.bf16.msra.mxu0 0
    %5518 = vmatprep.subr.bf16.mxu0 0
    %5519 = vmatpush1.bf16.msra.mxu0 0
    %5520 = vmatprep.subr.bf16.mxu0 0
    %5521 = vmatpush1.bf16.msra.mxu0 0
    %5522 = vmatprep.subr.bf16.mxu0 0
    %5523 = vmatpush1.bf16.msra.mxu0 0
    %5524 = vmatprep.subr.bf16.mxu0 0
    %5525 = vmatpush1.bf16.msra.mxu0 0
    %5526 = vmatprep.subr.bf16.mxu0 0
    %5527 = vmatpush1.bf16.msra.mxu0 0
    %5528 = vmatprep.subr.bf16.mxu0 0
    %5529 = vmatpush1.bf16.msra.mxu0 0
    %5530 = vmatprep.subr.bf16.mxu0 0
    %5531 = vmatpush1.bf16.msra.mxu0 0
    %5532 = vmatprep.subr.bf16.mxu0 0
    %5533 = vmatpush1.bf16.msra.mxu0 0
    %5534 = vmatprep.subr.bf16.mxu0 0
    %5535 = vmatpush1.bf16.msra.mxu0 0
    %5536 = vmatprep.subr.bf16.mxu0 0
    %5537 = vmatpush1.bf16.msra.mxu0 0
    %5538 = vmatprep.subr.bf16.mxu0 0
    %5539 = vmatpush1.bf16.msra.mxu0 0
    %5540 = vmatprep.subr.bf16.mxu0 0
    %5541 = vmatpush1.bf16.msra.mxu0 0
    %5542 = vmatprep.subr.bf16.mxu0 0
    %5543 = vmatpush1.bf16.msra.mxu0 0
    %5544 = vmatprep.subr.bf16.mxu0 0
    %5545 = vmatpush1.bf16.msra.mxu0 0
    %5546 = vmatprep.mubr.bf16.mxu0 0
    %5547 = vmatmul.mubr.bf16.gmra.mrb[0].mxu0 %v1289
    %v5548 = vpop.f32.mrb[0].mxu0
    %v5549 = vadd.f32 0.0, %v5548
    %v5550 = vpop.f32.mrb[0].mxu0
    %v5551 = vadd.f32 0.0, %v5550
    %v5552 = vpop.f32.mrb[0].mxu0
    %v5553 = vpop.f32.mrb[0].mxu0
    %5554 = vdwg.mxu0
    %v5763 = vcombine.low %v1326, %v1328
    %v5764 = vcombine.low %v1367, %v1369
    %v5765 = vcombine.low %v1408, %v1410
    %v5766 = vcombine.low %v1449, %v1451
    %v5768 = vunpack.c.l.s4 1966171168
    %v5769 = vunpack.c.0.s8 %v5768
    %v5770 = vlaneseq
    %v5771 = vshrl.u32 %v5770, 7
    %v5772 = vsub.s32 %v5769, %v5771
    %v5773 = vrot.slane %v5763, %v5772
    %v5775 = vunpack.c.l.s4 1966171168
    %v5776 = vunpack.c.0.s8 %v5775
    %v5777 = vlaneseq
    %v5778 = vshrl.u32 %v5777, 7
    %v5779 = vsub.s32 %v5776, %v5778
    %v5780 = vrot.slane %v5764, %v5779
    %v5782 = vunpack.c.l.s4 1966171168
    %v5783 = vunpack.c.0.s8 %v5782
    %v5784 = vlaneseq
    %v5785 = vshrl.u32 %v5784, 7
    %v5786 = vsub.s32 %v5783, %v5785
    %v5787 = vrot.slane %v5765, %v5786
    %v5789 = vunpack.c.l.s4 1966171168
    %v5790 = vunpack.c.0.s8 %v5789
    %v5791 = vlaneseq
    %v5792 = vshrl.u32 %v5791, 7
    %v5793 = vsub.s32 %v5790, %v5792
    %v5794 = vrot.slane %v5766, %v5793
    %v5795 = vcombine.low %v5773, %v5780
    %v5796 = vcombine.high %v5773, %v5780
    %v5797 = vcombine.low %v5787, %v5794
    %v5798 = vcombine.high %v5787, %v5794
    %v5800 = vunpack.c.l.s4 1966171168
    %v5801 = vunpack.c.0.s8 %v5800
    %v5802 = vlaneseq
    %v5803 = vshrl.u32 %v5802, 7
    %v5804 = vsub.s32 %v5801, %v5803
    %v5805 = vrot.slane %v5795, %v5804
    %v5807 = vunpack.c.l.s4 1966171168
    %v5808 = vunpack.c.0.s8 %v5807
    %v5809 = vlaneseq
    %v5810 = vshrl.u32 %v5809, 7
    %v5811 = vsub.s32 %v5808, %v5810
    %v5812 = vrot.slane %v5796, %v5811
    %v5814 = vunpack.c.l.s4 1966171168
    %v5815 = vunpack.c.0.s8 %v5814
    %v5816 = vlaneseq
    %v5817 = vshrl.u32 %v5816, 7
    %v5818 = vsub.s32 %v5815, %v5817
    %v5819 = vrot.slane %v5797, %v5818
    %v5821 = vunpack.c.l.s4 1966171168
    %v5822 = vunpack.c.0.s8 %v5821
    %v5823 = vlaneseq
    %v5824 = vshrl.u32 %v5823, 7
    %v5825 = vsub.s32 %v5822, %v5824
    %v5826 = vrot.slane %v5798, %v5825
    %v5827 = vcombine.low %v5805, %v5819
    %v5828 = vcombine.low %v5812, %v5826
    %v5829 = vcombine.low %v1490, %v1492
    %v5830 = vcombine.low %v1531, %v1533
    %v5831 = vcombine.low %v1572, %v1574
    %v5832 = vcombine.low %v1613, %v1615
    %v5834 = vunpack.c.l.s4 1966171168
    %v5835 = vunpack.c.0.s8 %v5834
    %v5836 = vlaneseq
    %v5837 = vshrl.u32 %v5836, 7
    %v5838 = vsub.s32 %v5835, %v5837
    %v5839 = vrot.slane %v5829, %v5838
    %v5841 = vunpack.c.l.s4 1966171168
    %v5842 = vunpack.c.0.s8 %v5841
    %v5843 = vlaneseq
    %v5844 = vshrl.u32 %v5843, 7
    %v5845 = vsub.s32 %v5842, %v5844
    %v5846 = vrot.slane %v5830, %v5845
    %v5848 = vunpack.c.l.s4 1966171168
    %v5849 = vunpack.c.0.s8 %v5848
    %v5850 = vlaneseq
    %v5851 = vshrl.u32 %v5850, 7
    %v5852 = vsub.s32 %v5849, %v5851
    %v5853 = vrot.slane %v5831, %v5852
    %v5855 = vunpack.c.l.s4 1966171168
    %v5856 = vunpack.c.0.s8 %v5855
    %v5857 = vlaneseq
    %v5858 = vshrl.u32 %v5857, 7
    %v5859 = vsub.s32 %v5856, %v5858
    %v5860 = vrot.slane %v5832, %v5859
    %v5861 = vcombine.low %v5839, %v5846
    %v5862 = vcombine.high %v5839, %v5846
    %v5863 = vcombine.low %v5853, %v5860
    %v5864 = vcombine.high %v5853, %v5860
    %v5866 = vunpack.c.l.s4 1966171168
    %v5867 = vunpack.c.0.s8 %v5866
    %v5868 = vlaneseq
    %v5869 = vshrl.u32 %v5868, 7
    %v5870 = vsub.s32 %v5867, %v5869
    %v5871 = vrot.slane %v5861, %v5870
    %v5873 = vunpack.c.l.s4 1966171168
    %v5874 = vunpack.c.0.s8 %v5873
    %v5875 = vlaneseq
    %v5876 = vshrl.u32 %v5875, 7
    %v5877 = vsub.s32 %v5874, %v5876
    %v5878 = vrot.slane %v5862, %v5877
    %v5880 = vunpack.c.l.s4 1966171168
    %v5881 = vunpack.c.0.s8 %v5880
    %v5882 = vlaneseq
    %v5883 = vshrl.u32 %v5882, 7
    %v5884 = vsub.s32 %v5881, %v5883
    %v5885 = vrot.slane %v5863, %v5884
    %v5887 = vunpack.c.l.s4 1966171168
    %v5888 = vunpack.c.0.s8 %v5887
    %v5889 = vlaneseq
    %v5890 = vshrl.u32 %v5889, 7
    %v5891 = vsub.s32 %v5888, %v5890
    %v5892 = vrot.slane %v5864, %v5891
    %v5893 = vcombine.low %v5871, %v5885
    %v5894 = vcombine.low %v5878, %v5892
    %v5895 = vcombine.low %v1654, %v1656
    %v5896 = vcombine.low %v1695, %v1697
    %v5897 = vcombine.low %v1736, %v1738
    %v5898 = vcombine.low %v1777, %v1779
    %v5900 = vunpack.c.l.s4 1966171168
    %v5901 = vunpack.c.0.s8 %v5900
    %v5902 = vlaneseq
    %v5903 = vshrl.u32 %v5902, 7
    %v5904 = vsub.s32 %v5901, %v5903
    %v5905 = vrot.slane %v5895, %v5904
    %v5907 = vunpack.c.l.s4 1966171168
    %v5908 = vunpack.c.0.s8 %v5907
    %v5909 = vlaneseq
    %v5910 = vshrl.u32 %v5909, 7
    %v5911 = vsub.s32 %v5908, %v5910
    %v5912 = vrot.slane %v5896, %v5911
    %v5914 = vunpack.c.l.s4 1966171168
    %v5915 = vunpack.c.0.s8 %v5914
    %v5916 = vlaneseq
    %v5917 = vshrl.u32 %v5916, 7
    %v5918 = vsub.s32 %v5915, %v5917
    %v5919 = vrot.slane %v5897, %v5918
    %v5921 = vunpack.c.l.s4 1966171168
    %v5922 = vunpack.c.0.s8 %v5921
    %v5923 = vlaneseq
    %v5924 = vshrl.u32 %v5923, 7
    %v5925 = vsub.s32 %v5922, %v5924
    %v5926 = vrot.slane %v5898, %v5925
    %v5927 = vcombine.low %v5905, %v5912
    %v5928 = vcombine.high %v5905, %v5912
    %v5929 = vcombine.low %v5919, %v5926
    %v5930 = vcombine.high %v5919, %v5926
    %v5932 = vunpack.c.l.s4 1966171168
    %v5933 = vunpack.c.0.s8 %v5932
    %v5934 = vlaneseq
    %v5935 = vshrl.u32 %v5934, 7
    %v5936 = vsub.s32 %v5933, %v5935
    %v5937 = vrot.slane %v5927, %v5936
    %v5939 = vunpack.c.l.s4 1966171168
    %v5940 = vunpack.c.0.s8 %v5939
    %v5941 = vlaneseq
    %v5942 = vshrl.u32 %v5941, 7
    %v5943 = vsub.s32 %v5940, %v5942
    %v5944 = vrot.slane %v5928, %v5943
    %v5946 = vunpack.c.l.s4 1966171168
    %v5947 = vunpack.c.0.s8 %v5946
    %v5948 = vlaneseq
    %v5949 = vshrl.u32 %v5948, 7
    %v5950 = vsub.s32 %v5947, %v5949
    %v5951 = vrot.slane %v5929, %v5950
    %v5953 = vunpack.c.l.s4 1966171168
    %v5954 = vunpack.c.0.s8 %v5953
    %v5955 = vlaneseq
    %v5956 = vshrl.u32 %v5955, 7
    %v5957 = vsub.s32 %v5954, %v5956
    %v5958 = vrot.slane %v5930, %v5957
    %v5959 = vcombine.low %v5937, %v5951
    %v5960 = vcombine.low %v5944, %v5958
    %v5961 = vcombine.low %v1818, %v1820
    %v5962 = vcombine.low %v1859, %v1861
    %v5963 = vcombine.low %v1900, %v1902
    %v5964 = vcombine.low %v1941, %v1943
    %v5966 = vunpack.c.l.s4 1966171168
    %v5967 = vunpack.c.0.s8 %v5966
    %v5968 = vlaneseq
    %v5969 = vshrl.u32 %v5968, 7
    %v5970 = vsub.s32 %v5967, %v5969
    %v5971 = vrot.slane %v5961, %v5970
    %v5973 = vunpack.c.l.s4 1966171168
    %v5974 = vunpack.c.0.s8 %v5973
    %v5975 = vlaneseq
    %v5976 = vshrl.u32 %v5975, 7
    %v5977 = vsub.s32 %v5974, %v5976
    %v5978 = vrot.slane %v5962, %v5977
    %v5980 = vunpack.c.l.s4 1966171168
    %v5981 = vunpack.c.0.s8 %v5980
    %v5982 = vlaneseq
    %v5983 = vshrl.u32 %v5982, 7
    %v5984 = vsub.s32 %v5981, %v5983
    %v5985 = vrot.slane %v5963, %v5984
    %v5987 = vunpack.c.l.s4 1966171168
    %v5988 = vunpack.c.0.s8 %v5987
    %v5989 = vlaneseq
    %v5990 = vshrl.u32 %v5989, 7
    %v5991 = vsub.s32 %v5988, %v5990
    %v5992 = vrot.slane %v5964, %v5991
    %v5993 = vcombine.low %v5971, %v5978
    %v5994 = vcombine.high %v5971, %v5978
    %v5995 = vcombine.low %v5985, %v5992
    %v5996 = vcombine.high %v5985, %v5992
    %v5998 = vunpack.c.l.s4 1966171168
    %v5999 = vunpack.c.0.s8 %v5998
    %v6000 = vlaneseq
    %v6001 = vshrl.u32 %v6000, 7
    %v6002 = vsub.s32 %v5999, %v6001
    %v6003 = vrot.slane %v5993, %v6002
    %v6005 = vunpack.c.l.s4 1966171168
    %v6006 = vunpack.c.0.s8 %v6005
    %v6007 = vlaneseq
    %v6008 = vshrl.u32 %v6007, 7
    %v6009 = vsub.s32 %v6006, %v6008
    %v6010 = vrot.slane %v5994, %v6009
    %v6012 = vunpack.c.l.s4 1966171168
    %v6013 = vunpack.c.0.s8 %v6012
    %v6014 = vlaneseq
    %v6015 = vshrl.u32 %v6014, 7
    %v6016 = vsub.s32 %v6013, %v6015
    %v6017 = vrot.slane %v5995, %v6016
    %v6019 = vunpack.c.l.s4 1966171168
    %v6020 = vunpack.c.0.s8 %v6019
    %v6021 = vlaneseq
    %v6022 = vshrl.u32 %v6021, 7
    %v6023 = vsub.s32 %v6020, %v6022
    %v6024 = vrot.slane %v5996, %v6023
    %v6025 = vcombine.low %v6003, %v6017
    %v6026 = vcombine.low %v6010, %v6024
    %v6027 = vcombine.low %v1982, %v1984
    %v6028 = vcombine.low %v2023, %v2025
    %v6029 = vcombine.low %v2064, %v2066
    %v6030 = vcombine.low %v2105, %v2107
    %v6032 = vunpack.c.l.s4 1966171168
    %v6033 = vunpack.c.0.s8 %v6032
    %v6034 = vlaneseq
    %v6035 = vshrl.u32 %v6034, 7
    %v6036 = vsub.s32 %v6033, %v6035
    %v6037 = vrot.slane %v6027, %v6036
    %v6039 = vunpack.c.l.s4 1966171168
    %v6040 = vunpack.c.0.s8 %v6039
    %v6041 = vlaneseq
    %v6042 = vshrl.u32 %v6041, 7
    %v6043 = vsub.s32 %v6040, %v6042
    %v6044 = vrot.slane %v6028, %v6043
    %v6046 = vunpack.c.l.s4 1966171168
    %v6047 = vunpack.c.0.s8 %v6046
    %v6048 = vlaneseq
    %v6049 = vshrl.u32 %v6048, 7
    %v6050 = vsub.s32 %v6047, %v6049
    %v6051 = vrot.slane %v6029, %v6050
    %v6053 = vunpack.c.l.s4 1966171168
    %v6054 = vunpack.c.0.s8 %v6053
    %v6055 = vlaneseq
    %v6056 = vshrl.u32 %v6055, 7
    %v6057 = vsub.s32 %v6054, %v6056
    %v6058 = vrot.slane %v6030, %v6057
    %v6059 = vcombine.low %v6037, %v6044
    %v6060 = vcombine.high %v6037, %v6044
    %v6061 = vcombine.low %v6051, %v6058
    %v6062 = vcombine.high %v6051, %v6058
    %v6064 = vunpack.c.l.s4 1966171168
    %v6065 = vunpack.c.0.s8 %v6064
    %v6066 = vlaneseq
    %v6067 = vshrl.u32 %v6066, 7
    %v6068 = vsub.s32 %v6065, %v6067
    %v6069 = vrot.slane %v6059, %v6068
    %v6071 = vunpack.c.l.s4 1966171168
    %v6072 = vunpack.c.0.s8 %v6071
    %v6073 = vlaneseq
    %v6074 = vshrl.u32 %v6073, 7
    %v6075 = vsub.s32 %v6072, %v6074
    %v6076 = vrot.slane %v6060, %v6075
    %v6078 = vunpack.c.l.s4 1966171168
    %v6079 = vunpack.c.0.s8 %v6078
    %v6080 = vlaneseq
    %v6081 = vshrl.u32 %v6080, 7
    %v6082 = vsub.s32 %v6079, %v6081
    %v6083 = vrot.slane %v6061, %v6082
    %v6085 = vunpack.c.l.s4 1966171168
    %v6086 = vunpack.c.0.s8 %v6085
    %v6087 = vlaneseq
    %v6088 = vshrl.u32 %v6087, 7
    %v6089 = vsub.s32 %v6086, %v6088
    %v6090 = vrot.slane %v6062, %v6089
    %v6091 = vcombine.low %v6069, %v6083
    %v6092 = vcombine.low %v6076, %v6090
    %v6093 = vcombine.low %v2146, %v2148
    %v6094 = vcombine.low %v2187, %v2189
    %v6095 = vcombine.low %v2228, %v2230
    %v6096 = vcombine.low %v2269, %v2271
    %v6098 = vunpack.c.l.s4 1966171168
    %v6099 = vunpack.c.0.s8 %v6098
    %v6100 = vlaneseq
    %v6101 = vshrl.u32 %v6100, 7
    %v6102 = vsub.s32 %v6099, %v6101
    %v6103 = vrot.slane %v6093, %v6102
    %v6105 = vunpack.c.l.s4 1966171168
    %v6106 = vunpack.c.0.s8 %v6105
    %v6107 = vlaneseq
    %v6108 = vshrl.u32 %v6107, 7
    %v6109 = vsub.s32 %v6106, %v6108
    %v6110 = vrot.slane %v6094, %v6109
    %v6112 = vunpack.c.l.s4 1966171168
    %v6113 = vunpack.c.0.s8 %v6112
    %v6114 = vlaneseq
    %v6115 = vshrl.u32 %v6114, 7
    %v6116 = vsub.s32 %v6113, %v6115
    %v6117 = vrot.slane %v6095, %v6116
    %v6119 = vunpack.c.l.s4 1966171168
    %v6120 = vunpack.c.0.s8 %v6119
    %v6121 = vlaneseq
    %v6122 = vshrl.u32 %v6121, 7
    %v6123 = vsub.s32 %v6120, %v6122
    %v6124 = vrot.slane %v6096, %v6123
    %v6125 = vcombine.low %v6103, %v6110
    %v6126 = vcombine.high %v6103, %v6110
    %v6127 = vcombine.low %v6117, %v6124
    %v6128 = vcombine.high %v6117, %v6124
    %v6130 = vunpack.c.l.s4 1966171168
    %v6131 = vunpack.c.0.s8 %v6130
    %v6132 = vlaneseq
    %v6133 = vshrl.u32 %v6132, 7
    %v6134 = vsub.s32 %v6131, %v6133
    %v6135 = vrot.slane %v6125, %v6134
    %v6137 = vunpack.c.l.s4 1966171168
    %v6138 = vunpack.c.0.s8 %v6137
    %v6139 = vlaneseq
    %v6140 = vshrl.u32 %v6139, 7
    %v6141 = vsub.s32 %v6138, %v6140
    %v6142 = vrot.slane %v6126, %v6141
    %v6144 = vunpack.c.l.s4 1966171168
    %v6145 = vunpack.c.0.s8 %v6144
    %v6146 = vlaneseq
    %v6147 = vshrl.u32 %v6146, 7
    %v6148 = vsub.s32 %v6145, %v6147
    %v6149 = vrot.slane %v6127, %v6148
    %v6151 = vunpack.c.l.s4 1966171168
    %v6152 = vunpack.c.0.s8 %v6151
    %v6153 = vlaneseq
    %v6154 = vshrl.u32 %v6153, 7
    %v6155 = vsub.s32 %v6152, %v6154
    %v6156 = vrot.slane %v6128, %v6155
    %v6157 = vcombine.low %v6135, %v6149
    %v6158 = vcombine.low %v6142, %v6156
    %v6159 = vcombine.low %v2310, %v2312
    %v6160 = vcombine.low %v2351, %v2353
    %v6161 = vcombine.low %v2392, %v2394
    %v6162 = vcombine.low %v2433, %v2435
    %v6164 = vunpack.c.l.s4 1966171168
    %v6165 = vunpack.c.0.s8 %v6164
    %v6166 = vlaneseq
    %v6167 = vshrl.u32 %v6166, 7
    %v6168 = vsub.s32 %v6165, %v6167
    %v6169 = vrot.slane %v6159, %v6168
    %v6171 = vunpack.c.l.s4 1966171168
    %v6172 = vunpack.c.0.s8 %v6171
    %v6173 = vlaneseq
    %v6174 = vshrl.u32 %v6173, 7
    %v6175 = vsub.s32 %v6172, %v6174
    %v6176 = vrot.slane %v6160, %v6175
    %v6178 = vunpack.c.l.s4 1966171168
    %v6179 = vunpack.c.0.s8 %v6178
    %v6180 = vlaneseq
    %v6181 = vshrl.u32 %v6180, 7
    %v6182 = vsub.s32 %v6179, %v6181
    %v6183 = vrot.slane %v6161, %v6182
    %v6185 = vunpack.c.l.s4 1966171168
    %v6186 = vunpack.c.0.s8 %v6185
    %v6187 = vlaneseq
    %v6188 = vshrl.u32 %v6187, 7
    %v6189 = vsub.s32 %v6186, %v6188
    %v6190 = vrot.slane %v6162, %v6189
    %v6191 = vcombine.low %v6169, %v6176
    %v6192 = vcombine.high %v6169, %v6176
    %v6193 = vcombine.low %v6183, %v6190
    %v6194 = vcombine.high %v6183, %v6190
    %v6196 = vunpack.c.l.s4 1966171168
    %v6197 = vunpack.c.0.s8 %v6196
    %v6198 = vlaneseq
    %v6199 = vshrl.u32 %v6198, 7
    %v6200 = vsub.s32 %v6197, %v6199
    %v6201 = vrot.slane %v6191, %v6200
    %v6203 = vunpack.c.l.s4 1966171168
    %v6204 = vunpack.c.0.s8 %v6203
    %v6205 = vlaneseq
    %v6206 = vshrl.u32 %v6205, 7
    %v6207 = vsub.s32 %v6204, %v6206
    %v6208 = vrot.slane %v6192, %v6207
    %v6210 = vunpack.c.l.s4 1966171168
    %v6211 = vunpack.c.0.s8 %v6210
    %v6212 = vlaneseq
    %v6213 = vshrl.u32 %v6212, 7
    %v6214 = vsub.s32 %v6211, %v6213
    %v6215 = vrot.slane %v6193, %v6214
    %v6217 = vunpack.c.l.s4 1966171168
    %v6218 = vunpack.c.0.s8 %v6217
    %v6219 = vlaneseq
    %v6220 = vshrl.u32 %v6219, 7
    %v6221 = vsub.s32 %v6218, %v6220
    %v6222 = vrot.slane %v6194, %v6221
    %v6223 = vcombine.low %v6201, %v6215
    %v6224 = vcombine.low %v6208, %v6222
    %v6225 = vcombine.low %v2474, %v2476
    %v6226 = vcombine.low %v2515, %v2517
    %v6227 = vcombine.low %v2556, %v2558
    %v6228 = vcombine.low %v2597, %v2599
    %v6230 = vunpack.c.l.s4 1966171168
    %v6231 = vunpack.c.0.s8 %v6230
    %v6232 = vlaneseq
    %v6233 = vshrl.u32 %v6232, 7
    %v6234 = vsub.s32 %v6231, %v6233
    %v6235 = vrot.slane %v6225, %v6234
    %v6237 = vunpack.c.l.s4 1966171168
    %v6238 = vunpack.c.0.s8 %v6237
    %v6239 = vlaneseq
    %v6240 = vshrl.u32 %v6239, 7
    %v6241 = vsub.s32 %v6238, %v6240
    %v6242 = vrot.slane %v6226, %v6241
    %v6244 = vunpack.c.l.s4 1966171168
    %v6245 = vunpack.c.0.s8 %v6244
    %v6246 = vlaneseq
    %v6247 = vshrl.u32 %v6246, 7
    %v6248 = vsub.s32 %v6245, %v6247
    %v6249 = vrot.slane %v6227, %v6248
    %v6251 = vunpack.c.l.s4 1966171168
    %v6252 = vunpack.c.0.s8 %v6251
    %v6253 = vlaneseq
    %v6254 = vshrl.u32 %v6253, 7
    %v6255 = vsub.s32 %v6252, %v6254
    %v6256 = vrot.slane %v6228, %v6255
    %v6257 = vcombine.low %v6235, %v6242
    %v6258 = vcombine.high %v6235, %v6242
    %v6259 = vcombine.low %v6249, %v6256
    %v6260 = vcombine.high %v6249, %v6256
    %v6262 = vunpack.c.l.s4 1966171168
    %v6263 = vunpack.c.0.s8 %v6262
    %v6264 = vlaneseq
    %v6265 = vshrl.u32 %v6264, 7
    %v6266 = vsub.s32 %v6263, %v6265
    %v6267 = vrot.slane %v6257, %v6266
    %v6269 = vunpack.c.l.s4 1966171168
    %v6270 = vunpack.c.0.s8 %v6269
    %v6271 = vlaneseq
    %v6272 = vshrl.u32 %v6271, 7
    %v6273 = vsub.s32 %v6270, %v6272
    %v6274 = vrot.slane %v6258, %v6273
    %v6276 = vunpack.c.l.s4 1966171168
    %v6277 = vunpack.c.0.s8 %v6276
    %v6278 = vlaneseq
    %v6279 = vshrl.u32 %v6278, 7
    %v6280 = vsub.s32 %v6277, %v6279
    %v6281 = vrot.slane %v6259, %v6280
    %v6283 = vunpack.c.l.s4 1966171168
    %v6284 = vunpack.c.0.s8 %v6283
    %v6285 = vlaneseq
    %v6286 = vshrl.u32 %v6285, 7
    %v6287 = vsub.s32 %v6284, %v6286
    %v6288 = vrot.slane %v6260, %v6287
    %v6289 = vcombine.low %v6267, %v6281
    %v6290 = vcombine.low %v6274, %v6288
    %v6291 = vcombine.low %v2638, %v2640
    %v6292 = vcombine.low %v2679, %v2681
    %v6293 = vcombine.low %v2720, %v2722
    %v6294 = vcombine.low %v2761, %v2763
    %v6296 = vunpack.c.l.s4 1966171168
    %v6297 = vunpack.c.0.s8 %v6296
    %v6298 = vlaneseq
    %v6299 = vshrl.u32 %v6298, 7
    %v6300 = vsub.s32 %v6297, %v6299
    %v6301 = vrot.slane %v6291, %v6300
    %v6303 = vunpack.c.l.s4 1966171168
    %v6304 = vunpack.c.0.s8 %v6303
    %v6305 = vlaneseq
    %v6306 = vshrl.u32 %v6305, 7
    %v6307 = vsub.s32 %v6304, %v6306
    %v6308 = vrot.slane %v6292, %v6307
    %v6310 = vunpack.c.l.s4 1966171168
    %v6311 = vunpack.c.0.s8 %v6310
    %v6312 = vlaneseq
    %v6313 = vshrl.u32 %v6312, 7
    %v6314 = vsub.s32 %v6311, %v6313
    %v6315 = vrot.slane %v6293, %v6314
    %v6317 = vunpack.c.l.s4 1966171168
    %v6318 = vunpack.c.0.s8 %v6317
    %v6319 = vlaneseq
    %v6320 = vshrl.u32 %v6319, 7
    %v6321 = vsub.s32 %v6318, %v6320
    %v6322 = vrot.slane %v6294, %v6321
    %v6323 = vcombine.low %v6301, %v6308
    %v6324 = vcombine.high %v6301, %v6308
    %v6325 = vcombine.low %v6315, %v6322
    %v6326 = vcombine.high %v6315, %v6322
    %v6328 = vunpack.c.l.s4 1966171168
    %v6329 = vunpack.c.0.s8 %v6328
    %v6330 = vlaneseq
    %v6331 = vshrl.u32 %v6330, 7
    %v6332 = vsub.s32 %v6329, %v6331
    %v6333 = vrot.slane %v6323, %v6332
    %v6335 = vunpack.c.l.s4 1966171168
    %v6336 = vunpack.c.0.s8 %v6335
    %v6337 = vlaneseq
    %v6338 = vshrl.u32 %v6337, 7
    %v6339 = vsub.s32 %v6336, %v6338
    %v6340 = vrot.slane %v6324, %v6339
    %v6342 = vunpack.c.l.s4 1966171168
    %v6343 = vunpack.c.0.s8 %v6342
    %v6344 = vlaneseq
    %v6345 = vshrl.u32 %v6344, 7
    %v6346 = vsub.s32 %v6343, %v6345
    %v6347 = vrot.slane %v6325, %v6346
    %v6349 = vunpack.c.l.s4 1966171168
    %v6350 = vunpack.c.0.s8 %v6349
    %v6351 = vlaneseq
    %v6352 = vshrl.u32 %v6351, 7
    %v6353 = vsub.s32 %v6350, %v6352
    %v6354 = vrot.slane %v6326, %v6353
    %v6355 = vcombine.low %v6333, %v6347
    %v6356 = vcombine.low %v6340, %v6354
    %v6357 = vcombine.low %v2802, %v2804
    %v6358 = vcombine.low %v2843, %v2845
    %v6359 = vcombine.low %v2884, %v2886
    %v6360 = vcombine.low %v2925, %v2927
    %v6362 = vunpack.c.l.s4 1966171168
    %v6363 = vunpack.c.0.s8 %v6362
    %v6364 = vlaneseq
    %v6365 = vshrl.u32 %v6364, 7
    %v6366 = vsub.s32 %v6363, %v6365
    %v6367 = vrot.slane %v6357, %v6366
    %v6369 = vunpack.c.l.s4 1966171168
    %v6370 = vunpack.c.0.s8 %v6369
    %v6371 = vlaneseq
    %v6372 = vshrl.u32 %v6371, 7
    %v6373 = vsub.s32 %v6370, %v6372
    %v6374 = vrot.slane %v6358, %v6373
    %v6376 = vunpack.c.l.s4 1966171168
    %v6377 = vunpack.c.0.s8 %v6376
    %v6378 = vlaneseq
    %v6379 = vshrl.u32 %v6378, 7
    %v6380 = vsub.s32 %v6377, %v6379
    %v6381 = vrot.slane %v6359, %v6380
    %v6383 = vunpack.c.l.s4 1966171168
    %v6384 = vunpack.c.0.s8 %v6383
    %v6385 = vlaneseq
    %v6386 = vshrl.u32 %v6385, 7
    %v6387 = vsub.s32 %v6384, %v6386
    %v6388 = vrot.slane %v6360, %v6387
    %v6389 = vcombine.low %v6367, %v6374
    %v6390 = vcombine.high %v6367, %v6374
    %v6391 = vcombine.low %v6381, %v6388
    %v6392 = vcombine.high %v6381, %v6388
    %v6394 = vunpack.c.l.s4 1966171168
    %v6395 = vunpack.c.0.s8 %v6394
    %v6396 = vlaneseq
    %v6397 = vshrl.u32 %v6396, 7
    %v6398 = vsub.s32 %v6395, %v6397
    %v6399 = vrot.slane %v6389, %v6398
    %v6401 = vunpack.c.l.s4 1966171168
    %v6402 = vunpack.c.0.s8 %v6401
    %v6403 = vlaneseq
    %v6404 = vshrl.u32 %v6403, 7
    %v6405 = vsub.s32 %v6402, %v6404
    %v6406 = vrot.slane %v6390, %v6405
    %v6408 = vunpack.c.l.s4 1966171168
    %v6409 = vunpack.c.0.s8 %v6408
    %v6410 = vlaneseq
    %v6411 = vshrl.u32 %v6410, 7
    %v6412 = vsub.s32 %v6409, %v6411
    %v6413 = vrot.slane %v6391, %v6412
    %v6415 = vunpack.c.l.s4 1966171168
    %v6416 = vunpack.c.0.s8 %v6415
    %v6417 = vlaneseq
    %v6418 = vshrl.u32 %v6417, 7
    %v6419 = vsub.s32 %v6416, %v6418
    %v6420 = vrot.slane %v6392, %v6419
    %v6421 = vcombine.low %v6399, %v6413
    %v6422 = vcombine.low %v6406, %v6420
    %v6423 = vcombine.low %v2966, %v2968
    %v6424 = vcombine.low %v3007, %v3009
    %v6425 = vcombine.low %v3048, %v3050
    %v6426 = vcombine.low %v3089, %v3091
    %v6428 = vunpack.c.l.s4 1966171168
    %v6429 = vunpack.c.0.s8 %v6428
    %v6430 = vlaneseq
    %v6431 = vshrl.u32 %v6430, 7
    %v6432 = vsub.s32 %v6429, %v6431
    %v6433 = vrot.slane %v6423, %v6432
    %v6435 = vunpack.c.l.s4 1966171168
    %v6436 = vunpack.c.0.s8 %v6435
    %v6437 = vlaneseq
    %v6438 = vshrl.u32 %v6437, 7
    %v6439 = vsub.s32 %v6436, %v6438
    %v6440 = vrot.slane %v6424, %v6439
    %v6442 = vunpack.c.l.s4 1966171168
    %v6443 = vunpack.c.0.s8 %v6442
    %v6444 = vlaneseq
    %v6445 = vshrl.u32 %v6444, 7
    %v6446 = vsub.s32 %v6443, %v6445
    %v6447 = vrot.slane %v6425, %v6446
    %v6449 = vunpack.c.l.s4 1966171168
    %v6450 = vunpack.c.0.s8 %v6449
    %v6451 = vlaneseq
    %v6452 = vshrl.u32 %v6451, 7
    %v6453 = vsub.s32 %v6450, %v6452
    %v6454 = vrot.slane %v6426, %v6453
    %v6455 = vcombine.low %v6433, %v6440
    %v6456 = vcombine.high %v6433, %v6440
    %v6457 = vcombine.low %v6447, %v6454
    %v6458 = vcombine.high %v6447, %v6454
    %v6460 = vunpack.c.l.s4 1966171168
    %v6461 = vunpack.c.0.s8 %v6460
    %v6462 = vlaneseq
    %v6463 = vshrl.u32 %v6462, 7
    %v6464 = vsub.s32 %v6461, %v6463
    %v6465 = vrot.slane %v6455, %v6464
    %v6467 = vunpack.c.l.s4 1966171168
    %v6468 = vunpack.c.0.s8 %v6467
    %v6469 = vlaneseq
    %v6470 = vshrl.u32 %v6469, 7
    %v6471 = vsub.s32 %v6468, %v6470
    %v6472 = vrot.slane %v6456, %v6471
    %v6474 = vunpack.c.l.s4 1966171168
    %v6475 = vunpack.c.0.s8 %v6474
    %v6476 = vlaneseq
    %v6477 = vshrl.u32 %v6476, 7
    %v6478 = vsub.s32 %v6475, %v6477
    %v6479 = vrot.slane %v6457, %v6478
    %v6481 = vunpack.c.l.s4 1966171168
    %v6482 = vunpack.c.0.s8 %v6481
    %v6483 = vlaneseq
    %v6484 = vshrl.u32 %v6483, 7
    %v6485 = vsub.s32 %v6482, %v6484
    %v6486 = vrot.slane %v6458, %v6485
    %v6487 = vcombine.low %v6465, %v6479
    %v6488 = vcombine.low %v6472, %v6486
    %v6489 = vcombine.low %v3130, %v3132
    %v6490 = vcombine.low %v3171, %v3173
    %v6491 = vcombine.low %v3212, %v3214
    %v6492 = vcombine.low %v3253, %v3255
    %v6494 = vunpack.c.l.s4 1966171168
    %v6495 = vunpack.c.0.s8 %v6494
    %v6496 = vlaneseq
    %v6497 = vshrl.u32 %v6496, 7
    %v6498 = vsub.s32 %v6495, %v6497
    %v6499 = vrot.slane %v6489, %v6498
    %v6501 = vunpack.c.l.s4 1966171168
    %v6502 = vunpack.c.0.s8 %v6501
    %v6503 = vlaneseq
    %v6504 = vshrl.u32 %v6503, 7
    %v6505 = vsub.s32 %v6502, %v6504
    %v6506 = vrot.slane %v6490, %v6505
    %v6508 = vunpack.c.l.s4 1966171168
    %v6509 = vunpack.c.0.s8 %v6508
    %v6510 = vlaneseq
    %v6511 = vshrl.u32 %v6510, 7
    %v6512 = vsub.s32 %v6509, %v6511
    %v6513 = vrot.slane %v6491, %v6512
    %v6515 = vunpack.c.l.s4 1966171168
    %v6516 = vunpack.c.0.s8 %v6515
    %v6517 = vlaneseq
    %v6518 = vshrl.u32 %v6517, 7
    %v6519 = vsub.s32 %v6516, %v6518
    %v6520 = vrot.slane %v6492, %v6519
    %v6521 = vcombine.low %v6499, %v6506
    %v6522 = vcombine.high %v6499, %v6506
    %v6523 = vcombine.low %v6513, %v6520
    %v6524 = vcombine.high %v6513, %v6520
    %v6526 = vunpack.c.l.s4 1966171168
    %v6527 = vunpack.c.0.s8 %v6526
    %v6528 = vlaneseq
    %v6529 = vshrl.u32 %v6528, 7
    %v6530 = vsub.s32 %v6527, %v6529
    %v6531 = vrot.slane %v6521, %v6530
    %v6533 = vunpack.c.l.s4 1966171168
    %v6534 = vunpack.c.0.s8 %v6533
    %v6535 = vlaneseq
    %v6536 = vshrl.u32 %v6535, 7
    %v6537 = vsub.s32 %v6534, %v6536
    %v6538 = vrot.slane %v6522, %v6537
    %v6540 = vunpack.c.l.s4 1966171168
    %v6541 = vunpack.c.0.s8 %v6540
    %v6542 = vlaneseq
    %v6543 = vshrl.u32 %v6542, 7
    %v6544 = vsub.s32 %v6541, %v6543
    %v6545 = vrot.slane %v6523, %v6544
    %v6547 = vunpack.c.l.s4 1966171168
    %v6548 = vunpack.c.0.s8 %v6547
    %v6549 = vlaneseq
    %v6550 = vshrl.u32 %v6549, 7
    %v6551 = vsub.s32 %v6548, %v6550
    %v6552 = vrot.slane %v6524, %v6551
    %v6553 = vcombine.low %v6531, %v6545
    %v6554 = vcombine.low %v6538, %v6552
    %v6555 = vcombine.low %v3294, %v3296
    %v6556 = vcombine.low %v3335, %v3337
    %v6557 = vcombine.low %v3376, %v3378
    %v6558 = vcombine.low %v3417, %v3419
    %v6560 = vunpack.c.l.s4 1966171168
    %v6561 = vunpack.c.0.s8 %v6560
    %v6562 = vlaneseq
    %v6563 = vshrl.u32 %v6562, 7
    %v6564 = vsub.s32 %v6561, %v6563
    %v6565 = vrot.slane %v6555, %v6564
    %v6567 = vunpack.c.l.s4 1966171168
    %v6568 = vunpack.c.0.s8 %v6567
    %v6569 = vlaneseq
    %v6570 = vshrl.u32 %v6569, 7
    %v6571 = vsub.s32 %v6568, %v6570
    %v6572 = vrot.slane %v6556, %v6571
    %v6574 = vunpack.c.l.s4 1966171168
    %v6575 = vunpack.c.0.s8 %v6574
    %v6576 = vlaneseq
    %v6577 = vshrl.u32 %v6576, 7
    %v6578 = vsub.s32 %v6575, %v6577
    %v6579 = vrot.slane %v6557, %v6578
    %v6581 = vunpack.c.l.s4 1966171168
    %v6582 = vunpack.c.0.s8 %v6581
    %v6583 = vlaneseq
    %v6584 = vshrl.u32 %v6583, 7
    %v6585 = vsub.s32 %v6582, %v6584
    %v6586 = vrot.slane %v6558, %v6585
    %v6587 = vcombine.low %v6565, %v6572
    %v6588 = vcombine.high %v6565, %v6572
    %v6589 = vcombine.low %v6579, %v6586
    %v6590 = vcombine.high %v6579, %v6586
    %v6592 = vunpack.c.l.s4 1966171168
    %v6593 = vunpack.c.0.s8 %v6592
    %v6594 = vlaneseq
    %v6595 = vshrl.u32 %v6594, 7
    %v6596 = vsub.s32 %v6593, %v6595
    %v6597 = vrot.slane %v6587, %v6596
    %v6599 = vunpack.c.l.s4 1966171168
    %v6600 = vunpack.c.0.s8 %v6599
    %v6601 = vlaneseq
    %v6602 = vshrl.u32 %v6601, 7
    %v6603 = vsub.s32 %v6600, %v6602
    %v6604 = vrot.slane %v6588, %v6603
    %v6606 = vunpack.c.l.s4 1966171168
    %v6607 = vunpack.c.0.s8 %v6606
    %v6608 = vlaneseq
    %v6609 = vshrl.u32 %v6608, 7
    %v6610 = vsub.s32 %v6607, %v6609
    %v6611 = vrot.slane %v6589, %v6610
    %v6613 = vunpack.c.l.s4 1966171168
    %v6614 = vunpack.c.0.s8 %v6613
    %v6615 = vlaneseq
    %v6616 = vshrl.u32 %v6615, 7
    %v6617 = vsub.s32 %v6614, %v6616
    %v6618 = vrot.slane %v6590, %v6617
    %v6619 = vcombine.low %v6597, %v6611
    %v6620 = vcombine.low %v6604, %v6618
    %v6621 = vcombine.low %v3458, %v3460
    %v6622 = vcombine.low %v3499, %v3501
    %v6623 = vcombine.low %v3540, %v3542
    %v6624 = vcombine.low %v3581, %v3583
    %v6626 = vunpack.c.l.s4 1966171168
    %v6627 = vunpack.c.0.s8 %v6626
    %v6628 = vlaneseq
    %v6629 = vshrl.u32 %v6628, 7
    %v6630 = vsub.s32 %v6627, %v6629
    %v6631 = vrot.slane %v6621, %v6630
    %v6633 = vunpack.c.l.s4 1966171168
    %v6634 = vunpack.c.0.s8 %v6633
    %v6635 = vlaneseq
    %v6636 = vshrl.u32 %v6635, 7
    %v6637 = vsub.s32 %v6634, %v6636
    %v6638 = vrot.slane %v6622, %v6637
    %v6640 = vunpack.c.l.s4 1966171168
    %v6641 = vunpack.c.0.s8 %v6640
    %v6642 = vlaneseq
    %v6643 = vshrl.u32 %v6642, 7
    %v6644 = vsub.s32 %v6641, %v6643
    %v6645 = vrot.slane %v6623, %v6644
    %v6647 = vunpack.c.l.s4 1966171168
    %v6648 = vunpack.c.0.s8 %v6647
    %v6649 = vlaneseq
    %v6650 = vshrl.u32 %v6649, 7
    %v6651 = vsub.s32 %v6648, %v6650
    %v6652 = vrot.slane %v6624, %v6651
    %v6653 = vcombine.low %v6631, %v6638
    %v6654 = vcombine.high %v6631, %v6638
    %v6655 = vcombine.low %v6645, %v6652
    %v6656 = vcombine.high %v6645, %v6652
    %v6658 = vunpack.c.l.s4 1966171168
    %v6659 = vunpack.c.0.s8 %v6658
    %v6660 = vlaneseq
    %v6661 = vshrl.u32 %v6660, 7
    %v6662 = vsub.s32 %v6659, %v6661
    %v6663 = vrot.slane %v6653, %v6662
    %v6665 = vunpack.c.l.s4 1966171168
    %v6666 = vunpack.c.0.s8 %v6665
    %v6667 = vlaneseq
    %v6668 = vshrl.u32 %v6667, 7
    %v6669 = vsub.s32 %v6666, %v6668
    %v6670 = vrot.slane %v6654, %v6669
    %v6672 = vunpack.c.l.s4 1966171168
    %v6673 = vunpack.c.0.s8 %v6672
    %v6674 = vlaneseq
    %v6675 = vshrl.u32 %v6674, 7
    %v6676 = vsub.s32 %v6673, %v6675
    %v6677 = vrot.slane %v6655, %v6676
    %v6679 = vunpack.c.l.s4 1966171168
    %v6680 = vunpack.c.0.s8 %v6679
    %v6681 = vlaneseq
    %v6682 = vshrl.u32 %v6681, 7
    %v6683 = vsub.s32 %v6680, %v6682
    %v6684 = vrot.slane %v6656, %v6683
    %v6685 = vcombine.low %v6663, %v6677
    %v6686 = vcombine.low %v6670, %v6684
    %v6687 = vcombine.low %v3622, %v3624
    %v6688 = vcombine.low %v3663, %v3665
    %v6689 = vcombine.low %v3704, %v3706
    %v6690 = vcombine.low %v3745, %v3747
    %v6692 = vunpack.c.l.s4 1966171168
    %v6693 = vunpack.c.0.s8 %v6692
    %v6694 = vlaneseq
    %v6695 = vshrl.u32 %v6694, 7
    %v6696 = vsub.s32 %v6693, %v6695
    %v6697 = vrot.slane %v6687, %v6696
    %v6699 = vunpack.c.l.s4 1966171168
    %v6700 = vunpack.c.0.s8 %v6699
    %v6701 = vlaneseq
    %v6702 = vshrl.u32 %v6701, 7
    %v6703 = vsub.s32 %v6700, %v6702
    %v6704 = vrot.slane %v6688, %v6703
    %v6706 = vunpack.c.l.s4 1966171168
    %v6707 = vunpack.c.0.s8 %v6706
    %v6708 = vlaneseq
    %v6709 = vshrl.u32 %v6708, 7
    %v6710 = vsub.s32 %v6707, %v6709
    %v6711 = vrot.slane %v6689, %v6710
    %v6713 = vunpack.c.l.s4 1966171168
    %v6714 = vunpack.c.0.s8 %v6713
    %v6715 = vlaneseq
    %v6716 = vshrl.u32 %v6715, 7
    %v6717 = vsub.s32 %v6714, %v6716
    %v6718 = vrot.slane %v6690, %v6717
    %v6719 = vcombine.low %v6697, %v6704
    %v6720 = vcombine.high %v6697, %v6704
    %v6721 = vcombine.low %v6711, %v6718
    %v6722 = vcombine.high %v6711, %v6718
    %v6724 = vunpack.c.l.s4 1966171168
    %v6725 = vunpack.c.0.s8 %v6724
    %v6726 = vlaneseq
    %v6727 = vshrl.u32 %v6726, 7
    %v6728 = vsub.s32 %v6725, %v6727
    %v6729 = vrot.slane %v6719, %v6728
    %v6731 = vunpack.c.l.s4 1966171168
    %v6732 = vunpack.c.0.s8 %v6731
    %v6733 = vlaneseq
    %v6734 = vshrl.u32 %v6733, 7
    %v6735 = vsub.s32 %v6732, %v6734
    %v6736 = vrot.slane %v6720, %v6735
    %v6738 = vunpack.c.l.s4 1966171168
    %v6739 = vunpack.c.0.s8 %v6738
    %v6740 = vlaneseq
    %v6741 = vshrl.u32 %v6740, 7
    %v6742 = vsub.s32 %v6739, %v6741
    %v6743 = vrot.slane %v6721, %v6742
    %v6745 = vunpack.c.l.s4 1966171168
    %v6746 = vunpack.c.0.s8 %v6745
    %v6747 = vlaneseq
    %v6748 = vshrl.u32 %v6747, 7
    %v6749 = vsub.s32 %v6746, %v6748
    %v6750 = vrot.slane %v6722, %v6749
    %v6751 = vcombine.low %v6729, %v6743
    %v6752 = vcombine.low %v6736, %v6750
    %v6753 = vcombine.low %v3786, %v3788
    %v6754 = vcombine.low %v3827, %v3829
    %v6755 = vcombine.low %v3868, %v3870
    %v6756 = vcombine.low %v3909, %v3911
    %v6758 = vunpack.c.l.s4 1966171168
    %v6759 = vunpack.c.0.s8 %v6758
    %v6760 = vlaneseq
    %v6761 = vshrl.u32 %v6760, 7
    %v6762 = vsub.s32 %v6759, %v6761
    %v6763 = vrot.slane %v6753, %v6762
    %v6765 = vunpack.c.l.s4 1966171168
    %v6766 = vunpack.c.0.s8 %v6765
    %v6767 = vlaneseq
    %v6768 = vshrl.u32 %v6767, 7
    %v6769 = vsub.s32 %v6766, %v6768
    %v6770 = vrot.slane %v6754, %v6769
    %v6772 = vunpack.c.l.s4 1966171168
    %v6773 = vunpack.c.0.s8 %v6772
    %v6774 = vlaneseq
    %v6775 = vshrl.u32 %v6774, 7
    %v6776 = vsub.s32 %v6773, %v6775
    %v6777 = vrot.slane %v6755, %v6776
    %v6779 = vunpack.c.l.s4 1966171168
    %v6780 = vunpack.c.0.s8 %v6779
    %v6781 = vlaneseq
    %v6782 = vshrl.u32 %v6781, 7
    %v6783 = vsub.s32 %v6780, %v6782
    %v6784 = vrot.slane %v6756, %v6783
    %v6785 = vcombine.low %v6763, %v6770
    %v6786 = vcombine.high %v6763, %v6770
    %v6787 = vcombine.low %v6777, %v6784
    %v6788 = vcombine.high %v6777, %v6784
    %v6790 = vunpack.c.l.s4 1966171168
    %v6791 = vunpack.c.0.s8 %v6790
    %v6792 = vlaneseq
    %v6793 = vshrl.u32 %v6792, 7
    %v6794 = vsub.s32 %v6791, %v6793
    %v6795 = vrot.slane %v6785, %v6794
    %v6797 = vunpack.c.l.s4 1966171168
    %v6798 = vunpack.c.0.s8 %v6797
    %v6799 = vlaneseq
    %v6800 = vshrl.u32 %v6799, 7
    %v6801 = vsub.s32 %v6798, %v6800
    %v6802 = vrot.slane %v6786, %v6801
    %v6804 = vunpack.c.l.s4 1966171168
    %v6805 = vunpack.c.0.s8 %v6804
    %v6806 = vlaneseq
    %v6807 = vshrl.u32 %v6806, 7
    %v6808 = vsub.s32 %v6805, %v6807
    %v6809 = vrot.slane %v6787, %v6808
    %v6811 = vunpack.c.l.s4 1966171168
    %v6812 = vunpack.c.0.s8 %v6811
    %v6813 = vlaneseq
    %v6814 = vshrl.u32 %v6813, 7
    %v6815 = vsub.s32 %v6812, %v6814
    %v6816 = vrot.slane %v6788, %v6815
    %v6817 = vcombine.low %v6795, %v6809
    %v6818 = vcombine.low %v6802, %v6816
    %v6819 = vcombine.low %v3950, %v3952
    %v6820 = vcombine.low %v3991, %v3993
    %v6821 = vcombine.low %v4032, %v4034
    %v6822 = vcombine.low %v4073, %v4075
    %v6824 = vunpack.c.l.s4 1966171168
    %v6825 = vunpack.c.0.s8 %v6824
    %v6826 = vlaneseq
    %v6827 = vshrl.u32 %v6826, 7
    %v6828 = vsub.s32 %v6825, %v6827
    %v6829 = vrot.slane %v6819, %v6828
    %v6831 = vunpack.c.l.s4 1966171168
    %v6832 = vunpack.c.0.s8 %v6831
    %v6833 = vlaneseq
    %v6834 = vshrl.u32 %v6833, 7
    %v6835 = vsub.s32 %v6832, %v6834
    %v6836 = vrot.slane %v6820, %v6835
    %v6838 = vunpack.c.l.s4 1966171168
    %v6839 = vunpack.c.0.s8 %v6838
    %v6840 = vlaneseq
    %v6841 = vshrl.u32 %v6840, 7
    %v6842 = vsub.s32 %v6839, %v6841
    %v6843 = vrot.slane %v6821, %v6842
    %v6845 = vunpack.c.l.s4 1966171168
    %v6846 = vunpack.c.0.s8 %v6845
    %v6847 = vlaneseq
    %v6848 = vshrl.u32 %v6847, 7
    %v6849 = vsub.s32 %v6846, %v6848
    %v6850 = vrot.slane %v6822, %v6849
    %v6851 = vcombine.low %v6829, %v6836
    %v6852 = vcombine.high %v6829, %v6836
    %v6853 = vcombine.low %v6843, %v6850
    %v6854 = vcombine.high %v6843, %v6850
    %v6856 = vunpack.c.l.s4 1966171168
    %v6857 = vunpack.c.0.s8 %v6856
    %v6858 = vlaneseq
    %v6859 = vshrl.u32 %v6858, 7
    %v6860 = vsub.s32 %v6857, %v6859
    %v6861 = vrot.slane %v6851, %v6860
    %v6863 = vunpack.c.l.s4 1966171168
    %v6864 = vunpack.c.0.s8 %v6863
    %v6865 = vlaneseq
    %v6866 = vshrl.u32 %v6865, 7
    %v6867 = vsub.s32 %v6864, %v6866
    %v6868 = vrot.slane %v6852, %v6867
    %v6870 = vunpack.c.l.s4 1966171168
    %v6871 = vunpack.c.0.s8 %v6870
    %v6872 = vlaneseq
    %v6873 = vshrl.u32 %v6872, 7
    %v6874 = vsub.s32 %v6871, %v6873
    %v6875 = vrot.slane %v6853, %v6874
    %v6877 = vunpack.c.l.s4 1966171168
    %v6878 = vunpack.c.0.s8 %v6877
    %v6879 = vlaneseq
    %v6880 = vshrl.u32 %v6879, 7
    %v6881 = vsub.s32 %v6878, %v6880
    %v6882 = vrot.slane %v6854, %v6881
    %v6883 = vcombine.low %v6861, %v6875
    %v6884 = vcombine.low %v6868, %v6882
    %v6885 = vcombine.low %v4114, %v4116
    %v6886 = vcombine.low %v4155, %v4157
    %v6887 = vcombine.low %v4196, %v4198
    %v6888 = vcombine.low %v4237, %v4239
    %v6890 = vunpack.c.l.s4 1966171168
    %v6891 = vunpack.c.0.s8 %v6890
    %v6892 = vlaneseq
    %v6893 = vshrl.u32 %v6892, 7
    %v6894 = vsub.s32 %v6891, %v6893
    %v6895 = vrot.slane %v6885, %v6894
    %v6897 = vunpack.c.l.s4 1966171168
    %v6898 = vunpack.c.0.s8 %v6897
    %v6899 = vlaneseq
    %v6900 = vshrl.u32 %v6899, 7
    %v6901 = vsub.s32 %v6898, %v6900
    %v6902 = vrot.slane %v6886, %v6901
    %v6904 = vunpack.c.l.s4 1966171168
    %v6905 = vunpack.c.0.s8 %v6904
    %v6906 = vlaneseq
    %v6907 = vshrl.u32 %v6906, 7
    %v6908 = vsub.s32 %v6905, %v6907
    %v6909 = vrot.slane %v6887, %v6908
    %v6911 = vunpack.c.l.s4 1966171168
    %v6912 = vunpack.c.0.s8 %v6911
    %v6913 = vlaneseq
    %v6914 = vshrl.u32 %v6913, 7
    %v6915 = vsub.s32 %v6912, %v6914
    %v6916 = vrot.slane %v6888, %v6915
    %v6917 = vcombine.low %v6895, %v6902
    %v6918 = vcombine.high %v6895, %v6902
    %v6919 = vcombine.low %v6909, %v6916
    %v6920 = vcombine.high %v6909, %v6916
    %v6922 = vunpack.c.l.s4 1966171168
    %v6923 = vunpack.c.0.s8 %v6922
    %v6924 = vlaneseq
    %v6925 = vshrl.u32 %v6924, 7
    %v6926 = vsub.s32 %v6923, %v6925
    %v6927 = vrot.slane %v6917, %v6926
    %v6929 = vunpack.c.l.s4 1966171168
    %v6930 = vunpack.c.0.s8 %v6929
    %v6931 = vlaneseq
    %v6932 = vshrl.u32 %v6931, 7
    %v6933 = vsub.s32 %v6930, %v6932
    %v6934 = vrot.slane %v6918, %v6933
    %v6936 = vunpack.c.l.s4 1966171168
    %v6937 = vunpack.c.0.s8 %v6936
    %v6938 = vlaneseq
    %v6939 = vshrl.u32 %v6938, 7
    %v6940 = vsub.s32 %v6937, %v6939
    %v6941 = vrot.slane %v6919, %v6940
    %v6943 = vunpack.c.l.s4 1966171168
    %v6944 = vunpack.c.0.s8 %v6943
    %v6945 = vlaneseq
    %v6946 = vshrl.u32 %v6945, 7
    %v6947 = vsub.s32 %v6944, %v6946
    %v6948 = vrot.slane %v6920, %v6947
    %v6949 = vcombine.low %v6927, %v6941
    %v6950 = vcombine.low %v6934, %v6948
    %v6951 = vcombine.low %v4278, %v4280
    %v6952 = vcombine.low %v4319, %v4321
    %v6953 = vcombine.low %v4360, %v4362
    %v6954 = vcombine.low %v4401, %v4403
    %v6956 = vunpack.c.l.s4 1966171168
    %v6957 = vunpack.c.0.s8 %v6956
    %v6958 = vlaneseq
    %v6959 = vshrl.u32 %v6958, 7
    %v6960 = vsub.s32 %v6957, %v6959
    %v6961 = vrot.slane %v6951, %v6960
    %v6963 = vunpack.c.l.s4 1966171168
    %v6964 = vunpack.c.0.s8 %v6963
    %v6965 = vlaneseq
    %v6966 = vshrl.u32 %v6965, 7
    %v6967 = vsub.s32 %v6964, %v6966
    %v6968 = vrot.slane %v6952, %v6967
    %v6970 = vunpack.c.l.s4 1966171168
    %v6971 = vunpack.c.0.s8 %v6970
    %v6972 = vlaneseq
    %v6973 = vshrl.u32 %v6972, 7
    %v6974 = vsub.s32 %v6971, %v6973
    %v6975 = vrot.slane %v6953, %v6974
    %v6977 = vunpack.c.l.s4 1966171168
    %v6978 = vunpack.c.0.s8 %v6977
    %v6979 = vlaneseq
    %v6980 = vshrl.u32 %v6979, 7
    %v6981 = vsub.s32 %v6978, %v6980
    %v6982 = vrot.slane %v6954, %v6981
    %v6983 = vcombine.low %v6961, %v6968
    %v6984 = vcombine.high %v6961, %v6968
    %v6985 = vcombine.low %v6975, %v6982
    %v6986 = vcombine.high %v6975, %v6982
    %v6988 = vunpack.c.l.s4 1966171168
    %v6989 = vunpack.c.0.s8 %v6988
    %v6990 = vlaneseq
    %v6991 = vshrl.u32 %v6990, 7
    %v6992 = vsub.s32 %v6989, %v6991
    %v6993 = vrot.slane %v6983, %v6992
    %v6995 = vunpack.c.l.s4 1966171168
    %v6996 = vunpack.c.0.s8 %v6995
    %v6997 = vlaneseq
    %v6998 = vshrl.u32 %v6997, 7
    %v6999 = vsub.s32 %v6996, %v6998
    %v7000 = vrot.slane %v6984, %v6999
    %v7002 = vunpack.c.l.s4 1966171168
    %v7003 = vunpack.c.0.s8 %v7002
    %v7004 = vlaneseq
    %v7005 = vshrl.u32 %v7004, 7
    %v7006 = vsub.s32 %v7003, %v7005
    %v7007 = vrot.slane %v6985, %v7006
    %v7009 = vunpack.c.l.s4 1966171168
    %v7010 = vunpack.c.0.s8 %v7009
    %v7011 = vlaneseq
    %v7012 = vshrl.u32 %v7011, 7
    %v7013 = vsub.s32 %v7010, %v7012
    %v7014 = vrot.slane %v6986, %v7013
    %v7015 = vcombine.low %v6993, %v7007
    %v7016 = vcombine.low %v7000, %v7014
    %v7017 = vcombine.low %v4442, %v4444
    %v7018 = vcombine.low %v4483, %v4485
    %v7019 = vcombine.low %v4524, %v4526
    %v7020 = vcombine.low %v4565, %v4567
    %v7022 = vunpack.c.l.s4 1966171168
    %v7023 = vunpack.c.0.s8 %v7022
    %v7024 = vlaneseq
    %v7025 = vshrl.u32 %v7024, 7
    %v7026 = vsub.s32 %v7023, %v7025
    %v7027 = vrot.slane %v7017, %v7026
    %v7029 = vunpack.c.l.s4 1966171168
    %v7030 = vunpack.c.0.s8 %v7029
    %v7031 = vlaneseq
    %v7032 = vshrl.u32 %v7031, 7
    %v7033 = vsub.s32 %v7030, %v7032
    %v7034 = vrot.slane %v7018, %v7033
    %v7036 = vunpack.c.l.s4 1966171168
    %v7037 = vunpack.c.0.s8 %v7036
    %v7038 = vlaneseq
    %v7039 = vshrl.u32 %v7038, 7
    %v7040 = vsub.s32 %v7037, %v7039
    %v7041 = vrot.slane %v7019, %v7040
    %v7043 = vunpack.c.l.s4 1966171168
    %v7044 = vunpack.c.0.s8 %v7043
    %v7045 = vlaneseq
    %v7046 = vshrl.u32 %v7045, 7
    %v7047 = vsub.s32 %v7044, %v7046
    %v7048 = vrot.slane %v7020, %v7047
    %v7049 = vcombine.low %v7027, %v7034
    %v7050 = vcombine.high %v7027, %v7034
    %v7051 = vcombine.low %v7041, %v7048
    %v7052 = vcombine.high %v7041, %v7048
    %v7054 = vunpack.c.l.s4 1966171168
    %v7055 = vunpack.c.0.s8 %v7054
    %v7056 = vlaneseq
    %v7057 = vshrl.u32 %v7056, 7
    %v7058 = vsub.s32 %v7055, %v7057
    %v7059 = vrot.slane %v7049, %v7058
    %v7061 = vunpack.c.l.s4 1966171168
    %v7062 = vunpack.c.0.s8 %v7061
    %v7063 = vlaneseq
    %v7064 = vshrl.u32 %v7063, 7
    %v7065 = vsub.s32 %v7062, %v7064
    %v7066 = vrot.slane %v7050, %v7065
    %v7068 = vunpack.c.l.s4 1966171168
    %v7069 = vunpack.c.0.s8 %v7068
    %v7070 = vlaneseq
    %v7071 = vshrl.u32 %v7070, 7
    %v7072 = vsub.s32 %v7069, %v7071
    %v7073 = vrot.slane %v7051, %v7072
    %v7075 = vunpack.c.l.s4 1966171168
    %v7076 = vunpack.c.0.s8 %v7075
    %v7077 = vlaneseq
    %v7078 = vshrl.u32 %v7077, 7
    %v7079 = vsub.s32 %v7076, %v7078
    %v7080 = vrot.slane %v7052, %v7079
    %v7081 = vcombine.low %v7059, %v7073
    %v7082 = vcombine.low %v7066, %v7080
    %v7083 = vcombine.low %v4606, %v4608
    %v7084 = vcombine.low %v4647, %v4649
    %v7085 = vcombine.low %v4688, %v4690
    %v7086 = vcombine.low %v4729, %v4731
    %v7088 = vunpack.c.l.s4 1966171168
    %v7089 = vunpack.c.0.s8 %v7088
    %v7090 = vlaneseq
    %v7091 = vshrl.u32 %v7090, 7
    %v7092 = vsub.s32 %v7089, %v7091
    %v7093 = vrot.slane %v7083, %v7092
    %v7095 = vunpack.c.l.s4 1966171168
    %v7096 = vunpack.c.0.s8 %v7095
    %v7097 = vlaneseq
    %v7098 = vshrl.u32 %v7097, 7
    %v7099 = vsub.s32 %v7096, %v7098
    %v7100 = vrot.slane %v7084, %v7099
    %v7102 = vunpack.c.l.s4 1966171168
    %v7103 = vunpack.c.0.s8 %v7102
    %v7104 = vlaneseq
    %v7105 = vshrl.u32 %v7104, 7
    %v7106 = vsub.s32 %v7103, %v7105
    %v7107 = vrot.slane %v7085, %v7106
    %v7109 = vunpack.c.l.s4 1966171168
    %v7110 = vunpack.c.0.s8 %v7109
    %v7111 = vlaneseq
    %v7112 = vshrl.u32 %v7111, 7
    %v7113 = vsub.s32 %v7110, %v7112
    %v7114 = vrot.slane %v7086, %v7113
    %v7115 = vcombine.low %v7093, %v7100
    %v7116 = vcombine.high %v7093, %v7100
    %v7117 = vcombine.low %v7107, %v7114
    %v7118 = vcombine.high %v7107, %v7114
    %v7120 = vunpack.c.l.s4 1966171168
    %v7121 = vunpack.c.0.s8 %v7120
    %v7122 = vlaneseq
    %v7123 = vshrl.u32 %v7122, 7
    %v7124 = vsub.s32 %v7121, %v7123
    %v7125 = vrot.slane %v7115, %v7124
    %v7127 = vunpack.c.l.s4 1966171168
    %v7128 = vunpack.c.0.s8 %v7127
    %v7129 = vlaneseq
    %v7130 = vshrl.u32 %v7129, 7
    %v7131 = vsub.s32 %v7128, %v7130
    %v7132 = vrot.slane %v7116, %v7131
    %v7134 = vunpack.c.l.s4 1966171168
    %v7135 = vunpack.c.0.s8 %v7134
    %v7136 = vlaneseq
    %v7137 = vshrl.u32 %v7136, 7
    %v7138 = vsub.s32 %v7135, %v7137
    %v7139 = vrot.slane %v7117, %v7138
    %v7141 = vunpack.c.l.s4 1966171168
    %v7142 = vunpack.c.0.s8 %v7141
    %v7143 = vlaneseq
    %v7144 = vshrl.u32 %v7143, 7
    %v7145 = vsub.s32 %v7142, %v7144
    %v7146 = vrot.slane %v7118, %v7145
    %v7147 = vcombine.low %v7125, %v7139
    %v7148 = vcombine.low %v7132, %v7146
    %v7149 = vcombine.low %v4770, %v4772
    %v7150 = vcombine.low %v4811, %v4813
    %v7151 = vcombine.low %v4852, %v4854
    %v7152 = vcombine.low %v4893, %v4895
    %v7154 = vunpack.c.l.s4 1966171168
    %v7155 = vunpack.c.0.s8 %v7154
    %v7156 = vlaneseq
    %v7157 = vshrl.u32 %v7156, 7
    %v7158 = vsub.s32 %v7155, %v7157
    %v7159 = vrot.slane %v7149, %v7158
    %v7161 = vunpack.c.l.s4 1966171168
    %v7162 = vunpack.c.0.s8 %v7161
    %v7163 = vlaneseq
    %v7164 = vshrl.u32 %v7163, 7
    %v7165 = vsub.s32 %v7162, %v7164
    %v7166 = vrot.slane %v7150, %v7165
    %v7168 = vunpack.c.l.s4 1966171168
    %v7169 = vunpack.c.0.s8 %v7168
    %v7170 = vlaneseq
    %v7171 = vshrl.u32 %v7170, 7
    %v7172 = vsub.s32 %v7169, %v7171
    %v7173 = vrot.slane %v7151, %v7172
    %v7175 = vunpack.c.l.s4 1966171168
    %v7176 = vunpack.c.0.s8 %v7175
    %v7177 = vlaneseq
    %v7178 = vshrl.u32 %v7177, 7
    %v7179 = vsub.s32 %v7176, %v7178
    %v7180 = vrot.slane %v7152, %v7179
    %v7181 = vcombine.low %v7159, %v7166
    %v7182 = vcombine.high %v7159, %v7166
    %v7183 = vcombine.low %v7173, %v7180
    %v7184 = vcombine.high %v7173, %v7180
    %v7186 = vunpack.c.l.s4 1966171168
    %v7187 = vunpack.c.0.s8 %v7186
    %v7188 = vlaneseq
    %v7189 = vshrl.u32 %v7188, 7
    %v7190 = vsub.s32 %v7187, %v7189
    %v7191 = vrot.slane %v7181, %v7190
    %v7193 = vunpack.c.l.s4 1966171168
    %v7194 = vunpack.c.0.s8 %v7193
    %v7195 = vlaneseq
    %v7196 = vshrl.u32 %v7195, 7
    %v7197 = vsub.s32 %v7194, %v7196
    %v7198 = vrot.slane %v7182, %v7197
    %v7200 = vunpack.c.l.s4 1966171168
    %v7201 = vunpack.c.0.s8 %v7200
    %v7202 = vlaneseq
    %v7203 = vshrl.u32 %v7202, 7
    %v7204 = vsub.s32 %v7201, %v7203
    %v7205 = vrot.slane %v7183, %v7204
    %v7207 = vunpack.c.l.s4 1966171168
    %v7208 = vunpack.c.0.s8 %v7207
    %v7209 = vlaneseq
    %v7210 = vshrl.u32 %v7209, 7
    %v7211 = vsub.s32 %v7208, %v7210
    %v7212 = vrot.slane %v7184, %v7211
    %v7213 = vcombine.low %v7191, %v7205
    %v7214 = vcombine.low %v7198, %v7212
    %v7215 = vcombine.low %v4934, %v4936
    %v7216 = vcombine.low %v4975, %v4977
    %v7217 = vcombine.low %v5016, %v5018
    %v7218 = vcombine.low %v5057, %v5059
    %v7220 = vunpack.c.l.s4 1966171168
    %v7221 = vunpack.c.0.s8 %v7220
    %v7222 = vlaneseq
    %v7223 = vshrl.u32 %v7222, 7
    %v7224 = vsub.s32 %v7221, %v7223
    %v7225 = vrot.slane %v7215, %v7224
    %v7227 = vunpack.c.l.s4 1966171168
    %v7228 = vunpack.c.0.s8 %v7227
    %v7229 = vlaneseq
    %v7230 = vshrl.u32 %v7229, 7
    %v7231 = vsub.s32 %v7228, %v7230
    %v7232 = vrot.slane %v7216, %v7231
    %v7234 = vunpack.c.l.s4 1966171168
    %v7235 = vunpack.c.0.s8 %v7234
    %v7236 = vlaneseq
    %v7237 = vshrl.u32 %v7236, 7
    %v7238 = vsub.s32 %v7235, %v7237
    %v7239 = vrot.slane %v7217, %v7238
    %v7241 = vunpack.c.l.s4 1966171168
    %v7242 = vunpack.c.0.s8 %v7241
    %v7243 = vlaneseq
    %v7244 = vshrl.u32 %v7243, 7
    %v7245 = vsub.s32 %v7242, %v7244
    %v7246 = vrot.slane %v7218, %v7245
    %v7247 = vcombine.low %v7225, %v7232
    %v7248 = vcombine.high %v7225, %v7232
    %v7249 = vcombine.low %v7239, %v7246
    %v7250 = vcombine.high %v7239, %v7246
    %v7252 = vunpack.c.l.s4 1966171168
    %v7253 = vunpack.c.0.s8 %v7252
    %v7254 = vlaneseq
    %v7255 = vshrl.u32 %v7254, 7
    %v7256 = vsub.s32 %v7253, %v7255
    %v7257 = vrot.slane %v7247, %v7256
    %v7259 = vunpack.c.l.s4 1966171168
    %v7260 = vunpack.c.0.s8 %v7259
    %v7261 = vlaneseq
    %v7262 = vshrl.u32 %v7261, 7
    %v7263 = vsub.s32 %v7260, %v7262
    %v7264 = vrot.slane %v7248, %v7263
    %v7266 = vunpack.c.l.s4 1966171168
    %v7267 = vunpack.c.0.s8 %v7266
    %v7268 = vlaneseq
    %v7269 = vshrl.u32 %v7268, 7
    %v7270 = vsub.s32 %v7267, %v7269
    %v7271 = vrot.slane %v7249, %v7270
    %v7273 = vunpack.c.l.s4 1966171168
    %v7274 = vunpack.c.0.s8 %v7273
    %v7275 = vlaneseq
    %v7276 = vshrl.u32 %v7275, 7
    %v7277 = vsub.s32 %v7274, %v7276
    %v7278 = vrot.slane %v7250, %v7277
    %v7279 = vcombine.low %v7257, %v7271
    %v7280 = vcombine.low %v7264, %v7278
    %v7281 = vcombine.low %v5098, %v5100
    %v7282 = vcombine.low %v5139, %v5141
    %v7283 = vcombine.low %v5180, %v5182
    %v7284 = vcombine.low %v5221, %v5223
    %v7286 = vunpack.c.l.s4 1966171168
    %v7287 = vunpack.c.0.s8 %v7286
    %v7288 = vlaneseq
    %v7289 = vshrl.u32 %v7288, 7
    %v7290 = vsub.s32 %v7287, %v7289
    %v7291 = vrot.slane %v7281, %v7290
    %v7293 = vunpack.c.l.s4 1966171168
    %v7294 = vunpack.c.0.s8 %v7293
    %v7295 = vlaneseq
    %v7296 = vshrl.u32 %v7295, 7
    %v7297 = vsub.s32 %v7294, %v7296
    %v7298 = vrot.slane %v7282, %v7297
    %v7300 = vunpack.c.l.s4 1966171168
    %v7301 = vunpack.c.0.s8 %v7300
    %v7302 = vlaneseq
    %v7303 = vshrl.u32 %v7302, 7
    %v7304 = vsub.s32 %v7301, %v7303
    %v7305 = vrot.slane %v7283, %v7304
    %v7307 = vunpack.c.l.s4 1966171168
    %v7308 = vunpack.c.0.s8 %v7307
    %v7309 = vlaneseq
    %v7310 = vshrl.u32 %v7309, 7
    %v7311 = vsub.s32 %v7308, %v7310
    %v7312 = vrot.slane %v7284, %v7311
    %v7313 = vcombine.low %v7291, %v7298
    %v7314 = vcombine.high %v7291, %v7298
    %v7315 = vcombine.low %v7305, %v7312
    %v7316 = vcombine.high %v7305, %v7312
    %v7318 = vunpack.c.l.s4 1966171168
    %v7319 = vunpack.c.0.s8 %v7318
    %v7320 = vlaneseq
    %v7321 = vshrl.u32 %v7320, 7
    %v7322 = vsub.s32 %v7319, %v7321
    %v7323 = vrot.slane %v7313, %v7322
    %v7325 = vunpack.c.l.s4 1966171168
    %v7326 = vunpack.c.0.s8 %v7325
    %v7327 = vlaneseq
    %v7328 = vshrl.u32 %v7327, 7
    %v7329 = vsub.s32 %v7326, %v7328
    %v7330 = vrot.slane %v7314, %v7329
    %v7332 = vunpack.c.l.s4 1966171168
    %v7333 = vunpack.c.0.s8 %v7332
    %v7334 = vlaneseq
    %v7335 = vshrl.u32 %v7334, 7
    %v7336 = vsub.s32 %v7333, %v7335
    %v7337 = vrot.slane %v7315, %v7336
    %v7339 = vunpack.c.l.s4 1966171168
    %v7340 = vunpack.c.0.s8 %v7339
    %v7341 = vlaneseq
    %v7342 = vshrl.u32 %v7341, 7
    %v7343 = vsub.s32 %v7340, %v7342
    %v7344 = vrot.slane %v7316, %v7343
    %v7345 = vcombine.low %v7323, %v7337
    %v7346 = vcombine.low %v7330, %v7344
    %v7347 = vcombine.low %v5262, %v5264
    %v7348 = vcombine.low %v5303, %v5305
    %v7349 = vcombine.low %v5344, %v5346
    %v7350 = vcombine.low %v5385, %v5387
    %v7352 = vunpack.c.l.s4 1966171168
    %v7353 = vunpack.c.0.s8 %v7352
    %v7354 = vlaneseq
    %v7355 = vshrl.u32 %v7354, 7
    %v7356 = vsub.s32 %v7353, %v7355
    %v7357 = vrot.slane %v7347, %v7356
    %v7359 = vunpack.c.l.s4 1966171168
    %v7360 = vunpack.c.0.s8 %v7359
    %v7361 = vlaneseq
    %v7362 = vshrl.u32 %v7361, 7
    %v7363 = vsub.s32 %v7360, %v7362
    %v7364 = vrot.slane %v7348, %v7363
    %v7366 = vunpack.c.l.s4 1966171168
    %v7367 = vunpack.c.0.s8 %v7366
    %v7368 = vlaneseq
    %v7369 = vshrl.u32 %v7368, 7
    %v7370 = vsub.s32 %v7367, %v7369
    %v7371 = vrot.slane %v7349, %v7370
    %v7373 = vunpack.c.l.s4 1966171168
    %v7374 = vunpack.c.0.s8 %v7373
    %v7375 = vlaneseq
    %v7376 = vshrl.u32 %v7375, 7
    %v7377 = vsub.s32 %v7374, %v7376
    %v7378 = vrot.slane %v7350, %v7377
    %v7379 = vcombine.low %v7357, %v7364
    %v7380 = vcombine.high %v7357, %v7364
    %v7381 = vcombine.low %v7371, %v7378
    %v7382 = vcombine.high %v7371, %v7378
    %v7384 = vunpack.c.l.s4 1966171168
    %v7385 = vunpack.c.0.s8 %v7384
    %v7386 = vlaneseq
    %v7387 = vshrl.u32 %v7386, 7
    %v7388 = vsub.s32 %v7385, %v7387
    %v7389 = vrot.slane %v7379, %v7388
    %v7391 = vunpack.c.l.s4 1966171168
    %v7392 = vunpack.c.0.s8 %v7391
    %v7393 = vlaneseq
    %v7394 = vshrl.u32 %v7393, 7
    %v7395 = vsub.s32 %v7392, %v7394
    %v7396 = vrot.slane %v7380, %v7395
    %v7398 = vunpack.c.l.s4 1966171168
    %v7399 = vunpack.c.0.s8 %v7398
    %v7400 = vlaneseq
    %v7401 = vshrl.u32 %v7400, 7
    %v7402 = vsub.s32 %v7399, %v7401
    %v7403 = vrot.slane %v7381, %v7402
    %v7405 = vunpack.c.l.s4 1966171168
    %v7406 = vunpack.c.0.s8 %v7405
    %v7407 = vlaneseq
    %v7408 = vshrl.u32 %v7407, 7
    %v7409 = vsub.s32 %v7406, %v7408
    %v7410 = vrot.slane %v7382, %v7409
    %v7411 = vcombine.low %v7389, %v7403
    %v7412 = vcombine.low %v7396, %v7410
    %v7413 = vcombine.low %v5426, %v5428
    %v7414 = vcombine.low %v5467, %v5469
    %v7415 = vcombine.low %v5508, %v5510
    %v7416 = vcombine.low %v5549, %v5551
    %v7418 = vunpack.c.l.s4 1966171168
    %v7419 = vunpack.c.0.s8 %v7418
    %v7420 = vlaneseq
    %v7421 = vshrl.u32 %v7420, 7
    %v7422 = vsub.s32 %v7419, %v7421
    %v7423 = vrot.slane %v7413, %v7422
    %v7425 = vunpack.c.l.s4 1966171168
    %v7426 = vunpack.c.0.s8 %v7425
    %v7427 = vlaneseq
    %v7428 = vshrl.u32 %v7427, 7
    %v7429 = vsub.s32 %v7426, %v7428
    %v7430 = vrot.slane %v7414, %v7429
    %v7432 = vunpack.c.l.s4 1966171168
    %v7433 = vunpack.c.0.s8 %v7432
    %v7434 = vlaneseq
    %v7435 = vshrl.u32 %v7434, 7
    %v7436 = vsub.s32 %v7433, %v7435
    %v7437 = vrot.slane %v7415, %v7436
    %v7439 = vunpack.c.l.s4 1966171168
    %v7440 = vunpack.c.0.s8 %v7439
    %v7441 = vlaneseq
    %v7442 = vshrl.u32 %v7441, 7
    %v7443 = vsub.s32 %v7440, %v7442
    %v7444 = vrot.slane %v7416, %v7443
    %v7445 = vcombine.low %v7423, %v7430
    %v7446 = vcombine.high %v7423, %v7430
    %v7447 = vcombine.low %v7437, %v7444
    %v7448 = vcombine.high %v7437, %v7444
    %v7450 = vunpack.c.l.s4 1966171168
    %v7451 = vunpack.c.0.s8 %v7450
    %v7452 = vlaneseq
    %v7453 = vshrl.u32 %v7452, 7
    %v7454 = vsub.s32 %v7451, %v7453
    %v7455 = vrot.slane %v7445, %v7454
    %v7457 = vunpack.c.l.s4 1966171168
    %v7458 = vunpack.c.0.s8 %v7457
    %v7459 = vlaneseq
    %v7460 = vshrl.u32 %v7459, 7
    %v7461 = vsub.s32 %v7458, %v7460
    %v7462 = vrot.slane %v7446, %v7461
    %v7464 = vunpack.c.l.s4 1966171168
    %v7465 = vunpack.c.0.s8 %v7464
    %v7466 = vlaneseq
    %v7467 = vshrl.u32 %v7466, 7
    %v7468 = vsub.s32 %v7465, %v7467
    %v7469 = vrot.slane %v7447, %v7468
    %v7471 = vunpack.c.l.s4 1966171168
    %v7472 = vunpack.c.0.s8 %v7471
    %v7473 = vlaneseq
    %v7474 = vshrl.u32 %v7473, 7
    %v7475 = vsub.s32 %v7472, %v7474
    %v7476 = vrot.slane %v7448, %v7475
    %v7477 = vcombine.low %v7455, %v7469
    %v7478 = vcombine.low %v7462, %v7476
    %v7531 = vld [vmem:[%s4] sm:$0xff]
    %v7532 = vld [vmem:[%s4 + $0x8] sm:$0xff]
    %v7533 = vld [vmem:[%s4 + $0x10] sm:$0xff]
    %v7534 = vld [vmem:[%s4 + $0x18] sm:$0xff]
    %v7535 = vld [vmem:[%s4 + $0x20] sm:$0xff]
    %v7536 = vld [vmem:[%s4 + $0x28] sm:$0xff]
    %v7537 = vld [vmem:[%s4 + $0x30] sm:$0xff]
    %v7538 = vld [vmem:[%s4 + $0x38] sm:$0xff]
    %v7539 = vld [vmem:[%s4 + $0x40] sm:$0xff]
    %v7540 = vld [vmem:[%s4 + $0x48] sm:$0xff]
    %v7541 = vld [vmem:[%s4 + $0x50] sm:$0xff]
    %v7542 = vld [vmem:[%s4 + $0x58] sm:$0xff]
    %v7543 = vld [vmem:[%s4 + $0x60] sm:$0xff]
    %v7544 = vld [vmem:[%s4 + $0x68] sm:$0xff]
    %v7545 = vld [vmem:[%s4 + $0x70] sm:$0xff]
    %v7546 = vld [vmem:[%s4 + $0x78] sm:$0xff]
    %v7547 = vld [vmem:[%s4 + $0x80] sm:$0xff]
    %v7548 = vld [vmem:[%s4 + $0x88] sm:$0xff]
    %v7549 = vld [vmem:[%s4 + $0x90] sm:$0xff]
    %v7550 = vld [vmem:[%s4 + $0x98] sm:$0xff]
    %v7551 = vld [vmem:[%s4 + $0xa0] sm:$0xff]
    %v7552 = vld [vmem:[%s4 + $0xa8] sm:$0xff]
    %v7553 = vld [vmem:[%s4 + $0xb0] sm:$0xff]
    %v7554 = vld [vmem:[%s4 + $0xb8] sm:$0xff]
    %v7555 = vld [vmem:[%s4 + $0xc0] sm:$0xff]
    %v7556 = vld [vmem:[%s4 + $0xc8] sm:$0xff]
    %v7557 = vld [vmem:[%s4 + $0xd0] sm:$0xff]
    %v7558 = vld [vmem:[%s4 + $0xd8] sm:$0xff]
    %v7559 = vld [vmem:[%s4 + $0xe0] sm:$0xff]
    %v7560 = vld [vmem:[%s4 + $0xe8] sm:$0xff]
    %v7561 = vld [vmem:[%s4 + $0xf0] sm:$0xff]
    %v7562 = vld [vmem:[%s4 + $0xf8] sm:$0xff]
    %v7563 = vld [vmem:[%s4 + $0x100] sm:$0xff]
    %v7564 = vld [vmem:[%s4 + $0x108] sm:$0xff]
    %v7565 = vld [vmem:[%s4 + $0x110] sm:$0xff]
    %v7566 = vld [vmem:[%s4 + $0x118] sm:$0xff]
    %v7567 = vld [vmem:[%s4 + $0x120] sm:$0xff]
    %v7568 = vld [vmem:[%s4 + $0x128] sm:$0xff]
    %v7569 = vld [vmem:[%s4 + $0x130] sm:$0xff]
    %v7570 = vld [vmem:[%s4 + $0x138] sm:$0xff]
    %v7571 = vld [vmem:[%s4 + $0x140] sm:$0xff]
    %v7572 = vld [vmem:[%s4 + $0x148] sm:$0xff]
    %v7573 = vld [vmem:[%s4 + $0x150] sm:$0xff]
    %v7574 = vld [vmem:[%s4 + $0x158] sm:$0xff]
    %v7575 = vld [vmem:[%s4 + $0x160] sm:$0xff]
    %v7576 = vld [vmem:[%s4 + $0x168] sm:$0xff]
    %v7577 = vld [vmem:[%s4 + $0x170] sm:$0xff]
    %v7578 = vld [vmem:[%s4 + $0x178] sm:$0xff]
    %v7579 = vld [vmem:[%s4 + $0x180] sm:$0xff]
    %v7580 = vld [vmem:[%s4 + $0x188] sm:$0xff]
    %v7581 = vld [vmem:[%s4 + $0x190] sm:$0xff]
    %v7582 = vld [vmem:[%s4 + $0x198] sm:$0xff]
    %v7583 = vadd.f32 %v5827, %v5893
    %v7584 = vadd.f32 %v7583, %v5959
    %v7585 = vadd.f32 %v7584, %v6025
    %v7586 = vadd.f32 %v7585, %v6091
    %v7587 = vadd.f32 %v7586, %v6157
    %v7588 = vadd.f32 %v7587, %v6223
    %v7589 = vadd.f32 %v7588, %v6289
    %v7590 = vadd.f32 %v7589, %v6355
    %v7591 = vadd.f32 %v7590, %v6421
    %v7592 = vadd.f32 %v7591, %v6487
    %v7593 = vadd.f32 %v7592, %v6553
    %v7594 = vadd.f32 %v7593, %v6619
    %v7595 = vadd.f32 %v7594, %v6685
    %v7596 = vadd.f32 %v7595, %v6751
    %v7597 = vadd.f32 %v7596, %v6817
    %v7598 = vadd.f32 %v7597, %v6883
    %v7599 = vadd.f32 %v7598, %v6949
    %v7600 = vadd.f32 %v7599, %v7015
    %v7601 = vadd.f32 %v7600, %v7081
    %v7602 = vadd.f32 %v7601, %v7147
    %v7603 = vadd.f32 %v7602, %v7213
    %v7604 = vadd.f32 %v7603, %v7279
    %v7605 = vadd.f32 %v7604, %v7345
    %v7606 = vadd.f32 %v7605, %v7411
    %v7607 = vadd.f32 %v7606, %v7477
    %v7608 = vadd.f32 %v7607, %v5828
    %v7609 = vadd.f32 %v7608, %v5894
    %v7610 = vadd.f32 %v7609, %v5960
    %v7611 = vadd.f32 %v7610, %v6026
    %v7612 = vadd.f32 %v7611, %v6092
    %v7613 = vadd.f32 %v7612, %v6158
    %v7614 = vadd.f32 %v7613, %v6224
    %v7615 = vadd.f32 %v7614, %v6290
    %v7616 = vadd.f32 %v7615, %v6356
    %v7617 = vadd.f32 %v7616, %v6422
    %v7618 = vadd.f32 %v7617, %v6488
    %v7619 = vadd.f32 %v7618, %v6554
    %v7620 = vadd.f32 %v7619, %v6620
    %v7621 = vadd.f32 %v7620, %v6686
    %v7622 = vadd.f32 %v7621, %v6752
    %v7623 = vadd.f32 %v7622, %v6818
    %v7624 = vadd.f32 %v7623, %v6884
    %v7625 = vadd.f32 %v7624, %v6950
    %v7626 = vadd.f32 %v7625, %v7016
    %v7627 = vadd.f32 %v7626, %v7082
    %v7628 = vadd.f32 %v7627, %v7148
    %v7629 = vadd.f32 %v7628, %v7214
    %v7630 = vadd.f32 %v7629, %v7280
    %v7631 = vadd.f32 %v7630, %v7346
    %v7632 = vadd.f32 %v7631, %v7412
    %v7633 = vadd.f32 %v7632, %v7478
    %v7634 = vrot.slane %v7633, 4
    %v7635 = vadd.f32 %v7633, %v7634
    %v7636 = vrot.slane %v7635, 2
    %v7637 = vadd.f32 %v7635, %v7636
    %v7638 = vrot.slane %v7637, 1
    %v7639 = vadd.f32 %v7637, %v7638
    %v7640 = vmul.f32 %v7639, 0.005
    %v7641 = vsub.f32 %v5827, %v7640
    %v7642 = vsub.f32 %v5893, %v7640
    %v7643 = vsub.f32 %v5959, %v7640
    %v7644 = vsub.f32 %v6025, %v7640
    %v7645 = vsub.f32 %v6091, %v7640
    %v7646 = vsub.f32 %v6157, %v7640
    %v7647 = vsub.f32 %v6223, %v7640
    %v7648 = vsub.f32 %v6289, %v7640
    %v7649 = vsub.f32 %v6355, %v7640
    %v7650 = vsub.f32 %v6421, %v7640
    %v7651 = vsub.f32 %v6487, %v7640
    %v7652 = vsub.f32 %v6553, %v7640
    %v7653 = vsub.f32 %v6619, %v7640
    %v7654 = vsub.f32 %v6685, %v7640
    %v7655 = vsub.f32 %v6751, %v7640
    %v7656 = vsub.f32 %v6817, %v7640
    %v7657 = vsub.f32 %v6883, %v7640
    %v7658 = vsub.f32 %v6949, %v7640
    %v7659 = vsub.f32 %v7015, %v7640
    %v7660 = vsub.f32 %v7081, %v7640
    %v7661 = vsub.f32 %v7147, %v7640
    %v7662 = vsub.f32 %v7213, %v7640
    %v7663 = vsub.f32 %v7279, %v7640
    %v7664 = vsub.f32 %v7345, %v7640
    %v7665 = vsub.f32 %v7411, %v7640
    %v7666 = vsub.f32 %v7477, %v7640
    %v7667 = vsub.f32 %v5828, %v7640
    %v7668 = vsub.f32 %v5894, %v7640
    %v7669 = vsub.f32 %v5960, %v7640
    %v7670 = vsub.f32 %v6026, %v7640
    %v7671 = vsub.f32 %v6092, %v7640
    %v7672 = vsub.f32 %v6158, %v7640
    %v7673 = vsub.f32 %v6224, %v7640
    %v7674 = vsub.f32 %v6290, %v7640
    %v7675 = vsub.f32 %v6356, %v7640
    %v7676 = vsub.f32 %v6422, %v7640
    %v7677 = vsub.f32 %v6488, %v7640
    %v7678 = vsub.f32 %v6554, %v7640
    %v7679 = vsub.f32 %v6620, %v7640
    %v7680 = vsub.f32 %v6686, %v7640
    %v7681 = vsub.f32 %v6752, %v7640
    %v7682 = vsub.f32 %v6818, %v7640
    %v7683 = vsub.f32 %v6884, %v7640
    %v7684 = vsub.f32 %v6950, %v7640
    %v7685 = vsub.f32 %v7016, %v7640
    %v7686 = vsub.f32 %v7082, %v7640
    %v7687 = vsub.f32 %v7148, %v7640
    %v7688 = vsub.f32 %v7214, %v7640
    %v7689 = vsub.f32 %v7280, %v7640
    %v7690 = vsub.f32 %v7346, %v7640
    %v7691 = vsub.f32 %v7412, %v7640
    %v7692 = vsub.f32 %v7478, %v7640
    %v7693 = vmul.f32 %v7641, %v7641
    %v7694 = vmul.f32 %v7642, %v7642
    %v7695 = vmul.f32 %v7643, %v7643
    %v7696 = vmul.f32 %v7644, %v7644
    %v7697 = vmul.f32 %v7645, %v7645
    %v7698 = vmul.f32 %v7646, %v7646
    %v7699 = vmul.f32 %v7647, %v7647
    %v7700 = vmul.f32 %v7648, %v7648
    %v7701 = vmul.f32 %v7649, %v7649
    %v7702 = vmul.f32 %v7650, %v7650
    %v7703 = vmul.f32 %v7651, %v7651
    %v7704 = vmul.f32 %v7652, %v7652
    %v7705 = vmul.f32 %v7653, %v7653
    %v7706 = vmul.f32 %v7654, %v7654
    %v7707 = vmul.f32 %v7655, %v7655
    %v7708 = vmul.f32 %v7656, %v7656
    %v7709 = vmul.f32 %v7657, %v7657
    %v7710 = vmul.f32 %v7658, %v7658
    %v7711 = vmul.f32 %v7659, %v7659
    %v7712 = vmul.f32 %v7660, %v7660
    %v7713 = vmul.f32 %v7661, %v7661
    %v7714 = vmul.f32 %v7662, %v7662
    %v7715 = vmul.f32 %v7663, %v7663
    %v7716 = vmul.f32 %v7664, %v7664
    %v7717 = vmul.f32 %v7665, %v7665
    %v7718 = vmul.f32 %v7666, %v7666
    %v7719 = vmul.f32 %v7667, %v7667
    %v7720 = vmul.f32 %v7668, %v7668
    %v7721 = vmul.f32 %v7669, %v7669
    %v7722 = vmul.f32 %v7670, %v7670
    %v7723 = vmul.f32 %v7671, %v7671
    %v7724 = vmul.f32 %v7672, %v7672
    %v7725 = vmul.f32 %v7673, %v7673
    %v7726 = vmul.f32 %v7674, %v7674
    %v7727 = vmul.f32 %v7675, %v7675
    %v7728 = vmul.f32 %v7676, %v7676
    %v7729 = vmul.f32 %v7677, %v7677
    %v7730 = vmul.f32 %v7678, %v7678
    %v7731 = vmul.f32 %v7679, %v7679
    %v7732 = vmul.f32 %v7680, %v7680
    %v7733 = vmul.f32 %v7681, %v7681
    %v7734 = vmul.f32 %v7682, %v7682
    %v7735 = vmul.f32 %v7683, %v7683
    %v7736 = vmul.f32 %v7684, %v7684
    %v7737 = vmul.f32 %v7685, %v7685
    %v7738 = vmul.f32 %v7686, %v7686
    %v7739 = vmul.f32 %v7687, %v7687
    %v7740 = vmul.f32 %v7688, %v7688
    %v7741 = vmul.f32 %v7689, %v7689
    %v7742 = vmul.f32 %v7690, %v7690
    %v7743 = vmul.f32 %v7691, %v7691
    %v7744 = vmul.f32 %v7692, %v7692
    %7746 = vset.pattern.permute.xlu0 0
    %7747 = vperm.xlu0 %7746, %v7531
    %v7748 = vpop.permute.xlu0 %7747
    %7751 = vset.pattern.permute.xlu0 0
    %7752 = vperm.xlu0 %7751, %v7532
    %v7753 = vpop.permute.xlu0 %7752
    %7756 = vset.pattern.permute.xlu0 0
    %7757 = vperm.xlu0 %7756, %v7533
    %v7758 = vpop.permute.xlu0 %7757
    %7761 = vset.pattern.permute.xlu0 0
    %7762 = vperm.xlu0 %7761, %v7534
    %v7763 = vpop.permute.xlu0 %7762
    %7766 = vset.pattern.permute.xlu0 0
    %7767 = vperm.xlu0 %7766, %v7535
    %v7768 = vpop.permute.xlu0 %7767
    %7771 = vset.pattern.permute.xlu0 0
    %7772 = vperm.xlu0 %7771, %v7536
    %v7773 = vpop.permute.xlu0 %7772
    %7776 = vset.pattern.permute.xlu0 0
    %7777 = vperm.xlu0 %7776, %v7537
    %v7778 = vpop.permute.xlu0 %7777
    %7781 = vset.pattern.permute.xlu0 0
    %7782 = vperm.xlu0 %7781, %v7538
    %v7783 = vpop.permute.xlu0 %7782
    %7786 = vset.pattern.permute.xlu0 0
    %7787 = vperm.xlu0 %7786, %v7539
    %v7788 = vpop.permute.xlu0 %7787
    %7791 = vset.pattern.permute.xlu0 0
    %7792 = vperm.xlu0 %7791, %v7540
    %v7793 = vpop.permute.xlu0 %7792
    %7796 = vset.pattern.permute.xlu0 0
    %7797 = vperm.xlu0 %7796, %v7541
    %v7798 = vpop.permute.xlu0 %7797
    %7801 = vset.pattern.permute.xlu0 0
    %7802 = vperm.xlu0 %7801, %v7542
    %v7803 = vpop.permute.xlu0 %7802
    %7806 = vset.pattern.permute.xlu0 0
    %7807 = vperm.xlu0 %7806, %v7543
    %v7808 = vpop.permute.xlu0 %7807
    %7811 = vset.pattern.permute.xlu0 0
    %7812 = vperm.xlu0 %7811, %v7544
    %v7813 = vpop.permute.xlu0 %7812
    %7816 = vset.pattern.permute.xlu0 0
    %7817 = vperm.xlu0 %7816, %v7545
    %v7818 = vpop.permute.xlu0 %7817
    %7821 = vset.pattern.permute.xlu0 0
    %7822 = vperm.xlu0 %7821, %v7546
    %v7823 = vpop.permute.xlu0 %7822
    %7826 = vset.pattern.permute.xlu0 0
    %7827 = vperm.xlu0 %7826, %v7547
    %v7828 = vpop.permute.xlu0 %7827
    %7831 = vset.pattern.permute.xlu0 0
    %7832 = vperm.xlu0 %7831, %v7548
    %v7833 = vpop.permute.xlu0 %7832
    %7836 = vset.pattern.permute.xlu0 0
    %7837 = vperm.xlu0 %7836, %v7549
    %v7838 = vpop.permute.xlu0 %7837
    %7841 = vset.pattern.permute.xlu0 0
    %7842 = vperm.xlu0 %7841, %v7550
    %v7843 = vpop.permute.xlu0 %7842
    %7846 = vset.pattern.permute.xlu0 0
    %7847 = vperm.xlu0 %7846, %v7551
    %v7848 = vpop.permute.xlu0 %7847
    %7851 = vset.pattern.permute.xlu0 0
    %7852 = vperm.xlu0 %7851, %v7552
    %v7853 = vpop.permute.xlu0 %7852
    %7856 = vset.pattern.permute.xlu0 0
    %7857 = vperm.xlu0 %7856, %v7553
    %v7858 = vpop.permute.xlu0 %7857
    %7861 = vset.pattern.permute.xlu0 0
    %7862 = vperm.xlu0 %7861, %v7554
    %v7863 = vpop.permute.xlu0 %7862
    %7866 = vset.pattern.permute.xlu0 0
    %7867 = vperm.xlu0 %7866, %v7555
    %v7868 = vpop.permute.xlu0 %7867
    %7871 = vset.pattern.permute.xlu0 0
    %7872 = vperm.xlu0 %7871, %v7556
    %v7873 = vpop.permute.xlu0 %7872
    %7876 = vset.pattern.permute.xlu0 0
    %7877 = vperm.xlu0 %7876, %v7557
    %v7878 = vpop.permute.xlu0 %7877
    %7881 = vset.pattern.permute.xlu0 0
    %7882 = vperm.xlu0 %7881, %v7558
    %v7883 = vpop.permute.xlu0 %7882
    %7886 = vset.pattern.permute.xlu0 0
    %7887 = vperm.xlu0 %7886, %v7559
    %v7888 = vpop.permute.xlu0 %7887
    %7891 = vset.pattern.permute.xlu0 0
    %7892 = vperm.xlu0 %7891, %v7560
    %v7893 = vpop.permute.xlu0 %7892
    %7896 = vset.pattern.permute.xlu0 0
    %7897 = vperm.xlu0 %7896, %v7561
    %v7898 = vpop.permute.xlu0 %7897
    %7901 = vset.pattern.permute.xlu0 0
    %7902 = vperm.xlu0 %7901, %v7562
    %v7903 = vpop.permute.xlu0 %7902
    %7906 = vset.pattern.permute.xlu0 0
    %7907 = vperm.xlu0 %7906, %v7563
    %v7908 = vpop.permute.xlu0 %7907
    %7911 = vset.pattern.permute.xlu0 0
    %7912 = vperm.xlu0 %7911, %v7564
    %v7913 = vpop.permute.xlu0 %7912
    %7916 = vset.pattern.permute.xlu0 0
    %7917 = vperm.xlu0 %7916, %v7565
    %v7918 = vpop.permute.xlu0 %7917
    %7921 = vset.pattern.permute.xlu0 0
    %7922 = vperm.xlu0 %7921, %v7566
    %v7923 = vpop.permute.xlu0 %7922
    %7926 = vset.pattern.permute.xlu0 0
    %7927 = vperm.xlu0 %7926, %v7567
    %v7928 = vpop.permute.xlu0 %7927
    %7931 = vset.pattern.permute.xlu0 0
    %7932 = vperm.xlu0 %7931, %v7568
    %v7933 = vpop.permute.xlu0 %7932
    %7936 = vset.pattern.permute.xlu0 0
    %7937 = vperm.xlu0 %7936, %v7569
    %v7938 = vpop.permute.xlu0 %7937
    %7941 = vset.pattern.permute.xlu0 0
    %7942 = vperm.xlu0 %7941, %v7570
    %v7943 = vpop.permute.xlu0 %7942
    %7946 = vset.pattern.permute.xlu0 0
    %7947 = vperm.xlu0 %7946, %v7571
    %v7948 = vpop.permute.xlu0 %7947
    %7951 = vset.pattern.permute.xlu0 0
    %7952 = vperm.xlu0 %7951, %v7572
    %v7953 = vpop.permute.xlu0 %7952
    %7956 = vset.pattern.permute.xlu0 0
    %7957 = vperm.xlu0 %7956, %v7573
    %v7958 = vpop.permute.xlu0 %7957
    %7961 = vset.pattern.permute.xlu0 0
    %7962 = vperm.xlu0 %7961, %v7574
    %v7963 = vpop.permute.xlu0 %7962
    %7966 = vset.pattern.permute.xlu0 0
    %7967 = vperm.xlu0 %7966, %v7575
    %v7968 = vpop.permute.xlu0 %7967
    %7971 = vset.pattern.permute.xlu0 0
    %7972 = vperm.xlu0 %7971, %v7576
    %v7973 = vpop.permute.xlu0 %7972
    %7976 = vset.pattern.permute.xlu0 0
    %7977 = vperm.xlu0 %7976, %v7577
    %v7978 = vpop.permute.xlu0 %7977
    %7981 = vset.pattern.permute.xlu0 0
    %7982 = vperm.xlu0 %7981, %v7578
    %v7983 = vpop.permute.xlu0 %7982
    %7986 = vset.pattern.permute.xlu0 0
    %7987 = vperm.xlu0 %7986, %v7579
    %v7988 = vpop.permute.xlu0 %7987
    %7991 = vset.pattern.permute.xlu0 0
    %7992 = vperm.xlu0 %7991, %v7580
    %v7993 = vpop.permute.xlu0 %7992
    %7996 = vset.pattern.permute.xlu0 0
    %7997 = vperm.xlu0 %7996, %v7581
    %v7998 = vpop.permute.xlu0 %7997
    %8001 = vset.pattern.permute.xlu0 0
    %8002 = vperm.xlu0 %8001, %v7582
    %v8003 = vpop.permute.xlu0 %8002
    %v8005 = vmul.f32 %v7693, %v7748
    %v8006 = vmul.f32 %v7694, %v7753
    %v8007 = vmul.f32 %v7695, %v7758
    %v8008 = vmul.f32 %v7696, %v7763
    %v8009 = vmul.f32 %v7697, %v7768
    %v8010 = vmul.f32 %v7698, %v7773
    %v8011 = vmul.f32 %v7699, %v7778
    %v8012 = vmul.f32 %v7700, %v7783
    %v8013 = vmul.f32 %v7701, %v7788
    %v8014 = vmul.f32 %v7702, %v7793
    %v8015 = vmul.f32 %v7703, %v7798
    %v8016 = vmul.f32 %v7704, %v7803
    %v8017 = vmul.f32 %v7705, %v7808
    %v8018 = vmul.f32 %v7706, %v7813
    %v8019 = vmul.f32 %v7707, %v7818
    %v8020 = vmul.f32 %v7708, %v7823
    %v8021 = vmul.f32 %v7709, %v7828
    %v8022 = vmul.f32 %v7710, %v7833
    %v8023 = vmul.f32 %v7711, %v7838
    %v8024 = vmul.f32 %v7712, %v7843
    %v8025 = vmul.f32 %v7713, %v7848
    %v8026 = vmul.f32 %v7714, %v7853
    %v8027 = vmul.f32 %v7715, %v7858
    %v8028 = vmul.f32 %v7716, %v7863
    %v8029 = vmul.f32 %v7717, %v7868
    %v8030 = vmul.f32 %v7718, %v7873
    %v8031 = vmul.f32 %v7719, %v7878
    %v8032 = vmul.f32 %v7720, %v7883
    %v8033 = vmul.f32 %v7721, %v7888
    %v8034 = vmul.f32 %v7722, %v7893
    %v8035 = vmul.f32 %v7723, %v7898
    %v8036 = vmul.f32 %v7724, %v7903
    %v8037 = vmul.f32 %v7725, %v7908
    %v8038 = vmul.f32 %v7726, %v7913
    %v8039 = vmul.f32 %v7727, %v7918
    %v8040 = vmul.f32 %v7728, %v7923
    %v8041 = vmul.f32 %v7729, %v7928
    %v8042 = vmul.f32 %v7730, %v7933
    %v8043 = vmul.f32 %v7731, %v7938
    %v8044 = vmul.f32 %v7732, %v7943
    %v8045 = vmul.f32 %v7733, %v7948
    %v8046 = vmul.f32 %v7734, %v7953
    %v8047 = vmul.f32 %v7735, %v7958
    %v8048 = vmul.f32 %v7736, %v7963
    %v8049 = vmul.f32 %v7737, %v7968
    %v8050 = vmul.f32 %v7738, %v7973
    %v8051 = vmul.f32 %v7739, %v7978
    %v8052 = vmul.f32 %v7740, %v7983
    %v8053 = vmul.f32 %v7741, %v7988
    %v8054 = vmul.f32 %v7742, %v7993
    %v8055 = vmul.f32 %v7743, %v7998
    %v8056 = vmul.f32 %v7744, %v8003
    %v8057 = vadd.f32 %v8005, %v8006
    %v8058 = vadd.f32 %v8057, %v8007
    %v8059 = vadd.f32 %v8058, %v8008
    %v8060 = vadd.f32 %v8059, %v8009
    %v8061 = vadd.f32 %v8060, %v8010
    %v8062 = vadd.f32 %v8061, %v8011
    %v8063 = vadd.f32 %v8062, %v8012
    %v8064 = vadd.f32 %v8063, %v8013
    %v8065 = vadd.f32 %v8064, %v8014
    %v8066 = vadd.f32 %v8065, %v8015
    %v8067 = vadd.f32 %v8066, %v8016
    %v8068 = vadd.f32 %v8067, %v8017
    %v8069 = vadd.f32 %v8068, %v8018
    %v8070 = vadd.f32 %v8069, %v8019
    %v8071 = vadd.f32 %v8070, %v8020
    %v8072 = vadd.f32 %v8071, %v8021
    %v8073 = vadd.f32 %v8072, %v8022
    %v8074 = vadd.f32 %v8073, %v8023
    %v8075 = vadd.f32 %v8074, %v8024
    %v8076 = vadd.f32 %v8075, %v8025
    %v8077 = vadd.f32 %v8076, %v8026
    %v8078 = vadd.f32 %v8077, %v8027
    %v8079 = vadd.f32 %v8078, %v8028
    %v8080 = vadd.f32 %v8079, %v8029
    %v8081 = vadd.f32 %v8080, %v8030
    %v8082 = vadd.f32 %v8081, %v8031
    %v8083 = vadd.f32 %v8082, %v8032
    %v8084 = vadd.f32 %v8083, %v8033
    %v8085 = vadd.f32 %v8084, %v8034
    %v8086 = vadd.f32 %v8085, %v8035
    %v8087 = vadd.f32 %v8086, %v8036
    %v8088 = vadd.f32 %v8087, %v8037
    %v8089 = vadd.f32 %v8088, %v8038
    %v8090 = vadd.f32 %v8089, %v8039
    %v8091 = vadd.f32 %v8090, %v8040
    %v8092 = vadd.f32 %v8091, %v8041
    %v8093 = vadd.f32 %v8092, %v8042
    %v8094 = vadd.f32 %v8093, %v8043
    %v8095 = vadd.f32 %v8094, %v8044
    %v8096 = vadd.f32 %v8095, %v8045
    %v8097 = vadd.f32 %v8096, %v8046
    %v8098 = vadd.f32 %v8097, %v8047
    %v8099 = vadd.f32 %v8098, %v8048
    %v8100 = vadd.f32 %v8099, %v8049
    %v8101 = vadd.f32 %v8100, %v8050
    %v8102 = vadd.f32 %v8101, %v8051
    %v8103 = vadd.f32 %v8102, %v8052
    %v8104 = vadd.f32 %v8103, %v8053
    %v8105 = vadd.f32 %v8104, %v8054
    %v8106 = vadd.f32 %v8105, %v8055
    %v8107 = vadd.f32 %v8106, %v8056
    %v8108 = vrot.slane %v8107, 4
    %v8109 = vadd.f32 %v8107, %v8108
    %v8110 = vrot.slane %v8109, 2
    %v8111 = vadd.f32 %v8109, %v8110
    %v8112 = vrot.slane %v8111, 1
    %v8113 = vadd.f32 %v8111, %v8112
    %v8114 = vmul.f32 %v8113, 0.005
    %v8115 = vadd.f32 %v8114, 1e-05
    %v8116 = vrsqrt.pop %v8115
    %v8117 = vld [vmem:[%s2] sm:$0x1]
    %v8118 = vmul.f32 %v8116, %v8117
    %v8119 = vld [vmem:[%s3] sm:$0x1]
    %v8120 = vmul.f32 %v7640, %v8118
    %v8121 = vsub.f32 %v8119, %v8120
    %v8122 = vlaneseq
    %v8123 = vshrl.u32 %v8122, 7
    %v8124 = vsub.s32 0, %v8123
    %v8125 = vrot.slane %v8118, %v8124
    %v8126 = vmul.f32 %v5827, %v8125
    %v8127 = vmul.f32 %v5893, %v8125
    %v8128 = vmul.f32 %v5959, %v8125
    %v8129 = vmul.f32 %v6025, %v8125
    %v8130 = vmul.f32 %v6091, %v8125
    %v8131 = vmul.f32 %v6157, %v8125
    %v8132 = vmul.f32 %v6223, %v8125
    %v8133 = vmul.f32 %v6289, %v8125
    %v8134 = vmul.f32 %v6355, %v8125
    %v8135 = vmul.f32 %v6421, %v8125
    %v8136 = vmul.f32 %v6487, %v8125
    %v8137 = vmul.f32 %v6553, %v8125
    %v8138 = vmul.f32 %v6619, %v8125
    %v8139 = vmul.f32 %v6685, %v8125
    %v8140 = vmul.f32 %v6751, %v8125
    %v8141 = vmul.f32 %v6817, %v8125
    %v8142 = vmul.f32 %v6883, %v8125
    %v8143 = vmul.f32 %v6949, %v8125
    %v8144 = vmul.f32 %v7015, %v8125
    %v8145 = vmul.f32 %v7081, %v8125
    %v8146 = vmul.f32 %v7147, %v8125
    %v8147 = vmul.f32 %v7213, %v8125
    %v8148 = vmul.f32 %v7279, %v8125
    %v8149 = vmul.f32 %v7345, %v8125
    %v8150 = vmul.f32 %v7411, %v8125
    %v8151 = vmul.f32 %v7477, %v8125
    %v8152 = vmul.f32 %v5828, %v8125
    %v8153 = vmul.f32 %v5894, %v8125
    %v8154 = vmul.f32 %v5960, %v8125
    %v8155 = vmul.f32 %v6026, %v8125
    %v8156 = vmul.f32 %v6092, %v8125
    %v8157 = vmul.f32 %v6158, %v8125
    %v8158 = vmul.f32 %v6224, %v8125
    %v8159 = vmul.f32 %v6290, %v8125
    %v8160 = vmul.f32 %v6356, %v8125
    %v8161 = vmul.f32 %v6422, %v8125
    %v8162 = vmul.f32 %v6488, %v8125
    %v8163 = vmul.f32 %v6554, %v8125
    %v8164 = vmul.f32 %v6620, %v8125
    %v8165 = vmul.f32 %v6686, %v8125
    %v8166 = vmul.f32 %v6752, %v8125
    %v8167 = vmul.f32 %v6818, %v8125
    %v8168 = vmul.f32 %v6884, %v8125
    %v8169 = vmul.f32 %v6950, %v8125
    %v8170 = vmul.f32 %v7016, %v8125
    %v8171 = vmul.f32 %v7082, %v8125
    %v8172 = vmul.f32 %v7148, %v8125
    %v8173 = vmul.f32 %v7214, %v8125
    %v8174 = vmul.f32 %v7280, %v8125
    %v8175 = vmul.f32 %v7346, %v8125
    %v8176 = vmul.f32 %v7412, %v8125
    %v8177 = vmul.f32 %v7478, %v8125
    %v8179 = vlaneseq
    %v8180 = vshrl.u32 %v8179, 7
    %v8181 = vsub.s32 0, %v8180
    %v8182 = vrot.slane %v8121, %v8181
    %v8184 = vadd.f32 %v8126, %v8182
    %v8185 = vadd.f32 %v8127, %v8182
    %v8186 = vadd.f32 %v8128, %v8182
    %v8187 = vadd.f32 %v8129, %v8182
    %v8188 = vadd.f32 %v8130, %v8182
    %v8189 = vadd.f32 %v8131, %v8182
    %v8190 = vadd.f32 %v8132, %v8182
    %v8191 = vadd.f32 %v8133, %v8182
    %v8192 = vadd.f32 %v8134, %v8182
    %v8193 = vadd.f32 %v8135, %v8182
    %v8194 = vadd.f32 %v8136, %v8182
    %v8195 = vadd.f32 %v8137, %v8182
    %v8196 = vadd.f32 %v8138, %v8182
    %v8197 = vadd.f32 %v8139, %v8182
    %v8198 = vadd.f32 %v8140, %v8182
    %v8199 = vadd.f32 %v8141, %v8182
    %v8200 = vadd.f32 %v8142, %v8182
    %v8201 = vadd.f32 %v8143, %v8182
    %v8202 = vadd.f32 %v8144, %v8182
    %v8203 = vadd.f32 %v8145, %v8182
    %v8204 = vadd.f32 %v8146, %v8182
    %v8205 = vadd.f32 %v8147, %v8182
    %v8206 = vadd.f32 %v8148, %v8182
    %v8207 = vadd.f32 %v8149, %v8182
    %v8208 = vadd.f32 %v8150, %v8182
    %v8209 = vadd.f32 %v8151, %v8182
    %v8210 = vadd.f32 %v8152, %v8182
    %v8211 = vadd.f32 %v8153, %v8182
    %v8212 = vadd.f32 %v8154, %v8182
    %v8213 = vadd.f32 %v8155, %v8182
    %v8214 = vadd.f32 %v8156, %v8182
    %v8215 = vadd.f32 %v8157, %v8182
    %v8216 = vadd.f32 %v8158, %v8182
    %v8217 = vadd.f32 %v8159, %v8182
    %v8218 = vadd.f32 %v8160, %v8182
    %v8219 = vadd.f32 %v8161, %v8182
    %v8220 = vadd.f32 %v8162, %v8182
    %v8221 = vadd.f32 %v8163, %v8182
    %v8222 = vadd.f32 %v8164, %v8182
    %v8223 = vadd.f32 %v8165, %v8182
    %v8224 = vadd.f32 %v8166, %v8182
    %v8225 = vadd.f32 %v8167, %v8182
    %v8226 = vadd.f32 %v8168, %v8182
    %v8227 = vadd.f32 %v8169, %v8182
    %v8228 = vadd.f32 %v8170, %v8182
    %v8229 = vadd.f32 %v8171, %v8182
    %v8230 = vadd.f32 %v8172, %v8182
    %v8231 = vadd.f32 %v8173, %v8182
    %v8232 = vadd.f32 %v8174, %v8182
    %v8233 = vadd.f32 %v8175, %v8182
    %v8234 = vadd.f32 %v8176, %v8182
    %v8235 = vadd.f32 %v8177, %v8182
    %v8236 = vmax.f32 %v8184, 0.0
    %v8237 = vmax.f32 %v8185, 0.0
    %v8238 = vmax.f32 %v8186, 0.0
    %v8239 = vmax.f32 %v8187, 0.0
    %v8240 = vmax.f32 %v8188, 0.0
    %v8241 = vmax.f32 %v8189, 0.0
    %v8242 = vmax.f32 %v8190, 0.0
    %v8243 = vmax.f32 %v8191, 0.0
    %v8244 = vmax.f32 %v8192, 0.0
    %v8245 = vmax.f32 %v8193, 0.0
    %v8246 = vmax.f32 %v8194, 0.0
    %v8247 = vmax.f32 %v8195, 0.0
    %v8248 = vmax.f32 %v8196, 0.0
    %v8249 = vmax.f32 %v8197, 0.0
    %v8250 = vmax.f32 %v8198, 0.0
    %v8251 = vmax.f32 %v8199, 0.0
    %v8252 = vmax.f32 %v8200, 0.0
    %v8253 = vmax.f32 %v8201, 0.0
    %v8254 = vmax.f32 %v8202, 0.0
    %v8255 = vmax.f32 %v8203, 0.0
    %v8256 = vmax.f32 %v8204, 0.0
    %v8257 = vmax.f32 %v8205, 0.0
    %v8258 = vmax.f32 %v8206, 0.0
    %v8259 = vmax.f32 %v8207, 0.0
    %v8260 = vmax.f32 %v8208, 0.0
    %v8261 = vmax.f32 %v8209, 0.0
    %v8262 = vmax.f32 %v8210, 0.0
    %v8263 = vmax.f32 %v8211, 0.0
    %v8264 = vmax.f32 %v8212, 0.0
    %v8265 = vmax.f32 %v8213, 0.0
    %v8266 = vmax.f32 %v8214, 0.0
    %v8267 = vmax.f32 %v8215, 0.0
    %v8268 = vmax.f32 %v8216, 0.0
    %v8269 = vmax.f32 %v8217, 0.0
    %v8270 = vmax.f32 %v8218, 0.0
    %v8271 = vmax.f32 %v8219, 0.0
    %v8272 = vmax.f32 %v8220, 0.0
    %v8273 = vmax.f32 %v8221, 0.0
    %v8274 = vmax.f32 %v8222, 0.0
    %v8275 = vmax.f32 %v8223, 0.0
    %v8276 = vmax.f32 %v8224, 0.0
    %v8277 = vmax.f32 %v8225, 0.0
    %v8278 = vmax.f32 %v8226, 0.0
    %v8279 = vmax.f32 %v8227, 0.0
    %v8280 = vmax.f32 %v8228, 0.0
    %v8281 = vmax.f32 %v8229, 0.0
    %v8282 = vmax.f32 %v8230, 0.0
    %v8283 = vmax.f32 %v8231, 0.0
    %v8284 = vmax.f32 %v8232, 0.0
    %v8285 = vmax.f32 %v8233, 0.0
    %v8286 = vmax.f32 %v8234, 0.0
    %v8287 = vmax.f32 %v8235, 0.0
    %v8288 = vmul.f32 %v8236, %v7748
    %v8289 = vmul.f32 %v8237, %v7753
    %v8290 = vmul.f32 %v8238, %v7758
    %v8291 = vmul.f32 %v8239, %v7763
    %v8292 = vmul.f32 %v8240, %v7768
    %v8293 = vmul.f32 %v8241, %v7773
    %v8294 = vmul.f32 %v8242, %v7778
    %v8295 = vmul.f32 %v8243, %v7783
    %v8296 = vmul.f32 %v8244, %v7788
    %v8297 = vmul.f32 %v8245, %v7793
    %v8298 = vmul.f32 %v8246, %v7798
    %v8299 = vmul.f32 %v8247, %v7803
    %v8300 = vmul.f32 %v8248, %v7808
    %v8301 = vmul.f32 %v8249, %v7813
    %v8302 = vmul.f32 %v8250, %v7818
    %v8303 = vmul.f32 %v8251, %v7823
    %v8304 = vmul.f32 %v8252, %v7828
    %v8305 = vmul.f32 %v8253, %v7833
    %v8306 = vmul.f32 %v8254, %v7838
    %v8307 = vmul.f32 %v8255, %v7843
    %v8308 = vmul.f32 %v8256, %v7848
    %v8309 = vmul.f32 %v8257, %v7853
    %v8310 = vmul.f32 %v8258, %v7858
    %v8311 = vmul.f32 %v8259, %v7863
    %v8312 = vmul.f32 %v8260, %v7868
    %v8313 = vmul.f32 %v8261, %v7873
    %v8314 = vmul.f32 %v8262, %v7878
    %v8315 = vmul.f32 %v8263, %v7883
    %v8316 = vmul.f32 %v8264, %v7888
    %v8317 = vmul.f32 %v8265, %v7893
    %v8318 = vmul.f32 %v8266, %v7898
    %v8319 = vmul.f32 %v8267, %v7903
    %v8320 = vmul.f32 %v8268, %v7908
    %v8321 = vmul.f32 %v8269, %v7913
    %v8322 = vmul.f32 %v8270, %v7918
    %v8323 = vmul.f32 %v8271, %v7923
    %v8324 = vmul.f32 %v8272, %v7928
    %v8325 = vmul.f32 %v8273, %v7933
    %v8326 = vmul.f32 %v8274, %v7938
    %v8327 = vmul.f32 %v8275, %v7943
    %v8328 = vmul.f32 %v8276, %v7948
    %v8329 = vmul.f32 %v8277, %v7953
    %v8330 = vmul.f32 %v8278, %v7958
    %v8331 = vmul.f32 %v8279, %v7963
    %v8332 = vmul.f32 %v8280, %v7968
    %v8333 = vmul.f32 %v8281, %v7973
    %v8334 = vmul.f32 %v8282, %v7978
    %v8335 = vmul.f32 %v8283, %v7983
    %v8336 = vmul.f32 %v8284, %v7988
    %v8337 = vmul.f32 %v8285, %v7993
    %v8338 = vmul.f32 %v8286, %v7998
    %v8339 = vmul.f32 %v8287, %v8003
    %v8340 = vpack.c.bf16 %v8289, %v8288
    %v8341 = vpack.c.bf16 %v8291, %v8290
    %v8342 = vpack.c.bf16 %v8293, %v8292
    %v8343 = vpack.c.bf16 %v8295, %v8294
    %v8344 = vpack.c.bf16 %v8297, %v8296
    %v8345 = vpack.c.bf16 %v8299, %v8298
    %v8346 = vpack.c.bf16 %v8301, %v8300
    %v8347 = vpack.c.bf16 %v8303, %v8302
    %v8348 = vpack.c.bf16 %v8305, %v8304
    %v8349 = vpack.c.bf16 %v8307, %v8306
    %v8350 = vpack.c.bf16 %v8309, %v8308
    %v8351 = vpack.c.bf16 %v8311, %v8310
    %v8352 = vpack.c.bf16 %v8313, %v8312
    %v8353 = vpack.c.bf16 %v8315, %v8314
    %v8354 = vpack.c.bf16 %v8317, %v8316
    %v8355 = vpack.c.bf16 %v8319, %v8318
    %v8356 = vpack.c.bf16 %v8321, %v8320
    %v8357 = vpack.c.bf16 %v8323, %v8322
    %v8358 = vpack.c.bf16 %v8325, %v8324
    %v8359 = vpack.c.bf16 %v8327, %v8326
    %v8360 = vpack.c.bf16 %v8329, %v8328
    %v8361 = vpack.c.bf16 %v8331, %v8330
    %v8362 = vpack.c.bf16 %v8333, %v8332
    %v8363 = vpack.c.bf16 %v8335, %v8334
    %v8364 = vpack.c.bf16 %v8337, %v8336
    %v8365 = vpack.c.bf16 %v8339, %v8338
    %v8366 = vld [vmem:[%s5] sm:$0xf]
    %v8367 = vld [vmem:[%s5 + $0x4] sm:$0xf]
    %v8368 = vld [vmem:[%s5 + $0x8] sm:$0xf]
    %v8369 = vld [vmem:[%s5 + $0xc] sm:$0xf]
    %v8370 = vld [vmem:[%s5 + $0x10] sm:$0xf]
    %v8371 = vld [vmem:[%s5 + $0x14] sm:$0xf]
    %v8372 = vld [vmem:[%s5 + $0x18] sm:$0xf]
    %v8373 = vld [vmem:[%s5 + $0x1c] sm:$0xf]
    %v8374 = vld [vmem:[%s5 + $0x20] sm:$0xf]
    %v8375 = vld [vmem:[%s5 + $0x24] sm:$0xf]
    %v8376 = vld [vmem:[%s5 + $0x28] sm:$0xf]
    %v8377 = vld [vmem:[%s5 + $0x2c] sm:$0xf]
    %v8378 = vld [vmem:[%s5 + $0x30] sm:$0xf]
    %v8379 = vld [vmem:[%s5 + $0x34] sm:$0xf]
    %v8380 = vld [vmem:[%s5 + $0x38] sm:$0xf]
    %v8381 = vld [vmem:[%s5 + $0x3c] sm:$0xf]
    %v8398 = vunpack.c.l.b16 %v8366
    %v8399 = vunpack.c.l.b16 %v8367
    %v8400 = vunpack.c.l.b16 %v8368
    %v8401 = vunpack.c.l.b16 %v8369
    %v8402 = vunpack.c.l.b16 %v8370
    %v8403 = vunpack.c.l.b16 %v8371
    %v8404 = vunpack.c.l.b16 %v8372
    %v8405 = vunpack.c.l.b16 %v8373
    %v8406 = vunpack.c.l.b16 %v8374
    %v8407 = vunpack.c.l.b16 %v8375
    %v8408 = vunpack.c.l.b16 %v8376
    %v8409 = vunpack.c.l.b16 %v8377
    %v8410 = vunpack.c.l.b16 %v8378
    %v8411 = vunpack.c.l.b16 %v8379
    %v8412 = vunpack.c.l.b16 %v8380
    %v8413 = vunpack.c.l.b16 %v8381
    %v8414 = vpack.c.b16 %v8399, %v8398
    %v8415 = vpack.c.b16 %v8401, %v8400
    %v8416 = vpack.c.b16 %v8403, %v8402
    %v8417 = vpack.c.b16 %v8405, %v8404
    %v8418 = vpack.c.b16 %v8407, %v8406
    %v8419 = vpack.c.b16 %v8409, %v8408
    %v8420 = vpack.c.b16 %v8411, %v8410
    %v8421 = vpack.c.b16 %v8413, %v8412
    %8430 = vmatprep.subr.bf16.mxu0 0
    %8431 = vmatpush1.bf16.msra.mxu0 %v8414
    %8432 = vmatprep.subr.bf16.mxu0 0
    %8433 = vmatpush1.bf16.msra.mxu0 %v8415
    %8434 = vmatprep.subr.bf16.mxu0 0
    %8435 = vmatpush1.bf16.msra.mxu0 %v8416
    %8436 = vmatprep.subr.bf16.mxu0 0
    %8437 = vmatpush1.bf16.msra.mxu0 %v8417
    %8438 = vmatprep.subr.bf16.mxu0 0
    %8439 = vmatpush1.bf16.msra.mxu0 %v8418
    %8440 = vmatprep.subr.bf16.mxu0 0
    %8441 = vmatpush1.bf16.msra.mxu0 %v8419
    %8442 = vmatprep.subr.bf16.mxu0 0
    %8443 = vmatpush1.bf16.msra.mxu0 %v8420
    %8444 = vmatprep.subr.bf16.mxu0 0
    %8445 = vmatpush1.bf16.msra.mxu0 %v8421
    %8446 = vmatprep.subr.bf16.mxu0 0
    %8447 = vmatpush1.bf16.msra.mxu0 0
    %8448 = vmatprep.subr.bf16.mxu0 0
    %8449 = vmatpush1.bf16.msra.mxu0 0
    %8450 = vmatprep.subr.bf16.mxu0 0
    %8451 = vmatpush1.bf16.msra.mxu0 0
    %8452 = vmatprep.subr.bf16.mxu0 0
    %8453 = vmatpush1.bf16.msra.mxu0 0
    %8454 = vmatprep.subr.bf16.mxu0 0
    %8455 = vmatpush1.bf16.msra.mxu0 0
    %8456 = vmatprep.subr.bf16.mxu0 0
    %8457 = vmatpush1.bf16.msra.mxu0 0
    %8458 = vmatprep.subr.bf16.mxu0 0
    %8459 = vmatpush1.bf16.msra.mxu0 0
    %8460 = vmatprep.subr.bf16.mxu0 0
    %8461 = vmatpush1.bf16.msra.mxu0 0
    %8462 = vmatprep.mubr.bf16.mxu0 0
    %8463 = vmatmul.mubr.bf16.gmra.mrb[0].mxu0 %v8340
    %v8464 = vpop.f32.mrb[0].mxu0
    %v8465 = vadd.f32 0.0, %v8464
    %v8466 = vpop.f32.mrb[0].mxu0
    %v8467 = vpop.f32.mrb[0].mxu0
    %v8468 = vadd.f32 0.0, %v8467
    %v8469 = vpop.f32.mrb[0].mxu0
    %8470 = vmatprep.mubr.bf16.mxu0 0
    %8471 = vmatmul.mubr.bf16.gmra.mrb[0].mxu0 %v8341
    %v8472 = vpop.f32.mrb[0].mxu0
    %v8473 = vadd.f32 0.0, %v8472
    %v8474 = vpop.f32.mrb[0].mxu0
    %v8475 = vpop.f32.mrb[0].mxu0
    %v8476 = vadd.f32 0.0, %v8475
    %v8477 = vpop.f32.mrb[0].mxu0
    %8478 = vmatprep.mubr.bf16.mxu0 0
    %8479 = vmatmul.mubr.bf16.gmra.mrb[0].mxu0 %v8342
    %v8480 = vpop.f32.mrb[0].mxu0
    %v8481 = vadd.f32 0.0, %v8480
    %v8482 = vpop.f32.mrb[0].mxu0
    %v8483 = vpop.f32.mrb[0].mxu0
    %v8484 = vadd.f32 0.0, %v8483
    %v8485 = vpop.f32.mrb[0].mxu0
    %8486 = vmatprep.mubr.bf16.mxu0 0
    %8487 = vmatmul.mubr.bf16.gmra.mrb[0].mxu0 %v8343
    %v8488 = vpop.f32.mrb[0].mxu0
    %v8489 = vadd.f32 0.0, %v8488
    %v8490 = vpop.f32.mrb[0].mxu0
    %v8491 = vpop.f32.mrb[0].mxu0
    %v8492 = vadd.f32 0.0, %v8491
    %v8493 = vpop.f32.mrb[0].mxu0
    %8494 = vmatprep.mubr.bf16.mxu0 0
    %8495 = vmatmul.mubr.bf16.gmra.mrb[0].mxu0 %v8344
    %v8496 = vpop.f32.mrb[0].mxu0
    %v8497 = vadd.f32 0.0, %v8496
    %v8498 = vpop.f32.mrb[0].mxu0
    %v8499 = vpop.f32.mrb[0].mxu0
    %v8500 = vadd.f32 0.0, %v8499
    %v8501 = vpop.f32.mrb[0].mxu0
    %8502 = vmatprep.mubr.bf16.mxu0 0
    %8503 = vmatmul.mubr.bf16.gmra.mrb[0].mxu0 %v8345
    %v8504 = vpop.f32.mrb[0].mxu0
    %v8505 = vadd.f32 0.0, %v8504
    %v8506 = vpop.f32.mrb[0].mxu0
    %v8507 = vpop.f32.mrb[0].mxu0
    %v8508 = vadd.f32 0.0, %v8507
    %v8509 = vpop.f32.mrb[0].mxu0
    %8510 = vmatprep.mubr.bf16.mxu0 0
    %8511 = vmatmul.mubr.bf16.gmra.mrb[0].mxu0 %v8346
    %v8512 = vpop.f32.mrb[0].mxu0
    %v8513 = vadd.f32 0.0, %v8512
    %v8514 = vpop.f32.mrb[0].mxu0
    %v8515 = vpop.f32.mrb[0].mxu0
    %v8516 = vadd.f32 0.0, %v8515
    %v8517 = vpop.f32.mrb[0].mxu0
    %8518 = vmatprep.mubr.bf16.mxu0 0
    %8519 = vmatmul.mubr.bf16.gmra.mrb[0].mxu0 %v8347
    %v8520 = vpop.f32.mrb[0].mxu0
    %v8521 = vadd.f32 0.0, %v8520
    %v8522 = vpop.f32.mrb[0].mxu0
    %v8523 = vpop.f32.mrb[0].mxu0
    %v8524 = vadd.f32 0.0, %v8523
    %v8525 = vpop.f32.mrb[0].mxu0
    %8526 = vmatprep.mubr.bf16.mxu0 0
    %8527 = vmatmul.mubr.bf16.gmra.mrb[0].mxu0 %v8348
    %v8528 = vpop.f32.mrb[0].mxu0
    %v8529 = vadd.f32 0.0, %v8528
    %v8530 = vpop.f32.mrb[0].mxu0
    %v8531 = vpop.f32.mrb[0].mxu0
    %v8532 = vadd.f32 0.0, %v8531
    %v8533 = vpop.f32.mrb[0].mxu0
    %8534 = vmatprep.mubr.bf16.mxu0 0
    %8535 = vmatmul.mubr.bf16.gmra.mrb[0].mxu0 %v8349
    %v8536 = vpop.f32.mrb[0].mxu0
    %v8537 = vadd.f32 0.0, %v8536
    %v8538 = vpop.f32.mrb[0].mxu0
    %v8539 = vpop.f32.mrb[0].mxu0
    %v8540 = vadd.f32 0.0, %v8539
    %v8541 = vpop.f32.mrb[0].mxu0
    %8542 = vmatprep.mubr.bf16.mxu0 0
    %8543 = vmatmul.mubr.bf16.gmra.mrb[0].mxu0 %v8350
    %v8544 = vpop.f32.mrb[0].mxu0
    %v8545 = vadd.f32 0.0, %v8544
    %v8546 = vpop.f32.mrb[0].mxu0
    %v8547 = vpop.f32.mrb[0].mxu0
    %v8548 = vadd.f32 0.0, %v8547
    %v8549 = vpop.f32.mrb[0].mxu0
    %8550 = vmatprep.mubr.bf16.mxu0 0
    %8551 = vmatmul.mubr.bf16.gmra.mrb[0].mxu0 %v8351
    %v8552 = vpop.f32.mrb[0].mxu0
    %v8553 = vadd.f32 0.0, %v8552
    %v8554 = vpop.f32.mrb[0].mxu0
    %v8555 = vpop.f32.mrb[0].mxu0
    %v8556 = vadd.f32 0.0, %v8555
    %v8557 = vpop.f32.mrb[0].mxu0
    %8558 = vmatprep.mubr.bf16.mxu0 0
    %8559 = vmatmul.mubr.bf16.gmra.mrb[0].mxu0 %v8352
    %v8560 = vpop.f32.mrb[0].mxu0
    %v8561 = vadd.f32 0.0, %v8560
    %v8562 = vpop.f32.mrb[0].mxu0
    %v8563 = vpop.f32.mrb[0].mxu0
    %v8564 = vpop.f32.mrb[0].mxu0
    %8565 = vmatprep.mubr.bf16.mxu0 0
    %8566 = vmatmul.mubr.bf16.gmra.mrb[0].mxu0 %v8353
    %v8567 = vpop.f32.mrb[0].mxu0
    %v8568 = vadd.f32 0.0, %v8567
    %v8569 = vpop.f32.mrb[0].mxu0
    %v8570 = vpop.f32.mrb[0].mxu0
    %v8571 = vadd.f32 0.0, %v8570
    %v8572 = vpop.f32.mrb[0].mxu0
    %8573 = vmatprep.mubr.bf16.mxu0 0
    %8574 = vmatmul.mubr.bf16.gmra.mrb[0].mxu0 %v8354
    %v8575 = vpop.f32.mrb[0].mxu0
    %v8576 = vadd.f32 0.0, %v8575
    %v8577 = vpop.f32.mrb[0].mxu0
    %v8578 = vpop.f32.mrb[0].mxu0
    %v8579 = vadd.f32 0.0, %v8578
    %v8580 = vpop.f32.mrb[0].mxu0
    %8581 = vmatprep.mubr.bf16.mxu0 0
    %8582 = vmatmul.mubr.bf16.gmra.mrb[0].mxu0 %v8355
    %v8583 = vpop.f32.mrb[0].mxu0
    %v8584 = vadd.f32 0.0, %v8583
    %v8585 = vpop.f32.mrb[0].mxu0
    %v8586 = vpop.f32.mrb[0].mxu0
    %v8587 = vadd.f32 0.0, %v8586
    %v8588 = vpop.f32.mrb[0].mxu0
    %8589 = vmatprep.mubr.bf16.mxu0 0
    %8590 = vmatmul.mubr.bf16.gmra.mrb[0].mxu0 %v8356
    %v8591 = vpop.f32.mrb[0].mxu0
    %v8592 = vadd.f32 0.0, %v8591
    %v8593 = vpop.f32.mrb[0].mxu0
    %v8594 = vpop.f32.mrb[0].mxu0
    %v8595 = vadd.f32 0.0, %v8594
    %v8596 = vpop.f32.mrb[0].mxu0
    %8597 = vmatprep.mubr.bf16.mxu0 0
    %8598 = vmatmul.mubr.bf16.gmra.mrb[0].mxu0 %v8357
    %v8599 = vpop.f32.mrb[0].mxu0
    %v8600 = vadd.f32 0.0, %v8599
    %v8601 = vpop.f32.mrb[0].mxu0
    %v8602 = vpop.f32.mrb[0].mxu0
    %v8603 = vadd.f32 0.0, %v8602
    %v8604 = vpop.f32.mrb[0].mxu0
    %8605 = vmatprep.mubr.bf16.mxu0 0
    %8606 = vmatmul.mubr.bf16.gmra.mrb[0].mxu0 %v8358
    %v8607 = vpop.f32.mrb[0].mxu0
    %v8608 = vadd.f32 0.0, %v8607
    %v8609 = vpop.f32.mrb[0].mxu0
    %v8610 = vpop.f32.mrb[0].mxu0
    %v8611 = vadd.f32 0.0, %v8610
    %v8612 = vpop.f32.mrb[0].mxu0
    %8613 = vmatprep.mubr.bf16.mxu0 0
    %8614 = vmatmul.mubr.bf16.gmra.mrb[0].mxu0 %v8359
    %v8615 = vpop.f32.mrb[0].mxu0
    %v8616 = vadd.f32 0.0, %v8615
    %v8617 = vpop.f32.mrb[0].mxu0
    %v8618 = vpop.f32.mrb[0].mxu0
    %v8619 = vadd.f32 0.0, %v8618
    %v8620 = vpop.f32.mrb[0].mxu0
    %8621 = vmatprep.mubr.bf16.mxu0 0
    %8622 = vmatmul.mubr.bf16.gmra.mrb[0].mxu0 %v8360
    %v8623 = vpop.f32.mrb[0].mxu0
    %v8624 = vadd.f32 0.0, %v8623
    %v8625 = vpop.f32.mrb[0].mxu0
    %v8626 = vpop.f32.mrb[0].mxu0
    %v8627 = vadd.f32 0.0, %v8626
    %v8628 = vpop.f32.mrb[0].mxu0
    %8629 = vmatprep.mubr.bf16.mxu0 0
    %8630 = vmatmul.mubr.bf16.gmra.mrb[0].mxu0 %v8361
    %v8631 = vpop.f32.mrb[0].mxu0
    %v8632 = vadd.f32 0.0, %v8631
    %v8633 = vpop.f32.mrb[0].mxu0
    %v8634 = vpop.f32.mrb[0].mxu0
    %v8635 = vadd.f32 0.0, %v8634
    %v8636 = vpop.f32.mrb[0].mxu0
    %8637 = vmatprep.mubr.bf16.mxu0 0
    %8638 = vmatmul.mubr.bf16.gmra.mrb[0].mxu0 %v8362
    %v8639 = vpop.f32.mrb[0].mxu0
    %v8640 = vadd.f32 0.0, %v8639
    %v8641 = vpop.f32.mrb[0].mxu0
    %v8642 = vpop.f32.mrb[0].mxu0
    %v8643 = vadd.f32 0.0, %v8642
    %v8644 = vpop.f32.mrb[0].mxu0
    %8645 = vmatprep.mubr.bf16.mxu0 0
    %8646 = vmatmul.mubr.bf16.gmra.mrb[0].mxu0 %v8363
    %v8647 = vpop.f32.mrb[0].mxu0
    %v8648 = vadd.f32 0.0, %v8647
    %v8649 = vpop.f32.mrb[0].mxu0
    %v8650 = vpop.f32.mrb[0].mxu0
    %v8651 = vadd.f32 0.0, %v8650
    %v8652 = vpop.f32.mrb[0].mxu0
    %8653 = vmatprep.mubr.bf16.mxu0 0
    %8654 = vmatmul.mubr.bf16.gmra.mrb[0].mxu0 %v8364
    %v8655 = vpop.f32.mrb[0].mxu0
    %v8656 = vadd.f32 0.0, %v8655
    %v8657 = vpop.f32.mrb[0].mxu0
    %v8658 = vpop.f32.mrb[0].mxu0
    %v8659 = vadd.f32 0.0, %v8658
    %v8660 = vpop.f32.mrb[0].mxu0
    %8661 = vmatprep.mubr.bf16.mxu0 0
    %8662 = vmatmul.mubr.bf16.gmra.mrb[0].mxu0 %v8365
    %v8663 = vpop.f32.mrb[0].mxu0
    %v8664 = vadd.f32 0.0, %v8663
    %v8665 = vpop.f32.mrb[0].mxu0
    %v8666 = vpop.f32.mrb[0].mxu0
    %v8667 = vpop.f32.mrb[0].mxu0
    %8668 = vdwg.mxu0
    %vm8711 = vcmask 1046528
    %v8712 = vrot.slane %v8465, 1
    %v8713 = vrot.slane %v8468, 1
    %v8714 = vsel %vm8711, %v8712, %v8713
    %v8715 = vrot.slane %v8473, 1
    %v8716 = vsel %vm8711, %v8713, %v8715
    %v8717 = vrot.slane %v8476, 1
    %v8718 = vsel %vm8711, %v8715, %v8717
    %v8719 = vrot.slane %v8481, 1
    %v8720 = vsel %vm8711, %v8717, %v8719
    %v8721 = vrot.slane %v8484, 1
    %v8722 = vsel %vm8711, %v8719, %v8721
    %v8723 = vrot.slane %v8489, 1
    %v8724 = vsel %vm8711, %v8721, %v8723
    %v8725 = vrot.slane %v8492, 1
    %v8726 = vsel %vm8711, %v8723, %v8725
    %v8727 = vrot.slane %v8497, 1
    %v8728 = vsel %vm8711, %v8725, %v8727
    %v8729 = vrot.slane %v8500, 1
    %v8730 = vsel %vm8711, %v8727, %v8729
    %v8731 = vrot.slane %v8505, 1
    %v8732 = vsel %vm8711, %v8729, %v8731
    %v8733 = vrot.slane %v8508, 1
    %v8734 = vsel %vm8711, %v8731, %v8733
    %v8735 = vrot.slane %v8513, 1
    %v8736 = vsel %vm8711, %v8733, %v8735
    %v8737 = vrot.slane %v8516, 1
    %v8738 = vsel %vm8711, %v8735, %v8737
    %v8739 = vrot.slane %v8521, 1
    %v8740 = vsel %vm8711, %v8737, %v8739
    %v8741 = vrot.slane %v8524, 1
    %v8742 = vsel %vm8711, %v8739, %v8741
    %v8743 = vrot.slane %v8529, 1
    %v8744 = vsel %vm8711, %v8741, %v8743
    %v8745 = vrot.slane %v8532, 1
    %v8746 = vsel %vm8711, %v8743, %v8745
    %v8747 = vrot.slane %v8537, 1
    %v8748 = vsel %vm8711, %v8745, %v8747
    %v8749 = vrot.slane %v8540, 1
    %v8750 = vsel %vm8711, %v8747, %v8749
    %v8751 = vrot.slane %v8545, 1
    %v8752 = vsel %vm8711, %v8749, %v8751
    %v8753 = vrot.slane %v8568, 1
    %v8754 = vrot.slane %v8571, 1
    %v8755 = vsel %vm8711, %v8753, %v8754
    %v8756 = vrot.slane %v8576, 1
    %v8757 = vsel %vm8711, %v8754, %v8756
    %v8758 = vrot.slane %v8579, 1
    %v8759 = vsel %vm8711, %v8756, %v8758
    %v8760 = vrot.slane %v8584, 1
    %v8761 = vsel %vm8711, %v8758, %v8760
    %v8762 = vrot.slane %v8587, 1
    %v8763 = vsel %vm8711, %v8760, %v8762
    %v8764 = vrot.slane %v8592, 1
    %v8765 = vsel %vm8711, %v8762, %v8764
    %v8766 = vrot.slane %v8595, 1
    %v8767 = vsel %vm8711, %v8764, %v8766
    %v8768 = vrot.slane %v8600, 1
    %v8769 = vsel %vm8711, %v8766, %v8768
    %v8770 = vrot.slane %v8603, 1
    %v8771 = vsel %vm8711, %v8768, %v8770
    %v8772 = vrot.slane %v8608, 1
    %v8773 = vsel %vm8711, %v8770, %v8772
    %v8774 = vrot.slane %v8611, 1
    %v8775 = vsel %vm8711, %v8772, %v8774
    %v8776 = vrot.slane %v8616, 1
    %v8777 = vsel %vm8711, %v8774, %v8776
    %v8778 = vrot.slane %v8619, 1
    %v8779 = vsel %vm8711, %v8776, %v8778
    %v8780 = vrot.slane %v8624, 1
    %v8781 = vsel %vm8711, %v8778, %v8780
    %v8782 = vrot.slane %v8627, 1
    %v8783 = vsel %vm8711, %v8780, %v8782
    %v8784 = vrot.slane %v8632, 1
    %v8785 = vsel %vm8711, %v8782, %v8784
    %v8786 = vrot.slane %v8635, 1
    %v8787 = vsel %vm8711, %v8784, %v8786
    %v8788 = vrot.slane %v8640, 1
    %v8789 = vsel %vm8711, %v8786, %v8788
    %v8790 = vrot.slane %v8643, 1
    %v8791 = vsel %vm8711, %v8788, %v8790
    %v8792 = vrot.slane %v8648, 1
    %v8793 = vsel %vm8711, %v8790, %v8792
    %8794 = vrot.lane.b32.xlu0 %v8714, 120
    %v8795 = vpop.permute.xlu0 %8794
    %8796 = vrot.lane.b32.xlu0 %v8716, 120
    %v8797 = vpop.permute.xlu0 %8796
    %8798 = vrot.lane.b32.xlu0 %v8718, 120
    %v8799 = vpop.permute.xlu0 %8798
    %8800 = vrot.lane.b32.xlu0 %v8720, 120
    %v8801 = vpop.permute.xlu0 %8800
    %8802 = vrot.lane.b32.xlu0 %v8722, 120
    %v8803 = vpop.permute.xlu0 %8802
    %8804 = vrot.lane.b32.xlu0 %v8724, 120
    %v8805 = vpop.permute.xlu0 %8804
    %8806 = vrot.lane.b32.xlu0 %v8726, 120
    %v8807 = vpop.permute.xlu0 %8806
    %8808 = vrot.lane.b32.xlu0 %v8728, 120
    %v8809 = vpop.permute.xlu0 %8808
    %8810 = vrot.lane.b32.xlu0 %v8730, 120
    %v8811 = vpop.permute.xlu0 %8810
    %8812 = vrot.lane.b32.xlu0 %v8732, 120
    %v8813 = vpop.permute.xlu0 %8812
    %8814 = vrot.lane.b32.xlu0 %v8734, 120
    %v8815 = vpop.permute.xlu0 %8814
    %8816 = vrot.lane.b32.xlu0 %v8736, 120
    %v8817 = vpop.permute.xlu0 %8816
    %8818 = vrot.lane.b32.xlu0 %v8738, 120
    %v8819 = vpop.permute.xlu0 %8818
    %8820 = vrot.lane.b32.xlu0 %v8740, 120
    %v8821 = vpop.permute.xlu0 %8820
    %8822 = vrot.lane.b32.xlu0 %v8742, 120
    %v8823 = vpop.permute.xlu0 %8822
    %8824 = vrot.lane.b32.xlu0 %v8744, 120
    %v8825 = vpop.permute.xlu0 %8824
    %8826 = vrot.lane.b32.xlu0 %v8746, 120
    %v8827 = vpop.permute.xlu0 %8826
    %8828 = vrot.lane.b32.xlu0 %v8748, 120
    %v8829 = vpop.permute.xlu0 %8828
    %8830 = vrot.lane.b32.xlu0 %v8750, 120
    %v8831 = vpop.permute.xlu0 %8830
    %8832 = vrot.lane.b32.xlu0 %v8752, 120
    %v8833 = vpop.permute.xlu0 %8832
    %8834 = vrot.lane.b32.xlu0 %v8755, 120
    %v8835 = vpop.permute.xlu0 %8834
    %8836 = vrot.lane.b32.xlu0 %v8757, 120
    %v8837 = vpop.permute.xlu0 %8836
    %8838 = vrot.lane.b32.xlu0 %v8759, 120
    %v8839 = vpop.permute.xlu0 %8838
    %8840 = vrot.lane.b32.xlu0 %v8761, 120
    %v8841 = vpop.permute.xlu0 %8840
    %8842 = vrot.lane.b32.xlu0 %v8763, 120
    %v8843 = vpop.permute.xlu0 %8842
    %8844 = vrot.lane.b32.xlu0 %v8765, 120
    %v8845 = vpop.permute.xlu0 %8844
    %8846 = vrot.lane.b32.xlu0 %v8767, 120
    %v8847 = vpop.permute.xlu0 %8846
    %8848 = vrot.lane.b32.xlu0 %v8769, 120
    %v8849 = vpop.permute.xlu0 %8848
    %8850 = vrot.lane.b32.xlu0 %v8771, 120
    %v8851 = vpop.permute.xlu0 %8850
    %8852 = vrot.lane.b32.xlu0 %v8773, 120
    %v8853 = vpop.permute.xlu0 %8852
    %8854 = vrot.lane.b32.xlu0 %v8775, 120
    %v8855 = vpop.permute.xlu0 %8854
    %8856 = vrot.lane.b32.xlu0 %v8777, 120
    %v8857 = vpop.permute.xlu0 %8856
    %8858 = vrot.lane.b32.xlu0 %v8779, 120
    %v8859 = vpop.permute.xlu0 %8858
    %8860 = vrot.lane.b32.xlu0 %v8781, 120
    %v8861 = vpop.permute.xlu0 %8860
    %8862 = vrot.lane.b32.xlu0 %v8783, 120
    %v8863 = vpop.permute.xlu0 %8862
    %8864 = vrot.lane.b32.xlu0 %v8785, 120
    %v8865 = vpop.permute.xlu0 %8864
    %8866 = vrot.lane.b32.xlu0 %v8787, 120
    %v8867 = vpop.permute.xlu0 %8866
    %8868 = vrot.lane.b32.xlu0 %v8789, 120
    %v8869 = vpop.permute.xlu0 %8868
    %8870 = vrot.lane.b32.xlu0 %v8791, 120
    %v8871 = vpop.permute.xlu0 %8870
    %8872 = vrot.lane.b32.xlu0 %v8793, 120
    %v8873 = vpop.permute.xlu0 %8872
    %v8914 = vadd.f32 %v8465, %v8795
    %v8915 = vadd.f32 %v8468, %v8797
    %v8916 = vadd.f32 %v8473, %v8799
    %v8917 = vadd.f32 %v8476, %v8801
    %v8918 = vadd.f32 %v8481, %v8803
    %v8919 = vadd.f32 %v8484, %v8805
    %v8920 = vadd.f32 %v8489, %v8807
    %v8921 = vadd.f32 %v8492, %v8809
    %v8922 = vadd.f32 %v8497, %v8811
    %v8923 = vadd.f32 %v8500, %v8813
    %v8924 = vadd.f32 %v8505, %v8815
    %v8925 = vadd.f32 %v8508, %v8817
    %v8926 = vadd.f32 %v8513, %v8819
    %v8927 = vadd.f32 %v8516, %v8821
    %v8928 = vadd.f32 %v8521, %v8823
    %v8929 = vadd.f32 %v8524, %v8825
    %v8930 = vadd.f32 %v8529, %v8827
    %v8931 = vadd.f32 %v8532, %v8829
    %v8932 = vadd.f32 %v8537, %v8831
    %v8933 = vadd.f32 %v8540, %v8833
    %v8934 = vadd.f32 %v8568, %v8835
    %v8935 = vadd.f32 %v8571, %v8837
    %v8936 = vadd.f32 %v8576, %v8839
    %v8937 = vadd.f32 %v8579, %v8841
    %v8938 = vadd.f32 %v8584, %v8843
    %v8939 = vadd.f32 %v8587, %v8845
    %v8940 = vadd.f32 %v8592, %v8847
    %v8941 = vadd.f32 %v8595, %v8849
    %v8942 = vadd.f32 %v8600, %v8851
    %v8943 = vadd.f32 %v8603, %v8853
    %v8944 = vadd.f32 %v8608, %v8855
    %v8945 = vadd.f32 %v8611, %v8857
    %v8946 = vadd.f32 %v8616, %v8859
    %v8947 = vadd.f32 %v8619, %v8861
    %v8948 = vadd.f32 %v8624, %v8863
    %v8949 = vadd.f32 %v8627, %v8865
    %v8950 = vadd.f32 %v8632, %v8867
    %v8951 = vadd.f32 %v8635, %v8869
    %v8952 = vadd.f32 %v8640, %v8871
    %v8953 = vadd.f32 %v8643, %v8873
    %8956 = vrot.lane.b32.xlu0 %v8473, 112
    %v8957 = vpop.permute.xlu0 %8956
    %8958 = vrot.lane.b32.xlu0 %v8476, 112
    %v8959 = vpop.permute.xlu0 %8958
    %8960 = vrot.lane.b32.xlu0 %v8481, 112
    %v8961 = vpop.permute.xlu0 %8960
    %8962 = vrot.lane.b32.xlu0 %v8484, 112
    %v8963 = vpop.permute.xlu0 %8962
    %8964 = vrot.lane.b32.xlu0 %v8489, 112
    %v8965 = vpop.permute.xlu0 %8964
    %8966 = vrot.lane.b32.xlu0 %v8492, 112
    %v8967 = vpop.permute.xlu0 %8966
    %8968 = vrot.lane.b32.xlu0 %v8497, 112
    %v8969 = vpop.permute.xlu0 %8968
    %8970 = vrot.lane.b32.xlu0 %v8500, 112
    %v8971 = vpop.permute.xlu0 %8970
    %8972 = vrot.lane.b32.xlu0 %v8505, 112
    %v8973 = vpop.permute.xlu0 %8972
    %8974 = vrot.lane.b32.xlu0 %v8508, 112
    %v8975 = vpop.permute.xlu0 %8974
    %8976 = vrot.lane.b32.xlu0 %v8513, 112
    %v8977 = vpop.permute.xlu0 %8976
    %8978 = vrot.lane.b32.xlu0 %v8516, 112
    %v8979 = vpop.permute.xlu0 %8978
    %8980 = vrot.lane.b32.xlu0 %v8521, 112
    %v8981 = vpop.permute.xlu0 %8980
    %8982 = vrot.lane.b32.xlu0 %v8524, 112
    %v8983 = vpop.permute.xlu0 %8982
    %8984 = vrot.lane.b32.xlu0 %v8529, 112
    %v8985 = vpop.permute.xlu0 %8984
    %8986 = vrot.lane.b32.xlu0 %v8532, 112
    %v8987 = vpop.permute.xlu0 %8986
    %8988 = vrot.lane.b32.xlu0 %v8537, 112
    %v8989 = vpop.permute.xlu0 %8988
    %8990 = vrot.lane.b32.xlu0 %v8540, 112
    %v8991 = vpop.permute.xlu0 %8990
    %8992 = vrot.lane.b32.xlu0 %v8545, 112
    %v8993 = vpop.permute.xlu0 %8992
    %8994 = vrot.lane.b32.xlu0 %v8548, 112
    %v8995 = vpop.permute.xlu0 %8994
    %8996 = vrot.lane.b32.xlu0 %v8576, 112
    %v8997 = vpop.permute.xlu0 %8996
    %8998 = vrot.lane.b32.xlu0 %v8579, 112
    %v8999 = vpop.permute.xlu0 %8998
    %9000 = vrot.lane.b32.xlu0 %v8584, 112
    %v9001 = vpop.permute.xlu0 %9000
    %9002 = vrot.lane.b32.xlu0 %v8587, 112
    %v9003 = vpop.permute.xlu0 %9002
    %9004 = vrot.lane.b32.xlu0 %v8592, 112
    %v9005 = vpop.permute.xlu0 %9004
    %9006 = vrot.lane.b32.xlu0 %v8595, 112
    %v9007 = vpop.permute.xlu0 %9006
    %9008 = vrot.lane.b32.xlu0 %v8600, 112
    %v9009 = vpop.permute.xlu0 %9008
    %9010 = vrot.lane.b32.xlu0 %v8603, 112
    %v9011 = vpop.permute.xlu0 %9010
    %9012 = vrot.lane.b32.xlu0 %v8608, 112
    %v9013 = vpop.permute.xlu0 %9012
    %9014 = vrot.lane.b32.xlu0 %v8611, 112
    %v9015 = vpop.permute.xlu0 %9014
    %9016 = vrot.lane.b32.xlu0 %v8616, 112
    %v9017 = vpop.permute.xlu0 %9016
    %9018 = vrot.lane.b32.xlu0 %v8619, 112
    %v9019 = vpop.permute.xlu0 %9018
    %9020 = vrot.lane.b32.xlu0 %v8624, 112
    %v9021 = vpop.permute.xlu0 %9020
    %9022 = vrot.lane.b32.xlu0 %v8627, 112
    %v9023 = vpop.permute.xlu0 %9022
    %9024 = vrot.lane.b32.xlu0 %v8632, 112
    %v9025 = vpop.permute.xlu0 %9024
    %9026 = vrot.lane.b32.xlu0 %v8635, 112
    %v9027 = vpop.permute.xlu0 %9026
    %9028 = vrot.lane.b32.xlu0 %v8640, 112
    %v9029 = vpop.permute.xlu0 %9028
    %9030 = vrot.lane.b32.xlu0 %v8643, 112
    %v9031 = vpop.permute.xlu0 %9030
    %9032 = vrot.lane.b32.xlu0 %v8648, 112
    %v9033 = vpop.permute.xlu0 %9032
    %9034 = vrot.lane.b32.xlu0 %v8651, 112
    %v9035 = vpop.permute.xlu0 %9034
    %v9076 = vadd.f32 %v8914, %v8957
    %v9077 = vadd.f32 %v8915, %v8959
    %v9078 = vadd.f32 %v8916, %v8961
    %v9079 = vadd.f32 %v8917, %v8963
    %v9080 = vadd.f32 %v8918, %v8965
    %v9081 = vadd.f32 %v8919, %v8967
    %v9082 = vadd.f32 %v8920, %v8969
    %v9083 = vadd.f32 %v8921, %v8971
    %v9084 = vadd.f32 %v8922, %v8973
    %v9085 = vadd.f32 %v8923, %v8975
    %v9086 = vadd.f32 %v8924, %v8977
    %v9087 = vadd.f32 %v8925, %v8979
    %v9088 = vadd.f32 %v8926, %v8981
    %v9089 = vadd.f32 %v8927, %v8983
    %v9090 = vadd.f32 %v8928, %v8985
    %v9091 = vadd.f32 %v8929, %v8987
    %v9092 = vadd.f32 %v8930, %v8989
    %v9093 = vadd.f32 %v8931, %v8991
    %v9094 = vadd.f32 %v8932, %v8993
    %v9095 = vadd.f32 %v8933, %v8995
    %v9096 = vadd.f32 %v8934, %v8997
    %v9097 = vadd.f32 %v8935, %v8999
    %v9098 = vadd.f32 %v8936, %v9001
    %v9099 = vadd.f32 %v8937, %v9003
    %v9100 = vadd.f32 %v8938, %v9005
    %v9101 = vadd.f32 %v8939, %v9007
    %v9102 = vadd.f32 %v8940, %v9009
    %v9103 = vadd.f32 %v8941, %v9011
    %v9104 = vadd.f32 %v8942, %v9013
    %v9105 = vadd.f32 %v8943, %v9015
    %v9106 = vadd.f32 %v8944, %v9017
    %v9107 = vadd.f32 %v8945, %v9019
    %v9108 = vadd.f32 %v8946, %v9021
    %v9109 = vadd.f32 %v8947, %v9023
    %v9110 = vadd.f32 %v8948, %v9025
    %v9111 = vadd.f32 %v8949, %v9027
    %v9112 = vadd.f32 %v8950, %v9029
    %v9113 = vadd.f32 %v8951, %v9031
    %v9114 = vadd.f32 %v8952, %v9033
    %v9115 = vadd.f32 %v8953, %v9035
    %v9118 = vrot.slane %v8548, 1
    %v9119 = vsel %vm8711, %v8751, %v9118
    %v9120 = vrot.slane %v8553, 1
    %v9121 = vsel %vm8711, %v9118, %v9120
    %v9122 = vrot.slane %v8651, 1
    %v9123 = vsel %vm8711, %v8792, %v9122
    %v9124 = vrot.slane %v8656, 1
    %v9125 = vsel %vm8711, %v9122, %v9124
    %9126 = vrot.lane.b32.xlu0 %v8718, 104
    %v9127 = vpop.permute.xlu0 %9126
    %9128 = vrot.lane.b32.xlu0 %v8720, 104
    %v9129 = vpop.permute.xlu0 %9128
    %9130 = vrot.lane.b32.xlu0 %v8722, 104
    %v9131 = vpop.permute.xlu0 %9130
    %9132 = vrot.lane.b32.xlu0 %v8724, 104
    %v9133 = vpop.permute.xlu0 %9132
    %9134 = vrot.lane.b32.xlu0 %v8726, 104
    %v9135 = vpop.permute.xlu0 %9134
    %9136 = vrot.lane.b32.xlu0 %v8728, 104
    %v9137 = vpop.permute.xlu0 %9136
    %9138 = vrot.lane.b32.xlu0 %v8730, 104
    %v9139 = vpop.permute.xlu0 %9138
    %9140 = vrot.lane.b32.xlu0 %v8732, 104
    %v9141 = vpop.permute.xlu0 %9140
    %9142 = vrot.lane.b32.xlu0 %v8734, 104
    %v9143 = vpop.permute.xlu0 %9142
    %9144 = vrot.lane.b32.xlu0 %v8736, 104
    %v9145 = vpop.permute.xlu0 %9144
    %9146 = vrot.lane.b32.xlu0 %v8738, 104
    %v9147 = vpop.permute.xlu0 %9146
    %9148 = vrot.lane.b32.xlu0 %v8740, 104
    %v9149 = vpop.permute.xlu0 %9148
    %9150 = vrot.lane.b32.xlu0 %v8742, 104
    %v9151 = vpop.permute.xlu0 %9150
    %9152 = vrot.lane.b32.xlu0 %v8744, 104
    %v9153 = vpop.permute.xlu0 %9152
    %9154 = vrot.lane.b32.xlu0 %v8746, 104
    %v9155 = vpop.permute.xlu0 %9154
    %9156 = vrot.lane.b32.xlu0 %v8748, 104
    %v9157 = vpop.permute.xlu0 %9156
    %9158 = vrot.lane.b32.xlu0 %v8750, 104
    %v9159 = vpop.permute.xlu0 %9158
    %9160 = vrot.lane.b32.xlu0 %v8752, 104
    %v9161 = vpop.permute.xlu0 %9160
    %9162 = vrot.lane.b32.xlu0 %v9119, 104
    %v9163 = vpop.permute.xlu0 %9162
    %9164 = vrot.lane.b32.xlu0 %v9121, 104
    %v9165 = vpop.permute.xlu0 %9164
    %9166 = vrot.lane.b32.xlu0 %v8759, 104
    %v9167 = vpop.permute.xlu0 %9166
    %9168 = vrot.lane.b32.xlu0 %v8761, 104
    %v9169 = vpop.permute.xlu0 %9168
    %9170 = vrot.lane.b32.xlu0 %v8763, 104
    %v9171 = vpop.permute.xlu0 %9170
    %9172 = vrot.lane.b32.xlu0 %v8765, 104
    %v9173 = vpop.permute.xlu0 %9172
    %9174 = vrot.lane.b32.xlu0 %v8767, 104
    %v9175 = vpop.permute.xlu0 %9174
    %9176 = vrot.lane.b32.xlu0 %v8769, 104
    %v9177 = vpop.permute.xlu0 %9176
    %9178 = vrot.lane.b32.xlu0 %v8771, 104
    %v9179 = vpop.permute.xlu0 %9178
    %9180 = vrot.lane.b32.xlu0 %v8773, 104
    %v9181 = vpop.permute.xlu0 %9180
    %9182 = vrot.lane.b32.xlu0 %v8775, 104
    %v9183 = vpop.permute.xlu0 %9182
    %9184 = vrot.lane.b32.xlu0 %v8777, 104
    %v9185 = vpop.permute.xlu0 %9184
    %9186 = vrot.lane.b32.xlu0 %v8779, 104
    %v9187 = vpop.permute.xlu0 %9186
    %9188 = vrot.lane.b32.xlu0 %v8781, 104
    %v9189 = vpop.permute.xlu0 %9188
    %9190 = vrot.lane.b32.xlu0 %v8783, 104
    %v9191 = vpop.permute.xlu0 %9190
    %9192 = vrot.lane.b32.xlu0 %v8785, 104
    %v9193 = vpop.permute.xlu0 %9192
    %9194 = vrot.lane.b32.xlu0 %v8787, 104
    %v9195 = vpop.permute.xlu0 %9194
    %9196 = vrot.lane.b32.xlu0 %v8789, 104
    %v9197 = vpop.permute.xlu0 %9196
    %9198 = vrot.lane.b32.xlu0 %v8791, 104
    %v9199 = vpop.permute.xlu0 %9198
    %9200 = vrot.lane.b32.xlu0 %v8793, 104
    %v9201 = vpop.permute.xlu0 %9200
    %9202 = vrot.lane.b32.xlu0 %v9123, 104
    %v9203 = vpop.permute.xlu0 %9202
    %9204 = vrot.lane.b32.xlu0 %v9125, 104
    %v9205 = vpop.permute.xlu0 %9204
    %v9246 = vadd.f32 %v9076, %v9127
    %v9247 = vadd.f32 %v9077, %v9129
    %v9248 = vadd.f32 %v9078, %v9131
    %v9249 = vadd.f32 %v9079, %v9133
    %v9250 = vadd.f32 %v9080, %v9135
    %v9251 = vadd.f32 %v9081, %v9137
    %v9252 = vadd.f32 %v9082, %v9139
    %v9253 = vadd.f32 %v9083, %v9141
    %v9254 = vadd.f32 %v9084, %v9143
    %v9255 = vadd.f32 %v9085, %v9145
    %v9256 = vadd.f32 %v9086, %v9147
    %v9257 = vadd.f32 %v9087, %v9149
    %v9258 = vadd.f32 %v9088, %v9151
    %v9259 = vadd.f32 %v9089, %v9153
    %v9260 = vadd.f32 %v9090, %v9155
    %v9261 = vadd.f32 %v9091, %v9157
    %v9262 = vadd.f32 %v9092, %v9159
    %v9263 = vadd.f32 %v9093, %v9161
    %v9264 = vadd.f32 %v9094, %v9163
    %v9265 = vadd.f32 %v9095, %v9165
    %v9266 = vadd.f32 %v9096, %v9167
    %v9267 = vadd.f32 %v9097, %v9169
    %v9268 = vadd.f32 %v9098, %v9171
    %v9269 = vadd.f32 %v9099, %v9173
    %v9270 = vadd.f32 %v9100, %v9175
    %v9271 = vadd.f32 %v9101, %v9177
    %v9272 = vadd.f32 %v9102, %v9179
    %v9273 = vadd.f32 %v9103, %v9181
    %v9274 = vadd.f32 %v9104, %v9183
    %v9275 = vadd.f32 %v9105, %v9185
    %v9276 = vadd.f32 %v9106, %v9187
    %v9277 = vadd.f32 %v9107, %v9189
    %v9278 = vadd.f32 %v9108, %v9191
    %v9279 = vadd.f32 %v9109, %v9193
    %v9280 = vadd.f32 %v9110, %v9195
    %v9281 = vadd.f32 %v9111, %v9197
    %v9282 = vadd.f32 %v9112, %v9199
    %v9283 = vadd.f32 %v9113, %v9201
    %v9284 = vadd.f32 %v9114, %v9203
    %v9285 = vadd.f32 %v9115, %v9205
    %v9286 = vsub.f32 0.0, %v9246
    %v9287 = vsub.f32 0.0, %v9247
    %v9288 = vsub.f32 0.0, %v9248
    %v9289 = vsub.f32 0.0, %v9249
    %v9290 = vsub.f32 0.0, %v9250
    %v9291 = vsub.f32 0.0, %v9251
    %v9292 = vsub.f32 0.0, %v9252
    %v9293 = vsub.f32 0.0, %v9253
    %v9294 = vsub.f32 0.0, %v9254
    %v9295 = vsub.f32 0.0, %v9255
    %v9296 = vsub.f32 0.0, %v9256
    %v9297 = vsub.f32 0.0, %v9257
    %v9298 = vsub.f32 0.0, %v9258
    %v9299 = vsub.f32 0.0, %v9259
    %v9300 = vsub.f32 0.0, %v9260
    %v9301 = vsub.f32 0.0, %v9261
    %v9302 = vsub.f32 0.0, %v9262
    %v9303 = vsub.f32 0.0, %v9263
    %v9304 = vsub.f32 0.0, %v9264
    %v9305 = vsub.f32 0.0, %v9265
    %v9306 = vsub.f32 0.0, %v9266
    %v9307 = vsub.f32 0.0, %v9267
    %v9308 = vsub.f32 0.0, %v9268
    %v9309 = vsub.f32 0.0, %v9269
    %v9310 = vsub.f32 0.0, %v9270
    %v9311 = vsub.f32 0.0, %v9271
    %v9312 = vsub.f32 0.0, %v9272
    %v9313 = vsub.f32 0.0, %v9273
    %v9314 = vsub.f32 0.0, %v9274
    %v9315 = vsub.f32 0.0, %v9275
    %v9316 = vsub.f32 0.0, %v9276
    %v9317 = vsub.f32 0.0, %v9277
    %v9318 = vsub.f32 0.0, %v9278
    %v9319 = vsub.f32 0.0, %v9279
    %v9320 = vsub.f32 0.0, %v9280
    %v9321 = vsub.f32 0.0, %v9281
    %v9322 = vsub.f32 0.0, %v9282
    %v9323 = vsub.f32 0.0, %v9283
    %v9324 = vsub.f32 0.0, %v9284
    %v9325 = vsub.f32 0.0, %v9285
    %v9326 = vmul.f32 %v9286, 1.442695
    %v9327 = vpow.pop %v9326
    %v9328 = vmul.f32 %v9287, 1.442695
    %v9329 = vpow.pop %v9328
    %v9330 = vmul.f32 %v9288, 1.442695
    %v9331 = vpow.pop %v9330
    %v9332 = vmul.f32 %v9289, 1.442695
    %v9333 = vpow.pop %v9332
    %v9334 = vmul.f32 %v9290, 1.442695
    %v9335 = vpow.pop %v9334
    %v9336 = vmul.f32 %v9291, 1.442695
    %v9337 = vpow.pop %v9336
    %v9338 = vmul.f32 %v9292, 1.442695
    %v9339 = vpow.pop %v9338
    %v9340 = vmul.f32 %v9293, 1.442695
    %v9341 = vpow.pop %v9340
    %v9342 = vmul.f32 %v9294, 1.442695
    %v9343 = vpow.pop %v9342
    %v9344 = vmul.f32 %v9295, 1.442695
    %v9345 = vpow.pop %v9344
    %v9346 = vmul.f32 %v9296, 1.442695
    %v9347 = vpow.pop %v9346
    %v9348 = vmul.f32 %v9297, 1.442695
    %v9349 = vpow.pop %v9348
    %v9350 = vmul.f32 %v9298, 1.442695
    %v9351 = vpow.pop %v9350
    %v9352 = vmul.f32 %v9299, 1.442695
    %v9353 = vpow.pop %v9352
    %v9354 = vmul.f32 %v9300, 1.442695
    %v9355 = vpow.pop %v9354
    %v9356 = vmul.f32 %v9301, 1.442695
    %v9357 = vpow.pop %v9356
    %v9358 = vmul.f32 %v9302, 1.442695
    %v9359 = vpow.pop %v9358
    %v9360 = vmul.f32 %v9303, 1.442695
    %v9361 = vpow.pop %v9360
    %v9362 = vmul.f32 %v9304, 1.442695
    %v9363 = vpow.pop %v9362
    %v9364 = vmul.f32 %v9305, 1.442695
    %v9365 = vpow.pop %v9364
    %v9366 = vmul.f32 %v9306, 1.442695
    %v9367 = vpow.pop %v9366
    %v9368 = vmul.f32 %v9307, 1.442695
    %v9369 = vpow.pop %v9368
    %v9370 = vmul.f32 %v9308, 1.442695
    %v9371 = vpow.pop %v9370
    %v9372 = vmul.f32 %v9309, 1.442695
    %v9373 = vpow.pop %v9372
    %v9374 = vmul.f32 %v9310, 1.442695
    %v9375 = vpow.pop %v9374
    %v9376 = vmul.f32 %v9311, 1.442695
    %v9377 = vpow.pop %v9376
    %v9378 = vmul.f32 %v9312, 1.442695
    %v9379 = vpow.pop %v9378
    %v9380 = vmul.f32 %v9313, 1.442695
    %v9381 = vpow.pop %v9380
    %v9382 = vmul.f32 %v9314, 1.442695
    %v9383 = vpow.pop %v9382
    %v9384 = vmul.f32 %v9315, 1.442695
    %v9385 = vpow.pop %v9384
    %v9386 = vmul.f32 %v9316, 1.442695
    %v9387 = vpow.pop %v9386
    %v9388 = vmul.f32 %v9317, 1.442695
    %v9389 = vpow.pop %v9388
    %v9390 = vmul.f32 %v9318, 1.442695
    %v9391 = vpow.pop %v9390
    %v9392 = vmul.f32 %v9319, 1.442695
    %v9393 = vpow.pop %v9392
    %v9394 = vmul.f32 %v9320, 1.442695
    %v9395 = vpow.pop %v9394
    %v9396 = vmul.f32 %v9321, 1.442695
    %v9397 = vpow.pop %v9396
    %v9398 = vmul.f32 %v9322, 1.442695
    %v9399 = vpow.pop %v9398
    %v9400 = vmul.f32 %v9323, 1.442695
    %v9401 = vpow.pop %v9400
    %v9402 = vmul.f32 %v9324, 1.442695
    %v9403 = vpow.pop %v9402
    %v9404 = vmul.f32 %v9325, 1.442695
    %v9405 = vpow.pop %v9404
    %v9406 = vadd.f32 %v9327, 1.0
    %v9407 = vadd.f32 %v9329, 1.0
    %v9408 = vadd.f32 %v9331, 1.0
    %v9409 = vadd.f32 %v9333, 1.0
    %v9410 = vadd.f32 %v9335, 1.0
    %v9411 = vadd.f32 %v9337, 1.0
    %v9412 = vadd.f32 %v9339, 1.0
    %v9413 = vadd.f32 %v9341, 1.0
    %v9414 = vadd.f32 %v9343, 1.0
    %v9415 = vadd.f32 %v9345, 1.0
    %v9416 = vadd.f32 %v9347, 1.0
    %v9417 = vadd.f32 %v9349, 1.0
    %v9418 = vadd.f32 %v9351, 1.0
    %v9419 = vadd.f32 %v9353, 1.0
    %v9420 = vadd.f32 %v9355, 1.0
    %v9421 = vadd.f32 %v9357, 1.0
    %v9422 = vadd.f32 %v9359, 1.0
    %v9423 = vadd.f32 %v9361, 1.0
    %v9424 = vadd.f32 %v9363, 1.0
    %v9425 = vadd.f32 %v9365, 1.0
    %v9426 = vadd.f32 %v9367, 1.0
    %v9427 = vadd.f32 %v9369, 1.0
    %v9428 = vadd.f32 %v9371, 1.0
    %v9429 = vadd.f32 %v9373, 1.0
    %v9430 = vadd.f32 %v9375, 1.0
    %v9431 = vadd.f32 %v9377, 1.0
    %v9432 = vadd.f32 %v9379, 1.0
    %v9433 = vadd.f32 %v9381, 1.0
    %v9434 = vadd.f32 %v9383, 1.0
    %v9435 = vadd.f32 %v9385, 1.0
    %v9436 = vadd.f32 %v9387, 1.0
    %v9437 = vadd.f32 %v9389, 1.0
    %v9438 = vadd.f32 %v9391, 1.0
    %v9439 = vadd.f32 %v9393, 1.0
    %v9440 = vadd.f32 %v9395, 1.0
    %v9441 = vadd.f32 %v9397, 1.0
    %v9442 = vadd.f32 %v9399, 1.0
    %v9443 = vadd.f32 %v9401, 1.0
    %v9444 = vadd.f32 %v9403, 1.0
    %v9445 = vadd.f32 %v9405, 1.0
    %v9446 = vrcp.pop %v9406
    %v9447 = vmul.f32 1.0, %v9446
    %v9448 = vrcp.pop %v9407
    %v9449 = vmul.f32 1.0, %v9448
    %v9450 = vrcp.pop %v9408
    %v9451 = vmul.f32 1.0, %v9450
    %v9452 = vrcp.pop %v9409
    %v9453 = vmul.f32 1.0, %v9452
    %v9454 = vrcp.pop %v9410
    %v9455 = vmul.f32 1.0, %v9454
    %v9456 = vrcp.pop %v9411
    %v9457 = vmul.f32 1.0, %v9456
    %v9458 = vrcp.pop %v9412
    %v9459 = vmul.f32 1.0, %v9458
    %v9460 = vrcp.pop %v9413
    %v9461 = vmul.f32 1.0, %v9460
    %v9462 = vrcp.pop %v9414
    %v9463 = vmul.f32 1.0, %v9462
    %v9464 = vrcp.pop %v9415
    %v9465 = vmul.f32 1.0, %v9464
    %v9466 = vrcp.pop %v9416
    %v9467 = vmul.f32 1.0, %v9466
    %v9468 = vrcp.pop %v9417
    %v9469 = vmul.f32 1.0, %v9468
    %v9470 = vrcp.pop %v9418
    %v9471 = vmul.f32 1.0, %v9470
    %v9472 = vrcp.pop %v9419
    %v9473 = vmul.f32 1.0, %v9472
    %v9474 = vrcp.pop %v9420
    %v9475 = vmul.f32 1.0, %v9474
    %v9476 = vrcp.pop %v9421
    %v9477 = vmul.f32 1.0, %v9476
    %v9478 = vrcp.pop %v9422
    %v9479 = vmul.f32 1.0, %v9478
    %v9480 = vrcp.pop %v9423
    %v9481 = vmul.f32 1.0, %v9480
    %v9482 = vrcp.pop %v9424
    %v9483 = vmul.f32 1.0, %v9482
    %v9484 = vrcp.pop %v9425
    %v9485 = vmul.f32 1.0, %v9484
    %v9486 = vrcp.pop %v9426
    %v9487 = vmul.f32 1.0, %v9486
    %v9488 = vrcp.pop %v9427
    %v9489 = vmul.f32 1.0, %v9488
    %v9490 = vrcp.pop %v9428
    %v9491 = vmul.f32 1.0, %v9490
    %v9492 = vrcp.pop %v9429
    %v9493 = vmul.f32 1.0, %v9492
    %v9494 = vrcp.pop %v9430
    %v9495 = vmul.f32 1.0, %v9494
    %v9496 = vrcp.pop %v9431
    %v9497 = vmul.f32 1.0, %v9496
    %v9498 = vrcp.pop %v9432
    %v9499 = vmul.f32 1.0, %v9498
    %v9500 = vrcp.pop %v9433
    %v9501 = vmul.f32 1.0, %v9500
    %v9502 = vrcp.pop %v9434
    %v9503 = vmul.f32 1.0, %v9502
    %v9504 = vrcp.pop %v9435
    %v9505 = vmul.f32 1.0, %v9504
    %v9506 = vrcp.pop %v9436
    %v9507 = vmul.f32 1.0, %v9506
    %v9508 = vrcp.pop %v9437
    %v9509 = vmul.f32 1.0, %v9508
    %v9510 = vrcp.pop %v9438
    %v9511 = vmul.f32 1.0, %v9510
    %v9512 = vrcp.pop %v9439
    %v9513 = vmul.f32 1.0, %v9512
    %v9514 = vrcp.pop %v9440
    %v9515 = vmul.f32 1.0, %v9514
    %v9516 = vrcp.pop %v9441
    %v9517 = vmul.f32 1.0, %v9516
    %v9518 = vrcp.pop %v9442
    %v9519 = vmul.f32 1.0, %v9518
    %v9520 = vrcp.pop %v9443
    %v9521 = vmul.f32 1.0, %v9520
    %v9522 = vrcp.pop %v9444
    %v9523 = vmul.f32 1.0, %v9522
    %v9524 = vrcp.pop %v9445
    %v9525 = vmul.f32 1.0, %v9524
    %vm9526 = vcmask 64512
    %9527 = vst.msk [vmem:[%s6] sm:$0xff] %vm9526, %v9447
    %9528 = vst.msk [vmem:[%s6 + $0x8] sm:$0xff] %vm9526, %v9449
    %9529 = vst.msk [vmem:[%s6 + $0x10] sm:$0xff] %vm9526, %v9451
    %9530 = vst.msk [vmem:[%s6 + $0x18] sm:$0xff] %vm9526, %v9453
    %9531 = vst.msk [vmem:[%s6 + $0x20] sm:$0xff] %vm9526, %v9455
    %9532 = vst.msk [vmem:[%s6 + $0x28] sm:$0xff] %vm9526, %v9457
    %9533 = vst.msk [vmem:[%s6 + $0x30] sm:$0xff] %vm9526, %v9459
    %9534 = vst.msk [vmem:[%s6 + $0x38] sm:$0xff] %vm9526, %v9461
    %9535 = vst.msk [vmem:[%s6 + $0x40] sm:$0xff] %vm9526, %v9463
    %9536 = vst.msk [vmem:[%s6 + $0x48] sm:$0xff] %vm9526, %v9465
    %9537 = vst.msk [vmem:[%s6 + $0x50] sm:$0xff] %vm9526, %v9467
    %9538 = vst.msk [vmem:[%s6 + $0x58] sm:$0xff] %vm9526, %v9469
    %9539 = vst.msk [vmem:[%s6 + $0x60] sm:$0xff] %vm9526, %v9471
    %9540 = vst.msk [vmem:[%s6 + $0x68] sm:$0xff] %vm9526, %v9473
    %9541 = vst.msk [vmem:[%s6 + $0x70] sm:$0xff] %vm9526, %v9475
    %9542 = vst.msk [vmem:[%s6 + $0x78] sm:$0xff] %vm9526, %v9477
    %9543 = vst.msk [vmem:[%s6 + $0x80] sm:$0xff] %vm9526, %v9479
    %9544 = vst.msk [vmem:[%s6 + $0x88] sm:$0xff] %vm9526, %v9481
    %9545 = vst.msk [vmem:[%s6 + $0x90] sm:$0xff] %vm9526, %v9483
    %9546 = vst.msk [vmem:[%s6 + $0x98] sm:$0xff] %vm9526, %v9485
    %9547 = vst.msk [vmem:[%s6 + $0xa0] sm:$0xff] %vm9526, %v9487
    %9548 = vst.msk [vmem:[%s6 + $0xa8] sm:$0xff] %vm9526, %v9489
    %9549 = vst.msk [vmem:[%s6 + $0xb0] sm:$0xff] %vm9526, %v9491
    %9550 = vst.msk [vmem:[%s6 + $0xb8] sm:$0xff] %vm9526, %v9493
    %9551 = vst.msk [vmem:[%s6 + $0xc0] sm:$0xff] %vm9526, %v9495
    %9552 = vst.msk [vmem:[%s6 + $0xc8] sm:$0xff] %vm9526, %v9497
    %9553 = vst.msk [vmem:[%s6 + $0xd0] sm:$0xff] %vm9526, %v9499
    %9554 = vst.msk [vmem:[%s6 + $0xd8] sm:$0xff] %vm9526, %v9501
    %9555 = vst.msk [vmem:[%s6 + $0xe0] sm:$0xff] %vm9526, %v9503
    %9556 = vst.msk [vmem:[%s6 + $0xe8] sm:$0xff] %vm9526, %v9505
    %9557 = vst.msk [vmem:[%s6 + $0xf0] sm:$0xff] %vm9526, %v9507
    %9558 = vst.msk [vmem:[%s6 + $0xf8] sm:$0xff] %vm9526, %v9509
    %9559 = vst.msk [vmem:[%s6 + $0x100] sm:$0xff] %vm9526, %v9511
    %9560 = vst.msk [vmem:[%s6 + $0x108] sm:$0xff] %vm9526, %v9513
    %9561 = vst.msk [vmem:[%s6 + $0x110] sm:$0xff] %vm9526, %v9515
    %9562 = vst.msk [vmem:[%s6 + $0x118] sm:$0xff] %vm9526, %v9517
    %9563 = vst.msk [vmem:[%s6 + $0x120] sm:$0xff] %vm9526, %v9519
    %9564 = vst.msk [vmem:[%s6 + $0x128] sm:$0xff] %vm9526, %v9521
    %9565 = vst.msk [vmem:[%s6 + $0x130] sm:$0xff] %vm9526, %v9523
    %9566 = vst.msk [vmem:[%s6 + $0x138] sm:$0xff] %vm9526, %v9525
    %9567 = vrot.lane.b32.xlu0 %v8751, 120
    %v9568 = vpop.permute.xlu0 %9567
    %9569 = vrot.lane.b32.xlu0 %v8792, 120
    %v9570 = vpop.permute.xlu0 %9569
    %v9573 = vadd.f32 %v8545, %v9568
    %v9574 = vadd.f32 %v8648, %v9570
    %9575 = vrot.lane.b32.xlu0 %v8553, 112
    %v9576 = vpop.permute.xlu0 %9575
    %9577 = vrot.lane.b32.xlu0 %v8656, 112
    %v9578 = vpop.permute.xlu0 %9577
    %v9581 = vadd.f32 %v9573, %v9576
    %v9582 = vadd.f32 %v9574, %v9578
    %9583 = vrot.lane.b32.xlu0 %v9120, 104
    %v9584 = vpop.permute.xlu0 %9583
    %9585 = vrot.lane.b32.xlu0 %v9124, 104
    %v9586 = vpop.permute.xlu0 %9585
    %v9589 = vadd.f32 %v9581, %v9584
    %v9590 = vadd.f32 %v9582, %v9586
    %v9591 = vsub.f32 0.0, %v9589
    %v9592 = vsub.f32 0.0, %v9590
    %v9593 = vmul.f32 %v9591, 1.442695
    %v9594 = vpow.pop %v9593
    %v9595 = vmul.f32 %v9592, 1.442695
    %v9596 = vpow.pop %v9595
    %v9597 = vadd.f32 %v9594, 1.0
    %v9598 = vadd.f32 %v9596, 1.0
    %v9599 = vrcp.pop %v9597
    %v9600 = vmul.f32 1.0, %v9599
    %v9601 = vrcp.pop %v9598
    %v9602 = vmul.f32 1.0, %v9601
    %9645 = vrot.lane.b32.xlu0 %v9447, 104
    %v9646 = vpop.permute.xlu0 %9645
    %9647 = vrot.lane.b32.xlu0 %v9449, 104
    %v9648 = vpop.permute.xlu0 %9647
    %9649 = vrot.lane.b32.xlu0 %v9451, 104
    %v9650 = vpop.permute.xlu0 %9649
    %9651 = vrot.lane.b32.xlu0 %v9453, 104
    %v9652 = vpop.permute.xlu0 %9651
    %9653 = vrot.lane.b32.xlu0 %v9455, 104
    %v9654 = vpop.permute.xlu0 %9653
    %9655 = vrot.lane.b32.xlu0 %v9457, 104
    %v9656 = vpop.permute.xlu0 %9655
    %9657 = vrot.lane.b32.xlu0 %v9459, 104
    %v9658 = vpop.permute.xlu0 %9657
    %9659 = vrot.lane.b32.xlu0 %v9461, 104
    %v9660 = vpop.permute.xlu0 %9659
    %9661 = vrot.lane.b32.xlu0 %v9463, 104
    %v9662 = vpop.permute.xlu0 %9661
    %9663 = vrot.lane.b32.xlu0 %v9465, 104
    %v9664 = vpop.permute.xlu0 %9663
    %9665 = vrot.lane.b32.xlu0 %v9467, 104
    %v9666 = vpop.permute.xlu0 %9665
    %9667 = vrot.lane.b32.xlu0 %v9469, 104
    %v9668 = vpop.permute.xlu0 %9667
    %9669 = vrot.lane.b32.xlu0 %v9471, 104
    %v9670 = vpop.permute.xlu0 %9669
    %9671 = vrot.lane.b32.xlu0 %v9473, 104
    %v9672 = vpop.permute.xlu0 %9671
    %9673 = vrot.lane.b32.xlu0 %v9475, 104
    %v9674 = vpop.permute.xlu0 %9673
    %9675 = vrot.lane.b32.xlu0 %v9477, 104
    %v9676 = vpop.permute.xlu0 %9675
    %9677 = vrot.lane.b32.xlu0 %v9479, 104
    %v9678 = vpop.permute.xlu0 %9677
    %9679 = vrot.lane.b32.xlu0 %v9481, 104
    %v9680 = vpop.permute.xlu0 %9679
    %9681 = vrot.lane.b32.xlu0 %v9483, 104
    %v9682 = vpop.permute.xlu0 %9681
    %9683 = vrot.lane.b32.xlu0 %v9485, 104
    %v9684 = vpop.permute.xlu0 %9683
    %9685 = vrot.lane.b32.xlu0 %v9600, 104
    %v9686 = vpop.permute.xlu0 %9685
    %9687 = vrot.lane.b32.xlu0 %v9487, 104
    %v9688 = vpop.permute.xlu0 %9687
    %9689 = vrot.lane.b32.xlu0 %v9489, 104
    %v9690 = vpop.permute.xlu0 %9689
    %9691 = vrot.lane.b32.xlu0 %v9491, 104
    %v9692 = vpop.permute.xlu0 %9691
    %9693 = vrot.lane.b32.xlu0 %v9493, 104
    %v9694 = vpop.permute.xlu0 %9693
    %9695 = vrot.lane.b32.xlu0 %v9495, 104
    %v9696 = vpop.permute.xlu0 %9695
    %9697 = vrot.lane.b32.xlu0 %v9497, 104
    %v9698 = vpop.permute.xlu0 %9697
    %9699 = vrot.lane.b32.xlu0 %v9499, 104
    %v9700 = vpop.permute.xlu0 %9699
    %9701 = vrot.lane.b32.xlu0 %v9501, 104
    %v9702 = vpop.permute.xlu0 %9701
    %9703 = vrot.lane.b32.xlu0 %v9503, 104
    %v9704 = vpop.permute.xlu0 %9703
    %9705 = vrot.lane.b32.xlu0 %v9505, 104
    %v9706 = vpop.permute.xlu0 %9705
    %9707 = vrot.lane.b32.xlu0 %v9507, 104
    %v9708 = vpop.permute.xlu0 %9707
    %9709 = vrot.lane.b32.xlu0 %v9509, 104
    %v9710 = vpop.permute.xlu0 %9709
    %9711 = vrot.lane.b32.xlu0 %v9511, 104
    %v9712 = vpop.permute.xlu0 %9711
    %9713 = vrot.lane.b32.xlu0 %v9513, 104
    %v9714 = vpop.permute.xlu0 %9713
    %9715 = vrot.lane.b32.xlu0 %v9515, 104
    %v9716 = vpop.permute.xlu0 %9715
    %9717 = vrot.lane.b32.xlu0 %v9517, 104
    %v9718 = vpop.permute.xlu0 %9717
    %9719 = vrot.lane.b32.xlu0 %v9519, 104
    %v9720 = vpop.permute.xlu0 %9719
    %9721 = vrot.lane.b32.xlu0 %v9521, 104
    %v9722 = vpop.permute.xlu0 %9721
    %9723 = vrot.lane.b32.xlu0 %v9523, 104
    %v9724 = vpop.permute.xlu0 %9723
    %9725 = vrot.lane.b32.xlu0 %v9525, 104
    %v9726 = vpop.permute.xlu0 %9725
    %9727 = vrot.lane.b32.xlu0 %v9602, 104
    %v9728 = vpop.permute.xlu0 %9727
    %vm9771 = vcmask 130113
    %9772 = vst.msk [vmem:[%s6 - $0x1] sm:$0xfe] %vm9771, %v9646
    %vm9773 = vcmask 130112
    %9774 = vst.msk [vmem:[%s6 + $0x7] sm:$0xff] %vm9773, %v9648
    %9775 = vst.msk [vmem:[%s6 + $0xf] sm:$0xff] %vm9773, %v9650
    %9776 = vst.msk [vmem:[%s6 + $0x17] sm:$0xff] %vm9773, %v9652
    %9777 = vst.msk [vmem:[%s6 + $0x1f] sm:$0xff] %vm9773, %v9654
    %9778 = vst.msk [vmem:[%s6 + $0x27] sm:$0xff] %vm9773, %v9656
    %9779 = vst.msk [vmem:[%s6 + $0x2f] sm:$0xff] %vm9773, %v9658
    %9780 = vst.msk [vmem:[%s6 + $0x37] sm:$0xff] %vm9773, %v9660
    %9781 = vst.msk [vmem:[%s6 + $0x3f] sm:$0xff] %vm9773, %v9662
    %9782 = vst.msk [vmem:[%s6 + $0x47] sm:$0xff] %vm9773, %v9664
    %9783 = vst.msk [vmem:[%s6 + $0x4f] sm:$0xff] %vm9773, %v9666
    %9784 = vst.msk [vmem:[%s6 + $0x57] sm:$0xff] %vm9773, %v9668
    %9785 = vst.msk [vmem:[%s6 + $0x5f] sm:$0xff] %vm9773, %v9670
    %9786 = vst.msk [vmem:[%s6 + $0x67] sm:$0xff] %vm9773, %v9672
    %9787 = vst.msk [vmem:[%s6 + $0x6f] sm:$0xff] %vm9773, %v9674
    %9788 = vst.msk [vmem:[%s6 + $0x77] sm:$0xff] %vm9773, %v9676
    %9789 = vst.msk [vmem:[%s6 + $0x7f] sm:$0xff] %vm9773, %v9678
    %9790 = vst.msk [vmem:[%s6 + $0x87] sm:$0xff] %vm9773, %v9680
    %9791 = vst.msk [vmem:[%s6 + $0x8f] sm:$0xff] %vm9773, %v9682
    %9792 = vst.msk [vmem:[%s6 + $0x97] sm:$0xff] %vm9773, %v9684
    %vm9793 = vcmask 122944
    %9794 = vst.msk [vmem:[%s6 + $0x9f] sm:$0x1] %vm9793, %v9686
    %9795 = vst.msk [vmem:[%s6 + $0x9f] sm:$0xfe] %vm9771, %v9688
    %9796 = vst.msk [vmem:[%s6 + $0xa7] sm:$0xff] %vm9773, %v9690
    %9797 = vst.msk [vmem:[%s6 + $0xaf] sm:$0xff] %vm9773, %v9692
    %9798 = vst.msk [vmem:[%s6 + $0xb7] sm:$0xff] %vm9773, %v9694
    %9799 = vst.msk [vmem:[%s6 + $0xbf] sm:$0xff] %vm9773, %v9696
    %9800 = vst.msk [vmem:[%s6 + $0xc7] sm:$0xff] %vm9773, %v9698
    %9801 = vst.msk [vmem:[%s6 + $0xcf] sm:$0xff] %vm9773, %v9700
    %9802 = vst.msk [vmem:[%s6 + $0xd7] sm:$0xff] %vm9773, %v9702
    %9803 = vst.msk [vmem:[%s6 + $0xdf] sm:$0xff] %vm9773, %v9704
    %9804 = vst.msk [vmem:[%s6 + $0xe7] sm:$0xff] %vm9773, %v9706
    %9805 = vst.msk [vmem:[%s6 + $0xef] sm:$0xff] %vm9773, %v9708
    %9806 = vst.msk [vmem:[%s6 + $0xf7] sm:$0xff] %vm9773, %v9710
    %9807 = vst.msk [vmem:[%s6 + $0xff] sm:$0xff] %vm9773, %v9712
    %9808 = vst.msk [vmem:[%s6 + $0x107] sm:$0xff] %vm9773, %v9714
    %9809 = vst.msk [vmem:[%s6 + $0x10f] sm:$0xff] %vm9773, %v9716
    %9810 = vst.msk [vmem:[%s6 + $0x117] sm:$0xff] %vm9773, %v9718
    %9811 = vst.msk [vmem:[%s6 + $0x11f] sm:$0xff] %vm9773, %v9720
    %9812 = vst.msk [vmem:[%s6 + $0x127] sm:$0xff] %vm9773, %v9722
    %9813 = vst.msk [vmem:[%s6 + $0x12f] sm:$0xff] %vm9773, %v9724
    %9814 = vst.msk [vmem:[%s6 + $0x137] sm:$0xff] %vm9773, %v9726
    %9815 = vst.msk [vmem:[%s6 + $0x13f] sm:$0x1] %vm9793, %v9728
    %9816 = vrot.lane.b32.xlu0 %v9119, 120
    %v9817 = vpop.permute.xlu0 %9816
    %9818 = vrot.lane.b32.xlu0 %v9121, 120
    %v9819 = vpop.permute.xlu0 %9818
    %9820 = vrot.lane.b32.xlu0 %v9123, 120
    %v9821 = vpop.permute.xlu0 %9820
    %9822 = vrot.lane.b32.xlu0 %v9125, 120
    %v9823 = vpop.permute.xlu0 %9822
    %v9828 = vadd.f32 %v8545, %v9817
    %v9829 = vadd.f32 %v8548, %v9819
    %v9830 = vadd.f32 %v8648, %v9821
    %v9831 = vadd.f32 %v8651, %v9823
    %9834 = vrot.lane.b32.xlu0 %v8556, 112
    %v9835 = vpop.permute.xlu0 %9834
    %9836 = vrot.lane.b32.xlu0 %v8659, 112
    %v9837 = vpop.permute.xlu0 %9836
    %v9840 = vadd.f32 %v9828, %v9576
    %v9841 = vadd.f32 %v9829, %v9835
    %v9842 = vadd.f32 %v9830, %v9578
    %v9843 = vadd.f32 %v9831, %v9837
    %v9846 = vrot.slane %v8556, 1
    %v9847 = vsel %vm8711, %v9120, %v9846
    %v9848 = vrot.slane %v8561, 1
    %v9849 = vsel %vm8711, %v9846, %v9848
    %v9850 = vrot.slane %v8659, 1
    %v9851 = vsel %vm8711, %v9124, %v9850
    %v9852 = vrot.slane %v8664, 1
    %v9853 = vsel %vm8711, %v9850, %v9852
    %9854 = vrot.lane.b32.xlu0 %v9847, 104
    %v9855 = vpop.permute.xlu0 %9854
    %9856 = vrot.lane.b32.xlu0 %v9849, 104
    %v9857 = vpop.permute.xlu0 %9856
    %9858 = vrot.lane.b32.xlu0 %v9851, 104
    %v9859 = vpop.permute.xlu0 %9858
    %9860 = vrot.lane.b32.xlu0 %v9853, 104
    %v9861 = vpop.permute.xlu0 %9860
    %v9866 = vadd.f32 %v9840, %v9855
    %v9867 = vadd.f32 %v9841, %v9857
    %v9868 = vadd.f32 %v9842, %v9859
    %v9869 = vadd.f32 %v9843, %v9861
    %v9870 = vsub.f32 0.0, %v9866
    %v9871 = vsub.f32 0.0, %v9867
    %v9872 = vsub.f32 0.0, %v9868
    %v9873 = vsub.f32 0.0, %v9869
    %v9874 = vmul.f32 %v9870, 1.442695
    %v9875 = vpow.pop %v9874
    %v9876 = vmul.f32 %v9871, 1.442695
    %v9877 = vpow.pop %v9876
    %v9878 = vmul.f32 %v9872, 1.442695
    %v9879 = vpow.pop %v9878
    %v9880 = vmul.f32 %v9873, 1.442695
    %v9881 = vpow.pop %v9880
    %v9882 = vadd.f32 %v9875, 1.0
    %v9883 = vadd.f32 %v9877, 1.0
    %v9884 = vadd.f32 %v9879, 1.0
    %v9885 = vadd.f32 %v9881, 1.0
    %v9886 = vrcp.pop %v9882
    %v9887 = vmul.f32 1.0, %v9886
    %v9888 = vrcp.pop %v9883
    %v9889 = vmul.f32 1.0, %v9888
    %v9890 = vrcp.pop %v9884
    %v9891 = vmul.f32 1.0, %v9890
    %v9892 = vrcp.pop %v9885
    %v9893 = vmul.f32 1.0, %v9892
    %9898 = vrot.lane.b32.xlu0 %v9451, 80
    %v9899 = vpop.permute.xlu0 %9898
    %9900 = vrot.lane.b32.xlu0 %v9453, 80
    %v9901 = vpop.permute.xlu0 %9900
    %9902 = vrot.lane.b32.xlu0 %v9455, 80
    %v9903 = vpop.permute.xlu0 %9902
    %9904 = vrot.lane.b32.xlu0 %v9457, 80
    %v9905 = vpop.permute.xlu0 %9904
    %9906 = vrot.lane.b32.xlu0 %v9459, 80
    %v9907 = vpop.permute.xlu0 %9906
    %9908 = vrot.lane.b32.xlu0 %v9461, 80
    %v9909 = vpop.permute.xlu0 %9908
    %9910 = vrot.lane.b32.xlu0 %v9463, 80
    %v9911 = vpop.permute.xlu0 %9910
    %9912 = vrot.lane.b32.xlu0 %v9465, 80
    %v9913 = vpop.permute.xlu0 %9912
    %9914 = vrot.lane.b32.xlu0 %v9467, 80
    %v9915 = vpop.permute.xlu0 %9914
    %9916 = vrot.lane.b32.xlu0 %v9469, 80
    %v9917 = vpop.permute.xlu0 %9916
    %9918 = vrot.lane.b32.xlu0 %v9471, 80
    %v9919 = vpop.permute.xlu0 %9918
    %9920 = vrot.lane.b32.xlu0 %v9473, 80
    %v9921 = vpop.permute.xlu0 %9920
    %9922 = vrot.lane.b32.xlu0 %v9475, 80
    %v9923 = vpop.permute.xlu0 %9922
    %9924 = vrot.lane.b32.xlu0 %v9477, 80
    %v9925 = vpop.permute.xlu0 %9924
    %9926 = vrot.lane.b32.xlu0 %v9479, 80
    %v9927 = vpop.permute.xlu0 %9926
    %9928 = vrot.lane.b32.xlu0 %v9481, 80
    %v9929 = vpop.permute.xlu0 %9928
    %9930 = vrot.lane.b32.xlu0 %v9483, 80
    %v9931 = vpop.permute.xlu0 %9930
    %9932 = vrot.lane.b32.xlu0 %v9485, 80
    %v9933 = vpop.permute.xlu0 %9932
    %9934 = vrot.lane.b32.xlu0 %v9887, 80
    %v9935 = vpop.permute.xlu0 %9934
    %9936 = vrot.lane.b32.xlu0 %v9889, 80
    %v9937 = vpop.permute.xlu0 %9936
    %9938 = vrot.lane.b32.xlu0 %v9491, 80
    %v9939 = vpop.permute.xlu0 %9938
    %9940 = vrot.lane.b32.xlu0 %v9493, 80
    %v9941 = vpop.permute.xlu0 %9940
    %9942 = vrot.lane.b32.xlu0 %v9495, 80
    %v9943 = vpop.permute.xlu0 %9942
    %9944 = vrot.lane.b32.xlu0 %v9497, 80
    %v9945 = vpop.permute.xlu0 %9944
    %9946 = vrot.lane.b32.xlu0 %v9499, 80
    %v9947 = vpop.permute.xlu0 %9946
    %9948 = vrot.lane.b32.xlu0 %v9501, 80
    %v9949 = vpop.permute.xlu0 %9948
    %9950 = vrot.lane.b32.xlu0 %v9503, 80
    %v9951 = vpop.permute.xlu0 %9950
    %9952 = vrot.lane.b32.xlu0 %v9505, 80
    %v9953 = vpop.permute.xlu0 %9952
    %9954 = vrot.lane.b32.xlu0 %v9507, 80
    %v9955 = vpop.permute.xlu0 %9954
    %9956 = vrot.lane.b32.xlu0 %v9509, 80
    %v9957 = vpop.permute.xlu0 %9956
    %9958 = vrot.lane.b32.xlu0 %v9511, 80
    %v9959 = vpop.permute.xlu0 %9958
    %9960 = vrot.lane.b32.xlu0 %v9513, 80
    %v9961 = vpop.permute.xlu0 %9960
    %9962 = vrot.lane.b32.xlu0 %v9515, 80
    %v9963 = vpop.permute.xlu0 %9962
    %9964 = vrot.lane.b32.xlu0 %v9517, 80
    %v9965 = vpop.permute.xlu0 %9964
    %9966 = vrot.lane.b32.xlu0 %v9519, 80
    %v9967 = vpop.permute.xlu0 %9966
    %9968 = vrot.lane.b32.xlu0 %v9521, 80
    %v9969 = vpop.permute.xlu0 %9968
    %9970 = vrot.lane.b32.xlu0 %v9523, 80
    %v9971 = vpop.permute.xlu0 %9970
    %9972 = vrot.lane.b32.xlu0 %v9525, 80
    %v9973 = vpop.permute.xlu0 %9972
    %9974 = vrot.lane.b32.xlu0 %v9891, 80
    %v9975 = vpop.permute.xlu0 %9974
    %9976 = vrot.lane.b32.xlu0 %v9893, 80
    %v9977 = vpop.permute.xlu0 %9976
    %vm10018 = vcmask 195712
    %10019 = vst.msk [vmem:[%s6] sm:$0xff] %vm10018, %v9899
    %10020 = vst.msk [vmem:[%s6 + $0x8] sm:$0xff] %vm10018, %v9901
    %10021 = vst.msk [vmem:[%s6 + $0x10] sm:$0xff] %vm10018, %v9903
    %10022 = vst.msk [vmem:[%s6 + $0x18] sm:$0xff] %vm10018, %v9905
    %10023 = vst.msk [vmem:[%s6 + $0x20] sm:$0xff] %vm10018, %v9907
    %10024 = vst.msk [vmem:[%s6 + $0x28] sm:$0xff] %vm10018, %v9909
    %10025 = vst.msk [vmem:[%s6 + $0x30] sm:$0xff] %vm10018, %v9911
    %10026 = vst.msk [vmem:[%s6 + $0x38] sm:$0xff] %vm10018, %v9913
    %10027 = vst.msk [vmem:[%s6 + $0x40] sm:$0xff] %vm10018, %v9915
    %10028 = vst.msk [vmem:[%s6 + $0x48] sm:$0xff] %vm10018, %v9917
    %10029 = vst.msk [vmem:[%s6 + $0x50] sm:$0xff] %vm10018, %v9919
    %10030 = vst.msk [vmem:[%s6 + $0x58] sm:$0xff] %vm10018, %v9921
    %10031 = vst.msk [vmem:[%s6 + $0x60] sm:$0xff] %vm10018, %v9923
    %10032 = vst.msk [vmem:[%s6 + $0x68] sm:$0xff] %vm10018, %v9925
    %10033 = vst.msk [vmem:[%s6 + $0x70] sm:$0xff] %vm10018, %v9927
    %10034 = vst.msk [vmem:[%s6 + $0x78] sm:$0xff] %vm10018, %v9929
    %10035 = vst.msk [vmem:[%s6 + $0x80] sm:$0xff] %vm10018, %v9931
    %10036 = vst.msk [vmem:[%s6 + $0x88] sm:$0xff] %vm10018, %v9933
    %10037 = vst.msk [vmem:[%s6 + $0x90] sm:$0xff] %vm10018, %v9935
    %10038 = vst.msk [vmem:[%s6 + $0x98] sm:$0xff] %vm10018, %v9937
    %10039 = vst.msk [vmem:[%s6 + $0xa0] sm:$0xff] %vm10018, %v9939
    %10040 = vst.msk [vmem:[%s6 + $0xa8] sm:$0xff] %vm10018, %v9941
    %10041 = vst.msk [vmem:[%s6 + $0xb0] sm:$0xff] %vm10018, %v9943
    %10042 = vst.msk [vmem:[%s6 + $0xb8] sm:$0xff] %vm10018, %v9945
    %10043 = vst.msk [vmem:[%s6 + $0xc0] sm:$0xff] %vm10018, %v9947
    %10044 = vst.msk [vmem:[%s6 + $0xc8] sm:$0xff] %vm10018, %v9949
    %10045 = vst.msk [vmem:[%s6 + $0xd0] sm:$0xff] %vm10018, %v9951
    %10046 = vst.msk [vmem:[%s6 + $0xd8] sm:$0xff] %vm10018, %v9953
    %10047 = vst.msk [vmem:[%s6 + $0xe0] sm:$0xff] %vm10018, %v9955
    %10048 = vst.msk [vmem:[%s6 + $0xe8] sm:$0xff] %vm10018, %v9957
    %10049 = vst.msk [vmem:[%s6 + $0xf0] sm:$0xff] %vm10018, %v9959
    %10050 = vst.msk [vmem:[%s6 + $0xf8] sm:$0xff] %vm10018, %v9961
    %10051 = vst.msk [vmem:[%s6 + $0x100] sm:$0xff] %vm10018, %v9963
    %10052 = vst.msk [vmem:[%s6 + $0x108] sm:$0xff] %vm10018, %v9965
    %10053 = vst.msk [vmem:[%s6 + $0x110] sm:$0xff] %vm10018, %v9967
    %10054 = vst.msk [vmem:[%s6 + $0x118] sm:$0xff] %vm10018, %v9969
    %10055 = vst.msk [vmem:[%s6 + $0x120] sm:$0xff] %vm10018, %v9971
    %10056 = vst.msk [vmem:[%s6 + $0x128] sm:$0xff] %vm10018, %v9973
    %10057 = vst.msk [vmem:[%s6 + $0x130] sm:$0xff] %vm10018, %v9975
    %10058 = vst.msk [vmem:[%s6 + $0x138] sm:$0xff] %vm10018, %v9977
    %10059 = vrot.lane.b32.xlu0 %v9120, 120
    %v10060 = vpop.permute.xlu0 %10059
    %10061 = vrot.lane.b32.xlu0 %v9124, 120
    %v10062 = vpop.permute.xlu0 %10061
    %v10065 = vadd.f32 %v8553, %v10060
    %v10066 = vadd.f32 %v8656, %v10062
    %10067 = vrot.lane.b32.xlu0 %v8561, 112
    %v10068 = vpop.permute.xlu0 %10067
    %10069 = vrot.lane.b32.xlu0 %v8664, 112
    %v10070 = vpop.permute.xlu0 %10069
    %v10073 = vadd.f32 %v10065, %v10068
    %v10074 = vadd.f32 %v10066, %v10070
    %10075 = vrot.lane.b32.xlu0 %v9848, 104
    %v10076 = vpop.permute.xlu0 %10075
    %10077 = vrot.lane.b32.xlu0 %v9852, 104
    %v10078 = vpop.permute.xlu0 %10077
    %v10081 = vadd.f32 %v10073, %v10076
    %v10082 = vadd.f32 %v10074, %v10078
    %v10083 = vsub.f32 0.0, %v10081
    %v10084 = vsub.f32 0.0, %v10082
    %v10085 = vmul.f32 %v10083, 1.442695
    %v10086 = vpow.pop %v10085
    %v10087 = vmul.f32 %v10084, 1.442695
    %v10088 = vpow.pop %v10087
    %v10089 = vadd.f32 %v10086, 1.0
    %v10090 = vadd.f32 %v10088, 1.0
    %v10091 = vrcp.pop %v10089
    %v10092 = vmul.f32 1.0, %v10091
    %v10093 = vrcp.pop %v10090
    %v10094 = vmul.f32 1.0, %v10093
    %10097 = vrot.lane.b32.xlu0 %v9451, 56
    %v10098 = vpop.permute.xlu0 %10097
    %10099 = vrot.lane.b32.xlu0 %v9453, 56
    %v10100 = vpop.permute.xlu0 %10099
    %10101 = vrot.lane.b32.xlu0 %v9455, 56
    %v10102 = vpop.permute.xlu0 %10101
    %10103 = vrot.lane.b32.xlu0 %v9457, 56
    %v10104 = vpop.permute.xlu0 %10103
    %10105 = vrot.lane.b32.xlu0 %v9459, 56
    %v10106 = vpop.permute.xlu0 %10105
    %10107 = vrot.lane.b32.xlu0 %v9461, 56
    %v10108 = vpop.permute.xlu0 %10107
    %10109 = vrot.lane.b32.xlu0 %v9463, 56
    %v10110 = vpop.permute.xlu0 %10109
    %10111 = vrot.lane.b32.xlu0 %v9465, 56
    %v10112 = vpop.permute.xlu0 %10111
    %10113 = vrot.lane.b32.xlu0 %v9467, 56
    %v10114 = vpop.permute.xlu0 %10113
    %10115 = vrot.lane.b32.xlu0 %v9469, 56
    %v10116 = vpop.permute.xlu0 %10115
    %10117 = vrot.lane.b32.xlu0 %v9471, 56
    %v10118 = vpop.permute.xlu0 %10117
    %10119 = vrot.lane.b32.xlu0 %v9473, 56
    %v10120 = vpop.permute.xlu0 %10119
    %10121 = vrot.lane.b32.xlu0 %v9475, 56
    %v10122 = vpop.permute.xlu0 %10121
    %10123 = vrot.lane.b32.xlu0 %v9477, 56
    %v10124 = vpop.permute.xlu0 %10123
    %10125 = vrot.lane.b32.xlu0 %v9479, 56
    %v10126 = vpop.permute.xlu0 %10125
    %10127 = vrot.lane.b32.xlu0 %v9481, 56
    %v10128 = vpop.permute.xlu0 %10127
    %10129 = vrot.lane.b32.xlu0 %v9483, 56
    %v10130 = vpop.permute.xlu0 %10129
    %10131 = vrot.lane.b32.xlu0 %v9485, 56
    %v10132 = vpop.permute.xlu0 %10131
    %10133 = vrot.lane.b32.xlu0 %v9887, 56
    %v10134 = vpop.permute.xlu0 %10133
    %10135 = vrot.lane.b32.xlu0 %v9889, 56
    %v10136 = vpop.permute.xlu0 %10135
    %10137 = vrot.lane.b32.xlu0 %v10092, 56
    %v10138 = vpop.permute.xlu0 %10137
    %10139 = vrot.lane.b32.xlu0 %v9491, 56
    %v10140 = vpop.permute.xlu0 %10139
    %10141 = vrot.lane.b32.xlu0 %v9493, 56
    %v10142 = vpop.permute.xlu0 %10141
    %10143 = vrot.lane.b32.xlu0 %v9495, 56
    %v10144 = vpop.permute.xlu0 %10143
    %10145 = vrot.lane.b32.xlu0 %v9497, 56
    %v10146 = vpop.permute.xlu0 %10145
    %10147 = vrot.lane.b32.xlu0 %v9499, 56
    %v10148 = vpop.permute.xlu0 %10147
    %10149 = vrot.lane.b32.xlu0 %v9501, 56
    %v10150 = vpop.permute.xlu0 %10149
    %10151 = vrot.lane.b32.xlu0 %v9503, 56
    %v10152 = vpop.permute.xlu0 %10151
    %10153 = vrot.lane.b32.xlu0 %v9505, 56
    %v10154 = vpop.permute.xlu0 %10153
    %10155 = vrot.lane.b32.xlu0 %v9507, 56
    %v10156 = vpop.permute.xlu0 %10155
    %10157 = vrot.lane.b32.xlu0 %v9509, 56
    %v10158 = vpop.permute.xlu0 %10157
    %10159 = vrot.lane.b32.xlu0 %v9511, 56
    %v10160 = vpop.permute.xlu0 %10159
    %10161 = vrot.lane.b32.xlu0 %v9513, 56
    %v10162 = vpop.permute.xlu0 %10161
    %10163 = vrot.lane.b32.xlu0 %v9515, 56
    %v10164 = vpop.permute.xlu0 %10163
    %10165 = vrot.lane.b32.xlu0 %v9517, 56
    %v10166 = vpop.permute.xlu0 %10165
    %10167 = vrot.lane.b32.xlu0 %v9519, 56
    %v10168 = vpop.permute.xlu0 %10167
    %10169 = vrot.lane.b32.xlu0 %v9521, 56
    %v10170 = vpop.permute.xlu0 %10169
    %10171 = vrot.lane.b32.xlu0 %v9523, 56
    %v10172 = vpop.permute.xlu0 %10171
    %10173 = vrot.lane.b32.xlu0 %v9525, 56
    %v10174 = vpop.permute.xlu0 %10173
    %10175 = vrot.lane.b32.xlu0 %v9891, 56
    %v10176 = vpop.permute.xlu0 %10175
    %10177 = vrot.lane.b32.xlu0 %v9893, 56
    %v10178 = vpop.permute.xlu0 %10177
    %10179 = vrot.lane.b32.xlu0 %v10094, 56
    %v10180 = vpop.permute.xlu0 %10179
    %vm10223 = vcmask 261313
    %10224 = vst.msk [vmem:[%s6 - $0x1] sm:$0xfe] %vm10223, %v10098
    %vm10225 = vcmask 261312
    %10226 = vst.msk [vmem:[%s6 + $0x7] sm:$0xff] %vm10225, %v10100
    %10227 = vst.msk [vmem:[%s6 + $0xf] sm:$0xff] %vm10225, %v10102
    %10228 = vst.msk [vmem:[%s6 + $0x17] sm:$0xff] %vm10225, %v10104
    %10229 = vst.msk [vmem:[%s6 + $0x1f] sm:$0xff] %vm10225, %v10106
    %10230 = vst.msk [vmem:[%s6 + $0x27] sm:$0xff] %vm10225, %v10108
    %10231 = vst.msk [vmem:[%s6 + $0x2f] sm:$0xff] %vm10225, %v10110
    %10232 = vst.msk [vmem:[%s6 + $0x37] sm:$0xff] %vm10225, %v10112
    %10233 = vst.msk [vmem:[%s6 + $0x3f] sm:$0xff] %vm10225, %v10114
    %10234 = vst.msk [vmem:[%s6 + $0x47] sm:$0xff] %vm10225, %v10116
    %10235 = vst.msk [vmem:[%s6 + $0x4f] sm:$0xff] %vm10225, %v10118
    %10236 = vst.msk [vmem:[%s6 + $0x57] sm:$0xff] %vm10225, %v10120
    %10237 = vst.msk [vmem:[%s6 + $0x5f] sm:$0xff] %vm10225, %v10122
    %10238 = vst.msk [vmem:[%s6 + $0x67] sm:$0xff] %vm10225, %v10124
    %10239 = vst.msk [vmem:[%s6 + $0x6f] sm:$0xff] %vm10225, %v10126
    %10240 = vst.msk [vmem:[%s6 + $0x77] sm:$0xff] %vm10225, %v10128
    %10241 = vst.msk [vmem:[%s6 + $0x7f] sm:$0xff] %vm10225, %v10130
    %10242 = vst.msk [vmem:[%s6 + $0x87] sm:$0xff] %vm10225, %v10132
    %10243 = vst.msk [vmem:[%s6 + $0x8f] sm:$0xff] %vm10225, %v10134
    %10244 = vst.msk [vmem:[%s6 + $0x97] sm:$0xff] %vm10225, %v10136
    %vm10245 = vcmask 254144
    %10246 = vst.msk [vmem:[%s6 + $0x9f] sm:$0x1] %vm10245, %v10138
    %10247 = vst.msk [vmem:[%s6 + $0x9f] sm:$0xfe] %vm10223, %v10140
    %10248 = vst.msk [vmem:[%s6 + $0xa7] sm:$0xff] %vm10225, %v10142
    %10249 = vst.msk [vmem:[%s6 + $0xaf] sm:$0xff] %vm10225, %v10144
    %10250 = vst.msk [vmem:[%s6 + $0xb7] sm:$0xff] %vm10225, %v10146
    %10251 = vst.msk [vmem:[%s6 + $0xbf] sm:$0xff] %vm10225, %v10148
    %10252 = vst.msk [vmem:[%s6 + $0xc7] sm:$0xff] %vm10225, %v10150
    %10253 = vst.msk [vmem:[%s6 + $0xcf] sm:$0xff] %vm10225, %v10152
    %10254 = vst.msk [vmem:[%s6 + $0xd7] sm:$0xff] %vm10225, %v10154
    %10255 = vst.msk [vmem:[%s6 + $0xdf] sm:$0xff] %vm10225, %v10156
    %10256 = vst.msk [vmem:[%s6 + $0xe7] sm:$0xff] %vm10225, %v10158
    %10257 = vst.msk [vmem:[%s6 + $0xef] sm:$0xff] %vm10225, %v10160
    %10258 = vst.msk [vmem:[%s6 + $0xf7] sm:$0xff] %vm10225, %v10162
    %10259 = vst.msk [vmem:[%s6 + $0xff] sm:$0xff] %vm10225, %v10164
    %10260 = vst.msk [vmem:[%s6 + $0x107] sm:$0xff] %vm10225, %v10166
    %10261 = vst.msk [vmem:[%s6 + $0x10f] sm:$0xff] %vm10225, %v10168
    %10262 = vst.msk [vmem:[%s6 + $0x117] sm:$0xff] %vm10225, %v10170
    %10263 = vst.msk [vmem:[%s6 + $0x11f] sm:$0xff] %vm10225, %v10172
    %10264 = vst.msk [vmem:[%s6 + $0x127] sm:$0xff] %vm10225, %v10174
    %10265 = vst.msk [vmem:[%s6 + $0x12f] sm:$0xff] %vm10225, %v10176
    %10266 = vst.msk [vmem:[%s6 + $0x137] sm:$0xff] %vm10225, %v10178
    %10267 = vst.msk [vmem:[%s6 + $0x13f] sm:$0x1] %vm10245, %v10180
    // Predicated region
    $region30: #{generator_forward.1} parent=1 // pred_check
      _
    $region31: #{generator_forward.1} parent=1 // pred_check_branch
      %10269 = sbr.rel (0) target = $region33
    $region32: #{generator_forward.1} parent=1 // pred_region
      _
    $region33: #{generator_forward.1} parent=1 // pred_fallthru
      _
    // Predicated region
    $region34: #{generator_forward.1} parent=1 // pred_check
      _
    $region35: #{generator_forward.1} parent=1 // pred_check_branch
      %10271 = sbr.rel (0) target = $region37
    $region36: #{generator_forward.1} parent=1 // pred_region
      _
    $region37: #{generator_forward.1} parent=1 // pred_fallthru
      _
    %10272 = vsyncpa [#allocation3], 1

</llo_original>
